<compile_context>
chip_gen: v5e
topology: v5e:2x2
jax: 0.10.0
libtpu: 0.0.40
codegen_flags: <defaults>
</compile_context>

<pallas_src>
import numpy as np
import jax
import jax.numpy as jnp
from jax import lax
from jax.experimental import pallas as pl
from jax.experimental.pallas import tpu as pltpu

BN_EPS = 1e-5
MXU_DTYPE = jnp.bfloat16        # MXU operands; accumulation stays f32 (#1/#6)
# Explicit scoped-VMEM budget (#12): safe headroom on v7x (64 MiB physical);
# could be raised toward 64-100 MiB on v5e/v6e (128 MiB physical) when tiles
# grow.  At the toy shapes below this is nowhere near binding.
VMEM_LIMIT = 48 * 1024 * 1024


# ---------------------------------------------------------------------------
# Kernel 1 - fused BasicBlock (one batch element per grid step):
#   BN1(affine) -> PReLU1 -> Conv1x1(+bias) -> BN2(folded) -> PReLU2
#   -> Conv3x3(pad=1, +bias)
# The pointwise result is written into a zero-padded VMEM scratch, so the 3x3
# conv's pad never touches HBM; the nine shifted taps are cast to bf16 and
# concatenated once into an im2col slab contracted with a single K = 9*G
# bf16 matmul (wide-K instead of nine K=G matmuls).
# ---------------------------------------------------------------------------
def _block_kernel(x_ref, s1_ref, t1_ref, a1_ref, w1_ref, sh_ref, a2_ref,
                  w9_ref, b3_ref, o_ref, pad_ref):
    _, h, w, cin = x_ref.shape
    g = w1_ref.shape[1]
    m = h * w

    # ---- pointwise stage: BN1 -> PReLU1 -> 1x1 conv -> BN2 -> PReLU2 ----
    x = x_ref[0].reshape(m, cin)                                 # (M, Cin)
    y = x * s1_ref[...] + t1_ref[...]                            # BN1
    y = jnp.maximum(y, 0.0) + a1_ref[...] * jnp.minimum(y, 0.0)  # PReLU1
    v = jnp.dot(y.astype(MXU_DTYPE), w1_ref[...],
                preferred_element_type=jnp.float32)              # bf16 MXU, f32 acc
    v = v + sh_ref[...]                                          # bias + BN2 shift
    v = jnp.maximum(v, 0.0) + a2_ref[...] * jnp.minimum(v, 0.0)  # PReLU2

    # ---- pad=1 realised in VMEM (no HBM round trip of the activation) ----
    pad_ref[...] = jnp.zeros_like(pad_ref)          # keeps the 1-px halo zero
    pad_ref[1:h + 1, 1:w + 1, :] = v.reshape(h, w, g)

    # ---- 3x3 conv: per-patch bf16 cast, one K = 9*G matmul ----
    patches = [pad_ref[dy:dy + h, dx:dx + w, :].reshape(m, g).astype(MXU_DTYPE)
               for dy in range(3) for dx in range(3)]
    slab = jnp.concatenate(patches, axis=-1)                     # (M, 9G) bf16
    out = jnp.dot(slab, w9_ref[...], preferred_element_type=jnp.float32)
    o_ref[0] = (out + b3_ref[...]).reshape(h, w, g)


def _basic_block(x_nhwc, p):
    n, h, w, cin = x_nhwc.shape
    g = p["w1f"].shape[-1]
    return pl.pallas_call(
        _block_kernel,
        out_shape=jax.ShapeDtypeStruct((n, h, w, g), jnp.float32),
        grid=(n,),
        in_specs=[
            pl.BlockSpec((1, h, w, cin), lambda i: (i, 0, 0, 0)),
            pl.BlockSpec((1, cin), lambda i: (0, 0)),      # BN1 scale
            pl.BlockSpec((1, cin), lambda i: (0, 0)),      # BN1 shift
            pl.BlockSpec((1, cin), lambda i: (0, 0)),      # PReLU1 alpha
            pl.BlockSpec((cin, g), lambda i: (0, 0)),      # w1 * s2 (bf16)
            pl.BlockSpec((1, g), lambda i: (0, 0)),        # b1*s2 + t2
            pl.BlockSpec((1, g), lambda i: (0, 0)),        # PReLU2 alpha
            pl.BlockSpec((9 * g, g), lambda i: (0, 0)),    # 3x3 weight (bf16)
            pl.BlockSpec((1, g), lambda i: (0, 0)),        # conv3 bias
        ],
        out_specs=pl.BlockSpec((1, h, w, g), lambda i: (i, 0, 0, 0)),
        scratch_shapes=[pltpu.VMEM((h + 2, w + 2, g), jnp.float32)],
        compiler_params=pltpu.CompilerParams(
            dimension_semantics=("parallel",),             # megacore on v7x
            vmem_limit_bytes=VMEM_LIMIT),
    )(x_nhwc, p["s1"], p["t1"], p["a1"], p["w1f"], p["sh1"], p["a2"],
      p["w9"], p["b3"])


# ---------------------------------------------------------------------------
# Kernel 2 - fused head (one batch element per grid step):
#   UpChannelsAndDownSample (Conv3x3 pad=1 + AvgPool2x2, folded into a
#   4x4/stride-2 kernel presented as a 2x2 conv over space-to-depth channels)
#   + BatchNorm (folded) + SE block (GAP is per-sample, so it stays exact and
#   fused because a grid step owns the whole batch element).
# ---------------------------------------------------------------------------
def _head_kernel(xs_ref, w_ref, b_ref, w_se1_ref, b_se1_ref, ap_ref,
                 w_se2_ref, b_se2_ref, o_ref):
    _, hp1, wp1, c4 = xs_ref.shape          # hp1 = Ho+1, wp1 = Wo+1, c4 = 4*C
    ho, wo = hp1 - 1, wp1 - 1
    cout = w_ref.shape[1]
    m = ho * wo

    # Four taps of the space-to-depth packed input -> per-patch bf16 cast ->
    # one K = 16*C matmul (pool folded into the conv => 2.25x fewer FLOPs).
    patches = [xs_ref[0, a:a + ho, cc:cc + wo, :].reshape(m, c4).astype(MXU_DTYPE)
               for a in range(2) for cc in range(2)]
    slab = jnp.concatenate(patches, axis=-1)                     # (M, 16C) bf16
    y = jnp.dot(slab, w_ref[...], preferred_element_type=jnp.float32)
    y = y + b_ref[...]                      # conv bias + BN shift, post-pool

    # ---- SE block: GAP over this element, MLP as two small dots (#7) ----
    gap = jnp.mean(y, axis=0, keepdims=True)                     # (1, Cout)
    h1 = jnp.dot(gap, w_se1_ref[...], preferred_element_type=jnp.float32)
    h1 = h1 + b_se1_ref[...]
    h1 = jnp.maximum(h1, 0.0) + ap_ref[...] * jnp.minimum(h1, 0.0)   # PReLU
    h2 = jnp.dot(h1, w_se2_ref[...], preferred_element_type=jnp.float32)
    h2 = h2 + b_se2_ref[...]
    gate = 1.0 + jax.nn.sigmoid(h2)                              # x + sig*x
    o_ref[0] = (y * gate).reshape(ho, wo, cout)


def _head(x_nhwc, hp):
    n, h, w, c = x_nhwc.shape
    assert h % 2 == 0 and w % 2 == 0, "AvgPool2x2 needs even spatial dims"
    ho, wo = h // 2, w // 2
    cout = hp["w16"].shape[-1]
    cr = hp["w_se1"].shape[-1]

    # pad=1 for the 3x3 conv, then space-to-depth by 2: the fused 4x4/stride-2
    # kernel becomes a 2x2/stride-1 conv over 4*C lane-packed channels.
    xp = jnp.pad(x_nhwc, ((0, 0), (1, 1), (1, 1), (0, 0)))
    xs = (xp.reshape(n, ho + 1, 2, wo + 1, 2, c)
            .transpose(0, 1, 3, 2, 4, 5)
            .reshape(n, ho + 1, wo + 1, 4 * c))

    return pl.pallas_call(
        _head_kernel,
        out_shape=jax.ShapeDtypeStruct((n, ho, wo, cout), jnp.float32),
        grid=(n,),
        in_specs=[
            pl.BlockSpec((1, ho + 1, wo + 1, 4 * c), lambda i: (i, 0, 0, 0)),
            pl.BlockSpec((16 * c, cout), lambda i: (0, 0)),
            pl.BlockSpec((1, cout), lambda i: (0, 0)),
            pl.BlockSpec((cout, cr), lambda i: (0, 0)),
            pl.BlockSpec((1, cr), lambda i: (0, 0)),
            pl.BlockSpec((1, 1), lambda i: (0, 0)),
            pl.BlockSpec((cr, cout), lambda i: (0, 0)),
            pl.BlockSpec((1, cout), lambda i: (0, 0)),
        ],
        out_specs=pl.BlockSpec((1, ho, wo, cout), lambda i: (i, 0, 0, 0)),
        compiler_params=pltpu.CompilerParams(
            dimension_semantics=("parallel",),             # megacore on v7x
            vmem_limit_bytes=VMEM_LIMIT),
    )(xs, hp["w16"], hp["bias"], hp["w_se1"], hp["b_se1"], hp["ap"],
      hp["w_se2"], hp["b_se2"])


# ---------------------------------------------------------------------------
# Module wrapper (NHWC internally; glue = incremental concat + layout only).
# ---------------------------------------------------------------------------
def upblocks_forward(params, x_nchw):
    """UpBlocks.forward: x (N, Cin, H, W) -> (N, Cout, H//2, W//2)."""
    x = jnp.transpose(x_nchw, (0, 2, 3, 1))                    # NCHW -> NHWC
    xcat = x
    for p in params["blocks"]:                                 # DenseNet growth
        t = _basic_block(xcat, p)
        xcat = jnp.concatenate([xcat, t], axis=-1)             # incremental cat
    y = _head(xcat, params["head"])                            # (N, Ho, Wo, Cout)
    return jnp.transpose(y, (0, 3, 1, 2))                      # back to NCHW


# ---------------------------------------------------------------------------
# Synthetic parameters, parameter folding, and an all-f32 JAX reference.
# ---------------------------------------------------------------------------
def make_raw_params(key, c0, growth, blocks, cout):
    keys = iter(jax.random.split(key, 14 * blocks + 16))

    def nrm(shape, scale=0.1):
        return scale * jax.random.normal(next(keys), shape, jnp.float32)

    def uni(shape, lo, hi):
        return jax.random.uniform(next(keys), shape, jnp.float32, lo, hi)

    raw = {"blocks": []}
    for b in range(blocks):
        cb = c0 + b * growth
        raw["blocks"].append(dict(
            g1=uni((cb,), 0.5, 1.5), be1=nrm((cb,)), m1=nrm((cb,)),
            v1=uni((cb,), 0.5, 1.5), a1=uni((cb,), -0.25, 0.25),
            w1=nrm((cb, growth)), b1=nrm((growth,)),
            g2=uni((growth,), 0.5, 1.5), be2=nrm((growth,)), m2=nrm((growth,)),
            v2=uni((growth,), 0.5, 1.5), a2=uni((growth,), -0.25, 0.25),
            w3=nrm((3, 3, growth, growth)), b3=nrm((growth,)),
        ))
    ccat = c0 + blocks * growth
    cr = max(cout // 4, 1)
    raw["head"] = dict(
        wc=nrm((3, 3, ccat, cout)), bc=nrm((cout,)),
        g=uni((cout,), 0.5, 1.5), be=nrm((cout,)), m=nrm((cout,)),
        v=uni((cout,), 0.5, 1.5),
        A1=nrm((cout, cr), 0.3), c1=nrm((cr,)),
        ap=uni((), -0.25, 0.25),
        A2=nrm((cr, cout), 0.3), c2=nrm((cout,)),
    )
    return raw


def fold_params(raw):
    """Fold BN running stats / biases / the avg-pool into kernel operands."""
    def bn_affine(g, be, m, v):
        s = g * lax.rsqrt(v + BN_EPS)
        return s, be - m * s

    folded = {"blocks": []}
    for p in raw["blocks"]:
        s1, t1 = bn_affine(p["g1"], p["be1"], p["m1"], p["v1"])
        s2, t2 = bn_affine(p["g2"], p["be2"], p["m2"], p["v2"])
        g = p["w3"].shape[-1]
        folded["blocks"].append(dict(
            s1=s1[None, :], t1=t1[None, :], a1=p["a1"][None, :],
            w1f=(p["w1"] * s2[None, :]).astype(MXU_DTYPE),   # BN2 scale folded, bf16
            sh1=(p["b1"] * s2 + t2)[None, :],                # conv bias + BN2 shift
            a2=p["a2"][None, :],
            w9=p["w3"].reshape(9 * g, g).astype(MXU_DTYPE),  # (dy,dx,cin) rows, bf16
            b3=p["b3"][None, :],
        ))

    hp = raw["head"]
    c, cout = hp["wc"].shape[2], hp["wc"].shape[3]
    # Fuse AvgPool2x2 into the 3x3/pad-1 conv: equivalent 4x4/stride-2 kernel.
    w4 = jnp.zeros((4, 4, c, cout), jnp.float32)
    for dy in range(2):
        for dx in range(2):
            w4 = w4.at[dy:dy + 3, dx:dx + 3].add(0.25 * hp["wc"])
    # Reorder rows to match the space-to-depth im2col slab built in the kernel:
    # row = (((tap_a*2 + tap_c)*2 + sub_b)*2 + sub_d)*C + cin.
    w16 = (w4.reshape(2, 2, 2, 2, c, cout)       # (a, b, c', d, cin, cout)
             .transpose(0, 2, 1, 3, 4, 5)        # (a, c', b, d, cin, cout)
             .reshape(16 * c, cout))
    sbn, tbn = bn_affine(hp["g"], hp["be"], hp["m"], hp["v"])
    folded["head"] = dict(
        w16=(w16 * sbn[None, :]).astype(MXU_DTYPE),   # BN scale folded; bf16
        bias=((hp["bc"] * sbn) + tbn)[None, :],       # applied post-pool
        w_se1=hp["A1"], b_se1=hp["c1"][None, :],
        ap=hp["ap"].reshape(1, 1),
        w_se2=hp["A2"], b_se2=hp["c2"][None, :],
    )
    return folded


def reference_forward(raw, x_nchw):
    """Pure-JAX (all f32) reference of the PyTorch UpBlocks forward."""
    def bn(x, g, be, m, v):
        return (x - m) * lax.rsqrt(v + BN_EPS) * g + be

    def prelu(x, a):
        return jnp.maximum(x, 0.0) + a * jnp.minimum(x, 0.0)

    x = jnp.transpose(x_nchw, (0, 2, 3, 1))
    feats = [x]
    for p in raw["blocks"]:
        t = feats[0] if len(feats) == 1 else jnp.concatenate(feats, axis=-1)
        t = prelu(bn(t, p["g1"], p["be1"], p["m1"], p["v1"]), p["a1"])
        t = jnp.einsum("nhwc,cg->nhwg", t, p["w1"]) + p["b1"]
        t = prelu(bn(t, p["g2"], p["be2"], p["m2"], p["v2"]), p["a2"])
        t = lax.conv_general_dilated(
            t, p["w3"], (1, 1), ((1, 1), (1, 1)),
            dimension_numbers=("NHWC", "HWIO", "NHWC")) + p["b3"]
        feats.append(t)
    xcat = jnp.concatenate(feats, axis=-1)

    hp = raw["head"]
    conv = lax.conv_general_dilated(
        xcat, hp["wc"], (1, 1), ((1, 1), (1, 1)),
        dimension_numbers=("NHWC", "HWIO", "NHWC")) + hp["bc"]
    pool = lax.reduce_window(conv, 0.0, lax.add,
                             (1, 2, 2, 1), (1, 2, 2, 1), "VALID") / 4.0
    y = bn(pool, hp["g"], hp["be"], hp["m"], hp["v"])
    gap = jnp.mean(y, axis=(1, 2))
    h1 = prelu(gap @ hp["A1"] + hp["c1"], hp["ap"])
    gate = jax.nn.sigmoid(h1 @ hp["A2"] + hp["c2"])
    out = y + gate[:, None, None, :] * y
    return jnp.transpose(out, (0, 3, 1, 2))


if __name__ == "__main__":
    # Small shapes consistent with the module:
    #   batch=2, inChannels=4, growthRate=4, blocksNumber=2, outChannels=8, 16x16.
    N, C0, GROWTH, BLOCKS, COUT, H, W = 2, 4, 4, 2, 8, 16, 16

    kparam, kx = jax.random.split(jax.random.PRNGKey(0))
    raw = make_raw_params(kparam, C0, GROWTH, BLOCKS, COUT)
    x = jax.random.normal(kx, (N, C0, H, W), jnp.float32)

    folded = fold_params(raw)
    out = jax.block_until_ready(jax.jit(upblocks_forward)(folded, x))

    ref = reference_forward(raw, x)
    assert out.shape == (N, COUT, H // 2, W // 2), out.shape
    # Tolerance sized for bf16 MXU operands in every conv stage (1x1, 3x3, head)
    # versus the all-f32 reference; structural bugs would show up at O(0.1-1).
    np.testing.assert_allclose(np.asarray(out), np.asarray(ref),
                               rtol=4e-2, atol=4e-2)
    print("KERNEL_OK")
</pallas_src>

<mosaic_0001>
module attributes {stable_mosaic.version = 11 : i64} {
  func.func @_block_kernel(%arg0: i32, %arg1: memref<1x16x16x4xf32, #tpu.memory_space<vmem>>, %arg2: memref<1x4xf32, #tpu.memory_space<vmem>>, %arg3: memref<1x4xf32, #tpu.memory_space<vmem>>, %arg4: memref<1x4xf32, #tpu.memory_space<vmem>>, %arg5: memref<4x4xbf16, #tpu.memory_space<vmem>>, %arg6: memref<1x4xf32, #tpu.memory_space<vmem>>, %arg7: memref<1x4xf32, #tpu.memory_space<vmem>>, %arg8: memref<36x4xbf16, #tpu.memory_space<vmem>>, %arg9: memref<1x4xf32, #tpu.memory_space<vmem>>, %arg10: memref<1x16x16x4xf32, #tpu.memory_space<vmem>>, %arg11: memref<18x18x4xf32, #tpu.memory_space<vmem>>) attributes {dimension_semantics = [#tpu.dimension_semantics<parallel>], iteration_bounds = array<i64: 2>, scalar_prefetch = 0 : i64, scratch_operands = 1 : i64, tpu.core_type = #tpu.core_type<tc>, window_params = [{transform_indices = @transform_0, window_bounds = array<i64: 1, 16, 16, 4>}, {pipeline_mode = #tpu.pipeline_mode<synchronous>, transform_indices = @transform_1, window_bounds = array<i64: 1, 4>}, {pipeline_mode = #tpu.pipeline_mode<synchronous>, transform_indices = @transform_2, window_bounds = array<i64: 1, 4>}, {pipeline_mode = #tpu.pipeline_mode<synchronous>, transform_indices = @transform_3, window_bounds = array<i64: 1, 4>}, {pipeline_mode = #tpu.pipeline_mode<synchronous>, transform_indices = @transform_4, window_bounds = array<i64: 4, 4>}, {pipeline_mode = #tpu.pipeline_mode<synchronous>, transform_indices = @transform_5, window_bounds = array<i64: 1, 4>}, {pipeline_mode = #tpu.pipeline_mode<synchronous>, transform_indices = @transform_6, window_bounds = array<i64: 1, 4>}, {pipeline_mode = #tpu.pipeline_mode<synchronous>, transform_indices = @transform_7, window_bounds = array<i64: 36, 4>}, {pipeline_mode = #tpu.pipeline_mode<synchronous>, transform_indices = @transform_8, window_bounds = array<i64: 1, 4>}, {transform_indices = @transform_9, window_bounds = array<i64: 1, 16, 16, 4>}]} {
    %c0 = arith.constant 0 : index
    %c0_0 = arith.constant 0 : index
    %c0_1 = arith.constant 0 : index
    %c0_2 = arith.constant 0 : index
    %0 = vector.load %arg1[%c0, %c0_0, %c0_1, %c0_2] : memref<1x16x16x4xf32, #tpu.memory_space<vmem>>, vector<1x16x16x4xf32>
    %1 = vector.shape_cast %0 : vector<1x16x16x4xf32> to vector<16x16x4xf32>
    %2 = vector.shape_cast %1 : vector<16x16x4xf32> to vector<256x4xf32>
    %c0_3 = arith.constant 0 : index
    %c0_4 = arith.constant 0 : index
    %3 = vector.load %arg2[%c0_3, %c0_4] : memref<1x4xf32, #tpu.memory_space<vmem>>, vector<1x4xf32>
    %4 = vector.broadcast %3 : vector<1x4xf32> to vector<256x4xf32>
    %5 = arith.mulf %2, %4 : vector<256x4xf32>
    %c0_5 = arith.constant 0 : index
    %c0_6 = arith.constant 0 : index
    %6 = vector.load %arg3[%c0_5, %c0_6] : memref<1x4xf32, #tpu.memory_space<vmem>>, vector<1x4xf32>
    %7 = vector.broadcast %6 : vector<1x4xf32> to vector<256x4xf32>
    %8 = arith.addf %5, %7 : vector<256x4xf32>
    %cst = arith.constant 0.000000e+00 : f32
    %9 = vector.broadcast %cst : f32 to vector<256x4xf32>
    %10 = arith.maximumf %8, %9 : vector<256x4xf32>
    %c0_7 = arith.constant 0 : index
    %c0_8 = arith.constant 0 : index
    %11 = vector.load %arg4[%c0_7, %c0_8] : memref<1x4xf32, #tpu.memory_space<vmem>>, vector<1x4xf32>
    %cst_9 = arith.constant 0.000000e+00 : f32
    %12 = vector.broadcast %cst_9 : f32 to vector<256x4xf32>
    %13 = arith.minimumf %8, %12 : vector<256x4xf32>
    %14 = vector.broadcast %11 : vector<1x4xf32> to vector<256x4xf32>
    %15 = arith.mulf %14, %13 : vector<256x4xf32>
    %16 = arith.addf %10, %15 : vector<256x4xf32>
    %17 = arith.truncf %16 : vector<256x4xf32> to vector<256x4xbf16>
    %c0_10 = arith.constant 0 : index
    %c0_11 = arith.constant 0 : index
    %18 = vector.load %arg5[%c0_10, %c0_11] : memref<4x4xbf16, #tpu.memory_space<vmem>>, vector<4x4xbf16>
    %cst_12 = arith.constant dense<0.000000e+00> : vector<256x4xf32>
    %19 = tpu.matmul %17, %18, %cst_12 {dimension_numbers = #tpu.dot_dimension_numbers<[1], [0], [0], [1], [0, 0, 1, 1], [], []>} : vector<256x4xbf16>, vector<4x4xbf16>, vector<256x4xf32> -> vector<256x4xf32>
    %c0_13 = arith.constant 0 : index
    %c0_14 = arith.constant 0 : index
    %20 = vector.load %arg6[%c0_13, %c0_14] : memref<1x4xf32, #tpu.memory_space<vmem>>, vector<1x4xf32>
    %21 = vector.broadcast %20 : vector<1x4xf32> to vector<256x4xf32>
    %22 = arith.addf %19, %21 : vector<256x4xf32>
    %cst_15 = arith.constant 0.000000e+00 : f32
    %23 = vector.broadcast %cst_15 : f32 to vector<256x4xf32>
    %24 = arith.maximumf %22, %23 : vector<256x4xf32>
    %c0_16 = arith.constant 0 : index
    %c0_17 = arith.constant 0 : index
    %25 = vector.load %arg7[%c0_16, %c0_17] : memref<1x4xf32, #tpu.memory_space<vmem>>, vector<1x4xf32>
    %cst_18 = arith.constant 0.000000e+00 : f32
    %26 = vector.broadcast %cst_18 : f32 to vector<256x4xf32>
    %27 = arith.minimumf %22, %26 : vector<256x4xf32>
    %28 = vector.broadcast %25 : vector<1x4xf32> to vector<256x4xf32>
    %29 = arith.mulf %28, %27 : vector<256x4xf32>
    %30 = arith.addf %24, %29 : vector<256x4xf32>
    %cst_19 = arith.constant 0.000000e+00 : f32
    %31 = vector.broadcast %cst_19 : f32 to vector<18x18x4xf32>
    %c0_20 = arith.constant 0 : index
    %c0_21 = arith.constant 0 : index
    %c0_22 = arith.constant 0 : index
    %32 = vector.load %arg11[%c0_20, %c0_21, %c0_22] : memref<18x18x4xf32, #tpu.memory_space<vmem>>, vector<18x18x4xf32>
    tpu.vector_store %arg11[%c0_20, %c0_21, %c0_22], %31 {strides = array<i32>} : memref<18x18x4xf32, #tpu.memory_space<vmem>>, vector<18x18x4xf32>,
    %33 = vector.shape_cast %30 : vector<256x4xf32> to vector<16x16x4xf32>
    %c1 = arith.constant 1 : index
    %c1_23 = arith.constant 1 : index
    %c0_24 = arith.constant 0 : index
    %34 = vector.load %arg11[%c1, %c1_23, %c0_24] : memref<18x18x4xf32, #tpu.memory_space<vmem>>, vector<16x16x4xf32>
    tpu.vector_store %arg11[%c1, %c1_23, %c0_24], %33 {strides = array<i32>} : memref<18x18x4xf32, #tpu.memory_space<vmem>>, vector<16x16x4xf32>,
    %c0_25 = arith.constant 0 : index
    %c0_26 = arith.constant 0 : index
    %c0_27 = arith.constant 0 : index
    %35 = vector.load %arg11[%c0_25, %c0_26, %c0_27] : memref<18x18x4xf32, #tpu.memory_space<vmem>>, vector<16x16x4xf32>
    %36 = vector.shape_cast %35 : vector<16x16x4xf32> to vector<256x4xf32>
    %37 = arith.truncf %36 : vector<256x4xf32> to vector<256x4xbf16>
    %c0_28 = arith.constant 0 : index
    %c1_29 = arith.constant 1 : index
    %c0_30 = arith.constant 0 : index
    %38 = vector.load %arg11[%c0_28, %c1_29, %c0_30] : memref<18x18x4xf32, #tpu.memory_space<vmem>>, vector<16x16x4xf32>
    %39 = vector.shape_cast %38 : vector<16x16x4xf32> to vector<256x4xf32>
    %40 = arith.truncf %39 : vector<256x4xf32> to vector<256x4xbf16>
    %c0_31 = arith.constant 0 : index
    %c2 = arith.constant 2 : index
    %c0_32 = arith.constant 0 : index
    %41 = vector.load %arg11[%c0_31, %c2, %c0_32] : memref<18x18x4xf32, #tpu.memory_space<vmem>>, vector<16x16x4xf32>
    %42 = vector.shape_cast %41 : vector<16x16x4xf32> to vector<256x4xf32>
    %43 = arith.truncf %42 : vector<256x4xf32> to vector<256x4xbf16>
    %c1_33 = arith.constant 1 : index
    %c0_34 = arith.constant 0 : index
    %c0_35 = arith.constant 0 : index
    %44 = vector.load %arg11[%c1_33, %c0_34, %c0_35] : memref<18x18x4xf32, #tpu.memory_space<vmem>>, vector<16x16x4xf32>
    %45 = vector.shape_cast %44 : vector<16x16x4xf32> to vector<256x4xf32>
    %46 = arith.truncf %45 : vector<256x4xf32> to vector<256x4xbf16>
    %c1_36 = arith.constant 1 : index
    %c1_37 = arith.constant 1 : index
    %c0_38 = arith.constant 0 : index
    %47 = vector.load %arg11[%c1_36, %c1_37, %c0_38] : memref<18x18x4xf32, #tpu.memory_space<vmem>>, vector<16x16x4xf32>
    %48 = vector.shape_cast %47 : vector<16x16x4xf32> to vector<256x4xf32>
    %49 = arith.truncf %48 : vector<256x4xf32> to vector<256x4xbf16>
    %c1_39 = arith.constant 1 : index
    %c2_40 = arith.constant 2 : index
    %c0_41 = arith.constant 0 : index
    %50 = vector.load %arg11[%c1_39, %c2_40, %c0_41] : memref<18x18x4xf32, #tpu.memory_space<vmem>>, vector<16x16x4xf32>
    %51 = vector.shape_cast %50 : vector<16x16x4xf32> to vector<256x4xf32>
    %52 = arith.truncf %51 : vector<256x4xf32> to vector<256x4xbf16>
    %c2_42 = arith.constant 2 : index
    %c0_43 = arith.constant 0 : index
    %c0_44 = arith.constant 0 : index
    %53 = vector.load %arg11[%c2_42, %c0_43, %c0_44] : memref<18x18x4xf32, #tpu.memory_space<vmem>>, vector<16x16x4xf32>
    %54 = vector.shape_cast %53 : vector<16x16x4xf32> to vector<256x4xf32>
    %55 = arith.truncf %54 : vector<256x4xf32> to vector<256x4xbf16>
    %c2_45 = arith.constant 2 : index
    %c1_46 = arith.constant 1 : index
    %c0_47 = arith.constant 0 : index
    %56 = vector.load %arg11[%c2_45, %c1_46, %c0_47] : memref<18x18x4xf32, #tpu.memory_space<vmem>>, vector<16x16x4xf32>
    %57 = vector.shape_cast %56 : vector<16x16x4xf32> to vector<256x4xf32>
    %58 = arith.truncf %57 : vector<256x4xf32> to vector<256x4xbf16>
    %c2_48 = arith.constant 2 : index
    %c2_49 = arith.constant 2 : index
    %c0_50 = arith.constant 0 : index
    %59 = vector.load %arg11[%c2_48, %c2_49, %c0_50] : memref<18x18x4xf32, #tpu.memory_space<vmem>>, vector<16x16x4xf32>
    %60 = vector.shape_cast %59 : vector<16x16x4xf32> to vector<256x4xf32>
    %61 = arith.truncf %60 : vector<256x4xf32> to vector<256x4xbf16>
    %62 = tpu.concatenate %37, %40, %43, %46, %49, %52, %55, %58, %61 in 1 : vector<256x4xbf16>, vector<256x4xbf16>, vector<256x4xbf16>, vector<256x4xbf16>, vector<256x4xbf16>, vector<256x4xbf16>, vector<256x4xbf16>, vector<256x4xbf16>, vector<256x4xbf16> -> vector<256x36xbf16>
    %c0_51 = arith.constant 0 : index
    %c0_52 = arith.constant 0 : index
    %63 = vector.load %arg8[%c0_51, %c0_52] : memref<36x4xbf16, #tpu.memory_space<vmem>>, vector<36x4xbf16>
    %cst_53 = arith.constant dense<0.000000e+00> : vector<256x4xf32>
    %64 = tpu.matmul %62, %63, %cst_53 {dimension_numbers = #tpu.dot_dimension_numbers<[1], [0], [0], [1], [0, 0, 1, 1], [], []>} : vector<256x36xbf16>, vector<36x4xbf16>, vector<256x4xf32> -> vector<256x4xf32>
    %c0_54 = arith.constant 0 : index
    %c0_55 = arith.constant 0 : index
    %65 = vector.load %arg9[%c0_54, %c0_55] : memref<1x4xf32, #tpu.memory_space<vmem>>, vector<1x4xf32>
    %66 = vector.broadcast %65 : vector<1x4xf32> to vector<256x4xf32>
    %67 = arith.addf %64, %66 : vector<256x4xf32>
    %68 = vector.shape_cast %67 : vector<256x4xf32> to vector<16x16x4xf32>
    %c0_56 = arith.constant 0 : index
    %c0_57 = arith.constant 0 : index
    %c0_58 = arith.constant 0 : index
    %c0_59 = arith.constant 0 : index
    %69 = vector.load %arg10[%c0_56, %c0_57, %c0_58, %c0_59] : memref<1x16x16x4xf32, #tpu.memory_space<vmem>>, vector<1x16x16x4xf32>
    %70 = vector.shape_cast %69 : vector<1x16x16x4xf32> to vector<16x16x4xf32>
    %71 = vector.shape_cast %68 : vector<16x16x4xf32> to vector<1x16x16x4xf32>
    tpu.vector_store %arg10[%c0_56, %c0_57, %c0_58, %c0_59], %71 {strides = array<i32>} : memref<1x16x16x4xf32, #tpu.memory_space<vmem>>, vector<1x16x16x4xf32>,
    return
  }
  func.func @transform_0(%arg0: i32) -> (i32, i32, i32, i32) {
    %c0_i32 = arith.constant 0 : i32
    %c0_i32_0 = arith.constant 0 : i32
    %c0_i32_1 = arith.constant 0 : i32
    %c0_i32_2 = arith.constant 0 : i32
    return %arg0, %c0_i32, %c0_i32_0, %c0_i32_1 : i32, i32, i32, i32
  }
  func.func @transform_1(%arg0: i32) -> (i32, i32) {
    %c0_i32 = arith.constant 0 : i32
    %c0_i32_0 = arith.constant 0 : i32
    %c0_i32_1 = arith.constant 0 : i32
    return %c0_i32, %c0_i32_0 : i32, i32
  }
  func.func @transform_2(%arg0: i32) -> (i32, i32) {
    %c0_i32 = arith.constant 0 : i32
    %c0_i32_0 = arith.constant 0 : i32
    %c0_i32_1 = arith.constant 0 : i32
    return %c0_i32, %c0_i32_0 : i32, i32
  }
  func.func @transform_3(%arg0: i32) -> (i32, i32) {
    %c0_i32 = arith.constant 0 : i32
    %c0_i32_0 = arith.constant 0 : i32
    %c0_i32_1 = arith.constant 0 : i32
    return %c0_i32, %c0_i32_0 : i32, i32
  }
  func.func @transform_4(%arg0: i32) -> (i32, i32) {
    %c0_i32 = arith.constant 0 : i32
    %c0_i32_0 = arith.constant 0 : i32
    %c0_i32_1 = arith.constant 0 : i32
    return %c0_i32, %c0_i32_0 : i32, i32
  }
  func.func @transform_5(%arg0: i32) -> (i32, i32) {
    %c0_i32 = arith.constant 0 : i32
    %c0_i32_0 = arith.constant 0 : i32
    %c0_i32_1 = arith.constant 0 : i32
    return %c0_i32, %c0_i32_0 : i32, i32
  }
  func.func @transform_6(%arg0: i32) -> (i32, i32) {
    %c0_i32 = arith.constant 0 : i32
    %c0_i32_0 = arith.constant 0 : i32
    %c0_i32_1 = arith.constant 0 : i32
    return %c0_i32, %c0_i32_0 : i32, i32
  }
  func.func @transform_7(%arg0: i32) -> (i32, i32) {
    %c0_i32 = arith.constant 0 : i32
    %c0_i32_0 = arith.constant 0 : i32
    %c0_i32_1 = arith.constant 0 : i32
    return %c0_i32, %c0_i32_0 : i32, i32
  }
  func.func @transform_8(%arg0: i32) -> (i32, i32) {
    %c0_i32 = arith.constant 0 : i32
    %c0_i32_0 = arith.constant 0 : i32
    %c0_i32_1 = arith.constant 0 : i32
    return %c0_i32, %c0_i32_0 : i32, i32
  }
  func.func @transform_9(%arg0: i32) -> (i32, i32, i32, i32) {
    %c0_i32 = arith.constant 0 : i32
    %c0_i32_0 = arith.constant 0 : i32
    %c0_i32_1 = arith.constant 0 : i32
    %c0_i32_2 = arith.constant 0 : i32
    return %arg0, %c0_i32, %c0_i32_0, %c0_i32_1 : i32, i32, i32, i32
  }
}

module attributes {stable_mosaic.version = 11 : i64} {
  func.func @_block_kernel(%arg0: i32, %arg1: memref<1x16x16x8xf32, #tpu.memory_space<vmem>>, %arg2: memref<1x8xf32, #tpu.memory_space<vmem>>, %arg3: memref<1x8xf32, #tpu.memory_space<vmem>>, %arg4: memref<1x8xf32, #tpu.memory_space<vmem>>, %arg5: memref<8x4xbf16, #tpu.memory_space<vmem>>, %arg6: memref<1x4xf32, #tpu.memory_space<vmem>>, %arg7: memref<1x4xf32, #tpu.memory_space<vmem>>, %arg8: memref<36x4xbf16, #tpu.memory_space<vmem>>, %arg9: memref<1x4xf32, #tpu.memory_space<vmem>>, %arg10: memref<1x16x16x4xf32, #tpu.memory_space<vmem>>, %arg11: memref<18x18x4xf32, #tpu.memory_space<vmem>>) attributes {dimension_semantics = [#tpu.dimension_semantics<parallel>], iteration_bounds = array<i64: 2>, scalar_prefetch = 0 : i64, scratch_operands = 1 : i64, tpu.core_type = #tpu.core_type<tc>, window_params = [{transform_indices = @transform_0, window_bounds = array<i64: 1, 16, 16, 8>}, {pipeline_mode = #tpu.pipeline_mode<synchronous>, transform_indices = @transform_1, window_bounds = array<i64: 1, 8>}, {pipeline_mode = #tpu.pipeline_mode<synchronous>, transform_indices = @transform_2, window_bounds = array<i64: 1, 8>}, {pipeline_mode = #tpu.pipeline_mode<synchronous>, transform_indices = @transform_3, window_bounds = array<i64: 1, 8>}, {pipeline_mode = #tpu.pipeline_mode<synchronous>, transform_indices = @transform_4, window_bounds = array<i64: 8, 4>}, {pipeline_mode = #tpu.pipeline_mode<synchronous>, transform_indices = @transform_5, window_bounds = array<i64: 1, 4>}, {pipeline_mode = #tpu.pipeline_mode<synchronous>, transform_indices = @transform_6, window_bounds = array<i64: 1, 4>}, {pipeline_mode = #tpu.pipeline_mode<synchronous>, transform_indices = @transform_7, window_bounds = array<i64: 36, 4>}, {pipeline_mode = #tpu.pipeline_mode<synchronous>, transform_indices = @transform_8, window_bounds = array<i64: 1, 4>}, {transform_indices = @transform_9, window_bounds = array<i64: 1, 16, 16, 4>}]} {
    %c0 = arith.constant 0 : index
    %c0_0 = arith.constant 0 : index
    %c0_1 = arith.constant 0 : index
    %c0_2 = arith.constant 0 : index
    %0 = vector.load %arg1[%c0, %c0_0, %c0_1, %c0_2] : memref<1x16x16x8xf32, #tpu.memory_space<vmem>>, vector<1x16x16x8xf32>
    %1 = vector.shape_cast %0 : vector<1x16x16x8xf32> to vector<16x16x8xf32>
    %2 = vector.shape_cast %1 : vector<16x16x8xf32> to vector<256x8xf32>
    %c0_3 = arith.constant 0 : index
    %c0_4 = arith.constant 0 : index
    %3 = vector.load %arg2[%c0_3, %c0_4] : memref<1x8xf32, #tpu.memory_space<vmem>>, vector<1x8xf32>
    %4 = vector.broadcast %3 : vector<1x8xf32> to vector<256x8xf32>
    %5 = arith.mulf %2, %4 : vector<256x8xf32>
    %c0_5 = arith.constant 0 : index
    %c0_6 = arith.constant 0 : index
    %6 = vector.load %arg3[%c0_5, %c0_6] : memref<1x8xf32, #tpu.memory_space<vmem>>, vector<1x8xf32>
    %7 = vector.broadcast %6 : vector<1x8xf32> to vector<256x8xf32>
    %8 = arith.addf %5, %7 : vector<256x8xf32>
    %cst = arith.constant 0.000000e+00 : f32
    %9 = vector.broadcast %cst : f32 to vector<256x8xf32>
    %10 = arith.maximumf %8, %9 : vector<256x8xf32>
    %c0_7 = arith.constant 0 : index
    %c0_8 = arith.constant 0 : index
    %11 = vector.load %arg4[%c0_7, %c0_8] : memref<1x8xf32, #tpu.memory_space<vmem>>, vector<1x8xf32>
    %cst_9 = arith.constant 0.000000e+00 : f32
    %12 = vector.broadcast %cst_9 : f32 to vector<256x8xf32>
    %13 = arith.minimumf %8, %12 : vector<256x8xf32>
    %14 = vector.broadcast %11 : vector<1x8xf32> to vector<256x8xf32>
    %15 = arith.mulf %14, %13 : vector<256x8xf32>
    %16 = arith.addf %10, %15 : vector<256x8xf32>
    %17 = arith.truncf %16 : vector<256x8xf32> to vector<256x8xbf16>
    %c0_10 = arith.constant 0 : index
    %c0_11 = arith.constant 0 : index
    %18 = vector.load %arg5[%c0_10, %c0_11] : memref<8x4xbf16, #tpu.memory_space<vmem>>, vector<8x4xbf16>
    %cst_12 = arith.constant dense<0.000000e+00> : vector<256x4xf32>
    %19 = tpu.matmul %17, %18, %cst_12 {dimension_numbers = #tpu.dot_dimension_numbers<[1], [0], [0], [1], [0, 0, 1, 1], [], []>} : vector<256x8xbf16>, vector<8x4xbf16>, vector<256x4xf32> -> vector<256x4xf32>
    %c0_13 = arith.constant 0 : index
    %c0_14 = arith.constant 0 : index
    %20 = vector.load %arg6[%c0_13, %c0_14] : memref<1x4xf32, #tpu.memory_space<vmem>>, vector<1x4xf32>
    %21 = vector.broadcast %20 : vector<1x4xf32> to vector<256x4xf32>
    %22 = arith.addf %19, %21 : vector<256x4xf32>
    %cst_15 = arith.constant 0.000000e+00 : f32
    %23 = vector.broadcast %cst_15 : f32 to vector<256x4xf32>
    %24 = arith.maximumf %22, %23 : vector<256x4xf32>
    %c0_16 = arith.constant 0 : index
    %c0_17 = arith.constant 0 : index
    %25 = vector.load %arg7[%c0_16, %c0_17] : memref<1x4xf32, #tpu.memory_space<vmem>>, vector<1x4xf32>
    %cst_18 = arith.constant 0.000000e+00 : f32
    %26 = vector.broadcast %cst_18 : f32 to vector<256x4xf32>
    %27 = arith.minimumf %22, %26 : vector<256x4xf32>
    %28 = vector.broadcast %25 : vector<1x4xf32> to vector<256x4xf32>
    %29 = arith.mulf %28, %27 : vector<256x4xf32>
    %30 = arith.addf %24, %29 : vector<256x4xf32>
    %cst_19 = arith.constant 0.000000e+00 : f32
    %31 = vector.broadcast %cst_19 : f32 to vector<18x18x4xf32>
    %c0_20 = arith.constant 0 : index
    %c0_21 = arith.constant 0 : index
    %c0_22 = arith.constant 0 : index
    %32 = vector.load %arg11[%c0_20, %c0_21, %c0_22] : memref<18x18x4xf32, #tpu.memory_space<vmem>>, vector<18x18x4xf32>
    tpu.vector_store %arg11[%c0_20, %c0_21, %c0_22], %31 {strides = array<i32>} : memref<18x18x4xf32, #tpu.memory_space<vmem>>, vector<18x18x4xf32>,
    %33 = vector.shape_cast %30 : vector<256x4xf32> to vector<16x16x4xf32>
    %c1 = arith.constant 1 : index
    %c1_23 = arith.constant 1 : index
    %c0_24 = arith.constant 0 : index
    %34 = vector.load %arg11[%c1, %c1_23, %c0_24] : memref<18x18x4xf32, #tpu.memory_space<vmem>>, vector<16x16x4xf32>
    tpu.vector_store %arg11[%c1, %c1_23, %c0_24], %33 {strides = array<i32>} : memref<18x18x4xf32, #tpu.memory_space<vmem>>, vector<16x16x4xf32>,
    %c0_25 = arith.constant 0 : index
    %c0_26 = arith.constant 0 : index
    %c0_27 = arith.constant 0 : index
    %35 = vector.load %arg11[%c0_25, %c0_26, %c0_27] : memref<18x18x4xf32, #tpu.memory_space<vmem>>, vector<16x16x4xf32>
    %36 = vector.shape_cast %35 : vector<16x16x4xf32> to vector<256x4xf32>
    %37 = arith.truncf %36 : vector<256x4xf32> to vector<256x4xbf16>
    %c0_28 = arith.constant 0 : index
    %c1_29 = arith.constant 1 : index
    %c0_30 = arith.constant 0 : index
    %38 = vector.load %arg11[%c0_28, %c1_29, %c0_30] : memref<18x18x4xf32, #tpu.memory_space<vmem>>, vector<16x16x4xf32>
    %39 = vector.shape_cast %38 : vector<16x16x4xf32> to vector<256x4xf32>
    %40 = arith.truncf %39 : vector<256x4xf32> to vector<256x4xbf16>
    %c0_31 = arith.constant 0 : index
    %c2 = arith.constant 2 : index
    %c0_32 = arith.constant 0 : index
    %41 = vector.load %arg11[%c0_31, %c2, %c0_32] : memref<18x18x4xf32, #tpu.memory_space<vmem>>, vector<16x16x4xf32>
    %42 = vector.shape_cast %41 : vector<16x16x4xf32> to vector<256x4xf32>
    %43 = arith.truncf %42 : vector<256x4xf32> to vector<256x4xbf16>
    %c1_33 = arith.constant 1 : index
    %c0_34 = arith.constant 0 : index
    %c0_35 = arith.constant 0 : index
    %44 = vector.load %arg11[%c1_33, %c0_34, %c0_35] : memref<18x18x4xf32, #tpu.memory_space<vmem>>, vector<16x16x4xf32>
    %45 = vector.shape_cast %44 : vector<16x16x4xf32> to vector<256x4xf32>
    %46 = arith.truncf %45 : vector<256x4xf32> to vector<256x4xbf16>
    %c1_36 = arith.constant 1 : index
    %c1_37 = arith.constant 1 : index
    %c0_38 = arith.constant 0 : index
    %47 = vector.load %arg11[%c1_36, %c1_37, %c0_38] : memref<18x18x4xf32, #tpu.memory_space<vmem>>, vector<16x16x4xf32>
    %48 = vector.shape_cast %47 : vector<16x16x4xf32> to vector<256x4xf32>
    %49 = arith.truncf %48 : vector<256x4xf32> to vector<256x4xbf16>
    %c1_39 = arith.constant 1 : index
    %c2_40 = arith.constant 2 : index
    %c0_41 = arith.constant 0 : index
    %50 = vector.load %arg11[%c1_39, %c2_40, %c0_41] : memref<18x18x4xf32, #tpu.memory_space<vmem>>, vector<16x16x4xf32>
    %51 = vector.shape_cast %50 : vector<16x16x4xf32> to vector<256x4xf32>
    %52 = arith.truncf %51 : vector<256x4xf32> to vector<256x4xbf16>
    %c2_42 = arith.constant 2 : index
    %c0_43 = arith.constant 0 : index
    %c0_44 = arith.constant 0 : index
    %53 = vector.load %arg11[%c2_42, %c0_43, %c0_44] : memref<18x18x4xf32, #tpu.memory_space<vmem>>, vector<16x16x4xf32>
    %54 = vector.shape_cast %53 : vector<16x16x4xf32> to vector<256x4xf32>
    %55 = arith.truncf %54 : vector<256x4xf32> to vector<256x4xbf16>
    %c2_45 = arith.constant 2 : index
    %c1_46 = arith.constant 1 : index
    %c0_47 = arith.constant 0 : index
    %56 = vector.load %arg11[%c2_45, %c1_46, %c0_47] : memref<18x18x4xf32, #tpu.memory_space<vmem>>, vector<16x16x4xf32>
    %57 = vector.shape_cast %56 : vector<16x16x4xf32> to vector<256x4xf32>
    %58 = arith.truncf %57 : vector<256x4xf32> to vector<256x4xbf16>
    %c2_48 = arith.constant 2 : index
    %c2_49 = arith.constant 2 : index
    %c0_50 = arith.constant 0 : index
    %59 = vector.load %arg11[%c2_48, %c2_49, %c0_50] : memref<18x18x4xf32, #tpu.memory_space<vmem>>, vector<16x16x4xf32>
    %60 = vector.shape_cast %59 : vector<16x16x4xf32> to vector<256x4xf32>
    %61 = arith.truncf %60 : vector<256x4xf32> to vector<256x4xbf16>
    %62 = tpu.concatenate %37, %40, %43, %46, %49, %52, %55, %58, %61 in 1 : vector<256x4xbf16>, vector<256x4xbf16>, vector<256x4xbf16>, vector<256x4xbf16>, vector<256x4xbf16>, vector<256x4xbf16>, vector<256x4xbf16>, vector<256x4xbf16>, vector<256x4xbf16> -> vector<256x36xbf16>
    %c0_51 = arith.constant 0 : index
    %c0_52 = arith.constant 0 : index
    %63 = vector.load %arg8[%c0_51, %c0_52] : memref<36x4xbf16, #tpu.memory_space<vmem>>, vector<36x4xbf16>
    %cst_53 = arith.constant dense<0.000000e+00> : vector<256x4xf32>
    %64 = tpu.matmul %62, %63, %cst_53 {dimension_numbers = #tpu.dot_dimension_numbers<[1], [0], [0], [1], [0, 0, 1, 1], [], []>} : vector<256x36xbf16>, vector<36x4xbf16>, vector<256x4xf32> -> vector<256x4xf32>
    %c0_54 = arith.constant 0 : index
    %c0_55 = arith.constant 0 : index
    %65 = vector.load %arg9[%c0_54, %c0_55] : memref<1x4xf32, #tpu.memory_space<vmem>>, vector<1x4xf32>
    %66 = vector.broadcast %65 : vector<1x4xf32> to vector<256x4xf32>
    %67 = arith.addf %64, %66 : vector<256x4xf32>
    %68 = vector.shape_cast %67 : vector<256x4xf32> to vector<16x16x4xf32>
    %c0_56 = arith.constant 0 : index
    %c0_57 = arith.constant 0 : index
    %c0_58 = arith.constant 0 : index
    %c0_59 = arith.constant 0 : index
    %69 = vector.load %arg10[%c0_56, %c0_57, %c0_58, %c0_59] : memref<1x16x16x4xf32, #tpu.memory_space<vmem>>, vector<1x16x16x4xf32>
    %70 = vector.shape_cast %69 : vector<1x16x16x4xf32> to vector<16x16x4xf32>
    %71 = vector.shape_cast %68 : vector<16x16x4xf32> to vector<1x16x16x4xf32>
    tpu.vector_store %arg10[%c0_56, %c0_57, %c0_58, %c0_59], %71 {strides = array<i32>} : memref<1x16x16x4xf32, #tpu.memory_space<vmem>>, vector<1x16x16x4xf32>,
    return
  }
  func.func @transform_0(%arg0: i32) -> (i32, i32, i32, i32) {
    %c0_i32 = arith.constant 0 : i32
    %c0_i32_0 = arith.constant 0 : i32
    %c0_i32_1 = arith.constant 0 : i32
    %c0_i32_2 = arith.constant 0 : i32
    return %arg0, %c0_i32, %c0_i32_0, %c0_i32_1 : i32, i32, i32, i32
  }
  func.func @transform_1(%arg0: i32) -> (i32, i32) {
    %c0_i32 = arith.constant 0 : i32
    %c0_i32_0 = arith.constant 0 : i32
    %c0_i32_1 = arith.constant 0 : i32
    return %c0_i32, %c0_i32_0 : i32, i32
  }
  func.func @transform_2(%arg0: i32) -> (i32, i32) {
    %c0_i32 = arith.constant 0 : i32
    %c0_i32_0 = arith.constant 0 : i32
    %c0_i32_1 = arith.constant 0 : i32
    return %c0_i32, %c0_i32_0 : i32, i32
  }
  func.func @transform_3(%arg0: i32) -> (i32, i32) {
    %c0_i32 = arith.constant 0 : i32
    %c0_i32_0 = arith.constant 0 : i32
    %c0_i32_1 = arith.constant 0 : i32
    return %c0_i32, %c0_i32_0 : i32, i32
  }
  func.func @transform_4(%arg0: i32) -> (i32, i32) {
    %c0_i32 = arith.constant 0 : i32
    %c0_i32_0 = arith.constant 0 : i32
    %c0_i32_1 = arith.constant 0 : i32
    return %c0_i32, %c0_i32_0 : i32, i32
  }
  func.func @transform_5(%arg0: i32) -> (i32, i32) {
    %c0_i32 = arith.constant 0 : i32
    %c0_i32_0 = arith.constant 0 : i32
    %c0_i32_1 = arith.constant 0 : i32
    return %c0_i32, %c0_i32_0 : i32, i32
  }
  func.func @transform_6(%arg0: i32) -> (i32, i32) {
    %c0_i32 = arith.constant 0 : i32
    %c0_i32_0 = arith.constant 0 : i32
    %c0_i32_1 = arith.constant 0 : i32
    return %c0_i32, %c0_i32_0 : i32, i32
  }
  func.func @transform_7(%arg0: i32) -> (i32, i32) {
    %c0_i32 = arith.constant 0 : i32
    %c0_i32_0 = arith.constant 0 : i32
    %c0_i32_1 = arith.constant 0 : i32
    return %c0_i32, %c0_i32_0 : i32, i32
  }
  func.func @transform_8(%arg0: i32) -> (i32, i32) {
    %c0_i32 = arith.constant 0 : i32
    %c0_i32_0 = arith.constant 0 : i32
    %c0_i32_1 = arith.constant 0 : i32
    return %c0_i32, %c0_i32_0 : i32, i32
  }
  func.func @transform_9(%arg0: i32) -> (i32, i32, i32, i32) {
    %c0_i32 = arith.constant 0 : i32
    %c0_i32_0 = arith.constant 0 : i32
    %c0_i32_1 = arith.constant 0 : i32
    %c0_i32_2 = arith.constant 0 : i32
    return %arg0, %c0_i32, %c0_i32_0, %c0_i32_1 : i32, i32, i32, i32
  }
}

module attributes {stable_mosaic.version = 11 : i64} {
  func.func @_head_kernel(%arg0: i32, %arg1: memref<1x9x9x48xf32, #tpu.memory_space<vmem>>, %arg2: memref<192x8xbf16, #tpu.memory_space<vmem>>, %arg3: memref<1x8xf32, #tpu.memory_space<vmem>>, %arg4: memref<8x2xf32, #tpu.memory_space<vmem>>, %arg5: memref<1x2xf32, #tpu.memory_space<vmem>>, %arg6: memref<1x1xf32, #tpu.memory_space<vmem>>, %arg7: memref<2x8xf32, #tpu.memory_space<vmem>>, %arg8: memref<1x8xf32, #tpu.memory_space<vmem>>, %arg9: memref<1x8x8x8xf32, #tpu.memory_space<vmem>>) attributes {dimension_semantics = [#tpu.dimension_semantics<parallel>], iteration_bounds = array<i64: 2>, scalar_prefetch = 0 : i64, scratch_operands = 0 : i64, tpu.core_type = #tpu.core_type<tc>, window_params = [{transform_indices = @transform_0, window_bounds = array<i64: 1, 9, 9, 48>}, {pipeline_mode = #tpu.pipeline_mode<synchronous>, transform_indices = @transform_1, window_bounds = array<i64: 192, 8>}, {pipeline_mode = #tpu.pipeline_mode<synchronous>, transform_indices = @transform_2, window_bounds = array<i64: 1, 8>}, {pipeline_mode = #tpu.pipeline_mode<synchronous>, transform_indices = @transform_3, window_bounds = array<i64: 8, 2>}, {pipeline_mode = #tpu.pipeline_mode<synchronous>, transform_indices = @transform_4, window_bounds = array<i64: 1, 2>}, {pipeline_mode = #tpu.pipeline_mode<synchronous>, transform_indices = @transform_5, window_bounds = array<i64: 1, 1>}, {pipeline_mode = #tpu.pipeline_mode<synchronous>, transform_indices = @transform_6, window_bounds = array<i64: 2, 8>}, {pipeline_mode = #tpu.pipeline_mode<synchronous>, transform_indices = @transform_7, window_bounds = array<i64: 1, 8>}, {transform_indices = @transform_8, window_bounds = array<i64: 1, 8, 8, 8>}]} {
    %c0 = arith.constant 0 : index
    %c0_0 = arith.constant 0 : index
    %c0_1 = arith.constant 0 : index
    %c0_2 = arith.constant 0 : index
    %0 = vector.load %arg1[%c0, %c0_0, %c0_1, %c0_2] : memref<1x9x9x48xf32, #tpu.memory_space<vmem>>, vector<1x8x8x48xf32>
    %1 = vector.shape_cast %0 : vector<1x8x8x48xf32> to vector<8x8x48xf32>
    %2 = vector.shape_cast %1 : vector<8x8x48xf32> to vector<64x48xf32>
    %3 = arith.truncf %2 : vector<64x48xf32> to vector<64x48xbf16>
    %c0_3 = arith.constant 0 : index
    %c0_4 = arith.constant 0 : index
    %c1 = arith.constant 1 : index
    %c0_5 = arith.constant 0 : index
    %4 = vector.load %arg1[%c0_3, %c0_4, %c1, %c0_5] : memref<1x9x9x48xf32, #tpu.memory_space<vmem>>, vector<1x8x8x48xf32>
    %5 = vector.shape_cast %4 : vector<1x8x8x48xf32> to vector<8x8x48xf32>
    %6 = vector.shape_cast %5 : vector<8x8x48xf32> to vector<64x48xf32>
    %7 = arith.truncf %6 : vector<64x48xf32> to vector<64x48xbf16>
    %c0_6 = arith.constant 0 : index
    %c1_7 = arith.constant 1 : index
    %c0_8 = arith.constant 0 : index
    %c0_9 = arith.constant 0 : index
    %8 = vector.load %arg1[%c0_6, %c1_7, %c0_8, %c0_9] : memref<1x9x9x48xf32, #tpu.memory_space<vmem>>, vector<1x8x8x48xf32>
    %9 = vector.shape_cast %8 : vector<1x8x8x48xf32> to vector<8x8x48xf32>
    %10 = vector.shape_cast %9 : vector<8x8x48xf32> to vector<64x48xf32>
    %11 = arith.truncf %10 : vector<64x48xf32> to vector<64x48xbf16>
    %c0_10 = arith.constant 0 : index
    %c1_11 = arith.constant 1 : index
    %c1_12 = arith.constant 1 : index
    %c0_13 = arith.constant 0 : index
    %12 = vector.load %arg1[%c0_10, %c1_11, %c1_12, %c0_13] : memref<1x9x9x48xf32, #tpu.memory_space<vmem>>, vector<1x8x8x48xf32>
    %13 = vector.shape_cast %12 : vector<1x8x8x48xf32> to vector<8x8x48xf32>
    %14 = vector.shape_cast %13 : vector<8x8x48xf32> to vector<64x48xf32>
    %15 = arith.truncf %14 : vector<64x48xf32> to vector<64x48xbf16>
    %16 = tpu.concatenate %3, %7, %11, %15 in 1 : vector<64x48xbf16>, vector<64x48xbf16>, vector<64x48xbf16>, vector<64x48xbf16> -> vector<64x192xbf16>
    %c0_14 = arith.constant 0 : index
    %c0_15 = arith.constant 0 : index
    %17 = vector.load %arg2[%c0_14, %c0_15] : memref<192x8xbf16, #tpu.memory_space<vmem>>, vector<192x8xbf16>
    %cst = arith.constant dense<0.000000e+00> : vector<64x8xf32>
    %18 = tpu.matmul %16, %17, %cst {dimension_numbers = #tpu.dot_dimension_numbers<[1], [0], [0], [1], [0, 0, 1, 1], [], []>} : vector<64x192xbf16>, vector<192x8xbf16>, vector<64x8xf32> -> vector<64x8xf32>
    %c0_16 = arith.constant 0 : index
    %c0_17 = arith.constant 0 : index
    %19 = vector.load %arg3[%c0_16, %c0_17] : memref<1x8xf32, #tpu.memory_space<vmem>>, vector<1x8xf32>
    %20 = vector.broadcast %19 : vector<1x8xf32> to vector<64x8xf32>
    %21 = arith.addf %18, %20 : vector<64x8xf32>
    %cst_18 = arith.constant dense<0.000000e+00> : vector<8xf32>
    %22 = vector.multi_reduction <add>, %21, %cst_18 [0] : vector<64x8xf32> to vector<8xf32>
    %23 = vector.shape_cast %22 : vector<8xf32> to vector<1x8xf32>
    %cst_19 = arith.constant 6.400000e+01 : f32
    %24 = vector.broadcast %cst_19 : f32 to vector<1x8xf32>
    %25 = arith.divf %23, %24 : vector<1x8xf32>
    %c0_20 = arith.constant 0 : index
    %c0_21 = arith.constant 0 : index
    %26 = vector.load %arg4[%c0_20, %c0_21] : memref<8x2xf32, #tpu.memory_space<vmem>>, vector<8x2xf32>
    %cst_22 = arith.constant dense<0.000000e+00> : vector<1x2xf32>
    %27 = tpu.matmul %25, %26, %cst_22 {dimension_numbers = #tpu.dot_dimension_numbers<[1], [0], [0], [1], [0, 0, 1, 1], [], []>} : vector<1x8xf32>, vector<8x2xf32>, vector<1x2xf32> -> vector<1x2xf32>
    %c0_23 = arith.constant 0 : index
    %c0_24 = arith.constant 0 : index
    %28 = vector.load %arg5[%c0_23, %c0_24] : memref<1x2xf32, #tpu.memory_space<vmem>>, vector<1x2xf32>
    %29 = arith.addf %27, %28 : vector<1x2xf32>
    %cst_25 = arith.constant 0.000000e+00 : f32
    %30 = vector.broadcast %cst_25 : f32 to vector<1x2xf32>
    %31 = arith.maximumf %29, %30 : vector<1x2xf32>
    %c0_26 = arith.constant 0 : index
    %c0_27 = arith.constant 0 : index
    %32 = vector.load %arg6[%c0_26, %c0_27] : memref<1x1xf32, #tpu.memory_space<vmem>>, vector<1x1xf32>
    %cst_28 = arith.constant 0.000000e+00 : f32
    %33 = vector.broadcast %cst_28 : f32 to vector<1x2xf32>
    %34 = arith.minimumf %29, %33 : vector<1x2xf32>
    %35 = vector.broadcast %32 : vector<1x1xf32> to vector<1x2xf32>
    %36 = arith.mulf %35, %34 : vector<1x2xf32>
    %37 = arith.addf %31, %36 : vector<1x2xf32>
    %c0_29 = arith.constant 0 : index
    %c0_30 = arith.constant 0 : index
    %38 = vector.load %arg7[%c0_29, %c0_30] : memref<2x8xf32, #tpu.memory_space<vmem>>, vector<2x8xf32>
    %cst_31 = arith.constant dense<0.000000e+00> : vector<1x8xf32>
    %39 = tpu.matmul %37, %38, %cst_31 {dimension_numbers = #tpu.dot_dimension_numbers<[1], [0], [0], [1], [0, 0, 1, 1], [], []>} : vector<1x2xf32>, vector<2x8xf32>, vector<1x8xf32> -> vector<1x8xf32>
    %c0_32 = arith.constant 0 : index
    %c0_33 = arith.constant 0 : index
    %40 = vector.load %arg8[%c0_32, %c0_33] : memref<1x8xf32, #tpu.memory_space<vmem>>, vector<1x8xf32>
    %41 = arith.addf %39, %40 : vector<1x8xf32>
    %42 = arith.negf %41 : vector<1x8xf32>
    %43 = math.exp %42 : vector<1x8xf32>
    %cst_34 = arith.constant 1.000000e+00 : f32
    %44 = vector.broadcast %cst_34 : f32 to vector<1x8xf32>
    %45 = arith.addf %44, %43 : vector<1x8xf32>
    %46 = arith.divf %44, %45 : vector<1x8xf32>
    %cst_35 = arith.constant 1.000000e+00 : f32
    %47 = vector.broadcast %cst_35 : f32 to vector<1x8xf32>
    %48 = arith.addf %47, %46 : vector<1x8xf32>
    %49 = vector.broadcast %48 : vector<1x8xf32> to vector<64x8xf32>
    %50 = arith.mulf %21, %49 : vector<64x8xf32>
    %51 = vector.shape_cast %50 : vector<64x8xf32> to vector<8x8x8xf32>
    %c0_36 = arith.constant 0 : index
    %c0_37 = arith.constant 0 : index
    %c0_38 = arith.constant 0 : index
    %c0_39 = arith.constant 0 : index
    %52 = vector.load %arg9[%c0_36, %c0_37, %c0_38, %c0_39] : memref<1x8x8x8xf32, #tpu.memory_space<vmem>>, vector<1x8x8x8xf32>
    %53 = vector.shape_cast %52 : vector<1x8x8x8xf32> to vector<8x8x8xf32>
    %54 = vector.shape_cast %51 : vector<8x8x8xf32> to vector<1x8x8x8xf32>
    tpu.vector_store %arg9[%c0_36, %c0_37, %c0_38, %c0_39], %54 {strides = array<i32>} : memref<1x8x8x8xf32, #tpu.memory_space<vmem>>, vector<1x8x8x8xf32>,
    return
  }
  func.func @transform_0(%arg0: i32) -> (i32, i32, i32, i32) {
    %c0_i32 = arith.constant 0 : i32
    %c0_i32_0 = arith.constant 0 : i32
    %c0_i32_1 = arith.constant 0 : i32
    %c0_i32_2 = arith.constant 0 : i32
    return %arg0, %c0_i32, %c0_i32_0, %c0_i32_1 : i32, i32, i32, i32
  }
  func.func @transform_1(%arg0: i32) -> (i32, i32) {
    %c0_i32 = arith.constant 0 : i32
    %c0_i32_0 = arith.constant 0 : i32
    %c0_i32_1 = arith.constant 0 : i32
    return %c0_i32, %c0_i32_0 : i32, i32
  }
  func.func @transform_2(%arg0: i32) -> (i32, i32) {
    %c0_i32 = arith.constant 0 : i32
    %c0_i32_0 = arith.constant 0 : i32
    %c0_i32_1 = arith.constant 0 : i32
    return %c0_i32, %c0_i32_0 : i32, i32
  }
  func.func @transform_3(%arg0: i32) -> (i32, i32) {
    %c0_i32 = arith.constant 0 : i32
    %c0_i32_0 = arith.constant 0 : i32
    %c0_i32_1 = arith.constant 0 : i32
    return %c0_i32, %c0_i32_0 : i32, i32
  }
  func.func @transform_4(%arg0: i32) -> (i32, i32) {
    %c0_i32 = arith.constant 0 : i32
    %c0_i32_0 = arith.constant 0 : i32
    %c0_i32_1 = arith.constant 0 : i32
    return %c0_i32, %c0_i32_0 : i32, i32
  }
  func.func @transform_5(%arg0: i32) -> (i32, i32) {
    %c0_i32 = arith.constant 0 : i32
    %c0_i32_0 = arith.constant 0 : i32
    %c0_i32_1 = arith.constant 0 : i32
    return %c0_i32, %c0_i32_0 : i32, i32
  }
  func.func @transform_6(%arg0: i32) -> (i32, i32) {
    %c0_i32 = arith.constant 0 : i32
    %c0_i32_0 = arith.constant 0 : i32
    %c0_i32_1 = arith.constant 0 : i32
    return %c0_i32, %c0_i32_0 : i32, i32
  }
  func.func @transform_7(%arg0: i32) -> (i32, i32) {
    %c0_i32 = arith.constant 0 : i32
    %c0_i32_0 = arith.constant 0 : i32
    %c0_i32_1 = arith.constant 0 : i32
    return %c0_i32, %c0_i32_0 : i32, i32
  }
  func.func @transform_8(%arg0: i32) -> (i32, i32, i32, i32) {
    %c0_i32 = arith.constant 0 : i32
    %c0_i32_0 = arith.constant 0 : i32
    %c0_i32_1 = arith.constant 0 : i32
    %c0_i32_2 = arith.constant 0 : i32
    return %arg0, %c0_i32, %c0_i32_0, %c0_i32_1 : i32, i32, i32, i32
  }
}

</mosaic_0001>

<llo_original>
// kernel: upblocks_forward.3
$region0: #{upblocks_forward.3}
  #allocation0 [shape = 'u32[]', space=smem, size = 0x4, offset = 0x4, fixed_abs, tag = 'smem constant byte address 0x4 - core index']
  #allocation1 [shape = 'u32[72,128]{1,0:T(1,128)}', space=vmem, size = 0x9000, scoped, tag = 'internal scratch']
  #allocation2 [shape = 'f32[18,18,4]{2,1,0:T(8,128)}', space=vmem, size = 0x36000, scoped, tag = 'scratch operand']
  %s0 = inlined_call_operand.vmem [shape: f32[2,16,16,4], index: 0, kind: input, shape index: {}]
  %s1 = inlined_call_operand.vmem [shape: f32[1,4], index: 1, kind: input, shape index: {}]
  %s2 = inlined_call_operand.vmem [shape: f32[1,4], index: 2, kind: input, shape index: {}]
  %s3 = inlined_call_operand.vmem [shape: f32[1,4], index: 3, kind: input, shape index: {}]
  %s4 = inlined_call_operand.vmem [shape: bf16[4,4], index: 4, kind: input, shape index: {}]
  %s5 = inlined_call_operand.vmem [shape: f32[1,4], index: 5, kind: input, shape index: {}]
  %s6 = inlined_call_operand.vmem [shape: f32[1,4], index: 6, kind: input, shape index: {}]
  %s7 = inlined_call_operand.vmem [shape: bf16[36,4], index: 7, kind: input, shape index: {}]
  %s8 = inlined_call_operand.vmem [shape: f32[1,4], index: 8, kind: input, shape index: {}]
  %s9 = inlined_call_operand.vmem [shape: f32[2,16,16,4], index: 9, kind: output, shape index: {}]
  %s10 = sld [smem:[#allocation0]]
  $region69: #{upblocks_forward.3} parent=0
    _
  %s12 = ssub.s32 1, %s10
  %s13 = scalar_select 0, %s12, %s10
  loop: start=0, step=1, limit=4
  $region2: #{upblocks_forward.3} parent=0 // loop_pre_header
    _
  $region3: #{upblocks_forward.3} parent=0 // loop_header
    %s15 = sphi 0, %s19
    %p16 = scmp.ge.s32.totalorder %s15, 4
    %s25 = sphi 0, %s27
    %s28 = sphi 0, %s25
    %s29 = sphi 0, %s28
    %s45 = sphi 0, %s29
    %s49 = sphi 0, %s49
    %s51 = sphi 0, %s49
    %s52 = sphi 0, %s51
    %s66 = sphi 0, %s52
    %s70 = sphi 0, %s70
    %s72 = sphi 0, %s70
    %s73 = sphi 0, %s72
    %s87 = sphi 0, %s73
    %s91 = sphi 0, %s91
    %s93 = sphi 0, %s91
    %s94 = sphi 0, %s93
    %s108 = sphi 0, %s94
    %s112 = sphi 0, %s112
    %s114 = sphi 0, %s112
    %s115 = sphi 0, %s114
    %s129 = sphi 0, %s115
    %s133 = sphi 0, %s133
    %s135 = sphi 0, %s133
    %s136 = sphi 0, %s135
    %s150 = sphi 0, %s136
    %s154 = sphi 0, %s154
    %s156 = sphi 0, %s154
    %s157 = sphi 0, %s156
    %s171 = sphi 0, %s157
    %s175 = sphi 0, %s175
    %s177 = sphi 0, %s175
    %s178 = sphi 0, %s177
    %s192 = sphi 0, %s178
    %s196 = sphi 0, %s196
    %s198 = sphi 0, %s196
    %s199 = sphi 0, %s198
    %s213 = sphi 0, %s199
    %s219 = sphi 0, %s221
    %s222 = sphi 0, %s219
    %s223 = sphi 0, %s222
    %s239 = sphi 0, %s223
  $region4: #{upblocks_forward.3} parent=0 // loop_header_branch
    %18 = sbr.rel (%p16) target = $region8
  $region5: #{upblocks_forward.3} parent=0 // loop_body
    %s20 = ssub.s32 %s15, 1
    %s21 = ssub.s32 %s15, 2
    %s22 = sadd.s32 %s15, 1
    %s23 = ssub.s32 %s15, %s22
    %p24 = scmp.eq.s32.totalorder %s23, 0
    %s26 = sadd.s32 %s25, 1
    %s27 = scalar_select %p24, %s25, %s26
    %p30 = pneg %p24
    %p31 = scmp.eq.s32.totalorder %s15, 1
    %p32 = por %p30, %p31
    %p33 = scmp.ne.s32.totalorder %s25, %s28
    %p34 = scmp.eq.s32.totalorder %s15, 0
    %p35 = por %p33, %p34
    %p36 = scmp.ne.s32.totalorder %s25, %s28
    %p37 = scmp.eq.s32.totalorder %s20, 1
    %p38 = por %p36, %p37
    %p39 = scmp.ne.s32.totalorder %s28, %s29
    %p40 = scmp.eq.s32.totalorder %s20, 0
    %p41 = por %p39, %p40
    %p42 = scmp.ne.s32.totalorder %s28, %s29
    %p43 = scmp.eq.s32.totalorder %s21, 1
    %p44 = por %p42, %p43
    %p46 = scmp.ne.s32.totalorder %s29, %s45
    %p47 = scmp.eq.s32.totalorder %s21, 0
    %p48 = por %p46, %p47
    %s50 = sadd.s32 %s49, 1
    %p53 = scmp.eq.s32.totalorder %s15, 1
    %p54 = scmp.ne.s32.totalorder %s49, %s51
    %p55 = scmp.eq.s32.totalorder %s15, 0
    %p56 = por %p54, %p55
    %p57 = scmp.ne.s32.totalorder %s49, %s51
    %p58 = scmp.eq.s32.totalorder %s20, 1
    %p59 = por %p57, %p58
    %p60 = scmp.ne.s32.totalorder %s51, %s52
    %p61 = scmp.eq.s32.totalorder %s20, 0
    %p62 = por %p60, %p61
    %p63 = scmp.ne.s32.totalorder %s51, %s52
    %p64 = scmp.eq.s32.totalorder %s21, 1
    %p65 = por %p63, %p64
    %p67 = scmp.ne.s32.totalorder %s52, %s66
    %p68 = scmp.eq.s32.totalorder %s21, 0
    %p69 = por %p67, %p68
    %s71 = sadd.s32 %s70, 1
    %p74 = scmp.eq.s32.totalorder %s15, 1
    %p75 = scmp.ne.s32.totalorder %s70, %s72
    %p76 = scmp.eq.s32.totalorder %s15, 0
    %p77 = por %p75, %p76
    %p78 = scmp.ne.s32.totalorder %s70, %s72
    %p79 = scmp.eq.s32.totalorder %s20, 1
    %p80 = por %p78, %p79
    %p81 = scmp.ne.s32.totalorder %s72, %s73
    %p82 = scmp.eq.s32.totalorder %s20, 0
    %p83 = por %p81, %p82
    %p84 = scmp.ne.s32.totalorder %s72, %s73
    %p85 = scmp.eq.s32.totalorder %s21, 1
    %p86 = por %p84, %p85
    %p88 = scmp.ne.s32.totalorder %s73, %s87
    %p89 = scmp.eq.s32.totalorder %s21, 0
    %p90 = por %p88, %p89
    %s92 = sadd.s32 %s91, 1
    %p95 = scmp.eq.s32.totalorder %s15, 1
    %p96 = scmp.ne.s32.totalorder %s91, %s93
    %p97 = scmp.eq.s32.totalorder %s15, 0
    %p98 = por %p96, %p97
    %p99 = scmp.ne.s32.totalorder %s91, %s93
    %p100 = scmp.eq.s32.totalorder %s20, 1
    %p101 = por %p99, %p100
    %p102 = scmp.ne.s32.totalorder %s93, %s94
    %p103 = scmp.eq.s32.totalorder %s20, 0
    %p104 = por %p102, %p103
    %p105 = scmp.ne.s32.totalorder %s93, %s94
    %p106 = scmp.eq.s32.totalorder %s21, 1
    %p107 = por %p105, %p106
    %p109 = scmp.ne.s32.totalorder %s94, %s108
    %p110 = scmp.eq.s32.totalorder %s21, 0
    %p111 = por %p109, %p110
    %s113 = sadd.s32 %s112, 1
    %p116 = scmp.eq.s32.totalorder %s15, 1
    %p117 = scmp.ne.s32.totalorder %s112, %s114
    %p118 = scmp.eq.s32.totalorder %s15, 0
    %p119 = por %p117, %p118
    %p120 = scmp.ne.s32.totalorder %s112, %s114
    %p121 = scmp.eq.s32.totalorder %s20, 1
    %p122 = por %p120, %p121
    %p123 = scmp.ne.s32.totalorder %s114, %s115
    %p124 = scmp.eq.s32.totalorder %s20, 0
    %p125 = por %p123, %p124
    %p126 = scmp.ne.s32.totalorder %s114, %s115
    %p127 = scmp.eq.s32.totalorder %s21, 1
    %p128 = por %p126, %p127
    %p130 = scmp.ne.s32.totalorder %s115, %s129
    %p131 = scmp.eq.s32.totalorder %s21, 0
    %p132 = por %p130, %p131
    %s134 = sadd.s32 %s133, 1
    %p137 = scmp.eq.s32.totalorder %s15, 1
    %p138 = scmp.ne.s32.totalorder %s133, %s135
    %p139 = scmp.eq.s32.totalorder %s15, 0
    %p140 = por %p138, %p139
    %p141 = scmp.ne.s32.totalorder %s133, %s135
    %p142 = scmp.eq.s32.totalorder %s20, 1
    %p143 = por %p141, %p142
    %p144 = scmp.ne.s32.totalorder %s135, %s136
    %p145 = scmp.eq.s32.totalorder %s20, 0
    %p146 = por %p144, %p145
    %p147 = scmp.ne.s32.totalorder %s135, %s136
    %p148 = scmp.eq.s32.totalorder %s21, 1
    %p149 = por %p147, %p148
    %p151 = scmp.ne.s32.totalorder %s136, %s150
    %p152 = scmp.eq.s32.totalorder %s21, 0
    %p153 = por %p151, %p152
    %s155 = sadd.s32 %s154, 1
    %p158 = scmp.eq.s32.totalorder %s15, 1
    %p159 = scmp.ne.s32.totalorder %s154, %s156
    %p160 = scmp.eq.s32.totalorder %s15, 0
    %p161 = por %p159, %p160
    %p162 = scmp.ne.s32.totalorder %s154, %s156
    %p163 = scmp.eq.s32.totalorder %s20, 1
    %p164 = por %p162, %p163
    %p165 = scmp.ne.s32.totalorder %s156, %s157
    %p166 = scmp.eq.s32.totalorder %s20, 0
    %p167 = por %p165, %p166
    %p168 = scmp.ne.s32.totalorder %s156, %s157
    %p169 = scmp.eq.s32.totalorder %s21, 1
    %p170 = por %p168, %p169
    %p172 = scmp.ne.s32.totalorder %s157, %s171
    %p173 = scmp.eq.s32.totalorder %s21, 0
    %p174 = por %p172, %p173
    %s176 = sadd.s32 %s175, 1
    %p179 = scmp.eq.s32.totalorder %s15, 1
    %p180 = scmp.ne.s32.totalorder %s175, %s177
    %p181 = scmp.eq.s32.totalorder %s15, 0
    %p182 = por %p180, %p181
    %p183 = scmp.ne.s32.totalorder %s175, %s177
    %p184 = scmp.eq.s32.totalorder %s20, 1
    %p185 = por %p183, %p184
    %p186 = scmp.ne.s32.totalorder %s177, %s178
    %p187 = scmp.eq.s32.totalorder %s20, 0
    %p188 = por %p186, %p187
    %p189 = scmp.ne.s32.totalorder %s177, %s178
    %p190 = scmp.eq.s32.totalorder %s21, 1
    %p191 = por %p189, %p190
    %p193 = scmp.ne.s32.totalorder %s178, %s192
    %p194 = scmp.eq.s32.totalorder %s21, 0
    %p195 = por %p193, %p194
    %s197 = sadd.s32 %s196, 1
    %p200 = scmp.eq.s32.totalorder %s15, 1
    %p201 = scmp.ne.s32.totalorder %s196, %s198
    %p202 = scmp.eq.s32.totalorder %s15, 0
    %p203 = por %p201, %p202
    %p204 = scmp.ne.s32.totalorder %s196, %s198
    %p205 = scmp.eq.s32.totalorder %s20, 1
    %p206 = por %p204, %p205
    %p207 = scmp.ne.s32.totalorder %s198, %s199
    %p208 = scmp.eq.s32.totalorder %s20, 0
    %p209 = por %p207, %p208
    %p210 = scmp.ne.s32.totalorder %s198, %s199
    %p211 = scmp.eq.s32.totalorder %s21, 1
    %p212 = por %p210, %p211
    %p214 = scmp.ne.s32.totalorder %s199, %s213
    %p215 = scmp.eq.s32.totalorder %s21, 0
    %p216 = por %p214, %p215
    %s217 = ssub.s32 %s15, %s22
    %p218 = scmp.eq.s32.totalorder %s217, 0
    %s220 = sadd.s32 %s219, 1
    %s221 = scalar_select %p218, %s219, %s220
    %p224 = pneg %p218
    %p225 = scmp.eq.s32.totalorder %s15, 1
    %p226 = por %p224, %p225
    %p227 = scmp.ne.s32.totalorder %s219, %s222
    %p228 = scmp.eq.s32.totalorder %s15, 0
    %p229 = por %p227, %p228
    %p230 = scmp.ne.s32.totalorder %s219, %s222
    %p231 = scmp.eq.s32.totalorder %s20, 1
    %p232 = por %p230, %p231
    %p233 = scmp.ne.s32.totalorder %s222, %s223
    %p234 = scmp.eq.s32.totalorder %s20, 0
    %p235 = por %p233, %p234
    %p236 = scmp.ne.s32.totalorder %s222, %s223
    %p237 = scmp.eq.s32.totalorder %s21, 1
    %p238 = por %p236, %p237
    %p240 = scmp.ne.s32.totalorder %s223, %s239
    %p241 = scmp.eq.s32.totalorder %s21, 0
    %p242 = por %p240, %p241
    %p243 = scmp.le.s32.totalorder 1, %s15
    %p244 = scmp.lt.s32.totalorder %s15, 3
    %p245 = pnand %p243, %p244
    %p246 = pneg %p245
    // Predicated region
    $region9: #{upblocks_forward.3} parent=5 // pred_check
      _
    $region10: #{upblocks_forward.3} parent=5 // pred_check_branch
      %248 = sbr.rel (%p245) target = $region12
    $region11: #{upblocks_forward.3} parent=5 // pred_region
      %s249 = ssub.s32 %s15, 1
      // Predicated region
      $region13: #{upblocks_forward.3} parent=11 // pred_check
        %p250 = pneg %p62
      $region14: #{upblocks_forward.3} parent=11 // pred_check_branch
        %252 = sbr.rel (%p250) target = $region16
      $region15: #{upblocks_forward.3} parent=11 // pred_region
        _
      $region16: #{upblocks_forward.3} parent=11 // pred_fallthru
        _
      // Predicated region
      $region17: #{upblocks_forward.3} parent=11 // pred_check
        %p253 = pneg %p83
      $region18: #{upblocks_forward.3} parent=11 // pred_check_branch
        %255 = sbr.rel (%p253) target = $region20
      $region19: #{upblocks_forward.3} parent=11 // pred_region
        _
      $region20: #{upblocks_forward.3} parent=11 // pred_fallthru
        _
      // Predicated region
      $region21: #{upblocks_forward.3} parent=11 // pred_check
        %p256 = pneg %p104
      $region22: #{upblocks_forward.3} parent=11 // pred_check_branch
        %258 = sbr.rel (%p256) target = $region24
      $region23: #{upblocks_forward.3} parent=11 // pred_region
        _
      $region24: #{upblocks_forward.3} parent=11 // pred_fallthru
        _
      // Predicated region
      $region25: #{upblocks_forward.3} parent=11 // pred_check
        %p259 = pneg %p125
      $region26: #{upblocks_forward.3} parent=11 // pred_check_branch
        %261 = sbr.rel (%p259) target = $region28
      $region27: #{upblocks_forward.3} parent=11 // pred_region
        _
      $region28: #{upblocks_forward.3} parent=11 // pred_fallthru
        _
      // Predicated region
      $region29: #{upblocks_forward.3} parent=11 // pred_check
        %p262 = pneg %p146
      $region30: #{upblocks_forward.3} parent=11 // pred_check_branch
        %264 = sbr.rel (%p262) target = $region32
      $region31: #{upblocks_forward.3} parent=11 // pred_region
        _
      $region32: #{upblocks_forward.3} parent=11 // pred_fallthru
        _
      // Predicated region
      $region33: #{upblocks_forward.3} parent=11 // pred_check
        %p265 = pneg %p167
      $region34: #{upblocks_forward.3} parent=11 // pred_check_branch
        %267 = sbr.rel (%p265) target = $region36
      $region35: #{upblocks_forward.3} parent=11 // pred_region
        _
      $region36: #{upblocks_forward.3} parent=11 // pred_fallthru
        _
      // Predicated region
      $region37: #{upblocks_forward.3} parent=11 // pred_check
        %p268 = pneg %p188
      $region38: #{upblocks_forward.3} parent=11 // pred_check_branch
        %270 = sbr.rel (%p268) target = $region40
      $region39: #{upblocks_forward.3} parent=11 // pred_region
        _
      $region40: #{upblocks_forward.3} parent=11 // pred_fallthru
        _
      // Predicated region
      $region41: #{upblocks_forward.3} parent=11 // pred_check
        %p271 = pneg %p209
      $region42: #{upblocks_forward.3} parent=11 // pred_check_branch
        %273 = sbr.rel (%p271) target = $region44
      $region43: #{upblocks_forward.3} parent=11 // pred_region
        _
      $region44: #{upblocks_forward.3} parent=11 // pred_fallthru
        _
    $region12: #{upblocks_forward.3} parent=5 // pred_fallthru
      _
    %p274 = scmp.lt.s32.totalorder %s15, 2
    // Predicated region
    $region45: #{upblocks_forward.3} parent=5 // pred_check
      %p275 = pneg %p274
    $region46: #{upblocks_forward.3} parent=5 // pred_check_branch
      %277 = sbr.rel (%p275) target = $region48
    $region47: #{upblocks_forward.3} parent=5 // pred_region
      // Predicated region
      $region49: #{upblocks_forward.3} parent=47 // pred_check
        %p278 = pneg %p35
      $region50: #{upblocks_forward.3} parent=47 // pred_check_branch
        %280 = sbr.rel (%p278) target = $region52
      $region51: #{upblocks_forward.3} parent=47 // pred_region
        %p281 = scmp.lt.s32.totalorder %s15, 1
        %s282 = scalar_select %p281, %s15, 1
        %s283 = smul.addr %s282, 32
        %s284 = smul.addr %s283, 8
        %s285 = scalar_lea.vmem %s0, %s284
      $region52: #{upblocks_forward.3} parent=47 // pred_fallthru
        _
    $region48: #{upblocks_forward.3} parent=5 // pred_fallthru
      _
    %p286 = scmp.le.s32.totalorder 1, %s15
    %p287 = scmp.lt.s32.totalorder %s15, 3
    %p288 = pnand %p286, %p287
    %p289 = pneg %p288
    // Predicated region
    $region53: #{upblocks_forward.3} parent=5 // pred_check
      _
    $region54: #{upblocks_forward.3} parent=5 // pred_check_branch
      %291 = sbr.rel (%p288) target = $region56
    $region55: #{upblocks_forward.3} parent=5 // pred_region
      %s292 = ssub.s32 %s15, 1
      %p293 = scmp.lt.s32.totalorder %s20, 1
      %s294 = scalar_select %p293, %s20, 1
      %s295 = smul.addr %s294, 32
      %s296 = smul.addr %s295, 8
      %s297 = scalar_lea.vmem %s0, %s296
      %p298 = pneg %p41
      %p299 = pneg %p38
      %p300 = pneg %p62
      %p301 = pneg %p59
      %p302 = pneg %p83
      %p303 = pneg %p80
      %p304 = pneg %p104
      %p305 = pneg %p101
      %p306 = pneg %p125
      %p307 = pneg %p122
      %p308 = pneg %p146
      %p309 = pneg %p143
      %p310 = pneg %p167
      %p311 = pneg %p164
      %p312 = pneg %p188
      %p313 = pneg %p185
      %p314 = pneg %p209
      %p315 = pneg %p206
      %p316 = pneg %p235
      %p317 = pneg %p232
      %p318 = scmp.lt.s32.totalorder %s20, 1
      %s319 = scalar_select %p318, %s20, 1
      %s320 = smul.addr %s319, 32
      %s321 = smul.addr %s320, 8
      %s322 = scalar_lea.vmem %s9, %s321
      %p323 = scmp.lt.s32.totalorder %s20, 1
      %s324 = scalar_select %p323, %s20, 1
      %s325 = smul.addr %s324, 32
      %s326 = smul.addr %s325, 8
      %s327 = scalar_lea.vmem %s0, %s326
      %p328 = scmp.lt.s32.totalorder %s20, 1
      %s329 = scalar_select %p328, %s20, 1
      %s330 = smul.addr %s329, 32
      %s331 = smul.addr %s330, 8
      %s332 = scalar_lea.vmem %s9, %s331
      %v334 = vld [vmem:[%s327] sm:$0xff]
      %v335 = vld [vmem:[%s327 + $0x8] sm:$0xff]
      %v336 = vld [vmem:[%s327 + $0x10] sm:$0xff]
      %v337 = vld [vmem:[%s327 + $0x18] sm:$0xff]
      %v338 = vld [vmem:[%s327 + $0x20] sm:$0xff]
      %v339 = vld [vmem:[%s327 + $0x28] sm:$0xff]
      %v340 = vld [vmem:[%s327 + $0x30] sm:$0xff]
      %v341 = vld [vmem:[%s327 + $0x38] sm:$0xff]
      %v342 = vld [vmem:[%s327 + $0x40] sm:$0xff]
      %v343 = vld [vmem:[%s327 + $0x48] sm:$0xff]
      %v344 = vld [vmem:[%s327 + $0x50] sm:$0xff]
      %v345 = vld [vmem:[%s327 + $0x58] sm:$0xff]
      %v346 = vld [vmem:[%s327 + $0x60] sm:$0xff]
      %v347 = vld [vmem:[%s327 + $0x68] sm:$0xff]
      %v348 = vld [vmem:[%s327 + $0x70] sm:$0xff]
      %v349 = vld [vmem:[%s327 + $0x78] sm:$0xff]
      %v350 = vld [vmem:[%s327 + $0x80] sm:$0xff]
      %v351 = vld [vmem:[%s327 + $0x88] sm:$0xff]
      %v352 = vld [vmem:[%s327 + $0x90] sm:$0xff]
      %v353 = vld [vmem:[%s327 + $0x98] sm:$0xff]
      %v354 = vld [vmem:[%s327 + $0xa0] sm:$0xff]
      %v355 = vld [vmem:[%s327 + $0xa8] sm:$0xff]
      %v356 = vld [vmem:[%s327 + $0xb0] sm:$0xff]
      %v357 = vld [vmem:[%s327 + $0xb8] sm:$0xff]
      %v358 = vld [vmem:[%s327 + $0xc0] sm:$0xff]
      %v359 = vld [vmem:[%s327 + $0xc8] sm:$0xff]
      %v360 = vld [vmem:[%s327 + $0xd0] sm:$0xff]
      %v361 = vld [vmem:[%s327 + $0xd8] sm:$0xff]
      %v362 = vld [vmem:[%s327 + $0xe0] sm:$0xff]
      %v363 = vld [vmem:[%s327 + $0xe8] sm:$0xff]
      %v364 = vld [vmem:[%s327 + $0xf0] sm:$0xff]
      %v365 = vld [vmem:[%s327 + $0xf8] sm:$0xff]
      %v366 = vld [vmem:[%s1] sm:$0x1]
      %v368 = vperm.slane %v366, 0
      %v370 = vmul.f32 %v334, %v368
      %v371 = vmul.f32 %v335, %v368
      %v372 = vmul.f32 %v336, %v368
      %v373 = vmul.f32 %v337, %v368
      %v374 = vmul.f32 %v338, %v368
      %v375 = vmul.f32 %v339, %v368
      %v376 = vmul.f32 %v340, %v368
      %v377 = vmul.f32 %v341, %v368
      %v378 = vmul.f32 %v342, %v368
      %v379 = vmul.f32 %v343, %v368
      %v380 = vmul.f32 %v344, %v368
      %v381 = vmul.f32 %v345, %v368
      %v382 = vmul.f32 %v346, %v368
      %v383 = vmul.f32 %v347, %v368
      %v384 = vmul.f32 %v348, %v368
      %v385 = vmul.f32 %v349, %v368
      %v386 = vmul.f32 %v350, %v368
      %v387 = vmul.f32 %v351, %v368
      %v388 = vmul.f32 %v352, %v368
      %v389 = vmul.f32 %v353, %v368
      %v390 = vmul.f32 %v354, %v368
      %v391 = vmul.f32 %v355, %v368
      %v392 = vmul.f32 %v356, %v368
      %v393 = vmul.f32 %v357, %v368
      %v394 = vmul.f32 %v358, %v368
      %v395 = vmul.f32 %v359, %v368
      %v396 = vmul.f32 %v360, %v368
      %v397 = vmul.f32 %v361, %v368
      %v398 = vmul.f32 %v362, %v368
      %v399 = vmul.f32 %v363, %v368
      %v400 = vmul.f32 %v364, %v368
      %v401 = vmul.f32 %v365, %v368
      %v402 = vld [vmem:[%s2] sm:$0x1]
      %v404 = vperm.slane %v402, 0
      %v406 = vadd.f32 %v370, %v404
      %v407 = vadd.f32 %v371, %v404
      %v408 = vadd.f32 %v372, %v404
      %v409 = vadd.f32 %v373, %v404
      %v410 = vadd.f32 %v374, %v404
      %v411 = vadd.f32 %v375, %v404
      %v412 = vadd.f32 %v376, %v404
      %v413 = vadd.f32 %v377, %v404
      %v414 = vadd.f32 %v378, %v404
      %v415 = vadd.f32 %v379, %v404
      %v416 = vadd.f32 %v380, %v404
      %v417 = vadd.f32 %v381, %v404
      %v418 = vadd.f32 %v382, %v404
      %v419 = vadd.f32 %v383, %v404
      %v420 = vadd.f32 %v384, %v404
      %v421 = vadd.f32 %v385, %v404
      %v422 = vadd.f32 %v386, %v404
      %v423 = vadd.f32 %v387, %v404
      %v424 = vadd.f32 %v388, %v404
      %v425 = vadd.f32 %v389, %v404
      %v426 = vadd.f32 %v390, %v404
      %v427 = vadd.f32 %v391, %v404
      %v428 = vadd.f32 %v392, %v404
      %v429 = vadd.f32 %v393, %v404
      %v430 = vadd.f32 %v394, %v404
      %v431 = vadd.f32 %v395, %v404
      %v432 = vadd.f32 %v396, %v404
      %v433 = vadd.f32 %v397, %v404
      %v434 = vadd.f32 %v398, %v404
      %v435 = vadd.f32 %v399, %v404
      %v436 = vadd.f32 %v400, %v404
      %v437 = vadd.f32 %v401, %v404
      %v438 = vmax.f32 %v406, 0.0
      %v439 = vmax.f32 %v407, 0.0
      %v440 = vmax.f32 %v408, 0.0
      %v441 = vmax.f32 %v409, 0.0
      %v442 = vmax.f32 %v410, 0.0
      %v443 = vmax.f32 %v411, 0.0
      %v444 = vmax.f32 %v412, 0.0
      %v445 = vmax.f32 %v413, 0.0
      %v446 = vmax.f32 %v414, 0.0
      %v447 = vmax.f32 %v415, 0.0
      %v448 = vmax.f32 %v416, 0.0
      %v449 = vmax.f32 %v417, 0.0
      %v450 = vmax.f32 %v418, 0.0
      %v451 = vmax.f32 %v419, 0.0
      %v452 = vmax.f32 %v420, 0.0
      %v453 = vmax.f32 %v421, 0.0
      %v454 = vmax.f32 %v422, 0.0
      %v455 = vmax.f32 %v423, 0.0
      %v456 = vmax.f32 %v424, 0.0
      %v457 = vmax.f32 %v425, 0.0
      %v458 = vmax.f32 %v426, 0.0
      %v459 = vmax.f32 %v427, 0.0
      %v460 = vmax.f32 %v428, 0.0
      %v461 = vmax.f32 %v429, 0.0
      %v462 = vmax.f32 %v430, 0.0
      %v463 = vmax.f32 %v431, 0.0
      %v464 = vmax.f32 %v432, 0.0
      %v465 = vmax.f32 %v433, 0.0
      %v466 = vmax.f32 %v434, 0.0
      %v467 = vmax.f32 %v435, 0.0
      %v468 = vmax.f32 %v436, 0.0
      %v469 = vmax.f32 %v437, 0.0
      %v470 = vld [vmem:[%s3] sm:$0x1]
      %v471 = vmin.f32 %v406, 0.0
      %v472 = vmin.f32 %v407, 0.0
      %v473 = vmin.f32 %v408, 0.0
      %v474 = vmin.f32 %v409, 0.0
      %v475 = vmin.f32 %v410, 0.0
      %v476 = vmin.f32 %v411, 0.0
      %v477 = vmin.f32 %v412, 0.0
      %v478 = vmin.f32 %v413, 0.0
      %v479 = vmin.f32 %v414, 0.0
      %v480 = vmin.f32 %v415, 0.0
      %v481 = vmin.f32 %v416, 0.0
      %v482 = vmin.f32 %v417, 0.0
      %v483 = vmin.f32 %v418, 0.0
      %v484 = vmin.f32 %v419, 0.0
      %v485 = vmin.f32 %v420, 0.0
      %v486 = vmin.f32 %v421, 0.0
      %v487 = vmin.f32 %v422, 0.0
      %v488 = vmin.f32 %v423, 0.0
      %v489 = vmin.f32 %v424, 0.0
      %v490 = vmin.f32 %v425, 0.0
      %v491 = vmin.f32 %v426, 0.0
      %v492 = vmin.f32 %v427, 0.0
      %v493 = vmin.f32 %v428, 0.0
      %v494 = vmin.f32 %v429, 0.0
      %v495 = vmin.f32 %v430, 0.0
      %v496 = vmin.f32 %v431, 0.0
      %v497 = vmin.f32 %v432, 0.0
      %v498 = vmin.f32 %v433, 0.0
      %v499 = vmin.f32 %v434, 0.0
      %v500 = vmin.f32 %v435, 0.0
      %v501 = vmin.f32 %v436, 0.0
      %v502 = vmin.f32 %v437, 0.0
      %v504 = vperm.slane %v470, 0
      %v506 = vmul.f32 %v504, %v471
      %v507 = vmul.f32 %v504, %v472
      %v508 = vmul.f32 %v504, %v473
      %v509 = vmul.f32 %v504, %v474
      %v510 = vmul.f32 %v504, %v475
      %v511 = vmul.f32 %v504, %v476
      %v512 = vmul.f32 %v504, %v477
      %v513 = vmul.f32 %v504, %v478
      %v514 = vmul.f32 %v504, %v479
      %v515 = vmul.f32 %v504, %v480
      %v516 = vmul.f32 %v504, %v481
      %v517 = vmul.f32 %v504, %v482
      %v518 = vmul.f32 %v504, %v483
      %v519 = vmul.f32 %v504, %v484
      %v520 = vmul.f32 %v504, %v485
      %v521 = vmul.f32 %v504, %v486
      %v522 = vmul.f32 %v504, %v487
      %v523 = vmul.f32 %v504, %v488
      %v524 = vmul.f32 %v504, %v489
      %v525 = vmul.f32 %v504, %v490
      %v526 = vmul.f32 %v504, %v491
      %v527 = vmul.f32 %v504, %v492
      %v528 = vmul.f32 %v504, %v493
      %v529 = vmul.f32 %v504, %v494
      %v530 = vmul.f32 %v504, %v495
      %v531 = vmul.f32 %v504, %v496
      %v532 = vmul.f32 %v504, %v497
      %v533 = vmul.f32 %v504, %v498
      %v534 = vmul.f32 %v504, %v499
      %v535 = vmul.f32 %v504, %v500
      %v536 = vmul.f32 %v504, %v501
      %v537 = vmul.f32 %v504, %v502
      %v538 = vadd.f32 %v438, %v506
      %v539 = vadd.f32 %v439, %v507
      %v540 = vadd.f32 %v440, %v508
      %v541 = vadd.f32 %v441, %v509
      %v542 = vadd.f32 %v442, %v510
      %v543 = vadd.f32 %v443, %v511
      %v544 = vadd.f32 %v444, %v512
      %v545 = vadd.f32 %v445, %v513
      %v546 = vadd.f32 %v446, %v514
      %v547 = vadd.f32 %v447, %v515
      %v548 = vadd.f32 %v448, %v516
      %v549 = vadd.f32 %v449, %v517
      %v550 = vadd.f32 %v450, %v518
      %v551 = vadd.f32 %v451, %v519
      %v552 = vadd.f32 %v452, %v520
      %v553 = vadd.f32 %v453, %v521
      %v554 = vadd.f32 %v454, %v522
      %v555 = vadd.f32 %v455, %v523
      %v556 = vadd.f32 %v456, %v524
      %v557 = vadd.f32 %v457, %v525
      %v558 = vadd.f32 %v458, %v526
      %v559 = vadd.f32 %v459, %v527
      %v560 = vadd.f32 %v460, %v528
      %v561 = vadd.f32 %v461, %v529
      %v562 = vadd.f32 %v462, %v530
      %v563 = vadd.f32 %v463, %v531
      %v564 = vadd.f32 %v464, %v532
      %v565 = vadd.f32 %v465, %v533
      %v566 = vadd.f32 %v466, %v534
      %v567 = vadd.f32 %v467, %v535
      %v568 = vadd.f32 %v468, %v536
      %v569 = vadd.f32 %v469, %v537
      %v570 = vpack.c.bf16 %v539, %v538
      %v571 = vpack.c.bf16 %v541, %v540
      %v572 = vpack.c.bf16 %v543, %v542
      %v573 = vpack.c.bf16 %v545, %v544
      %v574 = vpack.c.bf16 %v547, %v546
      %v575 = vpack.c.bf16 %v549, %v548
      %v576 = vpack.c.bf16 %v551, %v550
      %v577 = vpack.c.bf16 %v553, %v552
      %v578 = vpack.c.bf16 %v555, %v554
      %v579 = vpack.c.bf16 %v557, %v556
      %v580 = vpack.c.bf16 %v559, %v558
      %v581 = vpack.c.bf16 %v561, %v560
      %v582 = vpack.c.bf16 %v563, %v562
      %v583 = vpack.c.bf16 %v565, %v564
      %v584 = vpack.c.bf16 %v567, %v566
      %v585 = vpack.c.bf16 %v569, %v568
      %v586 = vld [vmem:[%s4] sm:$0x3]
      %v587 = vld [vmem:[%s5] sm:$0x1]
      %v589 = vperm.slane %v587, 0
      %vm591 = vcmask 31744
      %v593 = vsel %vm591, %v570, 0
      %v596 = vsel %vm591, %v571, 0
      %v599 = vsel %vm591, %v572, 0
      %v602 = vsel %vm591, %v573, 0
      %v605 = vsel %vm591, %v574, 0
      %v608 = vsel %vm591, %v575, 0
      %v611 = vsel %vm591, %v576, 0
      %v614 = vsel %vm591, %v577, 0
      %v617 = vsel %vm591, %v578, 0
      %v620 = vsel %vm591, %v579, 0
      %v623 = vsel %vm591, %v580, 0
      %v626 = vsel %vm591, %v581, 0
      %v629 = vsel %vm591, %v582, 0
      %v632 = vsel %vm591, %v583, 0
      %v635 = vsel %vm591, %v584, 0
      %v638 = vsel %vm591, %v585, 0
      %vm640 = vcmask 1041408
      %v642 = vsel %vm640, %v586, 0
      %644 = vmatpush.bf16.msra.mxu0 0
      %645 = vmatpush.bf16.msra.mxu0 0
      %646 = vmatpush.bf16.msra.mxu0 0
      %647 = vmatpush.bf16.msra.mxu0 0
      %648 = vmatpush.bf16.msra.mxu0 0
      %649 = vmatpush.bf16.msra.mxu0 0
      %650 = vmatpush.bf16.msra.mxu0 0
      %651 = vmatpush.bf16.msra.mxu0 %v642
      %652 = vmatmul.bf16.gmra.mxu0 %v593
      %v653 = vpop.f32.mrf.mxu0
      %v654 = vadd.f32 %v589, %v653
      %v655 = vpop.f32.mrf.mxu0
      %v656 = vadd.f32 %v589, %v655
      %657 = vmatmul.bf16.gmra.mxu0 %v596
      %v658 = vpop.f32.mrf.mxu0
      %v659 = vadd.f32 %v589, %v658
      %v660 = vpop.f32.mrf.mxu0
      %v661 = vadd.f32 %v589, %v660
      %662 = vmatmul.bf16.gmra.mxu0 %v599
      %v663 = vpop.f32.mrf.mxu0
      %v664 = vadd.f32 %v589, %v663
      %v665 = vpop.f32.mrf.mxu0
      %v666 = vadd.f32 %v589, %v665
      %667 = vmatmul.bf16.gmra.mxu0 %v602
      %v668 = vpop.f32.mrf.mxu0
      %v669 = vadd.f32 %v589, %v668
      %v670 = vpop.f32.mrf.mxu0
      %v671 = vadd.f32 %v589, %v670
      %672 = vmatmul.bf16.gmra.mxu0 %v605
      %v673 = vpop.f32.mrf.mxu0
      %v674 = vadd.f32 %v589, %v673
      %v675 = vpop.f32.mrf.mxu0
      %v676 = vadd.f32 %v589, %v675
      %677 = vmatmul.bf16.gmra.mxu0 %v608
      %v678 = vpop.f32.mrf.mxu0
      %v679 = vadd.f32 %v589, %v678
      %v680 = vpop.f32.mrf.mxu0
      %v681 = vadd.f32 %v589, %v680
      %682 = vmatmul.bf16.gmra.mxu0 %v611
      %v683 = vpop.f32.mrf.mxu0
      %v684 = vadd.f32 %v589, %v683
      %v685 = vpop.f32.mrf.mxu0
      %v686 = vadd.f32 %v589, %v685
      %687 = vmatmul.bf16.gmra.mxu0 %v614
      %v688 = vpop.f32.mrf.mxu0
      %v689 = vadd.f32 %v589, %v688
      %v690 = vpop.f32.mrf.mxu0
      %v691 = vadd.f32 %v589, %v690
      %692 = vmatmul.bf16.gmra.mxu0 %v617
      %v693 = vpop.f32.mrf.mxu0
      %v694 = vadd.f32 %v589, %v693
      %v695 = vpop.f32.mrf.mxu0
      %v696 = vadd.f32 %v589, %v695
      %697 = vmatmul.bf16.gmra.mxu0 %v620
      %v698 = vpop.f32.mrf.mxu0
      %v699 = vadd.f32 %v589, %v698
      %v700 = vpop.f32.mrf.mxu0
      %v701 = vadd.f32 %v589, %v700
      %702 = vmatmul.bf16.gmra.mxu0 %v623
      %v703 = vpop.f32.mrf.mxu0
      %v704 = vadd.f32 %v589, %v703
      %v705 = vpop.f32.mrf.mxu0
      %v706 = vadd.f32 %v589, %v705
      %707 = vmatmul.bf16.gmra.mxu0 %v626
      %v708 = vpop.f32.mrf.mxu0
      %v709 = vadd.f32 %v589, %v708
      %v710 = vpop.f32.mrf.mxu0
      %v711 = vadd.f32 %v589, %v710
      %712 = vmatmul.bf16.gmra.mxu0 %v629
      %v713 = vpop.f32.mrf.mxu0
      %v714 = vadd.f32 %v589, %v713
      %v715 = vpop.f32.mrf.mxu0
      %v716 = vadd.f32 %v589, %v715
      %717 = vmatmul.bf16.gmra.mxu0 %v632
      %v718 = vpop.f32.mrf.mxu0
      %v719 = vadd.f32 %v589, %v718
      %v720 = vpop.f32.mrf.mxu0
      %v721 = vadd.f32 %v589, %v720
      %722 = vmatmul.bf16.gmra.mxu0 %v635
      %v723 = vpop.f32.mrf.mxu0
      %v724 = vadd.f32 %v589, %v723
      %v725 = vpop.f32.mrf.mxu0
      %v726 = vadd.f32 %v589, %v725
      %727 = vmatmul.bf16.gmra.mxu0 %v638
      %v728 = vpop.f32.mrf.mxu0
      %v729 = vadd.f32 %v589, %v728
      %v730 = vpop.f32.mrf.mxu0
      %v731 = vadd.f32 %v589, %v730
      %732 = vdwg.mxu0
      %v733 = vmax.f32 %v654, 0.0
      %v734 = vmax.f32 %v656, 0.0
      %v735 = vmax.f32 %v659, 0.0
      %v736 = vmax.f32 %v661, 0.0
      %v737 = vmax.f32 %v664, 0.0
      %v738 = vmax.f32 %v666, 0.0
      %v739 = vmax.f32 %v669, 0.0
      %v740 = vmax.f32 %v671, 0.0
      %v741 = vmax.f32 %v674, 0.0
      %v742 = vmax.f32 %v676, 0.0
      %v743 = vmax.f32 %v679, 0.0
      %v744 = vmax.f32 %v681, 0.0
      %v745 = vmax.f32 %v684, 0.0
      %v746 = vmax.f32 %v686, 0.0
      %v747 = vmax.f32 %v689, 0.0
      %v748 = vmax.f32 %v691, 0.0
      %v749 = vmax.f32 %v694, 0.0
      %v750 = vmax.f32 %v696, 0.0
      %v751 = vmax.f32 %v699, 0.0
      %v752 = vmax.f32 %v701, 0.0
      %v753 = vmax.f32 %v704, 0.0
      %v754 = vmax.f32 %v706, 0.0
      %v755 = vmax.f32 %v709, 0.0
      %v756 = vmax.f32 %v711, 0.0
      %v757 = vmax.f32 %v714, 0.0
      %v758 = vmax.f32 %v716, 0.0
      %v759 = vmax.f32 %v719, 0.0
      %v760 = vmax.f32 %v721, 0.0
      %v761 = vmax.f32 %v724, 0.0
      %v762 = vmax.f32 %v726, 0.0
      %v763 = vmax.f32 %v729, 0.0
      %v764 = vmax.f32 %v731, 0.0
      %v765 = vld [vmem:[%s6] sm:$0x1]
      %v766 = vmin.f32 %v654, 0.0
      %v767 = vmin.f32 %v656, 0.0
      %v768 = vmin.f32 %v659, 0.0
      %v769 = vmin.f32 %v661, 0.0
      %v770 = vmin.f32 %v664, 0.0
      %v771 = vmin.f32 %v666, 0.0
      %v772 = vmin.f32 %v669, 0.0
      %v773 = vmin.f32 %v671, 0.0
      %v774 = vmin.f32 %v674, 0.0
      %v775 = vmin.f32 %v676, 0.0
      %v776 = vmin.f32 %v679, 0.0
      %v777 = vmin.f32 %v681, 0.0
      %v778 = vmin.f32 %v684, 0.0
      %v779 = vmin.f32 %v686, 0.0
      %v780 = vmin.f32 %v689, 0.0
      %v781 = vmin.f32 %v691, 0.0
      %v782 = vmin.f32 %v694, 0.0
      %v783 = vmin.f32 %v696, 0.0
      %v784 = vmin.f32 %v699, 0.0
      %v785 = vmin.f32 %v701, 0.0
      %v786 = vmin.f32 %v704, 0.0
      %v787 = vmin.f32 %v706, 0.0
      %v788 = vmin.f32 %v709, 0.0
      %v789 = vmin.f32 %v711, 0.0
      %v790 = vmin.f32 %v714, 0.0
      %v791 = vmin.f32 %v716, 0.0
      %v792 = vmin.f32 %v719, 0.0
      %v793 = vmin.f32 %v721, 0.0
      %v794 = vmin.f32 %v724, 0.0
      %v795 = vmin.f32 %v726, 0.0
      %v796 = vmin.f32 %v729, 0.0
      %v797 = vmin.f32 %v731, 0.0
      %v799 = vperm.slane %v765, 0
      %v801 = vmul.f32 %v799, %v766
      %v802 = vmul.f32 %v799, %v767
      %v803 = vmul.f32 %v799, %v768
      %v804 = vmul.f32 %v799, %v769
      %v805 = vmul.f32 %v799, %v770
      %v806 = vmul.f32 %v799, %v771
      %v807 = vmul.f32 %v799, %v772
      %v808 = vmul.f32 %v799, %v773
      %v809 = vmul.f32 %v799, %v774
      %v810 = vmul.f32 %v799, %v775
      %v811 = vmul.f32 %v799, %v776
      %v812 = vmul.f32 %v799, %v777
      %v813 = vmul.f32 %v799, %v778
      %v814 = vmul.f32 %v799, %v779
      %v815 = vmul.f32 %v799, %v780
      %v816 = vmul.f32 %v799, %v781
      %v817 = vmul.f32 %v799, %v782
      %v818 = vmul.f32 %v799, %v783
      %v819 = vmul.f32 %v799, %v784
      %v820 = vmul.f32 %v799, %v785
      %v821 = vmul.f32 %v799, %v786
      %v822 = vmul.f32 %v799, %v787
      %v823 = vmul.f32 %v799, %v788
      %v824 = vmul.f32 %v799, %v789
      %v825 = vmul.f32 %v799, %v790
      %v826 = vmul.f32 %v799, %v791
      %v827 = vmul.f32 %v799, %v792
      %v828 = vmul.f32 %v799, %v793
      %v829 = vmul.f32 %v799, %v794
      %v830 = vmul.f32 %v799, %v795
      %v831 = vmul.f32 %v799, %v796
      %v832 = vmul.f32 %v799, %v797
      %v833 = vadd.f32 %v733, %v801
      %v834 = vadd.f32 %v734, %v802
      %v835 = vadd.f32 %v735, %v803
      %v836 = vadd.f32 %v736, %v804
      %v837 = vadd.f32 %v737, %v805
      %v838 = vadd.f32 %v738, %v806
      %v839 = vadd.f32 %v739, %v807
      %v840 = vadd.f32 %v740, %v808
      %v841 = vadd.f32 %v741, %v809
      %v842 = vadd.f32 %v742, %v810
      %v843 = vadd.f32 %v743, %v811
      %v844 = vadd.f32 %v744, %v812
      %v845 = vadd.f32 %v745, %v813
      %v846 = vadd.f32 %v746, %v814
      %v847 = vadd.f32 %v747, %v815
      %v848 = vadd.f32 %v748, %v816
      %v849 = vadd.f32 %v749, %v817
      %v850 = vadd.f32 %v750, %v818
      %v851 = vadd.f32 %v751, %v819
      %v852 = vadd.f32 %v752, %v820
      %v853 = vadd.f32 %v753, %v821
      %v854 = vadd.f32 %v754, %v822
      %v855 = vadd.f32 %v755, %v823
      %v856 = vadd.f32 %v756, %v824
      %v857 = vadd.f32 %v757, %v825
      %v858 = vadd.f32 %v758, %v826
      %v859 = vadd.f32 %v759, %v827
      %v860 = vadd.f32 %v760, %v828
      %v861 = vadd.f32 %v761, %v829
      %v862 = vadd.f32 %v762, %v830
      %v863 = vadd.f32 %v763, %v831
      %v864 = vadd.f32 %v764, %v832
      %865 = vst.msk [vmem:[#allocation2] sm:$0xff] %vm591, 0.0
      %866 = vst.msk [vmem:[#allocation2 + $0x8] sm:$0xff] %vm591, 0.0
      %vm867 = vcmask 25600
      %868 = vst.msk [vmem:[#allocation2 + $0x10] sm:$0x3] %vm867, 0.0
      %869 = vst.msk [vmem:[#allocation2 + $0x18] sm:$0xff] %vm591, 0.0
      %870 = vst.msk [vmem:[#allocation2 + $0x20] sm:$0xff] %vm591, 0.0
      %871 = vst.msk [vmem:[#allocation2 + $0x28] sm:$0x3] %vm867, 0.0
      %872 = vst.msk [vmem:[#allocation2 + $0x30] sm:$0xff] %vm591, 0.0
      %873 = vst.msk [vmem:[#allocation2 + $0x38] sm:$0xff] %vm591, 0.0
      %874 = vst.msk [vmem:[#allocation2 + $0x40] sm:$0x3] %vm867, 0.0
      %875 = vst.msk [vmem:[#allocation2 + $0x48] sm:$0xff] %vm591, 0.0
      %876 = vst.msk [vmem:[#allocation2 + $0x50] sm:$0xff] %vm591, 0.0
      %877 = vst.msk [vmem:[#allocation2 + $0x58] sm:$0x3] %vm867, 0.0
      %878 = vst.msk [vmem:[#allocation2 + $0x60] sm:$0xff] %vm591, 0.0
      %879 = vst.msk [vmem:[#allocation2 + $0x68] sm:$0xff] %vm591, 0.0
      %880 = vst.msk [vmem:[#allocation2 + $0x70] sm:$0x3] %vm867, 0.0
      %881 = vst.msk [vmem:[#allocation2 + $0x78] sm:$0xff] %vm591, 0.0
      %882 = vst.msk [vmem:[#allocation2 + $0x80] sm:$0xff] %vm591, 0.0
      %883 = vst.msk [vmem:[#allocation2 + $0x88] sm:$0x3] %vm867, 0.0
      %884 = vst.msk [vmem:[#allocation2 + $0x90] sm:$0xff] %vm591, 0.0
      %885 = vst.msk [vmem:[#allocation2 + $0x98] sm:$0xff] %vm591, 0.0
      %886 = vst.msk [vmem:[#allocation2 + $0xa0] sm:$0x3] %vm867, 0.0
      %887 = vst.msk [vmem:[#allocation2 + $0xa8] sm:$0xff] %vm591, 0.0
      %888 = vst.msk [vmem:[#allocation2 + $0xb0] sm:$0xff] %vm591, 0.0
      %889 = vst.msk [vmem:[#allocation2 + $0xb8] sm:$0x3] %vm867, 0.0
      %890 = vst.msk [vmem:[#allocation2 + $0xc0] sm:$0xff] %vm591, 0.0
      %891 = vst.msk [vmem:[#allocation2 + $0xc8] sm:$0xff] %vm591, 0.0
      %892 = vst.msk [vmem:[#allocation2 + $0xd0] sm:$0x3] %vm867, 0.0
      %893 = vst.msk [vmem:[#allocation2 + $0xd8] sm:$0xff] %vm591, 0.0
      %894 = vst.msk [vmem:[#allocation2 + $0xe0] sm:$0xff] %vm591, 0.0
      %895 = vst.msk [vmem:[#allocation2 + $0xe8] sm:$0x3] %vm867, 0.0
      %896 = vst.msk [vmem:[#allocation2 + $0xf0] sm:$0xff] %vm591, 0.0
      %897 = vst.msk [vmem:[#allocation2 + $0xf8] sm:$0xff] %vm591, 0.0
      %898 = vst.msk [vmem:[#allocation2 + $0x100] sm:$0x3] %vm867, 0.0
      %899 = vst.msk [vmem:[#allocation2 + $0x108] sm:$0xff] %vm591, 0.0
      %900 = vst.msk [vmem:[#allocation2 + $0x110] sm:$0xff] %vm591, 0.0
      %901 = vst.msk [vmem:[#allocation2 + $0x118] sm:$0x3] %vm867, 0.0
      %902 = vst.msk [vmem:[#allocation2 + $0x120] sm:$0xff] %vm591, 0.0
      %903 = vst.msk [vmem:[#allocation2 + $0x128] sm:$0xff] %vm591, 0.0
      %904 = vst.msk [vmem:[#allocation2 + $0x130] sm:$0x3] %vm867, 0.0
      %905 = vst.msk [vmem:[#allocation2 + $0x138] sm:$0xff] %vm591, 0.0
      %906 = vst.msk [vmem:[#allocation2 + $0x140] sm:$0xff] %vm591, 0.0
      %907 = vst.msk [vmem:[#allocation2 + $0x148] sm:$0x3] %vm867, 0.0
      %908 = vst.msk [vmem:[#allocation2 + $0x150] sm:$0xff] %vm591, 0.0
      %909 = vst.msk [vmem:[#allocation2 + $0x158] sm:$0xff] %vm591, 0.0
      %910 = vst.msk [vmem:[#allocation2 + $0x160] sm:$0x3] %vm867, 0.0
      %911 = vst.msk [vmem:[#allocation2 + $0x168] sm:$0xff] %vm591, 0.0
      %912 = vst.msk [vmem:[#allocation2 + $0x170] sm:$0xff] %vm591, 0.0
      %913 = vst.msk [vmem:[#allocation2 + $0x178] sm:$0x3] %vm867, 0.0
      %914 = vst.msk [vmem:[#allocation2 + $0x180] sm:$0xff] %vm591, 0.0
      %915 = vst.msk [vmem:[#allocation2 + $0x188] sm:$0xff] %vm591, 0.0
      %916 = vst.msk [vmem:[#allocation2 + $0x190] sm:$0x3] %vm867, 0.0
      %917 = vst.msk [vmem:[#allocation2 + $0x198] sm:$0xff] %vm591, 0.0
      %918 = vst.msk [vmem:[#allocation2 + $0x1a0] sm:$0xff] %vm591, 0.0
      %919 = vst.msk [vmem:[#allocation2 + $0x1a8] sm:$0x3] %vm867, 0.0
      %s920 = scalar_lea.vmem [#allocation2], 24
      %921 = vst.msk [vmem:[%s920 + $0x1] sm:$0xff] %vm591, %v833
      %922 = vst.msk [vmem:[%s920 + $0x9] sm:$0xff] %vm591, %v834
      %923 = vst.msk [vmem:[%s920 + $0x19] sm:$0xff] %vm591, %v835
      %924 = vst.msk [vmem:[%s920 + $0x21] sm:$0xff] %vm591, %v836
      %925 = vst.msk [vmem:[%s920 + $0x31] sm:$0xff] %vm591, %v837
      %926 = vst.msk [vmem:[%s920 + $0x39] sm:$0xff] %vm591, %v838
      %927 = vst.msk [vmem:[%s920 + $0x49] sm:$0xff] %vm591, %v839
      %928 = vst.msk [vmem:[%s920 + $0x51] sm:$0xff] %vm591, %v840
      %929 = vst.msk [vmem:[%s920 + $0x61] sm:$0xff] %vm591, %v841
      %930 = vst.msk [vmem:[%s920 + $0x69] sm:$0xff] %vm591, %v842
      %931 = vst.msk [vmem:[%s920 + $0x79] sm:$0xff] %vm591, %v843
      %932 = vst.msk [vmem:[%s920 + $0x81] sm:$0xff] %vm591, %v844
      %933 = vst.msk [vmem:[%s920 + $0x91] sm:$0xff] %vm591, %v845
      %934 = vst.msk [vmem:[%s920 + $0x99] sm:$0xff] %vm591, %v846
      %935 = vst.msk [vmem:[%s920 + $0xa9] sm:$0xff] %vm591, %v847
      %936 = vst.msk [vmem:[%s920 + $0xb1] sm:$0xff] %vm591, %v848
      %937 = vst.msk [vmem:[%s920 + $0xc1] sm:$0xff] %vm591, %v849
      %938 = vst.msk [vmem:[%s920 + $0xc9] sm:$0xff] %vm591, %v850
      %939 = vst.msk [vmem:[%s920 + $0xd9] sm:$0xff] %vm591, %v851
      %940 = vst.msk [vmem:[%s920 + $0xe1] sm:$0xff] %vm591, %v852
      %941 = vst.msk [vmem:[%s920 + $0xf1] sm:$0xff] %vm591, %v853
      %942 = vst.msk [vmem:[%s920 + $0xf9] sm:$0xff] %vm591, %v854
      %943 = vst.msk [vmem:[%s920 + $0x109] sm:$0xff] %vm591, %v855
      %944 = vst.msk [vmem:[%s920 + $0x111] sm:$0xff] %vm591, %v856
      %945 = vst.msk [vmem:[%s920 + $0x121] sm:$0xff] %vm591, %v857
      %946 = vst.msk [vmem:[%s920 + $0x129] sm:$0xff] %vm591, %v858
      %947 = vst.msk [vmem:[%s920 + $0x139] sm:$0xff] %vm591, %v859
      %948 = vst.msk [vmem:[%s920 + $0x141] sm:$0xff] %vm591, %v860
      %949 = vst.msk [vmem:[%s920 + $0x151] sm:$0xff] %vm591, %v861
      %950 = vst.msk [vmem:[%s920 + $0x159] sm:$0xff] %vm591, %v862
      %951 = vst.msk [vmem:[%s920 + $0x169] sm:$0xff] %vm591, %v863
      %952 = vst.msk [vmem:[%s920 + $0x171] sm:$0xff] %vm591, %v864
      %v953 = vld [vmem:[#allocation2] sm:$0xff]
      %v954 = vld [vmem:[#allocation2 + $0x8] sm:$0xff]
      %v955 = vld [vmem:[#allocation2 + $0x18] sm:$0xff]
      %v956 = vld [vmem:[#allocation2 + $0x20] sm:$0xff]
      %v957 = vld [vmem:[#allocation2 + $0x30] sm:$0xff]
      %v958 = vld [vmem:[#allocation2 + $0x38] sm:$0xff]
      %v959 = vld [vmem:[#allocation2 + $0x48] sm:$0xff]
      %v960 = vld [vmem:[#allocation2 + $0x50] sm:$0xff]
      %v961 = vld [vmem:[#allocation2 + $0x60] sm:$0xff]
      %v962 = vld [vmem:[#allocation2 + $0x68] sm:$0xff]
      %v963 = vld [vmem:[#allocation2 + $0x78] sm:$0xff]
      %v964 = vld [vmem:[#allocation2 + $0x80] sm:$0xff]
      %v965 = vld [vmem:[#allocation2 + $0x90] sm:$0xff]
      %v966 = vld [vmem:[#allocation2 + $0x98] sm:$0xff]
      %v967 = vld [vmem:[#allocation2 + $0xa8] sm:$0xff]
      %v968 = vld [vmem:[#allocation2 + $0xb0] sm:$0xff]
      %v969 = vld [vmem:[#allocation2 + $0xc0] sm:$0xff]
      %v970 = vld [vmem:[#allocation2 + $0xc8] sm:$0xff]
      %v971 = vld [vmem:[#allocation2 + $0xd8] sm:$0xff]
      %v972 = vld [vmem:[#allocation2 + $0xe0] sm:$0xff]
      %v973 = vld [vmem:[#allocation2 + $0xf0] sm:$0xff]
      %v974 = vld [vmem:[#allocation2 + $0xf8] sm:$0xff]
      %v975 = vld [vmem:[#allocation2 + $0x108] sm:$0xff]
      %v976 = vld [vmem:[#allocation2 + $0x110] sm:$0xff]
      %v977 = vld [vmem:[#allocation2 + $0x120] sm:$0xff]
      %v978 = vld [vmem:[#allocation2 + $0x128] sm:$0xff]
      %v979 = vld [vmem:[#allocation2 + $0x138] sm:$0xff]
      %v980 = vld [vmem:[#allocation2 + $0x140] sm:$0xff]
      %v981 = vld [vmem:[#allocation2 + $0x150] sm:$0xff]
      %v982 = vld [vmem:[#allocation2 + $0x158] sm:$0xff]
      %v983 = vld [vmem:[#allocation2 + $0x168] sm:$0xff]
      %v984 = vld [vmem:[#allocation2 + $0x170] sm:$0xff]
      %v985 = vpack.c.bf16 %v953, %v953
      %v986 = vpack.c.bf16 %v954, %v954
      %v987 = vpack.c.bf16 %v955, %v955
      %v988 = vpack.c.bf16 %v956, %v956
      %v989 = vpack.c.bf16 %v957, %v957
      %v990 = vpack.c.bf16 %v958, %v958
      %v991 = vpack.c.bf16 %v959, %v959
      %v992 = vpack.c.bf16 %v960, %v960
      %v993 = vpack.c.bf16 %v961, %v961
      %v994 = vpack.c.bf16 %v962, %v962
      %v995 = vpack.c.bf16 %v963, %v963
      %v996 = vpack.c.bf16 %v964, %v964
      %v997 = vpack.c.bf16 %v965, %v965
      %v998 = vpack.c.bf16 %v966, %v966
      %v999 = vpack.c.bf16 %v967, %v967
      %v1000 = vpack.c.bf16 %v968, %v968
      %v1001 = vpack.c.bf16 %v969, %v969
      %v1002 = vpack.c.bf16 %v970, %v970
      %v1003 = vpack.c.bf16 %v971, %v971
      %v1004 = vpack.c.bf16 %v972, %v972
      %v1005 = vpack.c.bf16 %v973, %v973
      %v1006 = vpack.c.bf16 %v974, %v974
      %v1007 = vpack.c.bf16 %v975, %v975
      %v1008 = vpack.c.bf16 %v976, %v976
      %v1009 = vpack.c.bf16 %v977, %v977
      %v1010 = vpack.c.bf16 %v978, %v978
      %v1011 = vpack.c.bf16 %v979, %v979
      %v1012 = vpack.c.bf16 %v980, %v980
      %v1013 = vpack.c.bf16 %v981, %v981
      %v1014 = vpack.c.bf16 %v982, %v982
      %v1015 = vpack.c.bf16 %v983, %v983
      %v1016 = vpack.c.bf16 %v984, %v984
      %v1017 = vld [vmem:[#allocation2 + $0x1] sm:$0xff]
      %v1018 = vld [vmem:[#allocation2 + $0x9] sm:$0xff]
      %v1019 = vld [vmem:[#allocation2 + $0x19] sm:$0xff]
      %v1020 = vld [vmem:[#allocation2 + $0x21] sm:$0xff]
      %v1021 = vld [vmem:[#allocation2 + $0x31] sm:$0xff]
      %v1022 = vld [vmem:[#allocation2 + $0x39] sm:$0xff]
      %v1023 = vld [vmem:[#allocation2 + $0x49] sm:$0xff]
      %v1024 = vld [vmem:[#allocation2 + $0x51] sm:$0xff]
      %v1025 = vld [vmem:[#allocation2 + $0x61] sm:$0xff]
      %v1026 = vld [vmem:[#allocation2 + $0x69] sm:$0xff]
      %v1027 = vld [vmem:[#allocation2 + $0x79] sm:$0xff]
      %v1028 = vld [vmem:[#allocation2 + $0x81] sm:$0xff]
      %v1029 = vld [vmem:[#allocation2 + $0x91] sm:$0xff]
      %v1030 = vld [vmem:[#allocation2 + $0x99] sm:$0xff]
      %v1031 = vld [vmem:[#allocation2 + $0xa9] sm:$0xff]
      %v1032 = vld [vmem:[#allocation2 + $0xb1] sm:$0xff]
      %v1033 = vld [vmem:[#allocation2 + $0xc1] sm:$0xff]
      %v1034 = vld [vmem:[#allocation2 + $0xc9] sm:$0xff]
      %v1035 = vld [vmem:[#allocation2 + $0xd9] sm:$0xff]
      %v1036 = vld [vmem:[#allocation2 + $0xe1] sm:$0xff]
      %v1037 = vld [vmem:[#allocation2 + $0xf1] sm:$0xff]
      %v1038 = vld [vmem:[#allocation2 + $0xf9] sm:$0xff]
      %v1039 = vld [vmem:[#allocation2 + $0x109] sm:$0xff]
      %v1040 = vld [vmem:[#allocation2 + $0x111] sm:$0xff]
      %v1041 = vld [vmem:[#allocation2 + $0x121] sm:$0xff]
      %v1042 = vld [vmem:[#allocation2 + $0x129] sm:$0xff]
      %v1043 = vld [vmem:[#allocation2 + $0x139] sm:$0xff]
      %v1044 = vld [vmem:[#allocation2 + $0x141] sm:$0xff]
      %v1045 = vld [vmem:[#allocation2 + $0x151] sm:$0xff]
      %v1046 = vld [vmem:[#allocation2 + $0x159] sm:$0xff]
      %v1047 = vld [vmem:[#allocation2 + $0x169] sm:$0xff]
      %v1048 = vld [vmem:[#allocation2 + $0x171] sm:$0xff]
      %v1049 = vpack.c.bf16 %v1017, %v1017
      %v1050 = vpack.c.bf16 %v1018, %v1018
      %v1051 = vpack.c.bf16 %v1019, %v1019
      %v1052 = vpack.c.bf16 %v1020, %v1020
      %v1053 = vpack.c.bf16 %v1021, %v1021
      %v1054 = vpack.c.bf16 %v1022, %v1022
      %v1055 = vpack.c.bf16 %v1023, %v1023
      %v1056 = vpack.c.bf16 %v1024, %v1024
      %v1057 = vpack.c.bf16 %v1025, %v1025
      %v1058 = vpack.c.bf16 %v1026, %v1026
      %v1059 = vpack.c.bf16 %v1027, %v1027
      %v1060 = vpack.c.bf16 %v1028, %v1028
      %v1061 = vpack.c.bf16 %v1029, %v1029
      %v1062 = vpack.c.bf16 %v1030, %v1030
      %v1063 = vpack.c.bf16 %v1031, %v1031
      %v1064 = vpack.c.bf16 %v1032, %v1032
      %v1065 = vpack.c.bf16 %v1033, %v1033
      %v1066 = vpack.c.bf16 %v1034, %v1034
      %v1067 = vpack.c.bf16 %v1035, %v1035
      %v1068 = vpack.c.bf16 %v1036, %v1036
      %v1069 = vpack.c.bf16 %v1037, %v1037
      %v1070 = vpack.c.bf16 %v1038, %v1038
      %v1071 = vpack.c.bf16 %v1039, %v1039
      %v1072 = vpack.c.bf16 %v1040, %v1040
      %v1073 = vpack.c.bf16 %v1041, %v1041
      %v1074 = vpack.c.bf16 %v1042, %v1042
      %v1075 = vpack.c.bf16 %v1043, %v1043
      %v1076 = vpack.c.bf16 %v1044, %v1044
      %v1077 = vpack.c.bf16 %v1045, %v1045
      %v1078 = vpack.c.bf16 %v1046, %v1046
      %v1079 = vpack.c.bf16 %v1047, %v1047
      %v1080 = vpack.c.bf16 %v1048, %v1048
      %v1081 = vld [vmem:[#allocation2 + $0x2] sm:$0xff]
      %v1082 = vld [vmem:[#allocation2 + $0xa] sm:$0xff]
      %v1083 = vld [vmem:[#allocation2 + $0x1a] sm:$0xff]
      %v1084 = vld [vmem:[#allocation2 + $0x22] sm:$0xff]
      %v1085 = vld [vmem:[#allocation2 + $0x32] sm:$0xff]
      %v1086 = vld [vmem:[#allocation2 + $0x3a] sm:$0xff]
      %v1087 = vld [vmem:[#allocation2 + $0x4a] sm:$0xff]
      %v1088 = vld [vmem:[#allocation2 + $0x52] sm:$0xff]
      %v1089 = vld [vmem:[#allocation2 + $0x62] sm:$0xff]
      %v1090 = vld [vmem:[#allocation2 + $0x6a] sm:$0xff]
      %v1091 = vld [vmem:[#allocation2 + $0x7a] sm:$0xff]
      %v1092 = vld [vmem:[#allocation2 + $0x82] sm:$0xff]
      %v1093 = vld [vmem:[#allocation2 + $0x92] sm:$0xff]
      %v1094 = vld [vmem:[#allocation2 + $0x9a] sm:$0xff]
      %v1095 = vld [vmem:[#allocation2 + $0xaa] sm:$0xff]
      %v1096 = vld [vmem:[#allocation2 + $0xb2] sm:$0xff]
      %v1097 = vld [vmem:[#allocation2 + $0xc2] sm:$0xff]
      %v1098 = vld [vmem:[#allocation2 + $0xca] sm:$0xff]
      %v1099 = vld [vmem:[#allocation2 + $0xda] sm:$0xff]
      %v1100 = vld [vmem:[#allocation2 + $0xe2] sm:$0xff]
      %v1101 = vld [vmem:[#allocation2 + $0xf2] sm:$0xff]
      %v1102 = vld [vmem:[#allocation2 + $0xfa] sm:$0xff]
      %v1103 = vld [vmem:[#allocation2 + $0x10a] sm:$0xff]
      %v1104 = vld [vmem:[#allocation2 + $0x112] sm:$0xff]
      %v1105 = vld [vmem:[#allocation2 + $0x122] sm:$0xff]
      %v1106 = vld [vmem:[#allocation2 + $0x12a] sm:$0xff]
      %v1107 = vld [vmem:[#allocation2 + $0x13a] sm:$0xff]
      %v1108 = vld [vmem:[#allocation2 + $0x142] sm:$0xff]
      %v1109 = vld [vmem:[#allocation2 + $0x152] sm:$0xff]
      %v1110 = vld [vmem:[#allocation2 + $0x15a] sm:$0xff]
      %v1111 = vld [vmem:[#allocation2 + $0x16a] sm:$0xff]
      %v1112 = vld [vmem:[#allocation2 + $0x172] sm:$0xff]
      %v1113 = vpack.c.bf16 %v1081, %v1081
      %v1114 = vpack.c.bf16 %v1082, %v1082
      %v1115 = vpack.c.bf16 %v1083, %v1083
      %v1116 = vpack.c.bf16 %v1084, %v1084
      %v1117 = vpack.c.bf16 %v1085, %v1085
      %v1118 = vpack.c.bf16 %v1086, %v1086
      %v1119 = vpack.c.bf16 %v1087, %v1087
      %v1120 = vpack.c.bf16 %v1088, %v1088
      %v1121 = vpack.c.bf16 %v1089, %v1089
      %v1122 = vpack.c.bf16 %v1090, %v1090
      %v1123 = vpack.c.bf16 %v1091, %v1091
      %v1124 = vpack.c.bf16 %v1092, %v1092
      %v1125 = vpack.c.bf16 %v1093, %v1093
      %v1126 = vpack.c.bf16 %v1094, %v1094
      %v1127 = vpack.c.bf16 %v1095, %v1095
      %v1128 = vpack.c.bf16 %v1096, %v1096
      %v1129 = vpack.c.bf16 %v1097, %v1097
      %v1130 = vpack.c.bf16 %v1098, %v1098
      %v1131 = vpack.c.bf16 %v1099, %v1099
      %v1132 = vpack.c.bf16 %v1100, %v1100
      %v1133 = vpack.c.bf16 %v1101, %v1101
      %v1134 = vpack.c.bf16 %v1102, %v1102
      %v1135 = vpack.c.bf16 %v1103, %v1103
      %v1136 = vpack.c.bf16 %v1104, %v1104
      %v1137 = vpack.c.bf16 %v1105, %v1105
      %v1138 = vpack.c.bf16 %v1106, %v1106
      %v1139 = vpack.c.bf16 %v1107, %v1107
      %v1140 = vpack.c.bf16 %v1108, %v1108
      %v1141 = vpack.c.bf16 %v1109, %v1109
      %v1142 = vpack.c.bf16 %v1110, %v1110
      %v1143 = vpack.c.bf16 %v1111, %v1111
      %v1144 = vpack.c.bf16 %v1112, %v1112
      %v1145 = vld [vmem:[%s920] sm:$0xff]
      %v1146 = vld [vmem:[%s920 + $0x8] sm:$0xff]
      %v1147 = vld [vmem:[%s920 + $0x18] sm:$0xff]
      %v1148 = vld [vmem:[%s920 + $0x20] sm:$0xff]
      %v1149 = vld [vmem:[%s920 + $0x30] sm:$0xff]
      %v1150 = vld [vmem:[%s920 + $0x38] sm:$0xff]
      %v1151 = vld [vmem:[%s920 + $0x48] sm:$0xff]
      %v1152 = vld [vmem:[%s920 + $0x50] sm:$0xff]
      %v1153 = vld [vmem:[%s920 + $0x60] sm:$0xff]
      %v1154 = vld [vmem:[%s920 + $0x68] sm:$0xff]
      %v1155 = vld [vmem:[%s920 + $0x78] sm:$0xff]
      %v1156 = vld [vmem:[%s920 + $0x80] sm:$0xff]
      %v1157 = vld [vmem:[%s920 + $0x90] sm:$0xff]
      %v1158 = vld [vmem:[%s920 + $0x98] sm:$0xff]
      %v1159 = vld [vmem:[%s920 + $0xa8] sm:$0xff]
      %v1160 = vld [vmem:[%s920 + $0xb0] sm:$0xff]
      %v1161 = vld [vmem:[%s920 + $0xc0] sm:$0xff]
      %v1162 = vld [vmem:[%s920 + $0xc8] sm:$0xff]
      %v1163 = vld [vmem:[%s920 + $0xd8] sm:$0xff]
      %v1164 = vld [vmem:[%s920 + $0xe0] sm:$0xff]
      %v1165 = vld [vmem:[%s920 + $0xf0] sm:$0xff]
      %v1166 = vld [vmem:[%s920 + $0xf8] sm:$0xff]
      %v1167 = vld [vmem:[%s920 + $0x108] sm:$0xff]
      %v1168 = vld [vmem:[%s920 + $0x110] sm:$0xff]
      %v1169 = vld [vmem:[%s920 + $0x120] sm:$0xff]
      %v1170 = vld [vmem:[%s920 + $0x128] sm:$0xff]
      %v1171 = vld [vmem:[%s920 + $0x138] sm:$0xff]
      %v1172 = vld [vmem:[%s920 + $0x140] sm:$0xff]
      %v1173 = vld [vmem:[%s920 + $0x150] sm:$0xff]
      %v1174 = vld [vmem:[%s920 + $0x158] sm:$0xff]
      %v1175 = vld [vmem:[%s920 + $0x168] sm:$0xff]
      %v1176 = vld [vmem:[%s920 + $0x170] sm:$0xff]
      %v1177 = vpack.c.bf16 %v1145, %v1145
      %v1178 = vpack.c.bf16 %v1146, %v1146
      %v1179 = vpack.c.bf16 %v1147, %v1147
      %v1180 = vpack.c.bf16 %v1148, %v1148
      %v1181 = vpack.c.bf16 %v1149, %v1149
      %v1182 = vpack.c.bf16 %v1150, %v1150
      %v1183 = vpack.c.bf16 %v1151, %v1151
      %v1184 = vpack.c.bf16 %v1152, %v1152
      %v1185 = vpack.c.bf16 %v1153, %v1153
      %v1186 = vpack.c.bf16 %v1154, %v1154
      %v1187 = vpack.c.bf16 %v1155, %v1155
      %v1188 = vpack.c.bf16 %v1156, %v1156
      %v1189 = vpack.c.bf16 %v1157, %v1157
      %v1190 = vpack.c.bf16 %v1158, %v1158
      %v1191 = vpack.c.bf16 %v1159, %v1159
      %v1192 = vpack.c.bf16 %v1160, %v1160
      %v1193 = vpack.c.bf16 %v1161, %v1161
      %v1194 = vpack.c.bf16 %v1162, %v1162
      %v1195 = vpack.c.bf16 %v1163, %v1163
      %v1196 = vpack.c.bf16 %v1164, %v1164
      %v1197 = vpack.c.bf16 %v1165, %v1165
      %v1198 = vpack.c.bf16 %v1166, %v1166
      %v1199 = vpack.c.bf16 %v1167, %v1167
      %v1200 = vpack.c.bf16 %v1168, %v1168
      %v1201 = vpack.c.bf16 %v1169, %v1169
      %v1202 = vpack.c.bf16 %v1170, %v1170
      %v1203 = vpack.c.bf16 %v1171, %v1171
      %v1204 = vpack.c.bf16 %v1172, %v1172
      %v1205 = vpack.c.bf16 %v1173, %v1173
      %v1206 = vpack.c.bf16 %v1174, %v1174
      %v1207 = vpack.c.bf16 %v1175, %v1175
      %v1208 = vpack.c.bf16 %v1176, %v1176
      %v1209 = vld [vmem:[%s920 + $0x1] sm:$0xff]
      %v1210 = vld [vmem:[%s920 + $0x9] sm:$0xff]
      %v1211 = vld [vmem:[%s920 + $0x19] sm:$0xff]
      %v1212 = vld [vmem:[%s920 + $0x21] sm:$0xff]
      %v1213 = vld [vmem:[%s920 + $0x31] sm:$0xff]
      %v1214 = vld [vmem:[%s920 + $0x39] sm:$0xff]
      %v1215 = vld [vmem:[%s920 + $0x49] sm:$0xff]
      %v1216 = vld [vmem:[%s920 + $0x51] sm:$0xff]
      %v1217 = vld [vmem:[%s920 + $0x61] sm:$0xff]
      %v1218 = vld [vmem:[%s920 + $0x69] sm:$0xff]
      %v1219 = vld [vmem:[%s920 + $0x79] sm:$0xff]
      %v1220 = vld [vmem:[%s920 + $0x81] sm:$0xff]
      %v1221 = vld [vmem:[%s920 + $0x91] sm:$0xff]
      %v1222 = vld [vmem:[%s920 + $0x99] sm:$0xff]
      %v1223 = vld [vmem:[%s920 + $0xa9] sm:$0xff]
      %v1224 = vld [vmem:[%s920 + $0xb1] sm:$0xff]
      %v1225 = vld [vmem:[%s920 + $0xc1] sm:$0xff]
      %v1226 = vld [vmem:[%s920 + $0xc9] sm:$0xff]
      %v1227 = vld [vmem:[%s920 + $0xd9] sm:$0xff]
      %v1228 = vld [vmem:[%s920 + $0xe1] sm:$0xff]
      %v1229 = vld [vmem:[%s920 + $0xf1] sm:$0xff]
      %v1230 = vld [vmem:[%s920 + $0xf9] sm:$0xff]
      %v1231 = vld [vmem:[%s920 + $0x109] sm:$0xff]
      %v1232 = vld [vmem:[%s920 + $0x111] sm:$0xff]
      %v1233 = vld [vmem:[%s920 + $0x121] sm:$0xff]
      %v1234 = vld [vmem:[%s920 + $0x129] sm:$0xff]
      %v1235 = vld [vmem:[%s920 + $0x139] sm:$0xff]
      %v1236 = vld [vmem:[%s920 + $0x141] sm:$0xff]
      %v1237 = vld [vmem:[%s920 + $0x151] sm:$0xff]
      %v1238 = vld [vmem:[%s920 + $0x159] sm:$0xff]
      %v1239 = vld [vmem:[%s920 + $0x169] sm:$0xff]
      %v1240 = vld [vmem:[%s920 + $0x171] sm:$0xff]
      %v1241 = vpack.c.bf16 %v1209, %v1209
      %v1242 = vpack.c.bf16 %v1210, %v1210
      %v1243 = vpack.c.bf16 %v1211, %v1211
      %v1244 = vpack.c.bf16 %v1212, %v1212
      %v1245 = vpack.c.bf16 %v1213, %v1213
      %v1246 = vpack.c.bf16 %v1214, %v1214
      %v1247 = vpack.c.bf16 %v1215, %v1215
      %v1248 = vpack.c.bf16 %v1216, %v1216
      %v1249 = vpack.c.bf16 %v1217, %v1217
      %v1250 = vpack.c.bf16 %v1218, %v1218
      %v1251 = vpack.c.bf16 %v1219, %v1219
      %v1252 = vpack.c.bf16 %v1220, %v1220
      %v1253 = vpack.c.bf16 %v1221, %v1221
      %v1254 = vpack.c.bf16 %v1222, %v1222
      %v1255 = vpack.c.bf16 %v1223, %v1223
      %v1256 = vpack.c.bf16 %v1224, %v1224
      %v1257 = vpack.c.bf16 %v1225, %v1225
      %v1258 = vpack.c.bf16 %v1226, %v1226
      %v1259 = vpack.c.bf16 %v1227, %v1227
      %v1260 = vpack.c.bf16 %v1228, %v1228
      %v1261 = vpack.c.bf16 %v1229, %v1229
      %v1262 = vpack.c.bf16 %v1230, %v1230
      %v1263 = vpack.c.bf16 %v1231, %v1231
      %v1264 = vpack.c.bf16 %v1232, %v1232
      %v1265 = vpack.c.bf16 %v1233, %v1233
      %v1266 = vpack.c.bf16 %v1234, %v1234
      %v1267 = vpack.c.bf16 %v1235, %v1235
      %v1268 = vpack.c.bf16 %v1236, %v1236
      %v1269 = vpack.c.bf16 %v1237, %v1237
      %v1270 = vpack.c.bf16 %v1238, %v1238
      %v1271 = vpack.c.bf16 %v1239, %v1239
      %v1272 = vpack.c.bf16 %v1240, %v1240
      %v1273 = vld [vmem:[%s920 + $0x2] sm:$0xff]
      %v1274 = vld [vmem:[%s920 + $0xa] sm:$0xff]
      %v1275 = vld [vmem:[%s920 + $0x1a] sm:$0xff]
      %v1276 = vld [vmem:[%s920 + $0x22] sm:$0xff]
      %v1277 = vld [vmem:[%s920 + $0x32] sm:$0xff]
      %v1278 = vld [vmem:[%s920 + $0x3a] sm:$0xff]
      %v1279 = vld [vmem:[%s920 + $0x4a] sm:$0xff]
      %v1280 = vld [vmem:[%s920 + $0x52] sm:$0xff]
      %v1281 = vld [vmem:[%s920 + $0x62] sm:$0xff]
      %v1282 = vld [vmem:[%s920 + $0x6a] sm:$0xff]
      %v1283 = vld [vmem:[%s920 + $0x7a] sm:$0xff]
      %v1284 = vld [vmem:[%s920 + $0x82] sm:$0xff]
      %v1285 = vld [vmem:[%s920 + $0x92] sm:$0xff]
      %v1286 = vld [vmem:[%s920 + $0x9a] sm:$0xff]
      %v1287 = vld [vmem:[%s920 + $0xaa] sm:$0xff]
      %v1288 = vld [vmem:[%s920 + $0xb2] sm:$0xff]
      %v1289 = vld [vmem:[%s920 + $0xc2] sm:$0xff]
      %v1290 = vld [vmem:[%s920 + $0xca] sm:$0xff]
      %v1291 = vld [vmem:[%s920 + $0xda] sm:$0xff]
      %v1292 = vld [vmem:[%s920 + $0xe2] sm:$0xff]
      %v1293 = vld [vmem:[%s920 + $0xf2] sm:$0xff]
      %v1294 = vld [vmem:[%s920 + $0xfa] sm:$0xff]
      %v1295 = vld [vmem:[%s920 + $0x10a] sm:$0xff]
      %v1296 = vld [vmem:[%s920 + $0x112] sm:$0xff]
      %v1297 = vld [vmem:[%s920 + $0x122] sm:$0xff]
      %v1298 = vld [vmem:[%s920 + $0x12a] sm:$0xff]
      %v1299 = vld [vmem:[%s920 + $0x13a] sm:$0xff]
      %v1300 = vld [vmem:[%s920 + $0x142] sm:$0xff]
      %v1301 = vld [vmem:[%s920 + $0x152] sm:$0xff]
      %v1302 = vld [vmem:[%s920 + $0x15a] sm:$0xff]
      %v1303 = vld [vmem:[%s920 + $0x16a] sm:$0xff]
      %v1304 = vld [vmem:[%s920 + $0x172] sm:$0xff]
      %v1305 = vpack.c.bf16 %v1273, %v1273
      %v1306 = vpack.c.bf16 %v1274, %v1274
      %v1307 = vpack.c.bf16 %v1275, %v1275
      %v1308 = vpack.c.bf16 %v1276, %v1276
      %v1309 = vpack.c.bf16 %v1277, %v1277
      %v1310 = vpack.c.bf16 %v1278, %v1278
      %v1311 = vpack.c.bf16 %v1279, %v1279
      %v1312 = vpack.c.bf16 %v1280, %v1280
      %v1313 = vpack.c.bf16 %v1281, %v1281
      %v1314 = vpack.c.bf16 %v1282, %v1282
      %v1315 = vpack.c.bf16 %v1283, %v1283
      %v1316 = vpack.c.bf16 %v1284, %v1284
      %v1317 = vpack.c.bf16 %v1285, %v1285
      %v1318 = vpack.c.bf16 %v1286, %v1286
      %v1319 = vpack.c.bf16 %v1287, %v1287
      %v1320 = vpack.c.bf16 %v1288, %v1288
      %v1321 = vpack.c.bf16 %v1289, %v1289
      %v1322 = vpack.c.bf16 %v1290, %v1290
      %v1323 = vpack.c.bf16 %v1291, %v1291
      %v1324 = vpack.c.bf16 %v1292, %v1292
      %v1325 = vpack.c.bf16 %v1293, %v1293
      %v1326 = vpack.c.bf16 %v1294, %v1294
      %v1327 = vpack.c.bf16 %v1295, %v1295
      %v1328 = vpack.c.bf16 %v1296, %v1296
      %v1329 = vpack.c.bf16 %v1297, %v1297
      %v1330 = vpack.c.bf16 %v1298, %v1298
      %v1331 = vpack.c.bf16 %v1299, %v1299
      %v1332 = vpack.c.bf16 %v1300, %v1300
      %v1333 = vpack.c.bf16 %v1301, %v1301
      %v1334 = vpack.c.bf16 %v1302, %v1302
      %v1335 = vpack.c.bf16 %v1303, %v1303
      %v1336 = vpack.c.bf16 %v1304, %v1304
      %s1337 = scalar_lea.vmem [#allocation2], 48
      %v1338 = vld [vmem:[%s1337] sm:$0xff]
      %v1339 = vld [vmem:[%s1337 + $0x8] sm:$0xff]
      %v1340 = vld [vmem:[%s1337 + $0x18] sm:$0xff]
      %v1341 = vld [vmem:[%s1337 + $0x20] sm:$0xff]
      %v1342 = vld [vmem:[%s1337 + $0x30] sm:$0xff]
      %v1343 = vld [vmem:[%s1337 + $0x38] sm:$0xff]
      %v1344 = vld [vmem:[%s1337 + $0x48] sm:$0xff]
      %v1345 = vld [vmem:[%s1337 + $0x50] sm:$0xff]
      %v1346 = vld [vmem:[%s1337 + $0x60] sm:$0xff]
      %v1347 = vld [vmem:[%s1337 + $0x68] sm:$0xff]
      %v1348 = vld [vmem:[%s1337 + $0x78] sm:$0xff]
      %v1349 = vld [vmem:[%s1337 + $0x80] sm:$0xff]
      %v1350 = vld [vmem:[%s1337 + $0x90] sm:$0xff]
      %v1351 = vld [vmem:[%s1337 + $0x98] sm:$0xff]
      %v1352 = vld [vmem:[%s1337 + $0xa8] sm:$0xff]
      %v1353 = vld [vmem:[%s1337 + $0xb0] sm:$0xff]
      %v1354 = vld [vmem:[%s1337 + $0xc0] sm:$0xff]
      %v1355 = vld [vmem:[%s1337 + $0xc8] sm:$0xff]
      %v1356 = vld [vmem:[%s1337 + $0xd8] sm:$0xff]
      %v1357 = vld [vmem:[%s1337 + $0xe0] sm:$0xff]
      %v1358 = vld [vmem:[%s1337 + $0xf0] sm:$0xff]
      %v1359 = vld [vmem:[%s1337 + $0xf8] sm:$0xff]
      %v1360 = vld [vmem:[%s1337 + $0x108] sm:$0xff]
      %v1361 = vld [vmem:[%s1337 + $0x110] sm:$0xff]
      %v1362 = vld [vmem:[%s1337 + $0x120] sm:$0xff]
      %v1363 = vld [vmem:[%s1337 + $0x128] sm:$0xff]
      %v1364 = vld [vmem:[%s1337 + $0x138] sm:$0xff]
      %v1365 = vld [vmem:[%s1337 + $0x140] sm:$0xff]
      %v1366 = vld [vmem:[%s1337 + $0x150] sm:$0xff]
      %v1367 = vld [vmem:[%s1337 + $0x158] sm:$0xff]
      %v1368 = vld [vmem:[%s1337 + $0x168] sm:$0xff]
      %v1369 = vld [vmem:[%s1337 + $0x170] sm:$0xff]
      %v1370 = vpack.c.bf16 %v1338, %v1338
      %v1371 = vpack.c.bf16 %v1339, %v1339
      %v1372 = vpack.c.bf16 %v1340, %v1340
      %v1373 = vpack.c.bf16 %v1341, %v1341
      %v1374 = vpack.c.bf16 %v1342, %v1342
      %v1375 = vpack.c.bf16 %v1343, %v1343
      %v1376 = vpack.c.bf16 %v1344, %v1344
      %v1377 = vpack.c.bf16 %v1345, %v1345
      %v1378 = vpack.c.bf16 %v1346, %v1346
      %v1379 = vpack.c.bf16 %v1347, %v1347
      %v1380 = vpack.c.bf16 %v1348, %v1348
      %v1381 = vpack.c.bf16 %v1349, %v1349
      %v1382 = vpack.c.bf16 %v1350, %v1350
      %v1383 = vpack.c.bf16 %v1351, %v1351
      %v1384 = vpack.c.bf16 %v1352, %v1352
      %v1385 = vpack.c.bf16 %v1353, %v1353
      %v1386 = vpack.c.bf16 %v1354, %v1354
      %v1387 = vpack.c.bf16 %v1355, %v1355
      %v1388 = vpack.c.bf16 %v1356, %v1356
      %v1389 = vpack.c.bf16 %v1357, %v1357
      %v1390 = vpack.c.bf16 %v1358, %v1358
      %v1391 = vpack.c.bf16 %v1359, %v1359
      %v1392 = vpack.c.bf16 %v1360, %v1360
      %v1393 = vpack.c.bf16 %v1361, %v1361
      %v1394 = vpack.c.bf16 %v1362, %v1362
      %v1395 = vpack.c.bf16 %v1363, %v1363
      %v1396 = vpack.c.bf16 %v1364, %v1364
      %v1397 = vpack.c.bf16 %v1365, %v1365
      %v1398 = vpack.c.bf16 %v1366, %v1366
      %v1399 = vpack.c.bf16 %v1367, %v1367
      %v1400 = vpack.c.bf16 %v1368, %v1368
      %v1401 = vpack.c.bf16 %v1369, %v1369
      %v1402 = vld [vmem:[%s1337 + $0x1] sm:$0xff]
      %v1403 = vld [vmem:[%s1337 + $0x9] sm:$0xff]
      %v1404 = vld [vmem:[%s1337 + $0x19] sm:$0xff]
      %v1405 = vld [vmem:[%s1337 + $0x21] sm:$0xff]
      %v1406 = vld [vmem:[%s1337 + $0x31] sm:$0xff]
      %v1407 = vld [vmem:[%s1337 + $0x39] sm:$0xff]
      %v1408 = vld [vmem:[%s1337 + $0x49] sm:$0xff]
      %v1409 = vld [vmem:[%s1337 + $0x51] sm:$0xff]
      %v1410 = vld [vmem:[%s1337 + $0x61] sm:$0xff]
      %v1411 = vld [vmem:[%s1337 + $0x69] sm:$0xff]
      %v1412 = vld [vmem:[%s1337 + $0x79] sm:$0xff]
      %v1413 = vld [vmem:[%s1337 + $0x81] sm:$0xff]
      %v1414 = vld [vmem:[%s1337 + $0x91] sm:$0xff]
      %v1415 = vld [vmem:[%s1337 + $0x99] sm:$0xff]
      %v1416 = vld [vmem:[%s1337 + $0xa9] sm:$0xff]
      %v1417 = vld [vmem:[%s1337 + $0xb1] sm:$0xff]
      %v1418 = vld [vmem:[%s1337 + $0xc1] sm:$0xff]
      %v1419 = vld [vmem:[%s1337 + $0xc9] sm:$0xff]
      %v1420 = vld [vmem:[%s1337 + $0xd9] sm:$0xff]
      %v1421 = vld [vmem:[%s1337 + $0xe1] sm:$0xff]
      %v1422 = vld [vmem:[%s1337 + $0xf1] sm:$0xff]
      %v1423 = vld [vmem:[%s1337 + $0xf9] sm:$0xff]
      %v1424 = vld [vmem:[%s1337 + $0x109] sm:$0xff]
      %v1425 = vld [vmem:[%s1337 + $0x111] sm:$0xff]
      %v1426 = vld [vmem:[%s1337 + $0x121] sm:$0xff]
      %v1427 = vld [vmem:[%s1337 + $0x129] sm:$0xff]
      %v1428 = vld [vmem:[%s1337 + $0x139] sm:$0xff]
      %v1429 = vld [vmem:[%s1337 + $0x141] sm:$0xff]
      %v1430 = vld [vmem:[%s1337 + $0x151] sm:$0xff]
      %v1431 = vld [vmem:[%s1337 + $0x159] sm:$0xff]
      %v1432 = vld [vmem:[%s1337 + $0x169] sm:$0xff]
      %v1433 = vld [vmem:[%s1337 + $0x171] sm:$0xff]
      %v1434 = vpack.c.bf16 %v1402, %v1402
      %v1435 = vpack.c.bf16 %v1403, %v1403
      %v1436 = vpack.c.bf16 %v1404, %v1404
      %v1437 = vpack.c.bf16 %v1405, %v1405
      %v1438 = vpack.c.bf16 %v1406, %v1406
      %v1439 = vpack.c.bf16 %v1407, %v1407
      %v1440 = vpack.c.bf16 %v1408, %v1408
      %v1441 = vpack.c.bf16 %v1409, %v1409
      %v1442 = vpack.c.bf16 %v1410, %v1410
      %v1443 = vpack.c.bf16 %v1411, %v1411
      %v1444 = vpack.c.bf16 %v1412, %v1412
      %v1445 = vpack.c.bf16 %v1413, %v1413
      %v1446 = vpack.c.bf16 %v1414, %v1414
      %v1447 = vpack.c.bf16 %v1415, %v1415
      %v1448 = vpack.c.bf16 %v1416, %v1416
      %v1449 = vpack.c.bf16 %v1417, %v1417
      %v1450 = vpack.c.bf16 %v1418, %v1418
      %v1451 = vpack.c.bf16 %v1419, %v1419
      %v1452 = vpack.c.bf16 %v1420, %v1420
      %v1453 = vpack.c.bf16 %v1421, %v1421
      %v1454 = vpack.c.bf16 %v1422, %v1422
      %v1455 = vpack.c.bf16 %v1423, %v1423
      %v1456 = vpack.c.bf16 %v1424, %v1424
      %v1457 = vpack.c.bf16 %v1425, %v1425
      %v1458 = vpack.c.bf16 %v1426, %v1426
      %v1459 = vpack.c.bf16 %v1427, %v1427
      %v1460 = vpack.c.bf16 %v1428, %v1428
      %v1461 = vpack.c.bf16 %v1429, %v1429
      %v1462 = vpack.c.bf16 %v1430, %v1430
      %v1463 = vpack.c.bf16 %v1431, %v1431
      %v1464 = vpack.c.bf16 %v1432, %v1432
      %v1465 = vpack.c.bf16 %v1433, %v1433
      %v1466 = vld [vmem:[%s1337 + $0x2] sm:$0xff]
      %v1467 = vld [vmem:[%s1337 + $0xa] sm:$0xff]
      %v1468 = vld [vmem:[%s1337 + $0x1a] sm:$0xff]
      %v1469 = vld [vmem:[%s1337 + $0x22] sm:$0xff]
      %v1470 = vld [vmem:[%s1337 + $0x32] sm:$0xff]
      %v1471 = vld [vmem:[%s1337 + $0x3a] sm:$0xff]
      %v1472 = vld [vmem:[%s1337 + $0x4a] sm:$0xff]
      %v1473 = vld [vmem:[%s1337 + $0x52] sm:$0xff]
      %v1474 = vld [vmem:[%s1337 + $0x62] sm:$0xff]
      %v1475 = vld [vmem:[%s1337 + $0x6a] sm:$0xff]
      %v1476 = vld [vmem:[%s1337 + $0x7a] sm:$0xff]
      %v1477 = vld [vmem:[%s1337 + $0x82] sm:$0xff]
      %v1478 = vld [vmem:[%s1337 + $0x92] sm:$0xff]
      %v1479 = vld [vmem:[%s1337 + $0x9a] sm:$0xff]
      %v1480 = vld [vmem:[%s1337 + $0xaa] sm:$0xff]
      %v1481 = vld [vmem:[%s1337 + $0xb2] sm:$0xff]
      %v1482 = vld [vmem:[%s1337 + $0xc2] sm:$0xff]
      %v1483 = vld [vmem:[%s1337 + $0xca] sm:$0xff]
      %v1484 = vld [vmem:[%s1337 + $0xda] sm:$0xff]
      %v1485 = vld [vmem:[%s1337 + $0xe2] sm:$0xff]
      %v1486 = vld [vmem:[%s1337 + $0xf2] sm:$0xff]
      %v1487 = vld [vmem:[%s1337 + $0xfa] sm:$0xff]
      %v1488 = vld [vmem:[%s1337 + $0x10a] sm:$0xff]
      %v1489 = vld [vmem:[%s1337 + $0x112] sm:$0xff]
      %v1490 = vld [vmem:[%s1337 + $0x122] sm:$0xff]
      %v1491 = vld [vmem:[%s1337 + $0x12a] sm:$0xff]
      %v1492 = vld [vmem:[%s1337 + $0x13a] sm:$0xff]
      %v1493 = vld [vmem:[%s1337 + $0x142] sm:$0xff]
      %v1494 = vld [vmem:[%s1337 + $0x152] sm:$0xff]
      %v1495 = vld [vmem:[%s1337 + $0x15a] sm:$0xff]
      %v1496 = vld [vmem:[%s1337 + $0x16a] sm:$0xff]
      %v1497 = vld [vmem:[%s1337 + $0x172] sm:$0xff]
      %v1498 = vpack.c.bf16 %v1466, %v1466
      %v1499 = vpack.c.bf16 %v1467, %v1467
      %v1500 = vpack.c.bf16 %v1468, %v1468
      %v1501 = vpack.c.bf16 %v1469, %v1469
      %v1502 = vpack.c.bf16 %v1470, %v1470
      %v1503 = vpack.c.bf16 %v1471, %v1471
      %v1504 = vpack.c.bf16 %v1472, %v1472
      %v1505 = vpack.c.bf16 %v1473, %v1473
      %v1506 = vpack.c.bf16 %v1474, %v1474
      %v1507 = vpack.c.bf16 %v1475, %v1475
      %v1508 = vpack.c.bf16 %v1476, %v1476
      %v1509 = vpack.c.bf16 %v1477, %v1477
      %v1510 = vpack.c.bf16 %v1478, %v1478
      %v1511 = vpack.c.bf16 %v1479, %v1479
      %v1512 = vpack.c.bf16 %v1480, %v1480
      %v1513 = vpack.c.bf16 %v1481, %v1481
      %v1514 = vpack.c.bf16 %v1482, %v1482
      %v1515 = vpack.c.bf16 %v1483, %v1483
      %v1516 = vpack.c.bf16 %v1484, %v1484
      %v1517 = vpack.c.bf16 %v1485, %v1485
      %v1518 = vpack.c.bf16 %v1486, %v1486
      %v1519 = vpack.c.bf16 %v1487, %v1487
      %v1520 = vpack.c.bf16 %v1488, %v1488
      %v1521 = vpack.c.bf16 %v1489, %v1489
      %v1522 = vpack.c.bf16 %v1490, %v1490
      %v1523 = vpack.c.bf16 %v1491, %v1491
      %v1524 = vpack.c.bf16 %v1492, %v1492
      %v1525 = vpack.c.bf16 %v1493, %v1493
      %v1526 = vpack.c.bf16 %v1494, %v1494
      %v1527 = vpack.c.bf16 %v1495, %v1495
      %v1528 = vpack.c.bf16 %v1496, %v1496
      %v1529 = vpack.c.bf16 %v1497, %v1497
      %v1562 = vunpack.c.l.b16 %v985
      %v1563 = vunpack.c.l.b16 %v986
      %v1564 = vunpack.c.l.b16 %v987
      %v1565 = vunpack.c.l.b16 %v988
      %v1566 = vunpack.c.l.b16 %v989
      %v1567 = vunpack.c.l.b16 %v990
      %v1568 = vunpack.c.l.b16 %v991
      %v1569 = vunpack.c.l.b16 %v992
      %v1570 = vunpack.c.l.b16 %v993
      %v1571 = vunpack.c.l.b16 %v994
      %v1572 = vunpack.c.l.b16 %v995
      %v1573 = vunpack.c.l.b16 %v996
      %v1574 = vunpack.c.l.b16 %v997
      %v1575 = vunpack.c.l.b16 %v998
      %v1576 = vunpack.c.l.b16 %v999
      %v1577 = vunpack.c.l.b16 %v1000
      %v1578 = vunpack.c.l.b16 %v1001
      %v1579 = vunpack.c.l.b16 %v1002
      %v1580 = vunpack.c.l.b16 %v1003
      %v1581 = vunpack.c.l.b16 %v1004
      %v1582 = vunpack.c.l.b16 %v1005
      %v1583 = vunpack.c.l.b16 %v1006
      %v1584 = vunpack.c.l.b16 %v1007
      %v1585 = vunpack.c.l.b16 %v1008
      %v1586 = vunpack.c.l.b16 %v1009
      %v1587 = vunpack.c.l.b16 %v1010
      %v1588 = vunpack.c.l.b16 %v1011
      %v1589 = vunpack.c.l.b16 %v1012
      %v1590 = vunpack.c.l.b16 %v1013
      %v1591 = vunpack.c.l.b16 %v1014
      %v1592 = vunpack.c.l.b16 %v1015
      %v1593 = vunpack.c.l.b16 %v1016
      %v1594 = vpack.c.b16 %v1563, %v1562
      %v1595 = vpack.c.b16 %v1565, %v1564
      %v1596 = vpack.c.b16 %v1567, %v1566
      %v1597 = vpack.c.b16 %v1569, %v1568
      %v1598 = vpack.c.b16 %v1571, %v1570
      %v1599 = vpack.c.b16 %v1573, %v1572
      %v1600 = vpack.c.b16 %v1575, %v1574
      %v1601 = vpack.c.b16 %v1577, %v1576
      %v1602 = vpack.c.b16 %v1579, %v1578
      %v1603 = vpack.c.b16 %v1581, %v1580
      %v1604 = vpack.c.b16 %v1583, %v1582
      %v1605 = vpack.c.b16 %v1585, %v1584
      %v1606 = vpack.c.b16 %v1587, %v1586
      %v1607 = vpack.c.b16 %v1589, %v1588
      %v1608 = vpack.c.b16 %v1591, %v1590
      %v1609 = vpack.c.b16 %v1593, %v1592
      %v1642 = vunpack.c.l.b16 %v1049
      %v1643 = vunpack.c.l.b16 %v1050
      %v1644 = vunpack.c.l.b16 %v1051
      %v1645 = vunpack.c.l.b16 %v1052
      %v1646 = vunpack.c.l.b16 %v1053
      %v1647 = vunpack.c.l.b16 %v1054
      %v1648 = vunpack.c.l.b16 %v1055
      %v1649 = vunpack.c.l.b16 %v1056
      %v1650 = vunpack.c.l.b16 %v1057
      %v1651 = vunpack.c.l.b16 %v1058
      %v1652 = vunpack.c.l.b16 %v1059
      %v1653 = vunpack.c.l.b16 %v1060
      %v1654 = vunpack.c.l.b16 %v1061
      %v1655 = vunpack.c.l.b16 %v1062
      %v1656 = vunpack.c.l.b16 %v1063
      %v1657 = vunpack.c.l.b16 %v1064
      %v1658 = vunpack.c.l.b16 %v1065
      %v1659 = vunpack.c.l.b16 %v1066
      %v1660 = vunpack.c.l.b16 %v1067
      %v1661 = vunpack.c.l.b16 %v1068
      %v1662 = vunpack.c.l.b16 %v1069
      %v1663 = vunpack.c.l.b16 %v1070
      %v1664 = vunpack.c.l.b16 %v1071
      %v1665 = vunpack.c.l.b16 %v1072
      %v1666 = vunpack.c.l.b16 %v1073
      %v1667 = vunpack.c.l.b16 %v1074
      %v1668 = vunpack.c.l.b16 %v1075
      %v1669 = vunpack.c.l.b16 %v1076
      %v1670 = vunpack.c.l.b16 %v1077
      %v1671 = vunpack.c.l.b16 %v1078
      %v1672 = vunpack.c.l.b16 %v1079
      %v1673 = vunpack.c.l.b16 %v1080
      %v1674 = vpack.c.b16 %v1643, %v1642
      %v1675 = vpack.c.b16 %v1645, %v1644
      %v1676 = vpack.c.b16 %v1647, %v1646
      %v1677 = vpack.c.b16 %v1649, %v1648
      %v1678 = vpack.c.b16 %v1651, %v1650
      %v1679 = vpack.c.b16 %v1653, %v1652
      %v1680 = vpack.c.b16 %v1655, %v1654
      %v1681 = vpack.c.b16 %v1657, %v1656
      %v1682 = vpack.c.b16 %v1659, %v1658
      %v1683 = vpack.c.b16 %v1661, %v1660
      %v1684 = vpack.c.b16 %v1663, %v1662
      %v1685 = vpack.c.b16 %v1665, %v1664
      %v1686 = vpack.c.b16 %v1667, %v1666
      %v1687 = vpack.c.b16 %v1669, %v1668
      %v1688 = vpack.c.b16 %v1671, %v1670
      %v1689 = vpack.c.b16 %v1673, %v1672
      %1690 = vrot.lane.b32.xlu0 %v1674, 4
      %v1691 = vpop.permute.xlu0 %1690
      %1692 = vrot.lane.b32.xlu0 %v1675, 4
      %v1693 = vpop.permute.xlu0 %1692
      %1694 = vrot.lane.b32.xlu0 %v1676, 4
      %v1695 = vpop.permute.xlu0 %1694
      %1696 = vrot.lane.b32.xlu0 %v1677, 4
      %v1697 = vpop.permute.xlu0 %1696
      %1698 = vrot.lane.b32.xlu0 %v1678, 4
      %v1699 = vpop.permute.xlu0 %1698
      %1700 = vrot.lane.b32.xlu0 %v1679, 4
      %v1701 = vpop.permute.xlu0 %1700
      %1702 = vrot.lane.b32.xlu0 %v1680, 4
      %v1703 = vpop.permute.xlu0 %1702
      %1704 = vrot.lane.b32.xlu0 %v1681, 4
      %v1705 = vpop.permute.xlu0 %1704
      %1706 = vrot.lane.b32.xlu0 %v1682, 4
      %v1707 = vpop.permute.xlu0 %1706
      %1708 = vrot.lane.b32.xlu0 %v1683, 4
      %v1709 = vpop.permute.xlu0 %1708
      %1710 = vrot.lane.b32.xlu0 %v1684, 4
      %v1711 = vpop.permute.xlu0 %1710
      %1712 = vrot.lane.b32.xlu0 %v1685, 4
      %v1713 = vpop.permute.xlu0 %1712
      %1714 = vrot.lane.b32.xlu0 %v1686, 4
      %v1715 = vpop.permute.xlu0 %1714
      %1716 = vrot.lane.b32.xlu0 %v1687, 4
      %v1717 = vpop.permute.xlu0 %1716
      %1718 = vrot.lane.b32.xlu0 %v1688, 4
      %v1719 = vpop.permute.xlu0 %1718
      %1720 = vrot.lane.b32.xlu0 %v1689, 4
      %v1721 = vpop.permute.xlu0 %1720
      %v1754 = vunpack.c.l.b16 %v1113
      %v1755 = vunpack.c.l.b16 %v1114
      %v1756 = vunpack.c.l.b16 %v1115
      %v1757 = vunpack.c.l.b16 %v1116
      %v1758 = vunpack.c.l.b16 %v1117
      %v1759 = vunpack.c.l.b16 %v1118
      %v1760 = vunpack.c.l.b16 %v1119
      %v1761 = vunpack.c.l.b16 %v1120
      %v1762 = vunpack.c.l.b16 %v1121
      %v1763 = vunpack.c.l.b16 %v1122
      %v1764 = vunpack.c.l.b16 %v1123
      %v1765 = vunpack.c.l.b16 %v1124
      %v1766 = vunpack.c.l.b16 %v1125
      %v1767 = vunpack.c.l.b16 %v1126
      %v1768 = vunpack.c.l.b16 %v1127
      %v1769 = vunpack.c.l.b16 %v1128
      %v1770 = vunpack.c.l.b16 %v1129
      %v1771 = vunpack.c.l.b16 %v1130
      %v1772 = vunpack.c.l.b16 %v1131
      %v1773 = vunpack.c.l.b16 %v1132
      %v1774 = vunpack.c.l.b16 %v1133
      %v1775 = vunpack.c.l.b16 %v1134
      %v1776 = vunpack.c.l.b16 %v1135
      %v1777 = vunpack.c.l.b16 %v1136
      %v1778 = vunpack.c.l.b16 %v1137
      %v1779 = vunpack.c.l.b16 %v1138
      %v1780 = vunpack.c.l.b16 %v1139
      %v1781 = vunpack.c.l.b16 %v1140
      %v1782 = vunpack.c.l.b16 %v1141
      %v1783 = vunpack.c.l.b16 %v1142
      %v1784 = vunpack.c.l.b16 %v1143
      %v1785 = vunpack.c.l.b16 %v1144
      %v1786 = vpack.c.b16 %v1755, %v1754
      %v1787 = vpack.c.b16 %v1757, %v1756
      %v1788 = vpack.c.b16 %v1759, %v1758
      %v1789 = vpack.c.b16 %v1761, %v1760
      %v1790 = vpack.c.b16 %v1763, %v1762
      %v1791 = vpack.c.b16 %v1765, %v1764
      %v1792 = vpack.c.b16 %v1767, %v1766
      %v1793 = vpack.c.b16 %v1769, %v1768
      %v1794 = vpack.c.b16 %v1771, %v1770
      %v1795 = vpack.c.b16 %v1773, %v1772
      %v1796 = vpack.c.b16 %v1775, %v1774
      %v1797 = vpack.c.b16 %v1777, %v1776
      %v1798 = vpack.c.b16 %v1779, %v1778
      %v1799 = vpack.c.b16 %v1781, %v1780
      %v1800 = vpack.c.b16 %v1783, %v1782
      %v1801 = vpack.c.b16 %v1785, %v1784
      %1802 = vrot.lane.b32.xlu0 %v1786, 8
      %v1803 = vpop.permute.xlu0 %1802
      %1804 = vrot.lane.b32.xlu0 %v1787, 8
      %v1805 = vpop.permute.xlu0 %1804
      %1806 = vrot.lane.b32.xlu0 %v1788, 8
      %v1807 = vpop.permute.xlu0 %1806
      %1808 = vrot.lane.b32.xlu0 %v1789, 8
      %v1809 = vpop.permute.xlu0 %1808
      %1810 = vrot.lane.b32.xlu0 %v1790, 8
      %v1811 = vpop.permute.xlu0 %1810
      %1812 = vrot.lane.b32.xlu0 %v1791, 8
      %v1813 = vpop.permute.xlu0 %1812
      %1814 = vrot.lane.b32.xlu0 %v1792, 8
      %v1815 = vpop.permute.xlu0 %1814
      %1816 = vrot.lane.b32.xlu0 %v1793, 8
      %v1817 = vpop.permute.xlu0 %1816
      %1818 = vrot.lane.b32.xlu0 %v1794, 8
      %v1819 = vpop.permute.xlu0 %1818
      %1820 = vrot.lane.b32.xlu0 %v1795, 8
      %v1821 = vpop.permute.xlu0 %1820
      %1822 = vrot.lane.b32.xlu0 %v1796, 8
      %v1823 = vpop.permute.xlu0 %1822
      %1824 = vrot.lane.b32.xlu0 %v1797, 8
      %v1825 = vpop.permute.xlu0 %1824
      %1826 = vrot.lane.b32.xlu0 %v1798, 8
      %v1827 = vpop.permute.xlu0 %1826
      %1828 = vrot.lane.b32.xlu0 %v1799, 8
      %v1829 = vpop.permute.xlu0 %1828
      %1830 = vrot.lane.b32.xlu0 %v1800, 8
      %v1831 = vpop.permute.xlu0 %1830
      %1832 = vrot.lane.b32.xlu0 %v1801, 8
      %v1833 = vpop.permute.xlu0 %1832
      %v1866 = vunpack.c.l.b16 %v1177
      %v1867 = vunpack.c.l.b16 %v1178
      %v1868 = vunpack.c.l.b16 %v1179
      %v1869 = vunpack.c.l.b16 %v1180
      %v1870 = vunpack.c.l.b16 %v1181
      %v1871 = vunpack.c.l.b16 %v1182
      %v1872 = vunpack.c.l.b16 %v1183
      %v1873 = vunpack.c.l.b16 %v1184
      %v1874 = vunpack.c.l.b16 %v1185
      %v1875 = vunpack.c.l.b16 %v1186
      %v1876 = vunpack.c.l.b16 %v1187
      %v1877 = vunpack.c.l.b16 %v1188
      %v1878 = vunpack.c.l.b16 %v1189
      %v1879 = vunpack.c.l.b16 %v1190
      %v1880 = vunpack.c.l.b16 %v1191
      %v1881 = vunpack.c.l.b16 %v1192
      %v1882 = vunpack.c.l.b16 %v1193
      %v1883 = vunpack.c.l.b16 %v1194
      %v1884 = vunpack.c.l.b16 %v1195
      %v1885 = vunpack.c.l.b16 %v1196
      %v1886 = vunpack.c.l.b16 %v1197
      %v1887 = vunpack.c.l.b16 %v1198
      %v1888 = vunpack.c.l.b16 %v1199
      %v1889 = vunpack.c.l.b16 %v1200
      %v1890 = vunpack.c.l.b16 %v1201
      %v1891 = vunpack.c.l.b16 %v1202
      %v1892 = vunpack.c.l.b16 %v1203
      %v1893 = vunpack.c.l.b16 %v1204
      %v1894 = vunpack.c.l.b16 %v1205
      %v1895 = vunpack.c.l.b16 %v1206
      %v1896 = vunpack.c.l.b16 %v1207
      %v1897 = vunpack.c.l.b16 %v1208
      %v1898 = vpack.c.b16 %v1867, %v1866
      %v1899 = vpack.c.b16 %v1869, %v1868
      %v1900 = vpack.c.b16 %v1871, %v1870
      %v1901 = vpack.c.b16 %v1873, %v1872
      %v1902 = vpack.c.b16 %v1875, %v1874
      %v1903 = vpack.c.b16 %v1877, %v1876
      %v1904 = vpack.c.b16 %v1879, %v1878
      %v1905 = vpack.c.b16 %v1881, %v1880
      %v1906 = vpack.c.b16 %v1883, %v1882
      %v1907 = vpack.c.b16 %v1885, %v1884
      %v1908 = vpack.c.b16 %v1887, %v1886
      %v1909 = vpack.c.b16 %v1889, %v1888
      %v1910 = vpack.c.b16 %v1891, %v1890
      %v1911 = vpack.c.b16 %v1893, %v1892
      %v1912 = vpack.c.b16 %v1895, %v1894
      %v1913 = vpack.c.b16 %v1897, %v1896
      %1914 = vrot.lane.b32.xlu0 %v1898, 12
      %v1915 = vpop.permute.xlu0 %1914
      %1916 = vrot.lane.b32.xlu0 %v1899, 12
      %v1917 = vpop.permute.xlu0 %1916
      %1918 = vrot.lane.b32.xlu0 %v1900, 12
      %v1919 = vpop.permute.xlu0 %1918
      %1920 = vrot.lane.b32.xlu0 %v1901, 12
      %v1921 = vpop.permute.xlu0 %1920
      %1922 = vrot.lane.b32.xlu0 %v1902, 12
      %v1923 = vpop.permute.xlu0 %1922
      %1924 = vrot.lane.b32.xlu0 %v1903, 12
      %v1925 = vpop.permute.xlu0 %1924
      %1926 = vrot.lane.b32.xlu0 %v1904, 12
      %v1927 = vpop.permute.xlu0 %1926
      %1928 = vrot.lane.b32.xlu0 %v1905, 12
      %v1929 = vpop.permute.xlu0 %1928
      %1930 = vrot.lane.b32.xlu0 %v1906, 12
      %v1931 = vpop.permute.xlu0 %1930
      %1932 = vrot.lane.b32.xlu0 %v1907, 12
      %v1933 = vpop.permute.xlu0 %1932
      %1934 = vrot.lane.b32.xlu0 %v1908, 12
      %v1935 = vpop.permute.xlu0 %1934
      %1936 = vrot.lane.b32.xlu0 %v1909, 12
      %v1937 = vpop.permute.xlu0 %1936
      %1938 = vrot.lane.b32.xlu0 %v1910, 12
      %v1939 = vpop.permute.xlu0 %1938
      %1940 = vrot.lane.b32.xlu0 %v1911, 12
      %v1941 = vpop.permute.xlu0 %1940
      %1942 = vrot.lane.b32.xlu0 %v1912, 12
      %v1943 = vpop.permute.xlu0 %1942
      %1944 = vrot.lane.b32.xlu0 %v1913, 12
      %v1945 = vpop.permute.xlu0 %1944
      %v1978 = vunpack.c.l.b16 %v1241
      %v1979 = vunpack.c.l.b16 %v1242
      %v1980 = vunpack.c.l.b16 %v1243
      %v1981 = vunpack.c.l.b16 %v1244
      %v1982 = vunpack.c.l.b16 %v1245
      %v1983 = vunpack.c.l.b16 %v1246
      %v1984 = vunpack.c.l.b16 %v1247
      %v1985 = vunpack.c.l.b16 %v1248
      %v1986 = vunpack.c.l.b16 %v1249
      %v1987 = vunpack.c.l.b16 %v1250
      %v1988 = vunpack.c.l.b16 %v1251
      %v1989 = vunpack.c.l.b16 %v1252
      %v1990 = vunpack.c.l.b16 %v1253
      %v1991 = vunpack.c.l.b16 %v1254
      %v1992 = vunpack.c.l.b16 %v1255
      %v1993 = vunpack.c.l.b16 %v1256
      %v1994 = vunpack.c.l.b16 %v1257
      %v1995 = vunpack.c.l.b16 %v1258
      %v1996 = vunpack.c.l.b16 %v1259
      %v1997 = vunpack.c.l.b16 %v1260
      %v1998 = vunpack.c.l.b16 %v1261
      %v1999 = vunpack.c.l.b16 %v1262
      %v2000 = vunpack.c.l.b16 %v1263
      %v2001 = vunpack.c.l.b16 %v1264
      %v2002 = vunpack.c.l.b16 %v1265
      %v2003 = vunpack.c.l.b16 %v1266
      %v2004 = vunpack.c.l.b16 %v1267
      %v2005 = vunpack.c.l.b16 %v1268
      %v2006 = vunpack.c.l.b16 %v1269
      %v2007 = vunpack.c.l.b16 %v1270
      %v2008 = vunpack.c.l.b16 %v1271
      %v2009 = vunpack.c.l.b16 %v1272
      %v2010 = vpack.c.b16 %v1979, %v1978
      %v2011 = vpack.c.b16 %v1981, %v1980
      %v2012 = vpack.c.b16 %v1983, %v1982
      %v2013 = vpack.c.b16 %v1985, %v1984
      %v2014 = vpack.c.b16 %v1987, %v1986
      %v2015 = vpack.c.b16 %v1989, %v1988
      %v2016 = vpack.c.b16 %v1991, %v1990
      %v2017 = vpack.c.b16 %v1993, %v1992
      %v2018 = vpack.c.b16 %v1995, %v1994
      %v2019 = vpack.c.b16 %v1997, %v1996
      %v2020 = vpack.c.b16 %v1999, %v1998
      %v2021 = vpack.c.b16 %v2001, %v2000
      %v2022 = vpack.c.b16 %v2003, %v2002
      %v2023 = vpack.c.b16 %v2005, %v2004
      %v2024 = vpack.c.b16 %v2007, %v2006
      %v2025 = vpack.c.b16 %v2009, %v2008
      %2026 = vrot.lane.b32.xlu0 %v2010, 16
      %v2027 = vpop.permute.xlu0 %2026
      %2028 = vrot.lane.b32.xlu0 %v2011, 16
      %v2029 = vpop.permute.xlu0 %2028
      %2030 = vrot.lane.b32.xlu0 %v2012, 16
      %v2031 = vpop.permute.xlu0 %2030
      %2032 = vrot.lane.b32.xlu0 %v2013, 16
      %v2033 = vpop.permute.xlu0 %2032
      %2034 = vrot.lane.b32.xlu0 %v2014, 16
      %v2035 = vpop.permute.xlu0 %2034
      %2036 = vrot.lane.b32.xlu0 %v2015, 16
      %v2037 = vpop.permute.xlu0 %2036
      %2038 = vrot.lane.b32.xlu0 %v2016, 16
      %v2039 = vpop.permute.xlu0 %2038
      %2040 = vrot.lane.b32.xlu0 %v2017, 16
      %v2041 = vpop.permute.xlu0 %2040
      %2042 = vrot.lane.b32.xlu0 %v2018, 16
      %v2043 = vpop.permute.xlu0 %2042
      %2044 = vrot.lane.b32.xlu0 %v2019, 16
      %v2045 = vpop.permute.xlu0 %2044
      %2046 = vrot.lane.b32.xlu0 %v2020, 16
      %v2047 = vpop.permute.xlu0 %2046
      %2048 = vrot.lane.b32.xlu0 %v2021, 16
      %v2049 = vpop.permute.xlu0 %2048
      %2050 = vrot.lane.b32.xlu0 %v2022, 16
      %v2051 = vpop.permute.xlu0 %2050
      %2052 = vrot.lane.b32.xlu0 %v2023, 16
      %v2053 = vpop.permute.xlu0 %2052
      %2054 = vrot.lane.b32.xlu0 %v2024, 16
      %v2055 = vpop.permute.xlu0 %2054
      %2056 = vrot.lane.b32.xlu0 %v2025, 16
      %v2057 = vpop.permute.xlu0 %2056
      %v2090 = vunpack.c.l.b16 %v1305
      %v2091 = vunpack.c.l.b16 %v1306
      %v2092 = vunpack.c.l.b16 %v1307
      %v2093 = vunpack.c.l.b16 %v1308
      %v2094 = vunpack.c.l.b16 %v1309
      %v2095 = vunpack.c.l.b16 %v1310
      %v2096 = vunpack.c.l.b16 %v1311
      %v2097 = vunpack.c.l.b16 %v1312
      %v2098 = vunpack.c.l.b16 %v1313
      %v2099 = vunpack.c.l.b16 %v1314
      %v2100 = vunpack.c.l.b16 %v1315
      %v2101 = vunpack.c.l.b16 %v1316
      %v2102 = vunpack.c.l.b16 %v1317
      %v2103 = vunpack.c.l.b16 %v1318
      %v2104 = vunpack.c.l.b16 %v1319
      %v2105 = vunpack.c.l.b16 %v1320
      %v2106 = vunpack.c.l.b16 %v1321
      %v2107 = vunpack.c.l.b16 %v1322
      %v2108 = vunpack.c.l.b16 %v1323
      %v2109 = vunpack.c.l.b16 %v1324
      %v2110 = vunpack.c.l.b16 %v1325
      %v2111 = vunpack.c.l.b16 %v1326
      %v2112 = vunpack.c.l.b16 %v1327
      %v2113 = vunpack.c.l.b16 %v1328
      %v2114 = vunpack.c.l.b16 %v1329
      %v2115 = vunpack.c.l.b16 %v1330
      %v2116 = vunpack.c.l.b16 %v1331
      %v2117 = vunpack.c.l.b16 %v1332
      %v2118 = vunpack.c.l.b16 %v1333
      %v2119 = vunpack.c.l.b16 %v1334
      %v2120 = vunpack.c.l.b16 %v1335
      %v2121 = vunpack.c.l.b16 %v1336
      %v2122 = vpack.c.b16 %v2091, %v2090
      %v2123 = vpack.c.b16 %v2093, %v2092
      %v2124 = vpack.c.b16 %v2095, %v2094
      %v2125 = vpack.c.b16 %v2097, %v2096
      %v2126 = vpack.c.b16 %v2099, %v2098
      %v2127 = vpack.c.b16 %v2101, %v2100
      %v2128 = vpack.c.b16 %v2103, %v2102
      %v2129 = vpack.c.b16 %v2105, %v2104
      %v2130 = vpack.c.b16 %v2107, %v2106
      %v2131 = vpack.c.b16 %v2109, %v2108
      %v2132 = vpack.c.b16 %v2111, %v2110
      %v2133 = vpack.c.b16 %v2113, %v2112
      %v2134 = vpack.c.b16 %v2115, %v2114
      %v2135 = vpack.c.b16 %v2117, %v2116
      %v2136 = vpack.c.b16 %v2119, %v2118
      %v2137 = vpack.c.b16 %v2121, %v2120
      %2138 = vrot.lane.b32.xlu0 %v2122, 20
      %v2139 = vpop.permute.xlu0 %2138
      %2140 = vrot.lane.b32.xlu0 %v2123, 20
      %v2141 = vpop.permute.xlu0 %2140
      %2142 = vrot.lane.b32.xlu0 %v2124, 20
      %v2143 = vpop.permute.xlu0 %2142
      %2144 = vrot.lane.b32.xlu0 %v2125, 20
      %v2145 = vpop.permute.xlu0 %2144
      %2146 = vrot.lane.b32.xlu0 %v2126, 20
      %v2147 = vpop.permute.xlu0 %2146
      %2148 = vrot.lane.b32.xlu0 %v2127, 20
      %v2149 = vpop.permute.xlu0 %2148
      %2150 = vrot.lane.b32.xlu0 %v2128, 20
      %v2151 = vpop.permute.xlu0 %2150
      %2152 = vrot.lane.b32.xlu0 %v2129, 20
      %v2153 = vpop.permute.xlu0 %2152
      %2154 = vrot.lane.b32.xlu0 %v2130, 20
      %v2155 = vpop.permute.xlu0 %2154
      %2156 = vrot.lane.b32.xlu0 %v2131, 20
      %v2157 = vpop.permute.xlu0 %2156
      %2158 = vrot.lane.b32.xlu0 %v2132, 20
      %v2159 = vpop.permute.xlu0 %2158
      %2160 = vrot.lane.b32.xlu0 %v2133, 20
      %v2161 = vpop.permute.xlu0 %2160
      %2162 = vrot.lane.b32.xlu0 %v2134, 20
      %v2163 = vpop.permute.xlu0 %2162
      %2164 = vrot.lane.b32.xlu0 %v2135, 20
      %v2165 = vpop.permute.xlu0 %2164
      %2166 = vrot.lane.b32.xlu0 %v2136, 20
      %v2167 = vpop.permute.xlu0 %2166
      %2168 = vrot.lane.b32.xlu0 %v2137, 20
      %v2169 = vpop.permute.xlu0 %2168
      %v2202 = vunpack.c.l.b16 %v1370
      %v2203 = vunpack.c.l.b16 %v1371
      %v2204 = vunpack.c.l.b16 %v1372
      %v2205 = vunpack.c.l.b16 %v1373
      %v2206 = vunpack.c.l.b16 %v1374
      %v2207 = vunpack.c.l.b16 %v1375
      %v2208 = vunpack.c.l.b16 %v1376
      %v2209 = vunpack.c.l.b16 %v1377
      %v2210 = vunpack.c.l.b16 %v1378
      %v2211 = vunpack.c.l.b16 %v1379
      %v2212 = vunpack.c.l.b16 %v1380
      %v2213 = vunpack.c.l.b16 %v1381
      %v2214 = vunpack.c.l.b16 %v1382
      %v2215 = vunpack.c.l.b16 %v1383
      %v2216 = vunpack.c.l.b16 %v1384
      %v2217 = vunpack.c.l.b16 %v1385
      %v2218 = vunpack.c.l.b16 %v1386
      %v2219 = vunpack.c.l.b16 %v1387
      %v2220 = vunpack.c.l.b16 %v1388
      %v2221 = vunpack.c.l.b16 %v1389
      %v2222 = vunpack.c.l.b16 %v1390
      %v2223 = vunpack.c.l.b16 %v1391
      %v2224 = vunpack.c.l.b16 %v1392
      %v2225 = vunpack.c.l.b16 %v1393
      %v2226 = vunpack.c.l.b16 %v1394
      %v2227 = vunpack.c.l.b16 %v1395
      %v2228 = vunpack.c.l.b16 %v1396
      %v2229 = vunpack.c.l.b16 %v1397
      %v2230 = vunpack.c.l.b16 %v1398
      %v2231 = vunpack.c.l.b16 %v1399
      %v2232 = vunpack.c.l.b16 %v1400
      %v2233 = vunpack.c.l.b16 %v1401
      %v2234 = vpack.c.b16 %v2203, %v2202
      %v2235 = vpack.c.b16 %v2205, %v2204
      %v2236 = vpack.c.b16 %v2207, %v2206
      %v2237 = vpack.c.b16 %v2209, %v2208
      %v2238 = vpack.c.b16 %v2211, %v2210
      %v2239 = vpack.c.b16 %v2213, %v2212
      %v2240 = vpack.c.b16 %v2215, %v2214
      %v2241 = vpack.c.b16 %v2217, %v2216
      %v2242 = vpack.c.b16 %v2219, %v2218
      %v2243 = vpack.c.b16 %v2221, %v2220
      %v2244 = vpack.c.b16 %v2223, %v2222
      %v2245 = vpack.c.b16 %v2225, %v2224
      %v2246 = vpack.c.b16 %v2227, %v2226
      %v2247 = vpack.c.b16 %v2229, %v2228
      %v2248 = vpack.c.b16 %v2231, %v2230
      %v2249 = vpack.c.b16 %v2233, %v2232
      %2250 = vrot.lane.b32.xlu0 %v2234, 24
      %v2251 = vpop.permute.xlu0 %2250
      %2252 = vrot.lane.b32.xlu0 %v2235, 24
      %v2253 = vpop.permute.xlu0 %2252
      %2254 = vrot.lane.b32.xlu0 %v2236, 24
      %v2255 = vpop.permute.xlu0 %2254
      %2256 = vrot.lane.b32.xlu0 %v2237, 24
      %v2257 = vpop.permute.xlu0 %2256
      %2258 = vrot.lane.b32.xlu0 %v2238, 24
      %v2259 = vpop.permute.xlu0 %2258
      %2260 = vrot.lane.b32.xlu0 %v2239, 24
      %v2261 = vpop.permute.xlu0 %2260
      %2262 = vrot.lane.b32.xlu0 %v2240, 24
      %v2263 = vpop.permute.xlu0 %2262
      %2264 = vrot.lane.b32.xlu0 %v2241, 24
      %v2265 = vpop.permute.xlu0 %2264
      %2266 = vrot.lane.b32.xlu0 %v2242, 24
      %v2267 = vpop.permute.xlu0 %2266
      %2268 = vrot.lane.b32.xlu0 %v2243, 24
      %v2269 = vpop.permute.xlu0 %2268
      %2270 = vrot.lane.b32.xlu0 %v2244, 24
      %v2271 = vpop.permute.xlu0 %2270
      %2272 = vrot.lane.b32.xlu0 %v2245, 24
      %v2273 = vpop.permute.xlu0 %2272
      %2274 = vrot.lane.b32.xlu0 %v2246, 24
      %v2275 = vpop.permute.xlu0 %2274
      %2276 = vrot.lane.b32.xlu0 %v2247, 24
      %v2277 = vpop.permute.xlu0 %2276
      %2278 = vrot.lane.b32.xlu0 %v2248, 24
      %v2279 = vpop.permute.xlu0 %2278
      %2280 = vrot.lane.b32.xlu0 %v2249, 24
      %v2281 = vpop.permute.xlu0 %2280
      %v2314 = vunpack.c.l.b16 %v1434
      %v2315 = vunpack.c.l.b16 %v1435
      %v2316 = vunpack.c.l.b16 %v1436
      %v2317 = vunpack.c.l.b16 %v1437
      %v2318 = vunpack.c.l.b16 %v1438
      %v2319 = vunpack.c.l.b16 %v1439
      %v2320 = vunpack.c.l.b16 %v1440
      %v2321 = vunpack.c.l.b16 %v1441
      %v2322 = vunpack.c.l.b16 %v1442
      %v2323 = vunpack.c.l.b16 %v1443
      %v2324 = vunpack.c.l.b16 %v1444
      %v2325 = vunpack.c.l.b16 %v1445
      %v2326 = vunpack.c.l.b16 %v1446
      %v2327 = vunpack.c.l.b16 %v1447
      %v2328 = vunpack.c.l.b16 %v1448
      %v2329 = vunpack.c.l.b16 %v1449
      %v2330 = vunpack.c.l.b16 %v1450
      %v2331 = vunpack.c.l.b16 %v1451
      %v2332 = vunpack.c.l.b16 %v1452
      %v2333 = vunpack.c.l.b16 %v1453
      %v2334 = vunpack.c.l.b16 %v1454
      %v2335 = vunpack.c.l.b16 %v1455
      %v2336 = vunpack.c.l.b16 %v1456
      %v2337 = vunpack.c.l.b16 %v1457
      %v2338 = vunpack.c.l.b16 %v1458
      %v2339 = vunpack.c.l.b16 %v1459
      %v2340 = vunpack.c.l.b16 %v1460
      %v2341 = vunpack.c.l.b16 %v1461
      %v2342 = vunpack.c.l.b16 %v1462
      %v2343 = vunpack.c.l.b16 %v1463
      %v2344 = vunpack.c.l.b16 %v1464
      %v2345 = vunpack.c.l.b16 %v1465
      %v2346 = vpack.c.b16 %v2315, %v2314
      %v2347 = vpack.c.b16 %v2317, %v2316
      %v2348 = vpack.c.b16 %v2319, %v2318
      %v2349 = vpack.c.b16 %v2321, %v2320
      %v2350 = vpack.c.b16 %v2323, %v2322
      %v2351 = vpack.c.b16 %v2325, %v2324
      %v2352 = vpack.c.b16 %v2327, %v2326
      %v2353 = vpack.c.b16 %v2329, %v2328
      %v2354 = vpack.c.b16 %v2331, %v2330
      %v2355 = vpack.c.b16 %v2333, %v2332
      %v2356 = vpack.c.b16 %v2335, %v2334
      %v2357 = vpack.c.b16 %v2337, %v2336
      %v2358 = vpack.c.b16 %v2339, %v2338
      %v2359 = vpack.c.b16 %v2341, %v2340
      %v2360 = vpack.c.b16 %v2343, %v2342
      %v2361 = vpack.c.b16 %v2345, %v2344
      %2362 = vrot.lane.b32.xlu0 %v2346, 28
      %v2363 = vpop.permute.xlu0 %2362
      %2364 = vrot.lane.b32.xlu0 %v2347, 28
      %v2365 = vpop.permute.xlu0 %2364
      %2366 = vrot.lane.b32.xlu0 %v2348, 28
      %v2367 = vpop.permute.xlu0 %2366
      %2368 = vrot.lane.b32.xlu0 %v2349, 28
      %v2369 = vpop.permute.xlu0 %2368
      %2370 = vrot.lane.b32.xlu0 %v2350, 28
      %v2371 = vpop.permute.xlu0 %2370
      %2372 = vrot.lane.b32.xlu0 %v2351, 28
      %v2373 = vpop.permute.xlu0 %2372
      %2374 = vrot.lane.b32.xlu0 %v2352, 28
      %v2375 = vpop.permute.xlu0 %2374
      %2376 = vrot.lane.b32.xlu0 %v2353, 28
      %v2377 = vpop.permute.xlu0 %2376
      %2378 = vrot.lane.b32.xlu0 %v2354, 28
      %v2379 = vpop.permute.xlu0 %2378
      %2380 = vrot.lane.b32.xlu0 %v2355, 28
      %v2381 = vpop.permute.xlu0 %2380
      %2382 = vrot.lane.b32.xlu0 %v2356, 28
      %v2383 = vpop.permute.xlu0 %2382
      %2384 = vrot.lane.b32.xlu0 %v2357, 28
      %v2385 = vpop.permute.xlu0 %2384
      %2386 = vrot.lane.b32.xlu0 %v2358, 28
      %v2387 = vpop.permute.xlu0 %2386
      %2388 = vrot.lane.b32.xlu0 %v2359, 28
      %v2389 = vpop.permute.xlu0 %2388
      %2390 = vrot.lane.b32.xlu0 %v2360, 28
      %v2391 = vpop.permute.xlu0 %2390
      %2392 = vrot.lane.b32.xlu0 %v2361, 28
      %v2393 = vpop.permute.xlu0 %2392
      %v2426 = vunpack.c.l.b16 %v1498
      %v2427 = vunpack.c.l.b16 %v1499
      %v2428 = vunpack.c.l.b16 %v1500
      %v2429 = vunpack.c.l.b16 %v1501
      %v2430 = vunpack.c.l.b16 %v1502
      %v2431 = vunpack.c.l.b16 %v1503
      %v2432 = vunpack.c.l.b16 %v1504
      %v2433 = vunpack.c.l.b16 %v1505
      %v2434 = vunpack.c.l.b16 %v1506
      %v2435 = vunpack.c.l.b16 %v1507
      %v2436 = vunpack.c.l.b16 %v1508
      %v2437 = vunpack.c.l.b16 %v1509
      %v2438 = vunpack.c.l.b16 %v1510
      %v2439 = vunpack.c.l.b16 %v1511
      %v2440 = vunpack.c.l.b16 %v1512
      %v2441 = vunpack.c.l.b16 %v1513
      %v2442 = vunpack.c.l.b16 %v1514
      %v2443 = vunpack.c.l.b16 %v1515
      %v2444 = vunpack.c.l.b16 %v1516
      %v2445 = vunpack.c.l.b16 %v1517
      %v2446 = vunpack.c.l.b16 %v1518
      %v2447 = vunpack.c.l.b16 %v1519
      %v2448 = vunpack.c.l.b16 %v1520
      %v2449 = vunpack.c.l.b16 %v1521
      %v2450 = vunpack.c.l.b16 %v1522
      %v2451 = vunpack.c.l.b16 %v1523
      %v2452 = vunpack.c.l.b16 %v1524
      %v2453 = vunpack.c.l.b16 %v1525
      %v2454 = vunpack.c.l.b16 %v1526
      %v2455 = vunpack.c.l.b16 %v1527
      %v2456 = vunpack.c.l.b16 %v1528
      %v2457 = vunpack.c.l.b16 %v1529
      %v2458 = vpack.c.b16 %v2427, %v2426
      %v2459 = vpack.c.b16 %v2429, %v2428
      %v2460 = vpack.c.b16 %v2431, %v2430
      %v2461 = vpack.c.b16 %v2433, %v2432
      %v2462 = vpack.c.b16 %v2435, %v2434
      %v2463 = vpack.c.b16 %v2437, %v2436
      %v2464 = vpack.c.b16 %v2439, %v2438
      %v2465 = vpack.c.b16 %v2441, %v2440
      %v2466 = vpack.c.b16 %v2443, %v2442
      %v2467 = vpack.c.b16 %v2445, %v2444
      %v2468 = vpack.c.b16 %v2447, %v2446
      %v2469 = vpack.c.b16 %v2449, %v2448
      %v2470 = vpack.c.b16 %v2451, %v2450
      %v2471 = vpack.c.b16 %v2453, %v2452
      %v2472 = vpack.c.b16 %v2455, %v2454
      %v2473 = vpack.c.b16 %v2457, %v2456
      %2474 = vrot.lane.b32.xlu0 %v2458, 32
      %v2475 = vpop.permute.xlu0 %2474
      %2476 = vrot.lane.b32.xlu0 %v2459, 32
      %v2477 = vpop.permute.xlu0 %2476
      %2478 = vrot.lane.b32.xlu0 %v2460, 32
      %v2479 = vpop.permute.xlu0 %2478
      %2480 = vrot.lane.b32.xlu0 %v2461, 32
      %v2481 = vpop.permute.xlu0 %2480
      %2482 = vrot.lane.b32.xlu0 %v2462, 32
      %v2483 = vpop.permute.xlu0 %2482
      %2484 = vrot.lane.b32.xlu0 %v2463, 32
      %v2485 = vpop.permute.xlu0 %2484
      %2486 = vrot.lane.b32.xlu0 %v2464, 32
      %v2487 = vpop.permute.xlu0 %2486
      %2488 = vrot.lane.b32.xlu0 %v2465, 32
      %v2489 = vpop.permute.xlu0 %2488
      %2490 = vrot.lane.b32.xlu0 %v2466, 32
      %v2491 = vpop.permute.xlu0 %2490
      %2492 = vrot.lane.b32.xlu0 %v2467, 32
      %v2493 = vpop.permute.xlu0 %2492
      %2494 = vrot.lane.b32.xlu0 %v2468, 32
      %v2495 = vpop.permute.xlu0 %2494
      %2496 = vrot.lane.b32.xlu0 %v2469, 32
      %v2497 = vpop.permute.xlu0 %2496
      %2498 = vrot.lane.b32.xlu0 %v2470, 32
      %v2499 = vpop.permute.xlu0 %2498
      %2500 = vrot.lane.b32.xlu0 %v2471, 32
      %v2501 = vpop.permute.xlu0 %2500
      %2502 = vrot.lane.b32.xlu0 %v2472, 32
      %v2503 = vpop.permute.xlu0 %2502
      %2504 = vrot.lane.b32.xlu0 %v2473, 32
      %v2505 = vpop.permute.xlu0 %2504
      %v2508 = vsel %vm591, %v1594, %v1691
      %v2511 = vsel %vm591, %v1595, %v1693
      %v2514 = vsel %vm591, %v1596, %v1695
      %v2517 = vsel %vm591, %v1597, %v1697
      %v2520 = vsel %vm591, %v1598, %v1699
      %v2523 = vsel %vm591, %v1599, %v1701
      %v2526 = vsel %vm591, %v1600, %v1703
      %v2529 = vsel %vm591, %v1601, %v1705
      %v2532 = vsel %vm591, %v1602, %v1707
      %v2535 = vsel %vm591, %v1603, %v1709
      %v2538 = vsel %vm591, %v1604, %v1711
      %v2541 = vsel %vm591, %v1605, %v1713
      %v2544 = vsel %vm591, %v1606, %v1715
      %v2547 = vsel %vm591, %v1607, %v1717
      %v2550 = vsel %vm591, %v1608, %v1719
      %v2553 = vsel %vm591, %v1609, %v1721
      %vm2554 = vcmask 64512
      %v2556 = vsel %vm2554, %v2508, %v1803
      %v2558 = vsel %vm2554, %v2511, %v1805
      %v2560 = vsel %vm2554, %v2514, %v1807
      %v2562 = vsel %vm2554, %v2517, %v1809
      %v2564 = vsel %vm2554, %v2520, %v1811
      %v2566 = vsel %vm2554, %v2523, %v1813
      %v2568 = vsel %vm2554, %v2526, %v1815
      %v2570 = vsel %vm2554, %v2529, %v1817
      %v2572 = vsel %vm2554, %v2532, %v1819
      %v2574 = vsel %vm2554, %v2535, %v1821
      %v2576 = vsel %vm2554, %v2538, %v1823
      %v2578 = vsel %vm2554, %v2541, %v1825
      %v2580 = vsel %vm2554, %v2544, %v1827
      %v2582 = vsel %vm2554, %v2547, %v1829
      %v2584 = vsel %vm2554, %v2550, %v1831
      %v2586 = vsel %vm2554, %v2553, %v1833
      %vm2587 = vcmask 97280
      %v2589 = vsel %vm2587, %v2556, %v1915
      %v2591 = vsel %vm2587, %v2558, %v1917
      %v2593 = vsel %vm2587, %v2560, %v1919
      %v2595 = vsel %vm2587, %v2562, %v1921
      %v2597 = vsel %vm2587, %v2564, %v1923
      %v2599 = vsel %vm2587, %v2566, %v1925
      %v2601 = vsel %vm2587, %v2568, %v1927
      %v2603 = vsel %vm2587, %v2570, %v1929
      %v2605 = vsel %vm2587, %v2572, %v1931
      %v2607 = vsel %vm2587, %v2574, %v1933
      %v2609 = vsel %vm2587, %v2576, %v1935
      %v2611 = vsel %vm2587, %v2578, %v1937
      %v2613 = vsel %vm2587, %v2580, %v1939
      %v2615 = vsel %vm2587, %v2582, %v1941
      %v2617 = vsel %vm2587, %v2584, %v1943
      %v2619 = vsel %vm2587, %v2586, %v1945
      %vm2620 = vcmask 130048
      %v2622 = vsel %vm2620, %v2589, %v2027
      %v2624 = vsel %vm2620, %v2591, %v2029
      %v2626 = vsel %vm2620, %v2593, %v2031
      %v2628 = vsel %vm2620, %v2595, %v2033
      %v2630 = vsel %vm2620, %v2597, %v2035
      %v2632 = vsel %vm2620, %v2599, %v2037
      %v2634 = vsel %vm2620, %v2601, %v2039
      %v2636 = vsel %vm2620, %v2603, %v2041
      %v2638 = vsel %vm2620, %v2605, %v2043
      %v2640 = vsel %vm2620, %v2607, %v2045
      %v2642 = vsel %vm2620, %v2609, %v2047
      %v2644 = vsel %vm2620, %v2611, %v2049
      %v2646 = vsel %vm2620, %v2613, %v2051
      %v2648 = vsel %vm2620, %v2615, %v2053
      %v2650 = vsel %vm2620, %v2617, %v2055
      %v2652 = vsel %vm2620, %v2619, %v2057
      %vm2653 = vcmask 162816
      %v2655 = vsel %vm2653, %v2622, %v2139
      %v2657 = vsel %vm2653, %v2624, %v2141
      %v2659 = vsel %vm2653, %v2626, %v2143
      %v2661 = vsel %vm2653, %v2628, %v2145
      %v2663 = vsel %vm2653, %v2630, %v2147
      %v2665 = vsel %vm2653, %v2632, %v2149
      %v2667 = vsel %vm2653, %v2634, %v2151
      %v2669 = vsel %vm2653, %v2636, %v2153
      %v2671 = vsel %vm2653, %v2638, %v2155
      %v2673 = vsel %vm2653, %v2640, %v2157
      %v2675 = vsel %vm2653, %v2642, %v2159
      %v2677 = vsel %vm2653, %v2644, %v2161
      %v2679 = vsel %vm2653, %v2646, %v2163
      %v2681 = vsel %vm2653, %v2648, %v2165
      %v2683 = vsel %vm2653, %v2650, %v2167
      %v2685 = vsel %vm2653, %v2652, %v2169
      %vm2686 = vcmask 195584
      %v2688 = vsel %vm2686, %v2655, %v2251
      %v2690 = vsel %vm2686, %v2657, %v2253
      %v2692 = vsel %vm2686, %v2659, %v2255
      %v2694 = vsel %vm2686, %v2661, %v2257
      %v2696 = vsel %vm2686, %v2663, %v2259
      %v2698 = vsel %vm2686, %v2665, %v2261
      %v2700 = vsel %vm2686, %v2667, %v2263
      %v2702 = vsel %vm2686, %v2669, %v2265
      %v2704 = vsel %vm2686, %v2671, %v2267
      %v2706 = vsel %vm2686, %v2673, %v2269
      %v2708 = vsel %vm2686, %v2675, %v2271
      %v2710 = vsel %vm2686, %v2677, %v2273
      %v2712 = vsel %vm2686, %v2679, %v2275
      %v2714 = vsel %vm2686, %v2681, %v2277
      %v2716 = vsel %vm2686, %v2683, %v2279
      %v2718 = vsel %vm2686, %v2685, %v2281
      %vm2719 = vcmask 228352
      %v2721 = vsel %vm2719, %v2688, %v2363
      %v2723 = vsel %vm2719, %v2690, %v2365
      %v2725 = vsel %vm2719, %v2692, %v2367
      %v2727 = vsel %vm2719, %v2694, %v2369
      %v2729 = vsel %vm2719, %v2696, %v2371
      %v2731 = vsel %vm2719, %v2698, %v2373
      %v2733 = vsel %vm2719, %v2700, %v2375
      %v2735 = vsel %vm2719, %v2702, %v2377
      %v2737 = vsel %vm2719, %v2704, %v2379
      %v2739 = vsel %vm2719, %v2706, %v2381
      %v2741 = vsel %vm2719, %v2708, %v2383
      %v2743 = vsel %vm2719, %v2710, %v2385
      %v2745 = vsel %vm2719, %v2712, %v2387
      %v2747 = vsel %vm2719, %v2714, %v2389
      %v2749 = vsel %vm2719, %v2716, %v2391
      %v2751 = vsel %vm2719, %v2718, %v2393
      %vm2752 = vcmask 261120
      %v2754 = vsel %vm2752, %v2721, %v2475
      %v2756 = vsel %vm2752, %v2723, %v2477
      %v2758 = vsel %vm2752, %v2725, %v2479
      %v2760 = vsel %vm2752, %v2727, %v2481
      %v2762 = vsel %vm2752, %v2729, %v2483
      %v2764 = vsel %vm2752, %v2731, %v2485
      %v2766 = vsel %vm2752, %v2733, %v2487
      %v2768 = vsel %vm2752, %v2735, %v2489
      %v2770 = vsel %vm2752, %v2737, %v2491
      %v2772 = vsel %vm2752, %v2739, %v2493
      %v2774 = vsel %vm2752, %v2741, %v2495
      %v2776 = vsel %vm2752, %v2743, %v2497
      %v2778 = vsel %vm2752, %v2745, %v2499
      %v2780 = vsel %vm2752, %v2747, %v2501
      %v2782 = vsel %vm2752, %v2749, %v2503
      %v2784 = vsel %vm2752, %v2751, %v2505
      %v2785 = vld [vmem:[%s7] sm:$0xf]
      %v2786 = vld [vmem:[%s7 + $0x4] sm:$0xf]
      %v2787 = vld [vmem:[%s7 + $0x8] sm:$0xf]
      %v2788 = vld [vmem:[%s7 + $0xc] sm:$0xf]
      %v2789 = vld [vmem:[%s7 + $0x10] sm:$0x3]
      %v2790 = vld [vmem:[%s8] sm:$0x1]
      %v2792 = vperm.slane %v2790, 0
      %v2799 = vunpack.c.l.b16 %v2785
      %v2800 = vunpack.c.l.b16 %v2786
      %v2801 = vunpack.c.l.b16 %v2787
      %v2802 = vunpack.c.l.b16 %v2788
      %v2803 = vunpack.c.l.b16 %v2789
      %v2804 = vpack.c.b16 %v2800, %v2799
      %v2805 = vpack.c.b16 %v2802, %v2801
      %v2806 = vpack.c.b16 %v2803, %v2803
      %vm2809 = vcmask 293888
      %v2810 = vsel %vm2809, %v2754, 0
      %v2812 = vsel %vm2809, %v2756, 0
      %v2814 = vsel %vm2809, %v2758, 0
      %v2816 = vsel %vm2809, %v2760, 0
      %v2818 = vsel %vm2809, %v2762, 0
      %v2820 = vsel %vm2809, %v2764, 0
      %v2822 = vsel %vm2809, %v2766, 0
      %v2824 = vsel %vm2809, %v2768, 0
      %v2826 = vsel %vm2809, %v2770, 0
      %v2828 = vsel %vm2809, %v2772, 0
      %v2830 = vsel %vm2809, %v2774, 0
      %v2832 = vsel %vm2809, %v2776, 0
      %v2834 = vsel %vm2809, %v2778, 0
      %v2836 = vsel %vm2809, %v2780, 0
      %v2838 = vsel %vm2809, %v2782, 0
      %v2840 = vsel %vm2809, %v2784, 0
      %v2843 = vsel %vm640, %v2806, 0
      %2845 = vmatpush.bf16.msra.mxu0 0
      %2846 = vmatpush.bf16.msra.mxu0 0
      %2847 = vmatpush.bf16.msra.mxu0 0
      %2848 = vmatpush.bf16.msra.mxu0 0
      %2849 = vmatpush.bf16.msra.mxu0 0
      %2850 = vmatpush.bf16.msra.mxu0 %v2843
      %2851 = vmatpush.bf16.msra.mxu0 %v2805
      %2852 = vmatpush.bf16.msra.mxu0 %v2804
      %2853 = vmatmul.bf16.gmra.mxu0 %v2810
      %v2854 = vpop.f32.mrf.mxu0
      %v2855 = vadd.f32 %v2792, %v2854
      %v2856 = vpop.f32.mrf.mxu0
      %v2857 = vadd.f32 %v2792, %v2856
      %2858 = vmatmul.bf16.gmra.mxu0 %v2812
      %v2859 = vpop.f32.mrf.mxu0
      %v2860 = vadd.f32 %v2792, %v2859
      %v2861 = vpop.f32.mrf.mxu0
      %v2862 = vadd.f32 %v2792, %v2861
      %2863 = vmatmul.bf16.gmra.mxu0 %v2814
      %v2864 = vpop.f32.mrf.mxu0
      %v2865 = vadd.f32 %v2792, %v2864
      %v2866 = vpop.f32.mrf.mxu0
      %v2867 = vadd.f32 %v2792, %v2866
      %2868 = vmatmul.bf16.gmra.mxu0 %v2816
      %v2869 = vpop.f32.mrf.mxu0
      %v2870 = vadd.f32 %v2792, %v2869
      %v2871 = vpop.f32.mrf.mxu0
      %v2872 = vadd.f32 %v2792, %v2871
      %2873 = vmatmul.bf16.gmra.mxu0 %v2818
      %v2874 = vpop.f32.mrf.mxu0
      %v2875 = vadd.f32 %v2792, %v2874
      %v2876 = vpop.f32.mrf.mxu0
      %v2877 = vadd.f32 %v2792, %v2876
      %2878 = vmatmul.bf16.gmra.mxu0 %v2820
      %v2879 = vpop.f32.mrf.mxu0
      %v2880 = vadd.f32 %v2792, %v2879
      %v2881 = vpop.f32.mrf.mxu0
      %v2882 = vadd.f32 %v2792, %v2881
      %2883 = vmatmul.bf16.gmra.mxu0 %v2822
      %v2884 = vpop.f32.mrf.mxu0
      %v2885 = vadd.f32 %v2792, %v2884
      %v2886 = vpop.f32.mrf.mxu0
      %v2887 = vadd.f32 %v2792, %v2886
      %2888 = vmatmul.bf16.gmra.mxu0 %v2824
      %v2889 = vpop.f32.mrf.mxu0
      %v2890 = vadd.f32 %v2792, %v2889
      %v2891 = vpop.f32.mrf.mxu0
      %v2892 = vadd.f32 %v2792, %v2891
      %2893 = vmatmul.bf16.gmra.mxu0 %v2826
      %v2894 = vpop.f32.mrf.mxu0
      %v2895 = vadd.f32 %v2792, %v2894
      %v2896 = vpop.f32.mrf.mxu0
      %v2897 = vadd.f32 %v2792, %v2896
      %2898 = vmatmul.bf16.gmra.mxu0 %v2828
      %v2899 = vpop.f32.mrf.mxu0
      %v2900 = vadd.f32 %v2792, %v2899
      %v2901 = vpop.f32.mrf.mxu0
      %v2902 = vadd.f32 %v2792, %v2901
      %2903 = vmatmul.bf16.gmra.mxu0 %v2830
      %v2904 = vpop.f32.mrf.mxu0
      %v2905 = vadd.f32 %v2792, %v2904
      %v2906 = vpop.f32.mrf.mxu0
      %v2907 = vadd.f32 %v2792, %v2906
      %2908 = vmatmul.bf16.gmra.mxu0 %v2832
      %v2909 = vpop.f32.mrf.mxu0
      %v2910 = vadd.f32 %v2792, %v2909
      %v2911 = vpop.f32.mrf.mxu0
      %v2912 = vadd.f32 %v2792, %v2911
      %2913 = vmatmul.bf16.gmra.mxu0 %v2834
      %v2914 = vpop.f32.mrf.mxu0
      %v2915 = vadd.f32 %v2792, %v2914
      %v2916 = vpop.f32.mrf.mxu0
      %v2917 = vadd.f32 %v2792, %v2916
      %2918 = vmatmul.bf16.gmra.mxu0 %v2836
      %v2919 = vpop.f32.mrf.mxu0
      %v2920 = vadd.f32 %v2792, %v2919
      %v2921 = vpop.f32.mrf.mxu0
      %v2922 = vadd.f32 %v2792, %v2921
      %2923 = vmatmul.bf16.gmra.mxu0 %v2838
      %v2924 = vpop.f32.mrf.mxu0
      %v2925 = vadd.f32 %v2792, %v2924
      %v2926 = vpop.f32.mrf.mxu0
      %v2927 = vadd.f32 %v2792, %v2926
      %2928 = vmatmul.bf16.gmra.mxu0 %v2840
      %v2929 = vpop.f32.mrf.mxu0
      %v2930 = vadd.f32 %v2792, %v2929
      %v2931 = vpop.f32.mrf.mxu0
      %v2932 = vadd.f32 %v2792, %v2931
      %2933 = vdwg.mxu0
      %2934 = vst.msk [vmem:[%s332] sm:$0xff] %vm591, %v2855
      %2935 = vst.msk [vmem:[%s332 + $0x8] sm:$0xff] %vm591, %v2857
      %2936 = vst.msk [vmem:[%s332 + $0x10] sm:$0xff] %vm591, %v2860
      %2937 = vst.msk [vmem:[%s332 + $0x18] sm:$0xff] %vm591, %v2862
      %2938 = vst.msk [vmem:[%s332 + $0x20] sm:$0xff] %vm591, %v2865
      %2939 = vst.msk [vmem:[%s332 + $0x28] sm:$0xff] %vm591, %v2867
      %2940 = vst.msk [vmem:[%s332 + $0x30] sm:$0xff] %vm591, %v2870
      %2941 = vst.msk [vmem:[%s332 + $0x38] sm:$0xff] %vm591, %v2872
      %2942 = vst.msk [vmem:[%s332 + $0x40] sm:$0xff] %vm591, %v2875
      %2943 = vst.msk [vmem:[%s332 + $0x48] sm:$0xff] %vm591, %v2877
      %2944 = vst.msk [vmem:[%s332 + $0x50] sm:$0xff] %vm591, %v2880
      %2945 = vst.msk [vmem:[%s332 + $0x58] sm:$0xff] %vm591, %v2882
      %2946 = vst.msk [vmem:[%s332 + $0x60] sm:$0xff] %vm591, %v2885
      %2947 = vst.msk [vmem:[%s332 + $0x68] sm:$0xff] %vm591, %v2887
      %2948 = vst.msk [vmem:[%s332 + $0x70] sm:$0xff] %vm591, %v2890
      %2949 = vst.msk [vmem:[%s332 + $0x78] sm:$0xff] %vm591, %v2892
      %2950 = vst.msk [vmem:[%s332 + $0x80] sm:$0xff] %vm591, %v2895
      %2951 = vst.msk [vmem:[%s332 + $0x88] sm:$0xff] %vm591, %v2897
      %2952 = vst.msk [vmem:[%s332 + $0x90] sm:$0xff] %vm591, %v2900
      %2953 = vst.msk [vmem:[%s332 + $0x98] sm:$0xff] %vm591, %v2902
      %2954 = vst.msk [vmem:[%s332 + $0xa0] sm:$0xff] %vm591, %v2905
      %2955 = vst.msk [vmem:[%s332 + $0xa8] sm:$0xff] %vm591, %v2907
      %2956 = vst.msk [vmem:[%s332 + $0xb0] sm:$0xff] %vm591, %v2910
      %2957 = vst.msk [vmem:[%s332 + $0xb8] sm:$0xff] %vm591, %v2912
      %2958 = vst.msk [vmem:[%s332 + $0xc0] sm:$0xff] %vm591, %v2915
      %2959 = vst.msk [vmem:[%s332 + $0xc8] sm:$0xff] %vm591, %v2917
      %2960 = vst.msk [vmem:[%s332 + $0xd0] sm:$0xff] %vm591, %v2920
      %2961 = vst.msk [vmem:[%s332 + $0xd8] sm:$0xff] %vm591, %v2922
      %2962 = vst.msk [vmem:[%s332 + $0xe0] sm:$0xff] %vm591, %v2925
      %2963 = vst.msk [vmem:[%s332 + $0xe8] sm:$0xff] %vm591, %v2927
      %2964 = vst.msk [vmem:[%s332 + $0xf0] sm:$0xff] %vm591, %v2930
      %2965 = vst.msk [vmem:[%s332 + $0xf8] sm:$0xff] %vm591, %v2932
      %p2966 = scmp.lt.s32.totalorder %s20, 1
      %s2967 = scalar_select %p2966, %s20, 1
      %s2968 = smul.addr %s2967, 32
      %s2969 = smul.addr %s2968, 8
      %s2970 = scalar_lea.vmem %s9, %s2969
      // Predicated region
      $region57: #{upblocks_forward.3} parent=55 // pred_check
        %p2971 = pneg %p232
      $region58: #{upblocks_forward.3} parent=55 // pred_check_branch
        %2973 = sbr.rel (%p2971) target = $region60
      $region59: #{upblocks_forward.3} parent=55 // pred_region
        _
      $region60: #{upblocks_forward.3} parent=55 // pred_fallthru
        _
    $region56: #{upblocks_forward.3} parent=5 // pred_fallthru
      _
    %p2974 = scmp.le.s32.totalorder 2, %s15
    // Predicated region
    $region61: #{upblocks_forward.3} parent=5 // pred_check
      %p2975 = pneg %p2974
    $region62: #{upblocks_forward.3} parent=5 // pred_check_branch
      %2977 = sbr.rel (%p2975) target = $region64
    $region63: #{upblocks_forward.3} parent=5 // pred_region
      %s2978 = ssub.s32 %s15, 2
      // Predicated region
      $region65: #{upblocks_forward.3} parent=63 // pred_check
        %p2979 = pneg %p238
      $region66: #{upblocks_forward.3} parent=63 // pred_check_branch
        %2981 = sbr.rel (%p2979) target = $region68
      $region67: #{upblocks_forward.3} parent=63 // pred_region
        %p2982 = scmp.lt.s32.totalorder %s21, 1
        %s2983 = scalar_select %p2982, %s21, 1
        %s2984 = smul.addr %s2983, 32
        %s2985 = smul.addr %s2984, 8
        %s2986 = scalar_lea.vmem %s9, %s2985
      $region68: #{upblocks_forward.3} parent=63 // pred_fallthru
        _
    $region64: #{upblocks_forward.3} parent=5 // pred_fallthru
      _
  $region6: #{upblocks_forward.3} parent=0 // loop_footer
    %s19 = sadd.s32 1, %s15
  $region7: #{upblocks_forward.3} parent=0 // loop_footer_branch
    %14 = sbr.rel target = $region3
  $region8: #{upblocks_forward.3} parent=0 // loop_exit
    _

// kernel: upblocks_forward.4
$region0: #{upblocks_forward.4}
  #allocation0 [shape = 'u32[]', space=smem, size = 0x4, offset = 0x4, fixed_abs, tag = 'smem constant byte address 0x4 - core index']
  #allocation1 [shape = 'u32[72,128]{1,0:T(1,128)}', space=vmem, size = 0x9000, scoped, tag = 'internal scratch']
  #allocation2 [shape = 'f32[18,18,4]{2,1,0:T(8,128)}', space=vmem, size = 0x36000, scoped, tag = 'scratch operand']
  %s0 = inlined_call_operand.vmem [shape: f32[2,16,16,8], index: 0, kind: input, shape index: {}]
  %s1 = inlined_call_operand.vmem [shape: f32[1,8], index: 1, kind: input, shape index: {}]
  %s2 = inlined_call_operand.vmem [shape: f32[1,8], index: 2, kind: input, shape index: {}]
  %s3 = inlined_call_operand.vmem [shape: f32[1,8], index: 3, kind: input, shape index: {}]
  %s4 = inlined_call_operand.vmem [shape: bf16[8,4], index: 4, kind: input, shape index: {}]
  %s5 = inlined_call_operand.vmem [shape: f32[1,4], index: 5, kind: input, shape index: {}]
  %s6 = inlined_call_operand.vmem [shape: f32[1,4], index: 6, kind: input, shape index: {}]
  %s7 = inlined_call_operand.vmem [shape: bf16[36,4], index: 7, kind: input, shape index: {}]
  %s8 = inlined_call_operand.vmem [shape: f32[1,4], index: 8, kind: input, shape index: {}]
  %s9 = inlined_call_operand.vmem [shape: f32[2,16,16,4], index: 9, kind: output, shape index: {}]
  %s10 = sld [smem:[#allocation0]]
  $region69: #{upblocks_forward.4} parent=0
    _
  %s12 = ssub.s32 1, %s10
  %s13 = scalar_select 0, %s12, %s10
  loop: start=0, step=1, limit=4
  $region2: #{upblocks_forward.4} parent=0 // loop_pre_header
    _
  $region3: #{upblocks_forward.4} parent=0 // loop_header
    %s15 = sphi 0, %s19
    %p16 = scmp.ge.s32.totalorder %s15, 4
    %s25 = sphi 0, %s27
    %s28 = sphi 0, %s25
    %s29 = sphi 0, %s28
    %s45 = sphi 0, %s29
    %s49 = sphi 0, %s49
    %s51 = sphi 0, %s49
    %s52 = sphi 0, %s51
    %s66 = sphi 0, %s52
    %s70 = sphi 0, %s70
    %s72 = sphi 0, %s70
    %s73 = sphi 0, %s72
    %s87 = sphi 0, %s73
    %s91 = sphi 0, %s91
    %s93 = sphi 0, %s91
    %s94 = sphi 0, %s93
    %s108 = sphi 0, %s94
    %s112 = sphi 0, %s112
    %s114 = sphi 0, %s112
    %s115 = sphi 0, %s114
    %s129 = sphi 0, %s115
    %s133 = sphi 0, %s133
    %s135 = sphi 0, %s133
    %s136 = sphi 0, %s135
    %s150 = sphi 0, %s136
    %s154 = sphi 0, %s154
    %s156 = sphi 0, %s154
    %s157 = sphi 0, %s156
    %s171 = sphi 0, %s157
    %s175 = sphi 0, %s175
    %s177 = sphi 0, %s175
    %s178 = sphi 0, %s177
    %s192 = sphi 0, %s178
    %s196 = sphi 0, %s196
    %s198 = sphi 0, %s196
    %s199 = sphi 0, %s198
    %s213 = sphi 0, %s199
    %s219 = sphi 0, %s221
    %s222 = sphi 0, %s219
    %s223 = sphi 0, %s222
    %s239 = sphi 0, %s223
  $region4: #{upblocks_forward.4} parent=0 // loop_header_branch
    %18 = sbr.rel (%p16) target = $region8
  $region5: #{upblocks_forward.4} parent=0 // loop_body
    %s20 = ssub.s32 %s15, 1
    %s21 = ssub.s32 %s15, 2
    %s22 = sadd.s32 %s15, 1
    %s23 = ssub.s32 %s15, %s22
    %p24 = scmp.eq.s32.totalorder %s23, 0
    %s26 = sadd.s32 %s25, 1
    %s27 = scalar_select %p24, %s25, %s26
    %p30 = pneg %p24
    %p31 = scmp.eq.s32.totalorder %s15, 1
    %p32 = por %p30, %p31
    %p33 = scmp.ne.s32.totalorder %s25, %s28
    %p34 = scmp.eq.s32.totalorder %s15, 0
    %p35 = por %p33, %p34
    %p36 = scmp.ne.s32.totalorder %s25, %s28
    %p37 = scmp.eq.s32.totalorder %s20, 1
    %p38 = por %p36, %p37
    %p39 = scmp.ne.s32.totalorder %s28, %s29
    %p40 = scmp.eq.s32.totalorder %s20, 0
    %p41 = por %p39, %p40
    %p42 = scmp.ne.s32.totalorder %s28, %s29
    %p43 = scmp.eq.s32.totalorder %s21, 1
    %p44 = por %p42, %p43
    %p46 = scmp.ne.s32.totalorder %s29, %s45
    %p47 = scmp.eq.s32.totalorder %s21, 0
    %p48 = por %p46, %p47
    %s50 = sadd.s32 %s49, 1
    %p53 = scmp.eq.s32.totalorder %s15, 1
    %p54 = scmp.ne.s32.totalorder %s49, %s51
    %p55 = scmp.eq.s32.totalorder %s15, 0
    %p56 = por %p54, %p55
    %p57 = scmp.ne.s32.totalorder %s49, %s51
    %p58 = scmp.eq.s32.totalorder %s20, 1
    %p59 = por %p57, %p58
    %p60 = scmp.ne.s32.totalorder %s51, %s52
    %p61 = scmp.eq.s32.totalorder %s20, 0
    %p62 = por %p60, %p61
    %p63 = scmp.ne.s32.totalorder %s51, %s52
    %p64 = scmp.eq.s32.totalorder %s21, 1
    %p65 = por %p63, %p64
    %p67 = scmp.ne.s32.totalorder %s52, %s66
    %p68 = scmp.eq.s32.totalorder %s21, 0
    %p69 = por %p67, %p68
    %s71 = sadd.s32 %s70, 1
    %p74 = scmp.eq.s32.totalorder %s15, 1
    %p75 = scmp.ne.s32.totalorder %s70, %s72
    %p76 = scmp.eq.s32.totalorder %s15, 0
    %p77 = por %p75, %p76
    %p78 = scmp.ne.s32.totalorder %s70, %s72
    %p79 = scmp.eq.s32.totalorder %s20, 1
    %p80 = por %p78, %p79
    %p81 = scmp.ne.s32.totalorder %s72, %s73
    %p82 = scmp.eq.s32.totalorder %s20, 0
    %p83 = por %p81, %p82
    %p84 = scmp.ne.s32.totalorder %s72, %s73
    %p85 = scmp.eq.s32.totalorder %s21, 1
    %p86 = por %p84, %p85
    %p88 = scmp.ne.s32.totalorder %s73, %s87
    %p89 = scmp.eq.s32.totalorder %s21, 0
    %p90 = por %p88, %p89
    %s92 = sadd.s32 %s91, 1
    %p95 = scmp.eq.s32.totalorder %s15, 1
    %p96 = scmp.ne.s32.totalorder %s91, %s93
    %p97 = scmp.eq.s32.totalorder %s15, 0
    %p98 = por %p96, %p97
    %p99 = scmp.ne.s32.totalorder %s91, %s93
    %p100 = scmp.eq.s32.totalorder %s20, 1
    %p101 = por %p99, %p100
    %p102 = scmp.ne.s32.totalorder %s93, %s94
    %p103 = scmp.eq.s32.totalorder %s20, 0
    %p104 = por %p102, %p103
    %p105 = scmp.ne.s32.totalorder %s93, %s94
    %p106 = scmp.eq.s32.totalorder %s21, 1
    %p107 = por %p105, %p106
    %p109 = scmp.ne.s32.totalorder %s94, %s108
    %p110 = scmp.eq.s32.totalorder %s21, 0
    %p111 = por %p109, %p110
    %s113 = sadd.s32 %s112, 1
    %p116 = scmp.eq.s32.totalorder %s15, 1
    %p117 = scmp.ne.s32.totalorder %s112, %s114
    %p118 = scmp.eq.s32.totalorder %s15, 0
    %p119 = por %p117, %p118
    %p120 = scmp.ne.s32.totalorder %s112, %s114
    %p121 = scmp.eq.s32.totalorder %s20, 1
    %p122 = por %p120, %p121
    %p123 = scmp.ne.s32.totalorder %s114, %s115
    %p124 = scmp.eq.s32.totalorder %s20, 0
    %p125 = por %p123, %p124
    %p126 = scmp.ne.s32.totalorder %s114, %s115
    %p127 = scmp.eq.s32.totalorder %s21, 1
    %p128 = por %p126, %p127
    %p130 = scmp.ne.s32.totalorder %s115, %s129
    %p131 = scmp.eq.s32.totalorder %s21, 0
    %p132 = por %p130, %p131
    %s134 = sadd.s32 %s133, 1
    %p137 = scmp.eq.s32.totalorder %s15, 1
    %p138 = scmp.ne.s32.totalorder %s133, %s135
    %p139 = scmp.eq.s32.totalorder %s15, 0
    %p140 = por %p138, %p139
    %p141 = scmp.ne.s32.totalorder %s133, %s135
    %p142 = scmp.eq.s32.totalorder %s20, 1
    %p143 = por %p141, %p142
    %p144 = scmp.ne.s32.totalorder %s135, %s136
    %p145 = scmp.eq.s32.totalorder %s20, 0
    %p146 = por %p144, %p145
    %p147 = scmp.ne.s32.totalorder %s135, %s136
    %p148 = scmp.eq.s32.totalorder %s21, 1
    %p149 = por %p147, %p148
    %p151 = scmp.ne.s32.totalorder %s136, %s150
    %p152 = scmp.eq.s32.totalorder %s21, 0
    %p153 = por %p151, %p152
    %s155 = sadd.s32 %s154, 1
    %p158 = scmp.eq.s32.totalorder %s15, 1
    %p159 = scmp.ne.s32.totalorder %s154, %s156
    %p160 = scmp.eq.s32.totalorder %s15, 0
    %p161 = por %p159, %p160
    %p162 = scmp.ne.s32.totalorder %s154, %s156
    %p163 = scmp.eq.s32.totalorder %s20, 1
    %p164 = por %p162, %p163
    %p165 = scmp.ne.s32.totalorder %s156, %s157
    %p166 = scmp.eq.s32.totalorder %s20, 0
    %p167 = por %p165, %p166
    %p168 = scmp.ne.s32.totalorder %s156, %s157
    %p169 = scmp.eq.s32.totalorder %s21, 1
    %p170 = por %p168, %p169
    %p172 = scmp.ne.s32.totalorder %s157, %s171
    %p173 = scmp.eq.s32.totalorder %s21, 0
    %p174 = por %p172, %p173
    %s176 = sadd.s32 %s175, 1
    %p179 = scmp.eq.s32.totalorder %s15, 1
    %p180 = scmp.ne.s32.totalorder %s175, %s177
    %p181 = scmp.eq.s32.totalorder %s15, 0
    %p182 = por %p180, %p181
    %p183 = scmp.ne.s32.totalorder %s175, %s177
    %p184 = scmp.eq.s32.totalorder %s20, 1
    %p185 = por %p183, %p184
    %p186 = scmp.ne.s32.totalorder %s177, %s178
    %p187 = scmp.eq.s32.totalorder %s20, 0
    %p188 = por %p186, %p187
    %p189 = scmp.ne.s32.totalorder %s177, %s178
    %p190 = scmp.eq.s32.totalorder %s21, 1
    %p191 = por %p189, %p190
    %p193 = scmp.ne.s32.totalorder %s178, %s192
    %p194 = scmp.eq.s32.totalorder %s21, 0
    %p195 = por %p193, %p194
    %s197 = sadd.s32 %s196, 1
    %p200 = scmp.eq.s32.totalorder %s15, 1
    %p201 = scmp.ne.s32.totalorder %s196, %s198
    %p202 = scmp.eq.s32.totalorder %s15, 0
    %p203 = por %p201, %p202
    %p204 = scmp.ne.s32.totalorder %s196, %s198
    %p205 = scmp.eq.s32.totalorder %s20, 1
    %p206 = por %p204, %p205
    %p207 = scmp.ne.s32.totalorder %s198, %s199
    %p208 = scmp.eq.s32.totalorder %s20, 0
    %p209 = por %p207, %p208
    %p210 = scmp.ne.s32.totalorder %s198, %s199
    %p211 = scmp.eq.s32.totalorder %s21, 1
    %p212 = por %p210, %p211
    %p214 = scmp.ne.s32.totalorder %s199, %s213
    %p215 = scmp.eq.s32.totalorder %s21, 0
    %p216 = por %p214, %p215
    %s217 = ssub.s32 %s15, %s22
    %p218 = scmp.eq.s32.totalorder %s217, 0
    %s220 = sadd.s32 %s219, 1
    %s221 = scalar_select %p218, %s219, %s220
    %p224 = pneg %p218
    %p225 = scmp.eq.s32.totalorder %s15, 1
    %p226 = por %p224, %p225
    %p227 = scmp.ne.s32.totalorder %s219, %s222
    %p228 = scmp.eq.s32.totalorder %s15, 0
    %p229 = por %p227, %p228
    %p230 = scmp.ne.s32.totalorder %s219, %s222
    %p231 = scmp.eq.s32.totalorder %s20, 1
    %p232 = por %p230, %p231
    %p233 = scmp.ne.s32.totalorder %s222, %s223
    %p234 = scmp.eq.s32.totalorder %s20, 0
    %p235 = por %p233, %p234
    %p236 = scmp.ne.s32.totalorder %s222, %s223
    %p237 = scmp.eq.s32.totalorder %s21, 1
    %p238 = por %p236, %p237
    %p240 = scmp.ne.s32.totalorder %s223, %s239
    %p241 = scmp.eq.s32.totalorder %s21, 0
    %p242 = por %p240, %p241
    %p243 = scmp.le.s32.totalorder 1, %s15
    %p244 = scmp.lt.s32.totalorder %s15, 3
    %p245 = pnand %p243, %p244
    %p246 = pneg %p245
    // Predicated region
    $region9: #{upblocks_forward.4} parent=5 // pred_check
      _
    $region10: #{upblocks_forward.4} parent=5 // pred_check_branch
      %248 = sbr.rel (%p245) target = $region12
    $region11: #{upblocks_forward.4} parent=5 // pred_region
      %s249 = ssub.s32 %s15, 1
      // Predicated region
      $region13: #{upblocks_forward.4} parent=11 // pred_check
        %p250 = pneg %p62
      $region14: #{upblocks_forward.4} parent=11 // pred_check_branch
        %252 = sbr.rel (%p250) target = $region16
      $region15: #{upblocks_forward.4} parent=11 // pred_region
        _
      $region16: #{upblocks_forward.4} parent=11 // pred_fallthru
        _
      // Predicated region
      $region17: #{upblocks_forward.4} parent=11 // pred_check
        %p253 = pneg %p83
      $region18: #{upblocks_forward.4} parent=11 // pred_check_branch
        %255 = sbr.rel (%p253) target = $region20
      $region19: #{upblocks_forward.4} parent=11 // pred_region
        _
      $region20: #{upblocks_forward.4} parent=11 // pred_fallthru
        _
      // Predicated region
      $region21: #{upblocks_forward.4} parent=11 // pred_check
        %p256 = pneg %p104
      $region22: #{upblocks_forward.4} parent=11 // pred_check_branch
        %258 = sbr.rel (%p256) target = $region24
      $region23: #{upblocks_forward.4} parent=11 // pred_region
        _
      $region24: #{upblocks_forward.4} parent=11 // pred_fallthru
        _
      // Predicated region
      $region25: #{upblocks_forward.4} parent=11 // pred_check
        %p259 = pneg %p125
      $region26: #{upblocks_forward.4} parent=11 // pred_check_branch
        %261 = sbr.rel (%p259) target = $region28
      $region27: #{upblocks_forward.4} parent=11 // pred_region
        _
      $region28: #{upblocks_forward.4} parent=11 // pred_fallthru
        _
      // Predicated region
      $region29: #{upblocks_forward.4} parent=11 // pred_check
        %p262 = pneg %p146
      $region30: #{upblocks_forward.4} parent=11 // pred_check_branch
        %264 = sbr.rel (%p262) target = $region32
      $region31: #{upblocks_forward.4} parent=11 // pred_region
        _
      $region32: #{upblocks_forward.4} parent=11 // pred_fallthru
        _
      // Predicated region
      $region33: #{upblocks_forward.4} parent=11 // pred_check
        %p265 = pneg %p167
      $region34: #{upblocks_forward.4} parent=11 // pred_check_branch
        %267 = sbr.rel (%p265) target = $region36
      $region35: #{upblocks_forward.4} parent=11 // pred_region
        _
      $region36: #{upblocks_forward.4} parent=11 // pred_fallthru
        _
      // Predicated region
      $region37: #{upblocks_forward.4} parent=11 // pred_check
        %p268 = pneg %p188
      $region38: #{upblocks_forward.4} parent=11 // pred_check_branch
        %270 = sbr.rel (%p268) target = $region40
      $region39: #{upblocks_forward.4} parent=11 // pred_region
        _
      $region40: #{upblocks_forward.4} parent=11 // pred_fallthru
        _
      // Predicated region
      $region41: #{upblocks_forward.4} parent=11 // pred_check
        %p271 = pneg %p209
      $region42: #{upblocks_forward.4} parent=11 // pred_check_branch
        %273 = sbr.rel (%p271) target = $region44
      $region43: #{upblocks_forward.4} parent=11 // pred_region
        _
      $region44: #{upblocks_forward.4} parent=11 // pred_fallthru
        _
    $region12: #{upblocks_forward.4} parent=5 // pred_fallthru
      _
    %p274 = scmp.lt.s32.totalorder %s15, 2
    // Predicated region
    $region45: #{upblocks_forward.4} parent=5 // pred_check
      %p275 = pneg %p274
    $region46: #{upblocks_forward.4} parent=5 // pred_check_branch
      %277 = sbr.rel (%p275) target = $region48
    $region47: #{upblocks_forward.4} parent=5 // pred_region
      // Predicated region
      $region49: #{upblocks_forward.4} parent=47 // pred_check
        %p278 = pneg %p35
      $region50: #{upblocks_forward.4} parent=47 // pred_check_branch
        %280 = sbr.rel (%p278) target = $region52
      $region51: #{upblocks_forward.4} parent=47 // pred_region
        %p281 = scmp.lt.s32.totalorder %s15, 1
        %s282 = scalar_select %p281, %s15, 1
        %s283 = smul.addr %s282, 32
        %s284 = smul.addr %s283, 8
        %s285 = scalar_lea.vmem %s0, %s284
      $region52: #{upblocks_forward.4} parent=47 // pred_fallthru
        _
    $region48: #{upblocks_forward.4} parent=5 // pred_fallthru
      _
    %p286 = scmp.le.s32.totalorder 1, %s15
    %p287 = scmp.lt.s32.totalorder %s15, 3
    %p288 = pnand %p286, %p287
    %p289 = pneg %p288
    // Predicated region
    $region53: #{upblocks_forward.4} parent=5 // pred_check
      _
    $region54: #{upblocks_forward.4} parent=5 // pred_check_branch
      %291 = sbr.rel (%p288) target = $region56
    $region55: #{upblocks_forward.4} parent=5 // pred_region
      %s292 = ssub.s32 %s15, 1
      %p293 = scmp.lt.s32.totalorder %s20, 1
      %s294 = scalar_select %p293, %s20, 1
      %s295 = smul.addr %s294, 32
      %s296 = smul.addr %s295, 8
      %s297 = scalar_lea.vmem %s0, %s296
      %p298 = pneg %p41
      %p299 = pneg %p38
      %p300 = pneg %p62
      %p301 = pneg %p59
      %p302 = pneg %p83
      %p303 = pneg %p80
      %p304 = pneg %p104
      %p305 = pneg %p101
      %p306 = pneg %p125
      %p307 = pneg %p122
      %p308 = pneg %p146
      %p309 = pneg %p143
      %p310 = pneg %p167
      %p311 = pneg %p164
      %p312 = pneg %p188
      %p313 = pneg %p185
      %p314 = pneg %p209
      %p315 = pneg %p206
      %p316 = pneg %p235
      %p317 = pneg %p232
      %p318 = scmp.lt.s32.totalorder %s20, 1
      %s319 = scalar_select %p318, %s20, 1
      %s320 = smul.addr %s319, 32
      %s321 = smul.addr %s320, 8
      %s322 = scalar_lea.vmem %s9, %s321
      %p323 = scmp.lt.s32.totalorder %s20, 1
      %s324 = scalar_select %p323, %s20, 1
      %s325 = smul.addr %s324, 32
      %s326 = smul.addr %s325, 8
      %s327 = scalar_lea.vmem %s0, %s326
      %p328 = scmp.lt.s32.totalorder %s20, 1
      %s329 = scalar_select %p328, %s20, 1
      %s330 = smul.addr %s329, 32
      %s331 = smul.addr %s330, 8
      %s332 = scalar_lea.vmem %s9, %s331
      %v334 = vld [vmem:[%s327] sm:$0xff]
      %v335 = vld [vmem:[%s327 + $0x8] sm:$0xff]
      %v336 = vld [vmem:[%s327 + $0x10] sm:$0xff]
      %v337 = vld [vmem:[%s327 + $0x18] sm:$0xff]
      %v338 = vld [vmem:[%s327 + $0x20] sm:$0xff]
      %v339 = vld [vmem:[%s327 + $0x28] sm:$0xff]
      %v340 = vld [vmem:[%s327 + $0x30] sm:$0xff]
      %v341 = vld [vmem:[%s327 + $0x38] sm:$0xff]
      %v342 = vld [vmem:[%s327 + $0x40] sm:$0xff]
      %v343 = vld [vmem:[%s327 + $0x48] sm:$0xff]
      %v344 = vld [vmem:[%s327 + $0x50] sm:$0xff]
      %v345 = vld [vmem:[%s327 + $0x58] sm:$0xff]
      %v346 = vld [vmem:[%s327 + $0x60] sm:$0xff]
      %v347 = vld [vmem:[%s327 + $0x68] sm:$0xff]
      %v348 = vld [vmem:[%s327 + $0x70] sm:$0xff]
      %v349 = vld [vmem:[%s327 + $0x78] sm:$0xff]
      %v350 = vld [vmem:[%s327 + $0x80] sm:$0xff]
      %v351 = vld [vmem:[%s327 + $0x88] sm:$0xff]
      %v352 = vld [vmem:[%s327 + $0x90] sm:$0xff]
      %v353 = vld [vmem:[%s327 + $0x98] sm:$0xff]
      %v354 = vld [vmem:[%s327 + $0xa0] sm:$0xff]
      %v355 = vld [vmem:[%s327 + $0xa8] sm:$0xff]
      %v356 = vld [vmem:[%s327 + $0xb0] sm:$0xff]
      %v357 = vld [vmem:[%s327 + $0xb8] sm:$0xff]
      %v358 = vld [vmem:[%s327 + $0xc0] sm:$0xff]
      %v359 = vld [vmem:[%s327 + $0xc8] sm:$0xff]
      %v360 = vld [vmem:[%s327 + $0xd0] sm:$0xff]
      %v361 = vld [vmem:[%s327 + $0xd8] sm:$0xff]
      %v362 = vld [vmem:[%s327 + $0xe0] sm:$0xff]
      %v363 = vld [vmem:[%s327 + $0xe8] sm:$0xff]
      %v364 = vld [vmem:[%s327 + $0xf0] sm:$0xff]
      %v365 = vld [vmem:[%s327 + $0xf8] sm:$0xff]
      %v366 = vld [vmem:[%s1] sm:$0x1]
      %v368 = vperm.slane %v366, 0
      %v370 = vmul.f32 %v334, %v368
      %v371 = vmul.f32 %v335, %v368
      %v372 = vmul.f32 %v336, %v368
      %v373 = vmul.f32 %v337, %v368
      %v374 = vmul.f32 %v338, %v368
      %v375 = vmul.f32 %v339, %v368
      %v376 = vmul.f32 %v340, %v368
      %v377 = vmul.f32 %v341, %v368
      %v378 = vmul.f32 %v342, %v368
      %v379 = vmul.f32 %v343, %v368
      %v380 = vmul.f32 %v344, %v368
      %v381 = vmul.f32 %v345, %v368
      %v382 = vmul.f32 %v346, %v368
      %v383 = vmul.f32 %v347, %v368
      %v384 = vmul.f32 %v348, %v368
      %v385 = vmul.f32 %v349, %v368
      %v386 = vmul.f32 %v350, %v368
      %v387 = vmul.f32 %v351, %v368
      %v388 = vmul.f32 %v352, %v368
      %v389 = vmul.f32 %v353, %v368
      %v390 = vmul.f32 %v354, %v368
      %v391 = vmul.f32 %v355, %v368
      %v392 = vmul.f32 %v356, %v368
      %v393 = vmul.f32 %v357, %v368
      %v394 = vmul.f32 %v358, %v368
      %v395 = vmul.f32 %v359, %v368
      %v396 = vmul.f32 %v360, %v368
      %v397 = vmul.f32 %v361, %v368
      %v398 = vmul.f32 %v362, %v368
      %v399 = vmul.f32 %v363, %v368
      %v400 = vmul.f32 %v364, %v368
      %v401 = vmul.f32 %v365, %v368
      %v402 = vld [vmem:[%s2] sm:$0x1]
      %v404 = vperm.slane %v402, 0
      %v406 = vadd.f32 %v370, %v404
      %v407 = vadd.f32 %v371, %v404
      %v408 = vadd.f32 %v372, %v404
      %v409 = vadd.f32 %v373, %v404
      %v410 = vadd.f32 %v374, %v404
      %v411 = vadd.f32 %v375, %v404
      %v412 = vadd.f32 %v376, %v404
      %v413 = vadd.f32 %v377, %v404
      %v414 = vadd.f32 %v378, %v404
      %v415 = vadd.f32 %v379, %v404
      %v416 = vadd.f32 %v380, %v404
      %v417 = vadd.f32 %v381, %v404
      %v418 = vadd.f32 %v382, %v404
      %v419 = vadd.f32 %v383, %v404
      %v420 = vadd.f32 %v384, %v404
      %v421 = vadd.f32 %v385, %v404
      %v422 = vadd.f32 %v386, %v404
      %v423 = vadd.f32 %v387, %v404
      %v424 = vadd.f32 %v388, %v404
      %v425 = vadd.f32 %v389, %v404
      %v426 = vadd.f32 %v390, %v404
      %v427 = vadd.f32 %v391, %v404
      %v428 = vadd.f32 %v392, %v404
      %v429 = vadd.f32 %v393, %v404
      %v430 = vadd.f32 %v394, %v404
      %v431 = vadd.f32 %v395, %v404
      %v432 = vadd.f32 %v396, %v404
      %v433 = vadd.f32 %v397, %v404
      %v434 = vadd.f32 %v398, %v404
      %v435 = vadd.f32 %v399, %v404
      %v436 = vadd.f32 %v400, %v404
      %v437 = vadd.f32 %v401, %v404
      %v438 = vmax.f32 %v406, 0.0
      %v439 = vmax.f32 %v407, 0.0
      %v440 = vmax.f32 %v408, 0.0
      %v441 = vmax.f32 %v409, 0.0
      %v442 = vmax.f32 %v410, 0.0
      %v443 = vmax.f32 %v411, 0.0
      %v444 = vmax.f32 %v412, 0.0
      %v445 = vmax.f32 %v413, 0.0
      %v446 = vmax.f32 %v414, 0.0
      %v447 = vmax.f32 %v415, 0.0
      %v448 = vmax.f32 %v416, 0.0
      %v449 = vmax.f32 %v417, 0.0
      %v450 = vmax.f32 %v418, 0.0
      %v451 = vmax.f32 %v419, 0.0
      %v452 = vmax.f32 %v420, 0.0
      %v453 = vmax.f32 %v421, 0.0
      %v454 = vmax.f32 %v422, 0.0
      %v455 = vmax.f32 %v423, 0.0
      %v456 = vmax.f32 %v424, 0.0
      %v457 = vmax.f32 %v425, 0.0
      %v458 = vmax.f32 %v426, 0.0
      %v459 = vmax.f32 %v427, 0.0
      %v460 = vmax.f32 %v428, 0.0
      %v461 = vmax.f32 %v429, 0.0
      %v462 = vmax.f32 %v430, 0.0
      %v463 = vmax.f32 %v431, 0.0
      %v464 = vmax.f32 %v432, 0.0
      %v465 = vmax.f32 %v433, 0.0
      %v466 = vmax.f32 %v434, 0.0
      %v467 = vmax.f32 %v435, 0.0
      %v468 = vmax.f32 %v436, 0.0
      %v469 = vmax.f32 %v437, 0.0
      %v470 = vld [vmem:[%s3] sm:$0x1]
      %v471 = vmin.f32 %v406, 0.0
      %v472 = vmin.f32 %v407, 0.0
      %v473 = vmin.f32 %v408, 0.0
      %v474 = vmin.f32 %v409, 0.0
      %v475 = vmin.f32 %v410, 0.0
      %v476 = vmin.f32 %v411, 0.0
      %v477 = vmin.f32 %v412, 0.0
      %v478 = vmin.f32 %v413, 0.0
      %v479 = vmin.f32 %v414, 0.0
      %v480 = vmin.f32 %v415, 0.0
      %v481 = vmin.f32 %v416, 0.0
      %v482 = vmin.f32 %v417, 0.0
      %v483 = vmin.f32 %v418, 0.0
      %v484 = vmin.f32 %v419, 0.0
      %v485 = vmin.f32 %v420, 0.0
      %v486 = vmin.f32 %v421, 0.0
      %v487 = vmin.f32 %v422, 0.0
      %v488 = vmin.f32 %v423, 0.0
      %v489 = vmin.f32 %v424, 0.0
      %v490 = vmin.f32 %v425, 0.0
      %v491 = vmin.f32 %v426, 0.0
      %v492 = vmin.f32 %v427, 0.0
      %v493 = vmin.f32 %v428, 0.0
      %v494 = vmin.f32 %v429, 0.0
      %v495 = vmin.f32 %v430, 0.0
      %v496 = vmin.f32 %v431, 0.0
      %v497 = vmin.f32 %v432, 0.0
      %v498 = vmin.f32 %v433, 0.0
      %v499 = vmin.f32 %v434, 0.0
      %v500 = vmin.f32 %v435, 0.0
      %v501 = vmin.f32 %v436, 0.0
      %v502 = vmin.f32 %v437, 0.0
      %v504 = vperm.slane %v470, 0
      %v506 = vmul.f32 %v504, %v471
      %v507 = vmul.f32 %v504, %v472
      %v508 = vmul.f32 %v504, %v473
      %v509 = vmul.f32 %v504, %v474
      %v510 = vmul.f32 %v504, %v475
      %v511 = vmul.f32 %v504, %v476
      %v512 = vmul.f32 %v504, %v477
      %v513 = vmul.f32 %v504, %v478
      %v514 = vmul.f32 %v504, %v479
      %v515 = vmul.f32 %v504, %v480
      %v516 = vmul.f32 %v504, %v481
      %v517 = vmul.f32 %v504, %v482
      %v518 = vmul.f32 %v504, %v483
      %v519 = vmul.f32 %v504, %v484
      %v520 = vmul.f32 %v504, %v485
      %v521 = vmul.f32 %v504, %v486
      %v522 = vmul.f32 %v504, %v487
      %v523 = vmul.f32 %v504, %v488
      %v524 = vmul.f32 %v504, %v489
      %v525 = vmul.f32 %v504, %v490
      %v526 = vmul.f32 %v504, %v491
      %v527 = vmul.f32 %v504, %v492
      %v528 = vmul.f32 %v504, %v493
      %v529 = vmul.f32 %v504, %v494
      %v530 = vmul.f32 %v504, %v495
      %v531 = vmul.f32 %v504, %v496
      %v532 = vmul.f32 %v504, %v497
      %v533 = vmul.f32 %v504, %v498
      %v534 = vmul.f32 %v504, %v499
      %v535 = vmul.f32 %v504, %v500
      %v536 = vmul.f32 %v504, %v501
      %v537 = vmul.f32 %v504, %v502
      %v538 = vadd.f32 %v438, %v506
      %v539 = vadd.f32 %v439, %v507
      %v540 = vadd.f32 %v440, %v508
      %v541 = vadd.f32 %v441, %v509
      %v542 = vadd.f32 %v442, %v510
      %v543 = vadd.f32 %v443, %v511
      %v544 = vadd.f32 %v444, %v512
      %v545 = vadd.f32 %v445, %v513
      %v546 = vadd.f32 %v446, %v514
      %v547 = vadd.f32 %v447, %v515
      %v548 = vadd.f32 %v448, %v516
      %v549 = vadd.f32 %v449, %v517
      %v550 = vadd.f32 %v450, %v518
      %v551 = vadd.f32 %v451, %v519
      %v552 = vadd.f32 %v452, %v520
      %v553 = vadd.f32 %v453, %v521
      %v554 = vadd.f32 %v454, %v522
      %v555 = vadd.f32 %v455, %v523
      %v556 = vadd.f32 %v456, %v524
      %v557 = vadd.f32 %v457, %v525
      %v558 = vadd.f32 %v458, %v526
      %v559 = vadd.f32 %v459, %v527
      %v560 = vadd.f32 %v460, %v528
      %v561 = vadd.f32 %v461, %v529
      %v562 = vadd.f32 %v462, %v530
      %v563 = vadd.f32 %v463, %v531
      %v564 = vadd.f32 %v464, %v532
      %v565 = vadd.f32 %v465, %v533
      %v566 = vadd.f32 %v466, %v534
      %v567 = vadd.f32 %v467, %v535
      %v568 = vadd.f32 %v468, %v536
      %v569 = vadd.f32 %v469, %v537
      %v570 = vpack.c.bf16 %v539, %v538
      %v571 = vpack.c.bf16 %v541, %v540
      %v572 = vpack.c.bf16 %v543, %v542
      %v573 = vpack.c.bf16 %v545, %v544
      %v574 = vpack.c.bf16 %v547, %v546
      %v575 = vpack.c.bf16 %v549, %v548
      %v576 = vpack.c.bf16 %v551, %v550
      %v577 = vpack.c.bf16 %v553, %v552
      %v578 = vpack.c.bf16 %v555, %v554
      %v579 = vpack.c.bf16 %v557, %v556
      %v580 = vpack.c.bf16 %v559, %v558
      %v581 = vpack.c.bf16 %v561, %v560
      %v582 = vpack.c.bf16 %v563, %v562
      %v583 = vpack.c.bf16 %v565, %v564
      %v584 = vpack.c.bf16 %v567, %v566
      %v585 = vpack.c.bf16 %v569, %v568
      %v586 = vld [vmem:[%s4] sm:$0xf]
      %v587 = vld [vmem:[%s5] sm:$0x1]
      %v589 = vperm.slane %v587, 0
      %vm591 = vcmask 64512
      %v593 = vsel %vm591, %v570, 0
      %v596 = vsel %vm591, %v571, 0
      %v599 = vsel %vm591, %v572, 0
      %v602 = vsel %vm591, %v573, 0
      %v605 = vsel %vm591, %v574, 0
      %v608 = vsel %vm591, %v575, 0
      %v611 = vsel %vm591, %v576, 0
      %v614 = vsel %vm591, %v577, 0
      %v617 = vsel %vm591, %v578, 0
      %v620 = vsel %vm591, %v579, 0
      %v623 = vsel %vm591, %v580, 0
      %v626 = vsel %vm591, %v581, 0
      %v629 = vsel %vm591, %v582, 0
      %v632 = vsel %vm591, %v583, 0
      %v635 = vsel %vm591, %v584, 0
      %v638 = vsel %vm591, %v585, 0
      %vm640 = vcmask 1043456
      %v642 = vsel %vm640, %v586, 0
      %644 = vmatpush.bf16.msra.mxu0 0
      %645 = vmatpush.bf16.msra.mxu0 0
      %646 = vmatpush.bf16.msra.mxu0 0
      %647 = vmatpush.bf16.msra.mxu0 0
      %648 = vmatpush.bf16.msra.mxu0 0
      %649 = vmatpush.bf16.msra.mxu0 0
      %650 = vmatpush.bf16.msra.mxu0 0
      %651 = vmatpush.bf16.msra.mxu0 %v642
      %652 = vmatmul.bf16.gmra.mxu0 %v593
      %v653 = vpop.f32.mrf.mxu0
      %v654 = vadd.f32 %v589, %v653
      %v655 = vpop.f32.mrf.mxu0
      %v656 = vadd.f32 %v589, %v655
      %657 = vmatmul.bf16.gmra.mxu0 %v596
      %v658 = vpop.f32.mrf.mxu0
      %v659 = vadd.f32 %v589, %v658
      %v660 = vpop.f32.mrf.mxu0
      %v661 = vadd.f32 %v589, %v660
      %662 = vmatmul.bf16.gmra.mxu0 %v599
      %v663 = vpop.f32.mrf.mxu0
      %v664 = vadd.f32 %v589, %v663
      %v665 = vpop.f32.mrf.mxu0
      %v666 = vadd.f32 %v589, %v665
      %667 = vmatmul.bf16.gmra.mxu0 %v602
      %v668 = vpop.f32.mrf.mxu0
      %v669 = vadd.f32 %v589, %v668
      %v670 = vpop.f32.mrf.mxu0
      %v671 = vadd.f32 %v589, %v670
      %672 = vmatmul.bf16.gmra.mxu0 %v605
      %v673 = vpop.f32.mrf.mxu0
      %v674 = vadd.f32 %v589, %v673
      %v675 = vpop.f32.mrf.mxu0
      %v676 = vadd.f32 %v589, %v675
      %677 = vmatmul.bf16.gmra.mxu0 %v608
      %v678 = vpop.f32.mrf.mxu0
      %v679 = vadd.f32 %v589, %v678
      %v680 = vpop.f32.mrf.mxu0
      %v681 = vadd.f32 %v589, %v680
      %682 = vmatmul.bf16.gmra.mxu0 %v611
      %v683 = vpop.f32.mrf.mxu0
      %v684 = vadd.f32 %v589, %v683
      %v685 = vpop.f32.mrf.mxu0
      %v686 = vadd.f32 %v589, %v685
      %687 = vmatmul.bf16.gmra.mxu0 %v614
      %v688 = vpop.f32.mrf.mxu0
      %v689 = vadd.f32 %v589, %v688
      %v690 = vpop.f32.mrf.mxu0
      %v691 = vadd.f32 %v589, %v690
      %692 = vmatmul.bf16.gmra.mxu0 %v617
      %v693 = vpop.f32.mrf.mxu0
      %v694 = vadd.f32 %v589, %v693
      %v695 = vpop.f32.mrf.mxu0
      %v696 = vadd.f32 %v589, %v695
      %697 = vmatmul.bf16.gmra.mxu0 %v620
      %v698 = vpop.f32.mrf.mxu0
      %v699 = vadd.f32 %v589, %v698
      %v700 = vpop.f32.mrf.mxu0
      %v701 = vadd.f32 %v589, %v700
      %702 = vmatmul.bf16.gmra.mxu0 %v623
      %v703 = vpop.f32.mrf.mxu0
      %v704 = vadd.f32 %v589, %v703
      %v705 = vpop.f32.mrf.mxu0
      %v706 = vadd.f32 %v589, %v705
      %707 = vmatmul.bf16.gmra.mxu0 %v626
      %v708 = vpop.f32.mrf.mxu0
      %v709 = vadd.f32 %v589, %v708
      %v710 = vpop.f32.mrf.mxu0
      %v711 = vadd.f32 %v589, %v710
      %712 = vmatmul.bf16.gmra.mxu0 %v629
      %v713 = vpop.f32.mrf.mxu0
      %v714 = vadd.f32 %v589, %v713
      %v715 = vpop.f32.mrf.mxu0
      %v716 = vadd.f32 %v589, %v715
      %717 = vmatmul.bf16.gmra.mxu0 %v632
      %v718 = vpop.f32.mrf.mxu0
      %v719 = vadd.f32 %v589, %v718
      %v720 = vpop.f32.mrf.mxu0
      %v721 = vadd.f32 %v589, %v720
      %722 = vmatmul.bf16.gmra.mxu0 %v635
      %v723 = vpop.f32.mrf.mxu0
      %v724 = vadd.f32 %v589, %v723
      %v725 = vpop.f32.mrf.mxu0
      %v726 = vadd.f32 %v589, %v725
      %727 = vmatmul.bf16.gmra.mxu0 %v638
      %v728 = vpop.f32.mrf.mxu0
      %v729 = vadd.f32 %v589, %v728
      %v730 = vpop.f32.mrf.mxu0
      %v731 = vadd.f32 %v589, %v730
      %732 = vdwg.mxu0
      %v733 = vmax.f32 %v654, 0.0
      %v734 = vmax.f32 %v656, 0.0
      %v735 = vmax.f32 %v659, 0.0
      %v736 = vmax.f32 %v661, 0.0
      %v737 = vmax.f32 %v664, 0.0
      %v738 = vmax.f32 %v666, 0.0
      %v739 = vmax.f32 %v669, 0.0
      %v740 = vmax.f32 %v671, 0.0
      %v741 = vmax.f32 %v674, 0.0
      %v742 = vmax.f32 %v676, 0.0
      %v743 = vmax.f32 %v679, 0.0
      %v744 = vmax.f32 %v681, 0.0
      %v745 = vmax.f32 %v684, 0.0
      %v746 = vmax.f32 %v686, 0.0
      %v747 = vmax.f32 %v689, 0.0
      %v748 = vmax.f32 %v691, 0.0
      %v749 = vmax.f32 %v694, 0.0
      %v750 = vmax.f32 %v696, 0.0
      %v751 = vmax.f32 %v699, 0.0
      %v752 = vmax.f32 %v701, 0.0
      %v753 = vmax.f32 %v704, 0.0
      %v754 = vmax.f32 %v706, 0.0
      %v755 = vmax.f32 %v709, 0.0
      %v756 = vmax.f32 %v711, 0.0
      %v757 = vmax.f32 %v714, 0.0
      %v758 = vmax.f32 %v716, 0.0
      %v759 = vmax.f32 %v719, 0.0
      %v760 = vmax.f32 %v721, 0.0
      %v761 = vmax.f32 %v724, 0.0
      %v762 = vmax.f32 %v726, 0.0
      %v763 = vmax.f32 %v729, 0.0
      %v764 = vmax.f32 %v731, 0.0
      %v765 = vld [vmem:[%s6] sm:$0x1]
      %v766 = vmin.f32 %v654, 0.0
      %v767 = vmin.f32 %v656, 0.0
      %v768 = vmin.f32 %v659, 0.0
      %v769 = vmin.f32 %v661, 0.0
      %v770 = vmin.f32 %v664, 0.0
      %v771 = vmin.f32 %v666, 0.0
      %v772 = vmin.f32 %v669, 0.0
      %v773 = vmin.f32 %v671, 0.0
      %v774 = vmin.f32 %v674, 0.0
      %v775 = vmin.f32 %v676, 0.0
      %v776 = vmin.f32 %v679, 0.0
      %v777 = vmin.f32 %v681, 0.0
      %v778 = vmin.f32 %v684, 0.0
      %v779 = vmin.f32 %v686, 0.0
      %v780 = vmin.f32 %v689, 0.0
      %v781 = vmin.f32 %v691, 0.0
      %v782 = vmin.f32 %v694, 0.0
      %v783 = vmin.f32 %v696, 0.0
      %v784 = vmin.f32 %v699, 0.0
      %v785 = vmin.f32 %v701, 0.0
      %v786 = vmin.f32 %v704, 0.0
      %v787 = vmin.f32 %v706, 0.0
      %v788 = vmin.f32 %v709, 0.0
      %v789 = vmin.f32 %v711, 0.0
      %v790 = vmin.f32 %v714, 0.0
      %v791 = vmin.f32 %v716, 0.0
      %v792 = vmin.f32 %v719, 0.0
      %v793 = vmin.f32 %v721, 0.0
      %v794 = vmin.f32 %v724, 0.0
      %v795 = vmin.f32 %v726, 0.0
      %v796 = vmin.f32 %v729, 0.0
      %v797 = vmin.f32 %v731, 0.0
      %v799 = vperm.slane %v765, 0
      %v801 = vmul.f32 %v799, %v766
      %v802 = vmul.f32 %v799, %v767
      %v803 = vmul.f32 %v799, %v768
      %v804 = vmul.f32 %v799, %v769
      %v805 = vmul.f32 %v799, %v770
      %v806 = vmul.f32 %v799, %v771
      %v807 = vmul.f32 %v799, %v772
      %v808 = vmul.f32 %v799, %v773
      %v809 = vmul.f32 %v799, %v774
      %v810 = vmul.f32 %v799, %v775
      %v811 = vmul.f32 %v799, %v776
      %v812 = vmul.f32 %v799, %v777
      %v813 = vmul.f32 %v799, %v778
      %v814 = vmul.f32 %v799, %v779
      %v815 = vmul.f32 %v799, %v780
      %v816 = vmul.f32 %v799, %v781
      %v817 = vmul.f32 %v799, %v782
      %v818 = vmul.f32 %v799, %v783
      %v819 = vmul.f32 %v799, %v784
      %v820 = vmul.f32 %v799, %v785
      %v821 = vmul.f32 %v799, %v786
      %v822 = vmul.f32 %v799, %v787
      %v823 = vmul.f32 %v799, %v788
      %v824 = vmul.f32 %v799, %v789
      %v825 = vmul.f32 %v799, %v790
      %v826 = vmul.f32 %v799, %v791
      %v827 = vmul.f32 %v799, %v792
      %v828 = vmul.f32 %v799, %v793
      %v829 = vmul.f32 %v799, %v794
      %v830 = vmul.f32 %v799, %v795
      %v831 = vmul.f32 %v799, %v796
      %v832 = vmul.f32 %v799, %v797
      %v833 = vadd.f32 %v733, %v801
      %v834 = vadd.f32 %v734, %v802
      %v835 = vadd.f32 %v735, %v803
      %v836 = vadd.f32 %v736, %v804
      %v837 = vadd.f32 %v737, %v805
      %v838 = vadd.f32 %v738, %v806
      %v839 = vadd.f32 %v739, %v807
      %v840 = vadd.f32 %v740, %v808
      %v841 = vadd.f32 %v741, %v809
      %v842 = vadd.f32 %v742, %v810
      %v843 = vadd.f32 %v743, %v811
      %v844 = vadd.f32 %v744, %v812
      %v845 = vadd.f32 %v745, %v813
      %v846 = vadd.f32 %v746, %v814
      %v847 = vadd.f32 %v747, %v815
      %v848 = vadd.f32 %v748, %v816
      %v849 = vadd.f32 %v749, %v817
      %v850 = vadd.f32 %v750, %v818
      %v851 = vadd.f32 %v751, %v819
      %v852 = vadd.f32 %v752, %v820
      %v853 = vadd.f32 %v753, %v821
      %v854 = vadd.f32 %v754, %v822
      %v855 = vadd.f32 %v755, %v823
      %v856 = vadd.f32 %v756, %v824
      %v857 = vadd.f32 %v757, %v825
      %v858 = vadd.f32 %v758, %v826
      %v859 = vadd.f32 %v759, %v827
      %v860 = vadd.f32 %v760, %v828
      %v861 = vadd.f32 %v761, %v829
      %v862 = vadd.f32 %v762, %v830
      %v863 = vadd.f32 %v763, %v831
      %v864 = vadd.f32 %v764, %v832
      %vm865 = vcmask 31744
      %866 = vst.msk [vmem:[#allocation2] sm:$0xff] %vm865, 0.0
      %867 = vst.msk [vmem:[#allocation2 + $0x8] sm:$0xff] %vm865, 0.0
      %vm868 = vcmask 25600
      %869 = vst.msk [vmem:[#allocation2 + $0x10] sm:$0x3] %vm868, 0.0
      %870 = vst.msk [vmem:[#allocation2 + $0x18] sm:$0xff] %vm865, 0.0
      %871 = vst.msk [vmem:[#allocation2 + $0x20] sm:$0xff] %vm865, 0.0
      %872 = vst.msk [vmem:[#allocation2 + $0x28] sm:$0x3] %vm868, 0.0
      %873 = vst.msk [vmem:[#allocation2 + $0x30] sm:$0xff] %vm865, 0.0
      %874 = vst.msk [vmem:[#allocation2 + $0x38] sm:$0xff] %vm865, 0.0
      %875 = vst.msk [vmem:[#allocation2 + $0x40] sm:$0x3] %vm868, 0.0
      %876 = vst.msk [vmem:[#allocation2 + $0x48] sm:$0xff] %vm865, 0.0
      %877 = vst.msk [vmem:[#allocation2 + $0x50] sm:$0xff] %vm865, 0.0
      %878 = vst.msk [vmem:[#allocation2 + $0x58] sm:$0x3] %vm868, 0.0
      %879 = vst.msk [vmem:[#allocation2 + $0x60] sm:$0xff] %vm865, 0.0
      %880 = vst.msk [vmem:[#allocation2 + $0x68] sm:$0xff] %vm865, 0.0
      %881 = vst.msk [vmem:[#allocation2 + $0x70] sm:$0x3] %vm868, 0.0
      %882 = vst.msk [vmem:[#allocation2 + $0x78] sm:$0xff] %vm865, 0.0
      %883 = vst.msk [vmem:[#allocation2 + $0x80] sm:$0xff] %vm865, 0.0
      %884 = vst.msk [vmem:[#allocation2 + $0x88] sm:$0x3] %vm868, 0.0
      %885 = vst.msk [vmem:[#allocation2 + $0x90] sm:$0xff] %vm865, 0.0
      %886 = vst.msk [vmem:[#allocation2 + $0x98] sm:$0xff] %vm865, 0.0
      %887 = vst.msk [vmem:[#allocation2 + $0xa0] sm:$0x3] %vm868, 0.0
      %888 = vst.msk [vmem:[#allocation2 + $0xa8] sm:$0xff] %vm865, 0.0
      %889 = vst.msk [vmem:[#allocation2 + $0xb0] sm:$0xff] %vm865, 0.0
      %890 = vst.msk [vmem:[#allocation2 + $0xb8] sm:$0x3] %vm868, 0.0
      %891 = vst.msk [vmem:[#allocation2 + $0xc0] sm:$0xff] %vm865, 0.0
      %892 = vst.msk [vmem:[#allocation2 + $0xc8] sm:$0xff] %vm865, 0.0
      %893 = vst.msk [vmem:[#allocation2 + $0xd0] sm:$0x3] %vm868, 0.0
      %894 = vst.msk [vmem:[#allocation2 + $0xd8] sm:$0xff] %vm865, 0.0
      %895 = vst.msk [vmem:[#allocation2 + $0xe0] sm:$0xff] %vm865, 0.0
      %896 = vst.msk [vmem:[#allocation2 + $0xe8] sm:$0x3] %vm868, 0.0
      %897 = vst.msk [vmem:[#allocation2 + $0xf0] sm:$0xff] %vm865, 0.0
      %898 = vst.msk [vmem:[#allocation2 + $0xf8] sm:$0xff] %vm865, 0.0
      %899 = vst.msk [vmem:[#allocation2 + $0x100] sm:$0x3] %vm868, 0.0
      %900 = vst.msk [vmem:[#allocation2 + $0x108] sm:$0xff] %vm865, 0.0
      %901 = vst.msk [vmem:[#allocation2 + $0x110] sm:$0xff] %vm865, 0.0
      %902 = vst.msk [vmem:[#allocation2 + $0x118] sm:$0x3] %vm868, 0.0
      %903 = vst.msk [vmem:[#allocation2 + $0x120] sm:$0xff] %vm865, 0.0
      %904 = vst.msk [vmem:[#allocation2 + $0x128] sm:$0xff] %vm865, 0.0
      %905 = vst.msk [vmem:[#allocation2 + $0x130] sm:$0x3] %vm868, 0.0
      %906 = vst.msk [vmem:[#allocation2 + $0x138] sm:$0xff] %vm865, 0.0
      %907 = vst.msk [vmem:[#allocation2 + $0x140] sm:$0xff] %vm865, 0.0
      %908 = vst.msk [vmem:[#allocation2 + $0x148] sm:$0x3] %vm868, 0.0
      %909 = vst.msk [vmem:[#allocation2 + $0x150] sm:$0xff] %vm865, 0.0
      %910 = vst.msk [vmem:[#allocation2 + $0x158] sm:$0xff] %vm865, 0.0
      %911 = vst.msk [vmem:[#allocation2 + $0x160] sm:$0x3] %vm868, 0.0
      %912 = vst.msk [vmem:[#allocation2 + $0x168] sm:$0xff] %vm865, 0.0
      %913 = vst.msk [vmem:[#allocation2 + $0x170] sm:$0xff] %vm865, 0.0
      %914 = vst.msk [vmem:[#allocation2 + $0x178] sm:$0x3] %vm868, 0.0
      %915 = vst.msk [vmem:[#allocation2 + $0x180] sm:$0xff] %vm865, 0.0
      %916 = vst.msk [vmem:[#allocation2 + $0x188] sm:$0xff] %vm865, 0.0
      %917 = vst.msk [vmem:[#allocation2 + $0x190] sm:$0x3] %vm868, 0.0
      %918 = vst.msk [vmem:[#allocation2 + $0x198] sm:$0xff] %vm865, 0.0
      %919 = vst.msk [vmem:[#allocation2 + $0x1a0] sm:$0xff] %vm865, 0.0
      %920 = vst.msk [vmem:[#allocation2 + $0x1a8] sm:$0x3] %vm868, 0.0
      %s921 = scalar_lea.vmem [#allocation2], 24
      %922 = vst.msk [vmem:[%s921 + $0x1] sm:$0xff] %vm865, %v833
      %923 = vst.msk [vmem:[%s921 + $0x9] sm:$0xff] %vm865, %v834
      %924 = vst.msk [vmem:[%s921 + $0x19] sm:$0xff] %vm865, %v835
      %925 = vst.msk [vmem:[%s921 + $0x21] sm:$0xff] %vm865, %v836
      %926 = vst.msk [vmem:[%s921 + $0x31] sm:$0xff] %vm865, %v837
      %927 = vst.msk [vmem:[%s921 + $0x39] sm:$0xff] %vm865, %v838
      %928 = vst.msk [vmem:[%s921 + $0x49] sm:$0xff] %vm865, %v839
      %929 = vst.msk [vmem:[%s921 + $0x51] sm:$0xff] %vm865, %v840
      %930 = vst.msk [vmem:[%s921 + $0x61] sm:$0xff] %vm865, %v841
      %931 = vst.msk [vmem:[%s921 + $0x69] sm:$0xff] %vm865, %v842
      %932 = vst.msk [vmem:[%s921 + $0x79] sm:$0xff] %vm865, %v843
      %933 = vst.msk [vmem:[%s921 + $0x81] sm:$0xff] %vm865, %v844
      %934 = vst.msk [vmem:[%s921 + $0x91] sm:$0xff] %vm865, %v845
      %935 = vst.msk [vmem:[%s921 + $0x99] sm:$0xff] %vm865, %v846
      %936 = vst.msk [vmem:[%s921 + $0xa9] sm:$0xff] %vm865, %v847
      %937 = vst.msk [vmem:[%s921 + $0xb1] sm:$0xff] %vm865, %v848
      %938 = vst.msk [vmem:[%s921 + $0xc1] sm:$0xff] %vm865, %v849
      %939 = vst.msk [vmem:[%s921 + $0xc9] sm:$0xff] %vm865, %v850
      %940 = vst.msk [vmem:[%s921 + $0xd9] sm:$0xff] %vm865, %v851
      %941 = vst.msk [vmem:[%s921 + $0xe1] sm:$0xff] %vm865, %v852
      %942 = vst.msk [vmem:[%s921 + $0xf1] sm:$0xff] %vm865, %v853
      %943 = vst.msk [vmem:[%s921 + $0xf9] sm:$0xff] %vm865, %v854
      %944 = vst.msk [vmem:[%s921 + $0x109] sm:$0xff] %vm865, %v855
      %945 = vst.msk [vmem:[%s921 + $0x111] sm:$0xff] %vm865, %v856
      %946 = vst.msk [vmem:[%s921 + $0x121] sm:$0xff] %vm865, %v857
      %947 = vst.msk [vmem:[%s921 + $0x129] sm:$0xff] %vm865, %v858
      %948 = vst.msk [vmem:[%s921 + $0x139] sm:$0xff] %vm865, %v859
      %949 = vst.msk [vmem:[%s921 + $0x141] sm:$0xff] %vm865, %v860
      %950 = vst.msk [vmem:[%s921 + $0x151] sm:$0xff] %vm865, %v861
      %951 = vst.msk [vmem:[%s921 + $0x159] sm:$0xff] %vm865, %v862
      %952 = vst.msk [vmem:[%s921 + $0x169] sm:$0xff] %vm865, %v863
      %953 = vst.msk [vmem:[%s921 + $0x171] sm:$0xff] %vm865, %v864
      %v954 = vld [vmem:[#allocation2] sm:$0xff]
      %v955 = vld [vmem:[#allocation2 + $0x8] sm:$0xff]
      %v956 = vld [vmem:[#allocation2 + $0x18] sm:$0xff]
      %v957 = vld [vmem:[#allocation2 + $0x20] sm:$0xff]
      %v958 = vld [vmem:[#allocation2 + $0x30] sm:$0xff]
      %v959 = vld [vmem:[#allocation2 + $0x38] sm:$0xff]
      %v960 = vld [vmem:[#allocation2 + $0x48] sm:$0xff]
      %v961 = vld [vmem:[#allocation2 + $0x50] sm:$0xff]
      %v962 = vld [vmem:[#allocation2 + $0x60] sm:$0xff]
      %v963 = vld [vmem:[#allocation2 + $0x68] sm:$0xff]
      %v964 = vld [vmem:[#allocation2 + $0x78] sm:$0xff]
      %v965 = vld [vmem:[#allocation2 + $0x80] sm:$0xff]
      %v966 = vld [vmem:[#allocation2 + $0x90] sm:$0xff]
      %v967 = vld [vmem:[#allocation2 + $0x98] sm:$0xff]
      %v968 = vld [vmem:[#allocation2 + $0xa8] sm:$0xff]
      %v969 = vld [vmem:[#allocation2 + $0xb0] sm:$0xff]
      %v970 = vld [vmem:[#allocation2 + $0xc0] sm:$0xff]
      %v971 = vld [vmem:[#allocation2 + $0xc8] sm:$0xff]
      %v972 = vld [vmem:[#allocation2 + $0xd8] sm:$0xff]
      %v973 = vld [vmem:[#allocation2 + $0xe0] sm:$0xff]
      %v974 = vld [vmem:[#allocation2 + $0xf0] sm:$0xff]
      %v975 = vld [vmem:[#allocation2 + $0xf8] sm:$0xff]
      %v976 = vld [vmem:[#allocation2 + $0x108] sm:$0xff]
      %v977 = vld [vmem:[#allocation2 + $0x110] sm:$0xff]
      %v978 = vld [vmem:[#allocation2 + $0x120] sm:$0xff]
      %v979 = vld [vmem:[#allocation2 + $0x128] sm:$0xff]
      %v980 = vld [vmem:[#allocation2 + $0x138] sm:$0xff]
      %v981 = vld [vmem:[#allocation2 + $0x140] sm:$0xff]
      %v982 = vld [vmem:[#allocation2 + $0x150] sm:$0xff]
      %v983 = vld [vmem:[#allocation2 + $0x158] sm:$0xff]
      %v984 = vld [vmem:[#allocation2 + $0x168] sm:$0xff]
      %v985 = vld [vmem:[#allocation2 + $0x170] sm:$0xff]
      %v986 = vpack.c.bf16 %v954, %v954
      %v987 = vpack.c.bf16 %v955, %v955
      %v988 = vpack.c.bf16 %v956, %v956
      %v989 = vpack.c.bf16 %v957, %v957
      %v990 = vpack.c.bf16 %v958, %v958
      %v991 = vpack.c.bf16 %v959, %v959
      %v992 = vpack.c.bf16 %v960, %v960
      %v993 = vpack.c.bf16 %v961, %v961
      %v994 = vpack.c.bf16 %v962, %v962
      %v995 = vpack.c.bf16 %v963, %v963
      %v996 = vpack.c.bf16 %v964, %v964
      %v997 = vpack.c.bf16 %v965, %v965
      %v998 = vpack.c.bf16 %v966, %v966
      %v999 = vpack.c.bf16 %v967, %v967
      %v1000 = vpack.c.bf16 %v968, %v968
      %v1001 = vpack.c.bf16 %v969, %v969
      %v1002 = vpack.c.bf16 %v970, %v970
      %v1003 = vpack.c.bf16 %v971, %v971
      %v1004 = vpack.c.bf16 %v972, %v972
      %v1005 = vpack.c.bf16 %v973, %v973
      %v1006 = vpack.c.bf16 %v974, %v974
      %v1007 = vpack.c.bf16 %v975, %v975
      %v1008 = vpack.c.bf16 %v976, %v976
      %v1009 = vpack.c.bf16 %v977, %v977
      %v1010 = vpack.c.bf16 %v978, %v978
      %v1011 = vpack.c.bf16 %v979, %v979
      %v1012 = vpack.c.bf16 %v980, %v980
      %v1013 = vpack.c.bf16 %v981, %v981
      %v1014 = vpack.c.bf16 %v982, %v982
      %v1015 = vpack.c.bf16 %v983, %v983
      %v1016 = vpack.c.bf16 %v984, %v984
      %v1017 = vpack.c.bf16 %v985, %v985
      %v1018 = vld [vmem:[#allocation2 + $0x1] sm:$0xff]
      %v1019 = vld [vmem:[#allocation2 + $0x9] sm:$0xff]
      %v1020 = vld [vmem:[#allocation2 + $0x19] sm:$0xff]
      %v1021 = vld [vmem:[#allocation2 + $0x21] sm:$0xff]
      %v1022 = vld [vmem:[#allocation2 + $0x31] sm:$0xff]
      %v1023 = vld [vmem:[#allocation2 + $0x39] sm:$0xff]
      %v1024 = vld [vmem:[#allocation2 + $0x49] sm:$0xff]
      %v1025 = vld [vmem:[#allocation2 + $0x51] sm:$0xff]
      %v1026 = vld [vmem:[#allocation2 + $0x61] sm:$0xff]
      %v1027 = vld [vmem:[#allocation2 + $0x69] sm:$0xff]
      %v1028 = vld [vmem:[#allocation2 + $0x79] sm:$0xff]
      %v1029 = vld [vmem:[#allocation2 + $0x81] sm:$0xff]
      %v1030 = vld [vmem:[#allocation2 + $0x91] sm:$0xff]
      %v1031 = vld [vmem:[#allocation2 + $0x99] sm:$0xff]
      %v1032 = vld [vmem:[#allocation2 + $0xa9] sm:$0xff]
      %v1033 = vld [vmem:[#allocation2 + $0xb1] sm:$0xff]
      %v1034 = vld [vmem:[#allocation2 + $0xc1] sm:$0xff]
      %v1035 = vld [vmem:[#allocation2 + $0xc9] sm:$0xff]
      %v1036 = vld [vmem:[#allocation2 + $0xd9] sm:$0xff]
      %v1037 = vld [vmem:[#allocation2 + $0xe1] sm:$0xff]
      %v1038 = vld [vmem:[#allocation2 + $0xf1] sm:$0xff]
      %v1039 = vld [vmem:[#allocation2 + $0xf9] sm:$0xff]
      %v1040 = vld [vmem:[#allocation2 + $0x109] sm:$0xff]
      %v1041 = vld [vmem:[#allocation2 + $0x111] sm:$0xff]
      %v1042 = vld [vmem:[#allocation2 + $0x121] sm:$0xff]
      %v1043 = vld [vmem:[#allocation2 + $0x129] sm:$0xff]
      %v1044 = vld [vmem:[#allocation2 + $0x139] sm:$0xff]
      %v1045 = vld [vmem:[#allocation2 + $0x141] sm:$0xff]
      %v1046 = vld [vmem:[#allocation2 + $0x151] sm:$0xff]
      %v1047 = vld [vmem:[#allocation2 + $0x159] sm:$0xff]
      %v1048 = vld [vmem:[#allocation2 + $0x169] sm:$0xff]
      %v1049 = vld [vmem:[#allocation2 + $0x171] sm:$0xff]
      %v1050 = vpack.c.bf16 %v1018, %v1018
      %v1051 = vpack.c.bf16 %v1019, %v1019
      %v1052 = vpack.c.bf16 %v1020, %v1020
      %v1053 = vpack.c.bf16 %v1021, %v1021
      %v1054 = vpack.c.bf16 %v1022, %v1022
      %v1055 = vpack.c.bf16 %v1023, %v1023
      %v1056 = vpack.c.bf16 %v1024, %v1024
      %v1057 = vpack.c.bf16 %v1025, %v1025
      %v1058 = vpack.c.bf16 %v1026, %v1026
      %v1059 = vpack.c.bf16 %v1027, %v1027
      %v1060 = vpack.c.bf16 %v1028, %v1028
      %v1061 = vpack.c.bf16 %v1029, %v1029
      %v1062 = vpack.c.bf16 %v1030, %v1030
      %v1063 = vpack.c.bf16 %v1031, %v1031
      %v1064 = vpack.c.bf16 %v1032, %v1032
      %v1065 = vpack.c.bf16 %v1033, %v1033
      %v1066 = vpack.c.bf16 %v1034, %v1034
      %v1067 = vpack.c.bf16 %v1035, %v1035
      %v1068 = vpack.c.bf16 %v1036, %v1036
      %v1069 = vpack.c.bf16 %v1037, %v1037
      %v1070 = vpack.c.bf16 %v1038, %v1038
      %v1071 = vpack.c.bf16 %v1039, %v1039
      %v1072 = vpack.c.bf16 %v1040, %v1040
      %v1073 = vpack.c.bf16 %v1041, %v1041
      %v1074 = vpack.c.bf16 %v1042, %v1042
      %v1075 = vpack.c.bf16 %v1043, %v1043
      %v1076 = vpack.c.bf16 %v1044, %v1044
      %v1077 = vpack.c.bf16 %v1045, %v1045
      %v1078 = vpack.c.bf16 %v1046, %v1046
      %v1079 = vpack.c.bf16 %v1047, %v1047
      %v1080 = vpack.c.bf16 %v1048, %v1048
      %v1081 = vpack.c.bf16 %v1049, %v1049
      %v1082 = vld [vmem:[#allocation2 + $0x2] sm:$0xff]
      %v1083 = vld [vmem:[#allocation2 + $0xa] sm:$0xff]
      %v1084 = vld [vmem:[#allocation2 + $0x1a] sm:$0xff]
      %v1085 = vld [vmem:[#allocation2 + $0x22] sm:$0xff]
      %v1086 = vld [vmem:[#allocation2 + $0x32] sm:$0xff]
      %v1087 = vld [vmem:[#allocation2 + $0x3a] sm:$0xff]
      %v1088 = vld [vmem:[#allocation2 + $0x4a] sm:$0xff]
      %v1089 = vld [vmem:[#allocation2 + $0x52] sm:$0xff]
      %v1090 = vld [vmem:[#allocation2 + $0x62] sm:$0xff]
      %v1091 = vld [vmem:[#allocation2 + $0x6a] sm:$0xff]
      %v1092 = vld [vmem:[#allocation2 + $0x7a] sm:$0xff]
      %v1093 = vld [vmem:[#allocation2 + $0x82] sm:$0xff]
      %v1094 = vld [vmem:[#allocation2 + $0x92] sm:$0xff]
      %v1095 = vld [vmem:[#allocation2 + $0x9a] sm:$0xff]
      %v1096 = vld [vmem:[#allocation2 + $0xaa] sm:$0xff]
      %v1097 = vld [vmem:[#allocation2 + $0xb2] sm:$0xff]
      %v1098 = vld [vmem:[#allocation2 + $0xc2] sm:$0xff]
      %v1099 = vld [vmem:[#allocation2 + $0xca] sm:$0xff]
      %v1100 = vld [vmem:[#allocation2 + $0xda] sm:$0xff]
      %v1101 = vld [vmem:[#allocation2 + $0xe2] sm:$0xff]
      %v1102 = vld [vmem:[#allocation2 + $0xf2] sm:$0xff]
      %v1103 = vld [vmem:[#allocation2 + $0xfa] sm:$0xff]
      %v1104 = vld [vmem:[#allocation2 + $0x10a] sm:$0xff]
      %v1105 = vld [vmem:[#allocation2 + $0x112] sm:$0xff]
      %v1106 = vld [vmem:[#allocation2 + $0x122] sm:$0xff]
      %v1107 = vld [vmem:[#allocation2 + $0x12a] sm:$0xff]
      %v1108 = vld [vmem:[#allocation2 + $0x13a] sm:$0xff]
      %v1109 = vld [vmem:[#allocation2 + $0x142] sm:$0xff]
      %v1110 = vld [vmem:[#allocation2 + $0x152] sm:$0xff]
      %v1111 = vld [vmem:[#allocation2 + $0x15a] sm:$0xff]
      %v1112 = vld [vmem:[#allocation2 + $0x16a] sm:$0xff]
      %v1113 = vld [vmem:[#allocation2 + $0x172] sm:$0xff]
      %v1114 = vpack.c.bf16 %v1082, %v1082
      %v1115 = vpack.c.bf16 %v1083, %v1083
      %v1116 = vpack.c.bf16 %v1084, %v1084
      %v1117 = vpack.c.bf16 %v1085, %v1085
      %v1118 = vpack.c.bf16 %v1086, %v1086
      %v1119 = vpack.c.bf16 %v1087, %v1087
      %v1120 = vpack.c.bf16 %v1088, %v1088
      %v1121 = vpack.c.bf16 %v1089, %v1089
      %v1122 = vpack.c.bf16 %v1090, %v1090
      %v1123 = vpack.c.bf16 %v1091, %v1091
      %v1124 = vpack.c.bf16 %v1092, %v1092
      %v1125 = vpack.c.bf16 %v1093, %v1093
      %v1126 = vpack.c.bf16 %v1094, %v1094
      %v1127 = vpack.c.bf16 %v1095, %v1095
      %v1128 = vpack.c.bf16 %v1096, %v1096
      %v1129 = vpack.c.bf16 %v1097, %v1097
      %v1130 = vpack.c.bf16 %v1098, %v1098
      %v1131 = vpack.c.bf16 %v1099, %v1099
      %v1132 = vpack.c.bf16 %v1100, %v1100
      %v1133 = vpack.c.bf16 %v1101, %v1101
      %v1134 = vpack.c.bf16 %v1102, %v1102
      %v1135 = vpack.c.bf16 %v1103, %v1103
      %v1136 = vpack.c.bf16 %v1104, %v1104
      %v1137 = vpack.c.bf16 %v1105, %v1105
      %v1138 = vpack.c.bf16 %v1106, %v1106
      %v1139 = vpack.c.bf16 %v1107, %v1107
      %v1140 = vpack.c.bf16 %v1108, %v1108
      %v1141 = vpack.c.bf16 %v1109, %v1109
      %v1142 = vpack.c.bf16 %v1110, %v1110
      %v1143 = vpack.c.bf16 %v1111, %v1111
      %v1144 = vpack.c.bf16 %v1112, %v1112
      %v1145 = vpack.c.bf16 %v1113, %v1113
      %v1146 = vld [vmem:[%s921] sm:$0xff]
      %v1147 = vld [vmem:[%s921 + $0x8] sm:$0xff]
      %v1148 = vld [vmem:[%s921 + $0x18] sm:$0xff]
      %v1149 = vld [vmem:[%s921 + $0x20] sm:$0xff]
      %v1150 = vld [vmem:[%s921 + $0x30] sm:$0xff]
      %v1151 = vld [vmem:[%s921 + $0x38] sm:$0xff]
      %v1152 = vld [vmem:[%s921 + $0x48] sm:$0xff]
      %v1153 = vld [vmem:[%s921 + $0x50] sm:$0xff]
      %v1154 = vld [vmem:[%s921 + $0x60] sm:$0xff]
      %v1155 = vld [vmem:[%s921 + $0x68] sm:$0xff]
      %v1156 = vld [vmem:[%s921 + $0x78] sm:$0xff]
      %v1157 = vld [vmem:[%s921 + $0x80] sm:$0xff]
      %v1158 = vld [vmem:[%s921 + $0x90] sm:$0xff]
      %v1159 = vld [vmem:[%s921 + $0x98] sm:$0xff]
      %v1160 = vld [vmem:[%s921 + $0xa8] sm:$0xff]
      %v1161 = vld [vmem:[%s921 + $0xb0] sm:$0xff]
      %v1162 = vld [vmem:[%s921 + $0xc0] sm:$0xff]
      %v1163 = vld [vmem:[%s921 + $0xc8] sm:$0xff]
      %v1164 = vld [vmem:[%s921 + $0xd8] sm:$0xff]
      %v1165 = vld [vmem:[%s921 + $0xe0] sm:$0xff]
      %v1166 = vld [vmem:[%s921 + $0xf0] sm:$0xff]
      %v1167 = vld [vmem:[%s921 + $0xf8] sm:$0xff]
      %v1168 = vld [vmem:[%s921 + $0x108] sm:$0xff]
      %v1169 = vld [vmem:[%s921 + $0x110] sm:$0xff]
      %v1170 = vld [vmem:[%s921 + $0x120] sm:$0xff]
      %v1171 = vld [vmem:[%s921 + $0x128] sm:$0xff]
      %v1172 = vld [vmem:[%s921 + $0x138] sm:$0xff]
      %v1173 = vld [vmem:[%s921 + $0x140] sm:$0xff]
      %v1174 = vld [vmem:[%s921 + $0x150] sm:$0xff]
      %v1175 = vld [vmem:[%s921 + $0x158] sm:$0xff]
      %v1176 = vld [vmem:[%s921 + $0x168] sm:$0xff]
      %v1177 = vld [vmem:[%s921 + $0x170] sm:$0xff]
      %v1178 = vpack.c.bf16 %v1146, %v1146
      %v1179 = vpack.c.bf16 %v1147, %v1147
      %v1180 = vpack.c.bf16 %v1148, %v1148
      %v1181 = vpack.c.bf16 %v1149, %v1149
      %v1182 = vpack.c.bf16 %v1150, %v1150
      %v1183 = vpack.c.bf16 %v1151, %v1151
      %v1184 = vpack.c.bf16 %v1152, %v1152
      %v1185 = vpack.c.bf16 %v1153, %v1153
      %v1186 = vpack.c.bf16 %v1154, %v1154
      %v1187 = vpack.c.bf16 %v1155, %v1155
      %v1188 = vpack.c.bf16 %v1156, %v1156
      %v1189 = vpack.c.bf16 %v1157, %v1157
      %v1190 = vpack.c.bf16 %v1158, %v1158
      %v1191 = vpack.c.bf16 %v1159, %v1159
      %v1192 = vpack.c.bf16 %v1160, %v1160
      %v1193 = vpack.c.bf16 %v1161, %v1161
      %v1194 = vpack.c.bf16 %v1162, %v1162
      %v1195 = vpack.c.bf16 %v1163, %v1163
      %v1196 = vpack.c.bf16 %v1164, %v1164
      %v1197 = vpack.c.bf16 %v1165, %v1165
      %v1198 = vpack.c.bf16 %v1166, %v1166
      %v1199 = vpack.c.bf16 %v1167, %v1167
      %v1200 = vpack.c.bf16 %v1168, %v1168
      %v1201 = vpack.c.bf16 %v1169, %v1169
      %v1202 = vpack.c.bf16 %v1170, %v1170
      %v1203 = vpack.c.bf16 %v1171, %v1171
      %v1204 = vpack.c.bf16 %v1172, %v1172
      %v1205 = vpack.c.bf16 %v1173, %v1173
      %v1206 = vpack.c.bf16 %v1174, %v1174
      %v1207 = vpack.c.bf16 %v1175, %v1175
      %v1208 = vpack.c.bf16 %v1176, %v1176
      %v1209 = vpack.c.bf16 %v1177, %v1177
      %v1210 = vld [vmem:[%s921 + $0x1] sm:$0xff]
      %v1211 = vld [vmem:[%s921 + $0x9] sm:$0xff]
      %v1212 = vld [vmem:[%s921 + $0x19] sm:$0xff]
      %v1213 = vld [vmem:[%s921 + $0x21] sm:$0xff]
      %v1214 = vld [vmem:[%s921 + $0x31] sm:$0xff]
      %v1215 = vld [vmem:[%s921 + $0x39] sm:$0xff]
      %v1216 = vld [vmem:[%s921 + $0x49] sm:$0xff]
      %v1217 = vld [vmem:[%s921 + $0x51] sm:$0xff]
      %v1218 = vld [vmem:[%s921 + $0x61] sm:$0xff]
      %v1219 = vld [vmem:[%s921 + $0x69] sm:$0xff]
      %v1220 = vld [vmem:[%s921 + $0x79] sm:$0xff]
      %v1221 = vld [vmem:[%s921 + $0x81] sm:$0xff]
      %v1222 = vld [vmem:[%s921 + $0x91] sm:$0xff]
      %v1223 = vld [vmem:[%s921 + $0x99] sm:$0xff]
      %v1224 = vld [vmem:[%s921 + $0xa9] sm:$0xff]
      %v1225 = vld [vmem:[%s921 + $0xb1] sm:$0xff]
      %v1226 = vld [vmem:[%s921 + $0xc1] sm:$0xff]
      %v1227 = vld [vmem:[%s921 + $0xc9] sm:$0xff]
      %v1228 = vld [vmem:[%s921 + $0xd9] sm:$0xff]
      %v1229 = vld [vmem:[%s921 + $0xe1] sm:$0xff]
      %v1230 = vld [vmem:[%s921 + $0xf1] sm:$0xff]
      %v1231 = vld [vmem:[%s921 + $0xf9] sm:$0xff]
      %v1232 = vld [vmem:[%s921 + $0x109] sm:$0xff]
      %v1233 = vld [vmem:[%s921 + $0x111] sm:$0xff]
      %v1234 = vld [vmem:[%s921 + $0x121] sm:$0xff]
      %v1235 = vld [vmem:[%s921 + $0x129] sm:$0xff]
      %v1236 = vld [vmem:[%s921 + $0x139] sm:$0xff]
      %v1237 = vld [vmem:[%s921 + $0x141] sm:$0xff]
      %v1238 = vld [vmem:[%s921 + $0x151] sm:$0xff]
      %v1239 = vld [vmem:[%s921 + $0x159] sm:$0xff]
      %v1240 = vld [vmem:[%s921 + $0x169] sm:$0xff]
      %v1241 = vld [vmem:[%s921 + $0x171] sm:$0xff]
      %v1242 = vpack.c.bf16 %v1210, %v1210
      %v1243 = vpack.c.bf16 %v1211, %v1211
      %v1244 = vpack.c.bf16 %v1212, %v1212
      %v1245 = vpack.c.bf16 %v1213, %v1213
      %v1246 = vpack.c.bf16 %v1214, %v1214
      %v1247 = vpack.c.bf16 %v1215, %v1215
      %v1248 = vpack.c.bf16 %v1216, %v1216
      %v1249 = vpack.c.bf16 %v1217, %v1217
      %v1250 = vpack.c.bf16 %v1218, %v1218
      %v1251 = vpack.c.bf16 %v1219, %v1219
      %v1252 = vpack.c.bf16 %v1220, %v1220
      %v1253 = vpack.c.bf16 %v1221, %v1221
      %v1254 = vpack.c.bf16 %v1222, %v1222
      %v1255 = vpack.c.bf16 %v1223, %v1223
      %v1256 = vpack.c.bf16 %v1224, %v1224
      %v1257 = vpack.c.bf16 %v1225, %v1225
      %v1258 = vpack.c.bf16 %v1226, %v1226
      %v1259 = vpack.c.bf16 %v1227, %v1227
      %v1260 = vpack.c.bf16 %v1228, %v1228
      %v1261 = vpack.c.bf16 %v1229, %v1229
      %v1262 = vpack.c.bf16 %v1230, %v1230
      %v1263 = vpack.c.bf16 %v1231, %v1231
      %v1264 = vpack.c.bf16 %v1232, %v1232
      %v1265 = vpack.c.bf16 %v1233, %v1233
      %v1266 = vpack.c.bf16 %v1234, %v1234
      %v1267 = vpack.c.bf16 %v1235, %v1235
      %v1268 = vpack.c.bf16 %v1236, %v1236
      %v1269 = vpack.c.bf16 %v1237, %v1237
      %v1270 = vpack.c.bf16 %v1238, %v1238
      %v1271 = vpack.c.bf16 %v1239, %v1239
      %v1272 = vpack.c.bf16 %v1240, %v1240
      %v1273 = vpack.c.bf16 %v1241, %v1241
      %v1274 = vld [vmem:[%s921 + $0x2] sm:$0xff]
      %v1275 = vld [vmem:[%s921 + $0xa] sm:$0xff]
      %v1276 = vld [vmem:[%s921 + $0x1a] sm:$0xff]
      %v1277 = vld [vmem:[%s921 + $0x22] sm:$0xff]
      %v1278 = vld [vmem:[%s921 + $0x32] sm:$0xff]
      %v1279 = vld [vmem:[%s921 + $0x3a] sm:$0xff]
      %v1280 = vld [vmem:[%s921 + $0x4a] sm:$0xff]
      %v1281 = vld [vmem:[%s921 + $0x52] sm:$0xff]
      %v1282 = vld [vmem:[%s921 + $0x62] sm:$0xff]
      %v1283 = vld [vmem:[%s921 + $0x6a] sm:$0xff]
      %v1284 = vld [vmem:[%s921 + $0x7a] sm:$0xff]
      %v1285 = vld [vmem:[%s921 + $0x82] sm:$0xff]
      %v1286 = vld [vmem:[%s921 + $0x92] sm:$0xff]
      %v1287 = vld [vmem:[%s921 + $0x9a] sm:$0xff]
      %v1288 = vld [vmem:[%s921 + $0xaa] sm:$0xff]
      %v1289 = vld [vmem:[%s921 + $0xb2] sm:$0xff]
      %v1290 = vld [vmem:[%s921 + $0xc2] sm:$0xff]
      %v1291 = vld [vmem:[%s921 + $0xca] sm:$0xff]
      %v1292 = vld [vmem:[%s921 + $0xda] sm:$0xff]
      %v1293 = vld [vmem:[%s921 + $0xe2] sm:$0xff]
      %v1294 = vld [vmem:[%s921 + $0xf2] sm:$0xff]
      %v1295 = vld [vmem:[%s921 + $0xfa] sm:$0xff]
      %v1296 = vld [vmem:[%s921 + $0x10a] sm:$0xff]
      %v1297 = vld [vmem:[%s921 + $0x112] sm:$0xff]
      %v1298 = vld [vmem:[%s921 + $0x122] sm:$0xff]
      %v1299 = vld [vmem:[%s921 + $0x12a] sm:$0xff]
      %v1300 = vld [vmem:[%s921 + $0x13a] sm:$0xff]
      %v1301 = vld [vmem:[%s921 + $0x142] sm:$0xff]
      %v1302 = vld [vmem:[%s921 + $0x152] sm:$0xff]
      %v1303 = vld [vmem:[%s921 + $0x15a] sm:$0xff]
      %v1304 = vld [vmem:[%s921 + $0x16a] sm:$0xff]
      %v1305 = vld [vmem:[%s921 + $0x172] sm:$0xff]
      %v1306 = vpack.c.bf16 %v1274, %v1274
      %v1307 = vpack.c.bf16 %v1275, %v1275
      %v1308 = vpack.c.bf16 %v1276, %v1276
      %v1309 = vpack.c.bf16 %v1277, %v1277
      %v1310 = vpack.c.bf16 %v1278, %v1278
      %v1311 = vpack.c.bf16 %v1279, %v1279
      %v1312 = vpack.c.bf16 %v1280, %v1280
      %v1313 = vpack.c.bf16 %v1281, %v1281
      %v1314 = vpack.c.bf16 %v1282, %v1282
      %v1315 = vpack.c.bf16 %v1283, %v1283
      %v1316 = vpack.c.bf16 %v1284, %v1284
      %v1317 = vpack.c.bf16 %v1285, %v1285
      %v1318 = vpack.c.bf16 %v1286, %v1286
      %v1319 = vpack.c.bf16 %v1287, %v1287
      %v1320 = vpack.c.bf16 %v1288, %v1288
      %v1321 = vpack.c.bf16 %v1289, %v1289
      %v1322 = vpack.c.bf16 %v1290, %v1290
      %v1323 = vpack.c.bf16 %v1291, %v1291
      %v1324 = vpack.c.bf16 %v1292, %v1292
      %v1325 = vpack.c.bf16 %v1293, %v1293
      %v1326 = vpack.c.bf16 %v1294, %v1294
      %v1327 = vpack.c.bf16 %v1295, %v1295
      %v1328 = vpack.c.bf16 %v1296, %v1296
      %v1329 = vpack.c.bf16 %v1297, %v1297
      %v1330 = vpack.c.bf16 %v1298, %v1298
      %v1331 = vpack.c.bf16 %v1299, %v1299
      %v1332 = vpack.c.bf16 %v1300, %v1300
      %v1333 = vpack.c.bf16 %v1301, %v1301
      %v1334 = vpack.c.bf16 %v1302, %v1302
      %v1335 = vpack.c.bf16 %v1303, %v1303
      %v1336 = vpack.c.bf16 %v1304, %v1304
      %v1337 = vpack.c.bf16 %v1305, %v1305
      %s1338 = scalar_lea.vmem [#allocation2], 48
      %v1339 = vld [vmem:[%s1338] sm:$0xff]
      %v1340 = vld [vmem:[%s1338 + $0x8] sm:$0xff]
      %v1341 = vld [vmem:[%s1338 + $0x18] sm:$0xff]
      %v1342 = vld [vmem:[%s1338 + $0x20] sm:$0xff]
      %v1343 = vld [vmem:[%s1338 + $0x30] sm:$0xff]
      %v1344 = vld [vmem:[%s1338 + $0x38] sm:$0xff]
      %v1345 = vld [vmem:[%s1338 + $0x48] sm:$0xff]
      %v1346 = vld [vmem:[%s1338 + $0x50] sm:$0xff]
      %v1347 = vld [vmem:[%s1338 + $0x60] sm:$0xff]
      %v1348 = vld [vmem:[%s1338 + $0x68] sm:$0xff]
      %v1349 = vld [vmem:[%s1338 + $0x78] sm:$0xff]
      %v1350 = vld [vmem:[%s1338 + $0x80] sm:$0xff]
      %v1351 = vld [vmem:[%s1338 + $0x90] sm:$0xff]
      %v1352 = vld [vmem:[%s1338 + $0x98] sm:$0xff]
      %v1353 = vld [vmem:[%s1338 + $0xa8] sm:$0xff]
      %v1354 = vld [vmem:[%s1338 + $0xb0] sm:$0xff]
      %v1355 = vld [vmem:[%s1338 + $0xc0] sm:$0xff]
      %v1356 = vld [vmem:[%s1338 + $0xc8] sm:$0xff]
      %v1357 = vld [vmem:[%s1338 + $0xd8] sm:$0xff]
      %v1358 = vld [vmem:[%s1338 + $0xe0] sm:$0xff]
      %v1359 = vld [vmem:[%s1338 + $0xf0] sm:$0xff]
      %v1360 = vld [vmem:[%s1338 + $0xf8] sm:$0xff]
      %v1361 = vld [vmem:[%s1338 + $0x108] sm:$0xff]
      %v1362 = vld [vmem:[%s1338 + $0x110] sm:$0xff]
      %v1363 = vld [vmem:[%s1338 + $0x120] sm:$0xff]
      %v1364 = vld [vmem:[%s1338 + $0x128] sm:$0xff]
      %v1365 = vld [vmem:[%s1338 + $0x138] sm:$0xff]
      %v1366 = vld [vmem:[%s1338 + $0x140] sm:$0xff]
      %v1367 = vld [vmem:[%s1338 + $0x150] sm:$0xff]
      %v1368 = vld [vmem:[%s1338 + $0x158] sm:$0xff]
      %v1369 = vld [vmem:[%s1338 + $0x168] sm:$0xff]
      %v1370 = vld [vmem:[%s1338 + $0x170] sm:$0xff]
      %v1371 = vpack.c.bf16 %v1339, %v1339
      %v1372 = vpack.c.bf16 %v1340, %v1340
      %v1373 = vpack.c.bf16 %v1341, %v1341
      %v1374 = vpack.c.bf16 %v1342, %v1342
      %v1375 = vpack.c.bf16 %v1343, %v1343
      %v1376 = vpack.c.bf16 %v1344, %v1344
      %v1377 = vpack.c.bf16 %v1345, %v1345
      %v1378 = vpack.c.bf16 %v1346, %v1346
      %v1379 = vpack.c.bf16 %v1347, %v1347
      %v1380 = vpack.c.bf16 %v1348, %v1348
      %v1381 = vpack.c.bf16 %v1349, %v1349
      %v1382 = vpack.c.bf16 %v1350, %v1350
      %v1383 = vpack.c.bf16 %v1351, %v1351
      %v1384 = vpack.c.bf16 %v1352, %v1352
      %v1385 = vpack.c.bf16 %v1353, %v1353
      %v1386 = vpack.c.bf16 %v1354, %v1354
      %v1387 = vpack.c.bf16 %v1355, %v1355
      %v1388 = vpack.c.bf16 %v1356, %v1356
      %v1389 = vpack.c.bf16 %v1357, %v1357
      %v1390 = vpack.c.bf16 %v1358, %v1358
      %v1391 = vpack.c.bf16 %v1359, %v1359
      %v1392 = vpack.c.bf16 %v1360, %v1360
      %v1393 = vpack.c.bf16 %v1361, %v1361
      %v1394 = vpack.c.bf16 %v1362, %v1362
      %v1395 = vpack.c.bf16 %v1363, %v1363
      %v1396 = vpack.c.bf16 %v1364, %v1364
      %v1397 = vpack.c.bf16 %v1365, %v1365
      %v1398 = vpack.c.bf16 %v1366, %v1366
      %v1399 = vpack.c.bf16 %v1367, %v1367
      %v1400 = vpack.c.bf16 %v1368, %v1368
      %v1401 = vpack.c.bf16 %v1369, %v1369
      %v1402 = vpack.c.bf16 %v1370, %v1370
      %v1403 = vld [vmem:[%s1338 + $0x1] sm:$0xff]
      %v1404 = vld [vmem:[%s1338 + $0x9] sm:$0xff]
      %v1405 = vld [vmem:[%s1338 + $0x19] sm:$0xff]
      %v1406 = vld [vmem:[%s1338 + $0x21] sm:$0xff]
      %v1407 = vld [vmem:[%s1338 + $0x31] sm:$0xff]
      %v1408 = vld [vmem:[%s1338 + $0x39] sm:$0xff]
      %v1409 = vld [vmem:[%s1338 + $0x49] sm:$0xff]
      %v1410 = vld [vmem:[%s1338 + $0x51] sm:$0xff]
      %v1411 = vld [vmem:[%s1338 + $0x61] sm:$0xff]
      %v1412 = vld [vmem:[%s1338 + $0x69] sm:$0xff]
      %v1413 = vld [vmem:[%s1338 + $0x79] sm:$0xff]
      %v1414 = vld [vmem:[%s1338 + $0x81] sm:$0xff]
      %v1415 = vld [vmem:[%s1338 + $0x91] sm:$0xff]
      %v1416 = vld [vmem:[%s1338 + $0x99] sm:$0xff]
      %v1417 = vld [vmem:[%s1338 + $0xa9] sm:$0xff]
      %v1418 = vld [vmem:[%s1338 + $0xb1] sm:$0xff]
      %v1419 = vld [vmem:[%s1338 + $0xc1] sm:$0xff]
      %v1420 = vld [vmem:[%s1338 + $0xc9] sm:$0xff]
      %v1421 = vld [vmem:[%s1338 + $0xd9] sm:$0xff]
      %v1422 = vld [vmem:[%s1338 + $0xe1] sm:$0xff]
      %v1423 = vld [vmem:[%s1338 + $0xf1] sm:$0xff]
      %v1424 = vld [vmem:[%s1338 + $0xf9] sm:$0xff]
      %v1425 = vld [vmem:[%s1338 + $0x109] sm:$0xff]
      %v1426 = vld [vmem:[%s1338 + $0x111] sm:$0xff]
      %v1427 = vld [vmem:[%s1338 + $0x121] sm:$0xff]
      %v1428 = vld [vmem:[%s1338 + $0x129] sm:$0xff]
      %v1429 = vld [vmem:[%s1338 + $0x139] sm:$0xff]
      %v1430 = vld [vmem:[%s1338 + $0x141] sm:$0xff]
      %v1431 = vld [vmem:[%s1338 + $0x151] sm:$0xff]
      %v1432 = vld [vmem:[%s1338 + $0x159] sm:$0xff]
      %v1433 = vld [vmem:[%s1338 + $0x169] sm:$0xff]
      %v1434 = vld [vmem:[%s1338 + $0x171] sm:$0xff]
      %v1435 = vpack.c.bf16 %v1403, %v1403
      %v1436 = vpack.c.bf16 %v1404, %v1404
      %v1437 = vpack.c.bf16 %v1405, %v1405
      %v1438 = vpack.c.bf16 %v1406, %v1406
      %v1439 = vpack.c.bf16 %v1407, %v1407
      %v1440 = vpack.c.bf16 %v1408, %v1408
      %v1441 = vpack.c.bf16 %v1409, %v1409
      %v1442 = vpack.c.bf16 %v1410, %v1410
      %v1443 = vpack.c.bf16 %v1411, %v1411
      %v1444 = vpack.c.bf16 %v1412, %v1412
      %v1445 = vpack.c.bf16 %v1413, %v1413
      %v1446 = vpack.c.bf16 %v1414, %v1414
      %v1447 = vpack.c.bf16 %v1415, %v1415
      %v1448 = vpack.c.bf16 %v1416, %v1416
      %v1449 = vpack.c.bf16 %v1417, %v1417
      %v1450 = vpack.c.bf16 %v1418, %v1418
      %v1451 = vpack.c.bf16 %v1419, %v1419
      %v1452 = vpack.c.bf16 %v1420, %v1420
      %v1453 = vpack.c.bf16 %v1421, %v1421
      %v1454 = vpack.c.bf16 %v1422, %v1422
      %v1455 = vpack.c.bf16 %v1423, %v1423
      %v1456 = vpack.c.bf16 %v1424, %v1424
      %v1457 = vpack.c.bf16 %v1425, %v1425
      %v1458 = vpack.c.bf16 %v1426, %v1426
      %v1459 = vpack.c.bf16 %v1427, %v1427
      %v1460 = vpack.c.bf16 %v1428, %v1428
      %v1461 = vpack.c.bf16 %v1429, %v1429
      %v1462 = vpack.c.bf16 %v1430, %v1430
      %v1463 = vpack.c.bf16 %v1431, %v1431
      %v1464 = vpack.c.bf16 %v1432, %v1432
      %v1465 = vpack.c.bf16 %v1433, %v1433
      %v1466 = vpack.c.bf16 %v1434, %v1434
      %v1467 = vld [vmem:[%s1338 + $0x2] sm:$0xff]
      %v1468 = vld [vmem:[%s1338 + $0xa] sm:$0xff]
      %v1469 = vld [vmem:[%s1338 + $0x1a] sm:$0xff]
      %v1470 = vld [vmem:[%s1338 + $0x22] sm:$0xff]
      %v1471 = vld [vmem:[%s1338 + $0x32] sm:$0xff]
      %v1472 = vld [vmem:[%s1338 + $0x3a] sm:$0xff]
      %v1473 = vld [vmem:[%s1338 + $0x4a] sm:$0xff]
      %v1474 = vld [vmem:[%s1338 + $0x52] sm:$0xff]
      %v1475 = vld [vmem:[%s1338 + $0x62] sm:$0xff]
      %v1476 = vld [vmem:[%s1338 + $0x6a] sm:$0xff]
      %v1477 = vld [vmem:[%s1338 + $0x7a] sm:$0xff]
      %v1478 = vld [vmem:[%s1338 + $0x82] sm:$0xff]
      %v1479 = vld [vmem:[%s1338 + $0x92] sm:$0xff]
      %v1480 = vld [vmem:[%s1338 + $0x9a] sm:$0xff]
      %v1481 = vld [vmem:[%s1338 + $0xaa] sm:$0xff]
      %v1482 = vld [vmem:[%s1338 + $0xb2] sm:$0xff]
      %v1483 = vld [vmem:[%s1338 + $0xc2] sm:$0xff]
      %v1484 = vld [vmem:[%s1338 + $0xca] sm:$0xff]
      %v1485 = vld [vmem:[%s1338 + $0xda] sm:$0xff]
      %v1486 = vld [vmem:[%s1338 + $0xe2] sm:$0xff]
      %v1487 = vld [vmem:[%s1338 + $0xf2] sm:$0xff]
      %v1488 = vld [vmem:[%s1338 + $0xfa] sm:$0xff]
      %v1489 = vld [vmem:[%s1338 + $0x10a] sm:$0xff]
      %v1490 = vld [vmem:[%s1338 + $0x112] sm:$0xff]
      %v1491 = vld [vmem:[%s1338 + $0x122] sm:$0xff]
      %v1492 = vld [vmem:[%s1338 + $0x12a] sm:$0xff]
      %v1493 = vld [vmem:[%s1338 + $0x13a] sm:$0xff]
      %v1494 = vld [vmem:[%s1338 + $0x142] sm:$0xff]
      %v1495 = vld [vmem:[%s1338 + $0x152] sm:$0xff]
      %v1496 = vld [vmem:[%s1338 + $0x15a] sm:$0xff]
      %v1497 = vld [vmem:[%s1338 + $0x16a] sm:$0xff]
      %v1498 = vld [vmem:[%s1338 + $0x172] sm:$0xff]
      %v1499 = vpack.c.bf16 %v1467, %v1467
      %v1500 = vpack.c.bf16 %v1468, %v1468
      %v1501 = vpack.c.bf16 %v1469, %v1469
      %v1502 = vpack.c.bf16 %v1470, %v1470
      %v1503 = vpack.c.bf16 %v1471, %v1471
      %v1504 = vpack.c.bf16 %v1472, %v1472
      %v1505 = vpack.c.bf16 %v1473, %v1473
      %v1506 = vpack.c.bf16 %v1474, %v1474
      %v1507 = vpack.c.bf16 %v1475, %v1475
      %v1508 = vpack.c.bf16 %v1476, %v1476
      %v1509 = vpack.c.bf16 %v1477, %v1477
      %v1510 = vpack.c.bf16 %v1478, %v1478
      %v1511 = vpack.c.bf16 %v1479, %v1479
      %v1512 = vpack.c.bf16 %v1480, %v1480
      %v1513 = vpack.c.bf16 %v1481, %v1481
      %v1514 = vpack.c.bf16 %v1482, %v1482
      %v1515 = vpack.c.bf16 %v1483, %v1483
      %v1516 = vpack.c.bf16 %v1484, %v1484
      %v1517 = vpack.c.bf16 %v1485, %v1485
      %v1518 = vpack.c.bf16 %v1486, %v1486
      %v1519 = vpack.c.bf16 %v1487, %v1487
      %v1520 = vpack.c.bf16 %v1488, %v1488
      %v1521 = vpack.c.bf16 %v1489, %v1489
      %v1522 = vpack.c.bf16 %v1490, %v1490
      %v1523 = vpack.c.bf16 %v1491, %v1491
      %v1524 = vpack.c.bf16 %v1492, %v1492
      %v1525 = vpack.c.bf16 %v1493, %v1493
      %v1526 = vpack.c.bf16 %v1494, %v1494
      %v1527 = vpack.c.bf16 %v1495, %v1495
      %v1528 = vpack.c.bf16 %v1496, %v1496
      %v1529 = vpack.c.bf16 %v1497, %v1497
      %v1530 = vpack.c.bf16 %v1498, %v1498
      %v1563 = vunpack.c.l.b16 %v986
      %v1564 = vunpack.c.l.b16 %v987
      %v1565 = vunpack.c.l.b16 %v988
      %v1566 = vunpack.c.l.b16 %v989
      %v1567 = vunpack.c.l.b16 %v990
      %v1568 = vunpack.c.l.b16 %v991
      %v1569 = vunpack.c.l.b16 %v992
      %v1570 = vunpack.c.l.b16 %v993
      %v1571 = vunpack.c.l.b16 %v994
      %v1572 = vunpack.c.l.b16 %v995
      %v1573 = vunpack.c.l.b16 %v996
      %v1574 = vunpack.c.l.b16 %v997
      %v1575 = vunpack.c.l.b16 %v998
      %v1576 = vunpack.c.l.b16 %v999
      %v1577 = vunpack.c.l.b16 %v1000
      %v1578 = vunpack.c.l.b16 %v1001
      %v1579 = vunpack.c.l.b16 %v1002
      %v1580 = vunpack.c.l.b16 %v1003
      %v1581 = vunpack.c.l.b16 %v1004
      %v1582 = vunpack.c.l.b16 %v1005
      %v1583 = vunpack.c.l.b16 %v1006
      %v1584 = vunpack.c.l.b16 %v1007
      %v1585 = vunpack.c.l.b16 %v1008
      %v1586 = vunpack.c.l.b16 %v1009
      %v1587 = vunpack.c.l.b16 %v1010
      %v1588 = vunpack.c.l.b16 %v1011
      %v1589 = vunpack.c.l.b16 %v1012
      %v1590 = vunpack.c.l.b16 %v1013
      %v1591 = vunpack.c.l.b16 %v1014
      %v1592 = vunpack.c.l.b16 %v1015
      %v1593 = vunpack.c.l.b16 %v1016
      %v1594 = vunpack.c.l.b16 %v1017
      %v1595 = vpack.c.b16 %v1564, %v1563
      %v1596 = vpack.c.b16 %v1566, %v1565
      %v1597 = vpack.c.b16 %v1568, %v1567
      %v1598 = vpack.c.b16 %v1570, %v1569
      %v1599 = vpack.c.b16 %v1572, %v1571
      %v1600 = vpack.c.b16 %v1574, %v1573
      %v1601 = vpack.c.b16 %v1576, %v1575
      %v1602 = vpack.c.b16 %v1578, %v1577
      %v1603 = vpack.c.b16 %v1580, %v1579
      %v1604 = vpack.c.b16 %v1582, %v1581
      %v1605 = vpack.c.b16 %v1584, %v1583
      %v1606 = vpack.c.b16 %v1586, %v1585
      %v1607 = vpack.c.b16 %v1588, %v1587
      %v1608 = vpack.c.b16 %v1590, %v1589
      %v1609 = vpack.c.b16 %v1592, %v1591
      %v1610 = vpack.c.b16 %v1594, %v1593
      %v1643 = vunpack.c.l.b16 %v1050
      %v1644 = vunpack.c.l.b16 %v1051
      %v1645 = vunpack.c.l.b16 %v1052
      %v1646 = vunpack.c.l.b16 %v1053
      %v1647 = vunpack.c.l.b16 %v1054
      %v1648 = vunpack.c.l.b16 %v1055
      %v1649 = vunpack.c.l.b16 %v1056
      %v1650 = vunpack.c.l.b16 %v1057
      %v1651 = vunpack.c.l.b16 %v1058
      %v1652 = vunpack.c.l.b16 %v1059
      %v1653 = vunpack.c.l.b16 %v1060
      %v1654 = vunpack.c.l.b16 %v1061
      %v1655 = vunpack.c.l.b16 %v1062
      %v1656 = vunpack.c.l.b16 %v1063
      %v1657 = vunpack.c.l.b16 %v1064
      %v1658 = vunpack.c.l.b16 %v1065
      %v1659 = vunpack.c.l.b16 %v1066
      %v1660 = vunpack.c.l.b16 %v1067
      %v1661 = vunpack.c.l.b16 %v1068
      %v1662 = vunpack.c.l.b16 %v1069
      %v1663 = vunpack.c.l.b16 %v1070
      %v1664 = vunpack.c.l.b16 %v1071
      %v1665 = vunpack.c.l.b16 %v1072
      %v1666 = vunpack.c.l.b16 %v1073
      %v1667 = vunpack.c.l.b16 %v1074
      %v1668 = vunpack.c.l.b16 %v1075
      %v1669 = vunpack.c.l.b16 %v1076
      %v1670 = vunpack.c.l.b16 %v1077
      %v1671 = vunpack.c.l.b16 %v1078
      %v1672 = vunpack.c.l.b16 %v1079
      %v1673 = vunpack.c.l.b16 %v1080
      %v1674 = vunpack.c.l.b16 %v1081
      %v1675 = vpack.c.b16 %v1644, %v1643
      %v1676 = vpack.c.b16 %v1646, %v1645
      %v1677 = vpack.c.b16 %v1648, %v1647
      %v1678 = vpack.c.b16 %v1650, %v1649
      %v1679 = vpack.c.b16 %v1652, %v1651
      %v1680 = vpack.c.b16 %v1654, %v1653
      %v1681 = vpack.c.b16 %v1656, %v1655
      %v1682 = vpack.c.b16 %v1658, %v1657
      %v1683 = vpack.c.b16 %v1660, %v1659
      %v1684 = vpack.c.b16 %v1662, %v1661
      %v1685 = vpack.c.b16 %v1664, %v1663
      %v1686 = vpack.c.b16 %v1666, %v1665
      %v1687 = vpack.c.b16 %v1668, %v1667
      %v1688 = vpack.c.b16 %v1670, %v1669
      %v1689 = vpack.c.b16 %v1672, %v1671
      %v1690 = vpack.c.b16 %v1674, %v1673
      %1691 = vrot.lane.b32.xlu0 %v1675, 4
      %v1692 = vpop.permute.xlu0 %1691
      %1693 = vrot.lane.b32.xlu0 %v1676, 4
      %v1694 = vpop.permute.xlu0 %1693
      %1695 = vrot.lane.b32.xlu0 %v1677, 4
      %v1696 = vpop.permute.xlu0 %1695
      %1697 = vrot.lane.b32.xlu0 %v1678, 4
      %v1698 = vpop.permute.xlu0 %1697
      %1699 = vrot.lane.b32.xlu0 %v1679, 4
      %v1700 = vpop.permute.xlu0 %1699
      %1701 = vrot.lane.b32.xlu0 %v1680, 4
      %v1702 = vpop.permute.xlu0 %1701
      %1703 = vrot.lane.b32.xlu0 %v1681, 4
      %v1704 = vpop.permute.xlu0 %1703
      %1705 = vrot.lane.b32.xlu0 %v1682, 4
      %v1706 = vpop.permute.xlu0 %1705
      %1707 = vrot.lane.b32.xlu0 %v1683, 4
      %v1708 = vpop.permute.xlu0 %1707
      %1709 = vrot.lane.b32.xlu0 %v1684, 4
      %v1710 = vpop.permute.xlu0 %1709
      %1711 = vrot.lane.b32.xlu0 %v1685, 4
      %v1712 = vpop.permute.xlu0 %1711
      %1713 = vrot.lane.b32.xlu0 %v1686, 4
      %v1714 = vpop.permute.xlu0 %1713
      %1715 = vrot.lane.b32.xlu0 %v1687, 4
      %v1716 = vpop.permute.xlu0 %1715
      %1717 = vrot.lane.b32.xlu0 %v1688, 4
      %v1718 = vpop.permute.xlu0 %1717
      %1719 = vrot.lane.b32.xlu0 %v1689, 4
      %v1720 = vpop.permute.xlu0 %1719
      %1721 = vrot.lane.b32.xlu0 %v1690, 4
      %v1722 = vpop.permute.xlu0 %1721
      %v1755 = vunpack.c.l.b16 %v1114
      %v1756 = vunpack.c.l.b16 %v1115
      %v1757 = vunpack.c.l.b16 %v1116
      %v1758 = vunpack.c.l.b16 %v1117
      %v1759 = vunpack.c.l.b16 %v1118
      %v1760 = vunpack.c.l.b16 %v1119
      %v1761 = vunpack.c.l.b16 %v1120
      %v1762 = vunpack.c.l.b16 %v1121
      %v1763 = vunpack.c.l.b16 %v1122
      %v1764 = vunpack.c.l.b16 %v1123
      %v1765 = vunpack.c.l.b16 %v1124
      %v1766 = vunpack.c.l.b16 %v1125
      %v1767 = vunpack.c.l.b16 %v1126
      %v1768 = vunpack.c.l.b16 %v1127
      %v1769 = vunpack.c.l.b16 %v1128
      %v1770 = vunpack.c.l.b16 %v1129
      %v1771 = vunpack.c.l.b16 %v1130
      %v1772 = vunpack.c.l.b16 %v1131
      %v1773 = vunpack.c.l.b16 %v1132
      %v1774 = vunpack.c.l.b16 %v1133
      %v1775 = vunpack.c.l.b16 %v1134
      %v1776 = vunpack.c.l.b16 %v1135
      %v1777 = vunpack.c.l.b16 %v1136
      %v1778 = vunpack.c.l.b16 %v1137
      %v1779 = vunpack.c.l.b16 %v1138
      %v1780 = vunpack.c.l.b16 %v1139
      %v1781 = vunpack.c.l.b16 %v1140
      %v1782 = vunpack.c.l.b16 %v1141
      %v1783 = vunpack.c.l.b16 %v1142
      %v1784 = vunpack.c.l.b16 %v1143
      %v1785 = vunpack.c.l.b16 %v1144
      %v1786 = vunpack.c.l.b16 %v1145
      %v1787 = vpack.c.b16 %v1756, %v1755
      %v1788 = vpack.c.b16 %v1758, %v1757
      %v1789 = vpack.c.b16 %v1760, %v1759
      %v1790 = vpack.c.b16 %v1762, %v1761
      %v1791 = vpack.c.b16 %v1764, %v1763
      %v1792 = vpack.c.b16 %v1766, %v1765
      %v1793 = vpack.c.b16 %v1768, %v1767
      %v1794 = vpack.c.b16 %v1770, %v1769
      %v1795 = vpack.c.b16 %v1772, %v1771
      %v1796 = vpack.c.b16 %v1774, %v1773
      %v1797 = vpack.c.b16 %v1776, %v1775
      %v1798 = vpack.c.b16 %v1778, %v1777
      %v1799 = vpack.c.b16 %v1780, %v1779
      %v1800 = vpack.c.b16 %v1782, %v1781
      %v1801 = vpack.c.b16 %v1784, %v1783
      %v1802 = vpack.c.b16 %v1786, %v1785
      %1803 = vrot.lane.b32.xlu0 %v1787, 8
      %v1804 = vpop.permute.xlu0 %1803
      %1805 = vrot.lane.b32.xlu0 %v1788, 8
      %v1806 = vpop.permute.xlu0 %1805
      %1807 = vrot.lane.b32.xlu0 %v1789, 8
      %v1808 = vpop.permute.xlu0 %1807
      %1809 = vrot.lane.b32.xlu0 %v1790, 8
      %v1810 = vpop.permute.xlu0 %1809
      %1811 = vrot.lane.b32.xlu0 %v1791, 8
      %v1812 = vpop.permute.xlu0 %1811
      %1813 = vrot.lane.b32.xlu0 %v1792, 8
      %v1814 = vpop.permute.xlu0 %1813
      %1815 = vrot.lane.b32.xlu0 %v1793, 8
      %v1816 = vpop.permute.xlu0 %1815
      %1817 = vrot.lane.b32.xlu0 %v1794, 8
      %v1818 = vpop.permute.xlu0 %1817
      %1819 = vrot.lane.b32.xlu0 %v1795, 8
      %v1820 = vpop.permute.xlu0 %1819
      %1821 = vrot.lane.b32.xlu0 %v1796, 8
      %v1822 = vpop.permute.xlu0 %1821
      %1823 = vrot.lane.b32.xlu0 %v1797, 8
      %v1824 = vpop.permute.xlu0 %1823
      %1825 = vrot.lane.b32.xlu0 %v1798, 8
      %v1826 = vpop.permute.xlu0 %1825
      %1827 = vrot.lane.b32.xlu0 %v1799, 8
      %v1828 = vpop.permute.xlu0 %1827
      %1829 = vrot.lane.b32.xlu0 %v1800, 8
      %v1830 = vpop.permute.xlu0 %1829
      %1831 = vrot.lane.b32.xlu0 %v1801, 8
      %v1832 = vpop.permute.xlu0 %1831
      %1833 = vrot.lane.b32.xlu0 %v1802, 8
      %v1834 = vpop.permute.xlu0 %1833
      %v1867 = vunpack.c.l.b16 %v1178
      %v1868 = vunpack.c.l.b16 %v1179
      %v1869 = vunpack.c.l.b16 %v1180
      %v1870 = vunpack.c.l.b16 %v1181
      %v1871 = vunpack.c.l.b16 %v1182
      %v1872 = vunpack.c.l.b16 %v1183
      %v1873 = vunpack.c.l.b16 %v1184
      %v1874 = vunpack.c.l.b16 %v1185
      %v1875 = vunpack.c.l.b16 %v1186
      %v1876 = vunpack.c.l.b16 %v1187
      %v1877 = vunpack.c.l.b16 %v1188
      %v1878 = vunpack.c.l.b16 %v1189
      %v1879 = vunpack.c.l.b16 %v1190
      %v1880 = vunpack.c.l.b16 %v1191
      %v1881 = vunpack.c.l.b16 %v1192
      %v1882 = vunpack.c.l.b16 %v1193
      %v1883 = vunpack.c.l.b16 %v1194
      %v1884 = vunpack.c.l.b16 %v1195
      %v1885 = vunpack.c.l.b16 %v1196
      %v1886 = vunpack.c.l.b16 %v1197
      %v1887 = vunpack.c.l.b16 %v1198
      %v1888 = vunpack.c.l.b16 %v1199
      %v1889 = vunpack.c.l.b16 %v1200
      %v1890 = vunpack.c.l.b16 %v1201
      %v1891 = vunpack.c.l.b16 %v1202
      %v1892 = vunpack.c.l.b16 %v1203
      %v1893 = vunpack.c.l.b16 %v1204
      %v1894 = vunpack.c.l.b16 %v1205
      %v1895 = vunpack.c.l.b16 %v1206
      %v1896 = vunpack.c.l.b16 %v1207
      %v1897 = vunpack.c.l.b16 %v1208
      %v1898 = vunpack.c.l.b16 %v1209
      %v1899 = vpack.c.b16 %v1868, %v1867
      %v1900 = vpack.c.b16 %v1870, %v1869
      %v1901 = vpack.c.b16 %v1872, %v1871
      %v1902 = vpack.c.b16 %v1874, %v1873
      %v1903 = vpack.c.b16 %v1876, %v1875
      %v1904 = vpack.c.b16 %v1878, %v1877
      %v1905 = vpack.c.b16 %v1880, %v1879
      %v1906 = vpack.c.b16 %v1882, %v1881
      %v1907 = vpack.c.b16 %v1884, %v1883
      %v1908 = vpack.c.b16 %v1886, %v1885
      %v1909 = vpack.c.b16 %v1888, %v1887
      %v1910 = vpack.c.b16 %v1890, %v1889
      %v1911 = vpack.c.b16 %v1892, %v1891
      %v1912 = vpack.c.b16 %v1894, %v1893
      %v1913 = vpack.c.b16 %v1896, %v1895
      %v1914 = vpack.c.b16 %v1898, %v1897
      %1915 = vrot.lane.b32.xlu0 %v1899, 12
      %v1916 = vpop.permute.xlu0 %1915
      %1917 = vrot.lane.b32.xlu0 %v1900, 12
      %v1918 = vpop.permute.xlu0 %1917
      %1919 = vrot.lane.b32.xlu0 %v1901, 12
      %v1920 = vpop.permute.xlu0 %1919
      %1921 = vrot.lane.b32.xlu0 %v1902, 12
      %v1922 = vpop.permute.xlu0 %1921
      %1923 = vrot.lane.b32.xlu0 %v1903, 12
      %v1924 = vpop.permute.xlu0 %1923
      %1925 = vrot.lane.b32.xlu0 %v1904, 12
      %v1926 = vpop.permute.xlu0 %1925
      %1927 = vrot.lane.b32.xlu0 %v1905, 12
      %v1928 = vpop.permute.xlu0 %1927
      %1929 = vrot.lane.b32.xlu0 %v1906, 12
      %v1930 = vpop.permute.xlu0 %1929
      %1931 = vrot.lane.b32.xlu0 %v1907, 12
      %v1932 = vpop.permute.xlu0 %1931
      %1933 = vrot.lane.b32.xlu0 %v1908, 12
      %v1934 = vpop.permute.xlu0 %1933
      %1935 = vrot.lane.b32.xlu0 %v1909, 12
      %v1936 = vpop.permute.xlu0 %1935
      %1937 = vrot.lane.b32.xlu0 %v1910, 12
      %v1938 = vpop.permute.xlu0 %1937
      %1939 = vrot.lane.b32.xlu0 %v1911, 12
      %v1940 = vpop.permute.xlu0 %1939
      %1941 = vrot.lane.b32.xlu0 %v1912, 12
      %v1942 = vpop.permute.xlu0 %1941
      %1943 = vrot.lane.b32.xlu0 %v1913, 12
      %v1944 = vpop.permute.xlu0 %1943
      %1945 = vrot.lane.b32.xlu0 %v1914, 12
      %v1946 = vpop.permute.xlu0 %1945
      %v1979 = vunpack.c.l.b16 %v1242
      %v1980 = vunpack.c.l.b16 %v1243
      %v1981 = vunpack.c.l.b16 %v1244
      %v1982 = vunpack.c.l.b16 %v1245
      %v1983 = vunpack.c.l.b16 %v1246
      %v1984 = vunpack.c.l.b16 %v1247
      %v1985 = vunpack.c.l.b16 %v1248
      %v1986 = vunpack.c.l.b16 %v1249
      %v1987 = vunpack.c.l.b16 %v1250
      %v1988 = vunpack.c.l.b16 %v1251
      %v1989 = vunpack.c.l.b16 %v1252
      %v1990 = vunpack.c.l.b16 %v1253
      %v1991 = vunpack.c.l.b16 %v1254
      %v1992 = vunpack.c.l.b16 %v1255
      %v1993 = vunpack.c.l.b16 %v1256
      %v1994 = vunpack.c.l.b16 %v1257
      %v1995 = vunpack.c.l.b16 %v1258
      %v1996 = vunpack.c.l.b16 %v1259
      %v1997 = vunpack.c.l.b16 %v1260
      %v1998 = vunpack.c.l.b16 %v1261
      %v1999 = vunpack.c.l.b16 %v1262
      %v2000 = vunpack.c.l.b16 %v1263
      %v2001 = vunpack.c.l.b16 %v1264
      %v2002 = vunpack.c.l.b16 %v1265
      %v2003 = vunpack.c.l.b16 %v1266
      %v2004 = vunpack.c.l.b16 %v1267
      %v2005 = vunpack.c.l.b16 %v1268
      %v2006 = vunpack.c.l.b16 %v1269
      %v2007 = vunpack.c.l.b16 %v1270
      %v2008 = vunpack.c.l.b16 %v1271
      %v2009 = vunpack.c.l.b16 %v1272
      %v2010 = vunpack.c.l.b16 %v1273
      %v2011 = vpack.c.b16 %v1980, %v1979
      %v2012 = vpack.c.b16 %v1982, %v1981
      %v2013 = vpack.c.b16 %v1984, %v1983
      %v2014 = vpack.c.b16 %v1986, %v1985
      %v2015 = vpack.c.b16 %v1988, %v1987
      %v2016 = vpack.c.b16 %v1990, %v1989
      %v2017 = vpack.c.b16 %v1992, %v1991
      %v2018 = vpack.c.b16 %v1994, %v1993
      %v2019 = vpack.c.b16 %v1996, %v1995
      %v2020 = vpack.c.b16 %v1998, %v1997
      %v2021 = vpack.c.b16 %v2000, %v1999
      %v2022 = vpack.c.b16 %v2002, %v2001
      %v2023 = vpack.c.b16 %v2004, %v2003
      %v2024 = vpack.c.b16 %v2006, %v2005
      %v2025 = vpack.c.b16 %v2008, %v2007
      %v2026 = vpack.c.b16 %v2010, %v2009
      %2027 = vrot.lane.b32.xlu0 %v2011, 16
      %v2028 = vpop.permute.xlu0 %2027
      %2029 = vrot.lane.b32.xlu0 %v2012, 16
      %v2030 = vpop.permute.xlu0 %2029
      %2031 = vrot.lane.b32.xlu0 %v2013, 16
      %v2032 = vpop.permute.xlu0 %2031
      %2033 = vrot.lane.b32.xlu0 %v2014, 16
      %v2034 = vpop.permute.xlu0 %2033
      %2035 = vrot.lane.b32.xlu0 %v2015, 16
      %v2036 = vpop.permute.xlu0 %2035
      %2037 = vrot.lane.b32.xlu0 %v2016, 16
      %v2038 = vpop.permute.xlu0 %2037
      %2039 = vrot.lane.b32.xlu0 %v2017, 16
      %v2040 = vpop.permute.xlu0 %2039
      %2041 = vrot.lane.b32.xlu0 %v2018, 16
      %v2042 = vpop.permute.xlu0 %2041
      %2043 = vrot.lane.b32.xlu0 %v2019, 16
      %v2044 = vpop.permute.xlu0 %2043
      %2045 = vrot.lane.b32.xlu0 %v2020, 16
      %v2046 = vpop.permute.xlu0 %2045
      %2047 = vrot.lane.b32.xlu0 %v2021, 16
      %v2048 = vpop.permute.xlu0 %2047
      %2049 = vrot.lane.b32.xlu0 %v2022, 16
      %v2050 = vpop.permute.xlu0 %2049
      %2051 = vrot.lane.b32.xlu0 %v2023, 16
      %v2052 = vpop.permute.xlu0 %2051
      %2053 = vrot.lane.b32.xlu0 %v2024, 16
      %v2054 = vpop.permute.xlu0 %2053
      %2055 = vrot.lane.b32.xlu0 %v2025, 16
      %v2056 = vpop.permute.xlu0 %2055
      %2057 = vrot.lane.b32.xlu0 %v2026, 16
      %v2058 = vpop.permute.xlu0 %2057
      %v2091 = vunpack.c.l.b16 %v1306
      %v2092 = vunpack.c.l.b16 %v1307
      %v2093 = vunpack.c.l.b16 %v1308
      %v2094 = vunpack.c.l.b16 %v1309
      %v2095 = vunpack.c.l.b16 %v1310
      %v2096 = vunpack.c.l.b16 %v1311
      %v2097 = vunpack.c.l.b16 %v1312
      %v2098 = vunpack.c.l.b16 %v1313
      %v2099 = vunpack.c.l.b16 %v1314
      %v2100 = vunpack.c.l.b16 %v1315
      %v2101 = vunpack.c.l.b16 %v1316
      %v2102 = vunpack.c.l.b16 %v1317
      %v2103 = vunpack.c.l.b16 %v1318
      %v2104 = vunpack.c.l.b16 %v1319
      %v2105 = vunpack.c.l.b16 %v1320
      %v2106 = vunpack.c.l.b16 %v1321
      %v2107 = vunpack.c.l.b16 %v1322
      %v2108 = vunpack.c.l.b16 %v1323
      %v2109 = vunpack.c.l.b16 %v1324
      %v2110 = vunpack.c.l.b16 %v1325
      %v2111 = vunpack.c.l.b16 %v1326
      %v2112 = vunpack.c.l.b16 %v1327
      %v2113 = vunpack.c.l.b16 %v1328
      %v2114 = vunpack.c.l.b16 %v1329
      %v2115 = vunpack.c.l.b16 %v1330
      %v2116 = vunpack.c.l.b16 %v1331
      %v2117 = vunpack.c.l.b16 %v1332
      %v2118 = vunpack.c.l.b16 %v1333
      %v2119 = vunpack.c.l.b16 %v1334
      %v2120 = vunpack.c.l.b16 %v1335
      %v2121 = vunpack.c.l.b16 %v1336
      %v2122 = vunpack.c.l.b16 %v1337
      %v2123 = vpack.c.b16 %v2092, %v2091
      %v2124 = vpack.c.b16 %v2094, %v2093
      %v2125 = vpack.c.b16 %v2096, %v2095
      %v2126 = vpack.c.b16 %v2098, %v2097
      %v2127 = vpack.c.b16 %v2100, %v2099
      %v2128 = vpack.c.b16 %v2102, %v2101
      %v2129 = vpack.c.b16 %v2104, %v2103
      %v2130 = vpack.c.b16 %v2106, %v2105
      %v2131 = vpack.c.b16 %v2108, %v2107
      %v2132 = vpack.c.b16 %v2110, %v2109
      %v2133 = vpack.c.b16 %v2112, %v2111
      %v2134 = vpack.c.b16 %v2114, %v2113
      %v2135 = vpack.c.b16 %v2116, %v2115
      %v2136 = vpack.c.b16 %v2118, %v2117
      %v2137 = vpack.c.b16 %v2120, %v2119
      %v2138 = vpack.c.b16 %v2122, %v2121
      %2139 = vrot.lane.b32.xlu0 %v2123, 20
      %v2140 = vpop.permute.xlu0 %2139
      %2141 = vrot.lane.b32.xlu0 %v2124, 20
      %v2142 = vpop.permute.xlu0 %2141
      %2143 = vrot.lane.b32.xlu0 %v2125, 20
      %v2144 = vpop.permute.xlu0 %2143
      %2145 = vrot.lane.b32.xlu0 %v2126, 20
      %v2146 = vpop.permute.xlu0 %2145
      %2147 = vrot.lane.b32.xlu0 %v2127, 20
      %v2148 = vpop.permute.xlu0 %2147
      %2149 = vrot.lane.b32.xlu0 %v2128, 20
      %v2150 = vpop.permute.xlu0 %2149
      %2151 = vrot.lane.b32.xlu0 %v2129, 20
      %v2152 = vpop.permute.xlu0 %2151
      %2153 = vrot.lane.b32.xlu0 %v2130, 20
      %v2154 = vpop.permute.xlu0 %2153
      %2155 = vrot.lane.b32.xlu0 %v2131, 20
      %v2156 = vpop.permute.xlu0 %2155
      %2157 = vrot.lane.b32.xlu0 %v2132, 20
      %v2158 = vpop.permute.xlu0 %2157
      %2159 = vrot.lane.b32.xlu0 %v2133, 20
      %v2160 = vpop.permute.xlu0 %2159
      %2161 = vrot.lane.b32.xlu0 %v2134, 20
      %v2162 = vpop.permute.xlu0 %2161
      %2163 = vrot.lane.b32.xlu0 %v2135, 20
      %v2164 = vpop.permute.xlu0 %2163
      %2165 = vrot.lane.b32.xlu0 %v2136, 20
      %v2166 = vpop.permute.xlu0 %2165
      %2167 = vrot.lane.b32.xlu0 %v2137, 20
      %v2168 = vpop.permute.xlu0 %2167
      %2169 = vrot.lane.b32.xlu0 %v2138, 20
      %v2170 = vpop.permute.xlu0 %2169
      %v2203 = vunpack.c.l.b16 %v1371
      %v2204 = vunpack.c.l.b16 %v1372
      %v2205 = vunpack.c.l.b16 %v1373
      %v2206 = vunpack.c.l.b16 %v1374
      %v2207 = vunpack.c.l.b16 %v1375
      %v2208 = vunpack.c.l.b16 %v1376
      %v2209 = vunpack.c.l.b16 %v1377
      %v2210 = vunpack.c.l.b16 %v1378
      %v2211 = vunpack.c.l.b16 %v1379
      %v2212 = vunpack.c.l.b16 %v1380
      %v2213 = vunpack.c.l.b16 %v1381
      %v2214 = vunpack.c.l.b16 %v1382
      %v2215 = vunpack.c.l.b16 %v1383
      %v2216 = vunpack.c.l.b16 %v1384
      %v2217 = vunpack.c.l.b16 %v1385
      %v2218 = vunpack.c.l.b16 %v1386
      %v2219 = vunpack.c.l.b16 %v1387
      %v2220 = vunpack.c.l.b16 %v1388
      %v2221 = vunpack.c.l.b16 %v1389
      %v2222 = vunpack.c.l.b16 %v1390
      %v2223 = vunpack.c.l.b16 %v1391
      %v2224 = vunpack.c.l.b16 %v1392
      %v2225 = vunpack.c.l.b16 %v1393
      %v2226 = vunpack.c.l.b16 %v1394
      %v2227 = vunpack.c.l.b16 %v1395
      %v2228 = vunpack.c.l.b16 %v1396
      %v2229 = vunpack.c.l.b16 %v1397
      %v2230 = vunpack.c.l.b16 %v1398
      %v2231 = vunpack.c.l.b16 %v1399
      %v2232 = vunpack.c.l.b16 %v1400
      %v2233 = vunpack.c.l.b16 %v1401
      %v2234 = vunpack.c.l.b16 %v1402
      %v2235 = vpack.c.b16 %v2204, %v2203
      %v2236 = vpack.c.b16 %v2206, %v2205
      %v2237 = vpack.c.b16 %v2208, %v2207
      %v2238 = vpack.c.b16 %v2210, %v2209
      %v2239 = vpack.c.b16 %v2212, %v2211
      %v2240 = vpack.c.b16 %v2214, %v2213
      %v2241 = vpack.c.b16 %v2216, %v2215
      %v2242 = vpack.c.b16 %v2218, %v2217
      %v2243 = vpack.c.b16 %v2220, %v2219
      %v2244 = vpack.c.b16 %v2222, %v2221
      %v2245 = vpack.c.b16 %v2224, %v2223
      %v2246 = vpack.c.b16 %v2226, %v2225
      %v2247 = vpack.c.b16 %v2228, %v2227
      %v2248 = vpack.c.b16 %v2230, %v2229
      %v2249 = vpack.c.b16 %v2232, %v2231
      %v2250 = vpack.c.b16 %v2234, %v2233
      %2251 = vrot.lane.b32.xlu0 %v2235, 24
      %v2252 = vpop.permute.xlu0 %2251
      %2253 = vrot.lane.b32.xlu0 %v2236, 24
      %v2254 = vpop.permute.xlu0 %2253
      %2255 = vrot.lane.b32.xlu0 %v2237, 24
      %v2256 = vpop.permute.xlu0 %2255
      %2257 = vrot.lane.b32.xlu0 %v2238, 24
      %v2258 = vpop.permute.xlu0 %2257
      %2259 = vrot.lane.b32.xlu0 %v2239, 24
      %v2260 = vpop.permute.xlu0 %2259
      %2261 = vrot.lane.b32.xlu0 %v2240, 24
      %v2262 = vpop.permute.xlu0 %2261
      %2263 = vrot.lane.b32.xlu0 %v2241, 24
      %v2264 = vpop.permute.xlu0 %2263
      %2265 = vrot.lane.b32.xlu0 %v2242, 24
      %v2266 = vpop.permute.xlu0 %2265
      %2267 = vrot.lane.b32.xlu0 %v2243, 24
      %v2268 = vpop.permute.xlu0 %2267
      %2269 = vrot.lane.b32.xlu0 %v2244, 24
      %v2270 = vpop.permute.xlu0 %2269
      %2271 = vrot.lane.b32.xlu0 %v2245, 24
      %v2272 = vpop.permute.xlu0 %2271
      %2273 = vrot.lane.b32.xlu0 %v2246, 24
      %v2274 = vpop.permute.xlu0 %2273
      %2275 = vrot.lane.b32.xlu0 %v2247, 24
      %v2276 = vpop.permute.xlu0 %2275
      %2277 = vrot.lane.b32.xlu0 %v2248, 24
      %v2278 = vpop.permute.xlu0 %2277
      %2279 = vrot.lane.b32.xlu0 %v2249, 24
      %v2280 = vpop.permute.xlu0 %2279
      %2281 = vrot.lane.b32.xlu0 %v2250, 24
      %v2282 = vpop.permute.xlu0 %2281
      %v2315 = vunpack.c.l.b16 %v1435
      %v2316 = vunpack.c.l.b16 %v1436
      %v2317 = vunpack.c.l.b16 %v1437
      %v2318 = vunpack.c.l.b16 %v1438
      %v2319 = vunpack.c.l.b16 %v1439
      %v2320 = vunpack.c.l.b16 %v1440
      %v2321 = vunpack.c.l.b16 %v1441
      %v2322 = vunpack.c.l.b16 %v1442
      %v2323 = vunpack.c.l.b16 %v1443
      %v2324 = vunpack.c.l.b16 %v1444
      %v2325 = vunpack.c.l.b16 %v1445
      %v2326 = vunpack.c.l.b16 %v1446
      %v2327 = vunpack.c.l.b16 %v1447
      %v2328 = vunpack.c.l.b16 %v1448
      %v2329 = vunpack.c.l.b16 %v1449
      %v2330 = vunpack.c.l.b16 %v1450
      %v2331 = vunpack.c.l.b16 %v1451
      %v2332 = vunpack.c.l.b16 %v1452
      %v2333 = vunpack.c.l.b16 %v1453
      %v2334 = vunpack.c.l.b16 %v1454
      %v2335 = vunpack.c.l.b16 %v1455
      %v2336 = vunpack.c.l.b16 %v1456
      %v2337 = vunpack.c.l.b16 %v1457
      %v2338 = vunpack.c.l.b16 %v1458
      %v2339 = vunpack.c.l.b16 %v1459
      %v2340 = vunpack.c.l.b16 %v1460
      %v2341 = vunpack.c.l.b16 %v1461
      %v2342 = vunpack.c.l.b16 %v1462
      %v2343 = vunpack.c.l.b16 %v1463
      %v2344 = vunpack.c.l.b16 %v1464
      %v2345 = vunpack.c.l.b16 %v1465
      %v2346 = vunpack.c.l.b16 %v1466
      %v2347 = vpack.c.b16 %v2316, %v2315
      %v2348 = vpack.c.b16 %v2318, %v2317
      %v2349 = vpack.c.b16 %v2320, %v2319
      %v2350 = vpack.c.b16 %v2322, %v2321
      %v2351 = vpack.c.b16 %v2324, %v2323
      %v2352 = vpack.c.b16 %v2326, %v2325
      %v2353 = vpack.c.b16 %v2328, %v2327
      %v2354 = vpack.c.b16 %v2330, %v2329
      %v2355 = vpack.c.b16 %v2332, %v2331
      %v2356 = vpack.c.b16 %v2334, %v2333
      %v2357 = vpack.c.b16 %v2336, %v2335
      %v2358 = vpack.c.b16 %v2338, %v2337
      %v2359 = vpack.c.b16 %v2340, %v2339
      %v2360 = vpack.c.b16 %v2342, %v2341
      %v2361 = vpack.c.b16 %v2344, %v2343
      %v2362 = vpack.c.b16 %v2346, %v2345
      %2363 = vrot.lane.b32.xlu0 %v2347, 28
      %v2364 = vpop.permute.xlu0 %2363
      %2365 = vrot.lane.b32.xlu0 %v2348, 28
      %v2366 = vpop.permute.xlu0 %2365
      %2367 = vrot.lane.b32.xlu0 %v2349, 28
      %v2368 = vpop.permute.xlu0 %2367
      %2369 = vrot.lane.b32.xlu0 %v2350, 28
      %v2370 = vpop.permute.xlu0 %2369
      %2371 = vrot.lane.b32.xlu0 %v2351, 28
      %v2372 = vpop.permute.xlu0 %2371
      %2373 = vrot.lane.b32.xlu0 %v2352, 28
      %v2374 = vpop.permute.xlu0 %2373
      %2375 = vrot.lane.b32.xlu0 %v2353, 28
      %v2376 = vpop.permute.xlu0 %2375
      %2377 = vrot.lane.b32.xlu0 %v2354, 28
      %v2378 = vpop.permute.xlu0 %2377
      %2379 = vrot.lane.b32.xlu0 %v2355, 28
      %v2380 = vpop.permute.xlu0 %2379
      %2381 = vrot.lane.b32.xlu0 %v2356, 28
      %v2382 = vpop.permute.xlu0 %2381
      %2383 = vrot.lane.b32.xlu0 %v2357, 28
      %v2384 = vpop.permute.xlu0 %2383
      %2385 = vrot.lane.b32.xlu0 %v2358, 28
      %v2386 = vpop.permute.xlu0 %2385
      %2387 = vrot.lane.b32.xlu0 %v2359, 28
      %v2388 = vpop.permute.xlu0 %2387
      %2389 = vrot.lane.b32.xlu0 %v2360, 28
      %v2390 = vpop.permute.xlu0 %2389
      %2391 = vrot.lane.b32.xlu0 %v2361, 28
      %v2392 = vpop.permute.xlu0 %2391
      %2393 = vrot.lane.b32.xlu0 %v2362, 28
      %v2394 = vpop.permute.xlu0 %2393
      %v2427 = vunpack.c.l.b16 %v1499
      %v2428 = vunpack.c.l.b16 %v1500
      %v2429 = vunpack.c.l.b16 %v1501
      %v2430 = vunpack.c.l.b16 %v1502
      %v2431 = vunpack.c.l.b16 %v1503
      %v2432 = vunpack.c.l.b16 %v1504
      %v2433 = vunpack.c.l.b16 %v1505
      %v2434 = vunpack.c.l.b16 %v1506
      %v2435 = vunpack.c.l.b16 %v1507
      %v2436 = vunpack.c.l.b16 %v1508
      %v2437 = vunpack.c.l.b16 %v1509
      %v2438 = vunpack.c.l.b16 %v1510
      %v2439 = vunpack.c.l.b16 %v1511
      %v2440 = vunpack.c.l.b16 %v1512
      %v2441 = vunpack.c.l.b16 %v1513
      %v2442 = vunpack.c.l.b16 %v1514
      %v2443 = vunpack.c.l.b16 %v1515
      %v2444 = vunpack.c.l.b16 %v1516
      %v2445 = vunpack.c.l.b16 %v1517
      %v2446 = vunpack.c.l.b16 %v1518
      %v2447 = vunpack.c.l.b16 %v1519
      %v2448 = vunpack.c.l.b16 %v1520
      %v2449 = vunpack.c.l.b16 %v1521
      %v2450 = vunpack.c.l.b16 %v1522
      %v2451 = vunpack.c.l.b16 %v1523
      %v2452 = vunpack.c.l.b16 %v1524
      %v2453 = vunpack.c.l.b16 %v1525
      %v2454 = vunpack.c.l.b16 %v1526
      %v2455 = vunpack.c.l.b16 %v1527
      %v2456 = vunpack.c.l.b16 %v1528
      %v2457 = vunpack.c.l.b16 %v1529
      %v2458 = vunpack.c.l.b16 %v1530
      %v2459 = vpack.c.b16 %v2428, %v2427
      %v2460 = vpack.c.b16 %v2430, %v2429
      %v2461 = vpack.c.b16 %v2432, %v2431
      %v2462 = vpack.c.b16 %v2434, %v2433
      %v2463 = vpack.c.b16 %v2436, %v2435
      %v2464 = vpack.c.b16 %v2438, %v2437
      %v2465 = vpack.c.b16 %v2440, %v2439
      %v2466 = vpack.c.b16 %v2442, %v2441
      %v2467 = vpack.c.b16 %v2444, %v2443
      %v2468 = vpack.c.b16 %v2446, %v2445
      %v2469 = vpack.c.b16 %v2448, %v2447
      %v2470 = vpack.c.b16 %v2450, %v2449
      %v2471 = vpack.c.b16 %v2452, %v2451
      %v2472 = vpack.c.b16 %v2454, %v2453
      %v2473 = vpack.c.b16 %v2456, %v2455
      %v2474 = vpack.c.b16 %v2458, %v2457
      %2475 = vrot.lane.b32.xlu0 %v2459, 32
      %v2476 = vpop.permute.xlu0 %2475
      %2477 = vrot.lane.b32.xlu0 %v2460, 32
      %v2478 = vpop.permute.xlu0 %2477
      %2479 = vrot.lane.b32.xlu0 %v2461, 32
      %v2480 = vpop.permute.xlu0 %2479
      %2481 = vrot.lane.b32.xlu0 %v2462, 32
      %v2482 = vpop.permute.xlu0 %2481
      %2483 = vrot.lane.b32.xlu0 %v2463, 32
      %v2484 = vpop.permute.xlu0 %2483
      %2485 = vrot.lane.b32.xlu0 %v2464, 32
      %v2486 = vpop.permute.xlu0 %2485
      %2487 = vrot.lane.b32.xlu0 %v2465, 32
      %v2488 = vpop.permute.xlu0 %2487
      %2489 = vrot.lane.b32.xlu0 %v2466, 32
      %v2490 = vpop.permute.xlu0 %2489
      %2491 = vrot.lane.b32.xlu0 %v2467, 32
      %v2492 = vpop.permute.xlu0 %2491
      %2493 = vrot.lane.b32.xlu0 %v2468, 32
      %v2494 = vpop.permute.xlu0 %2493
      %2495 = vrot.lane.b32.xlu0 %v2469, 32
      %v2496 = vpop.permute.xlu0 %2495
      %2497 = vrot.lane.b32.xlu0 %v2470, 32
      %v2498 = vpop.permute.xlu0 %2497
      %2499 = vrot.lane.b32.xlu0 %v2471, 32
      %v2500 = vpop.permute.xlu0 %2499
      %2501 = vrot.lane.b32.xlu0 %v2472, 32
      %v2502 = vpop.permute.xlu0 %2501
      %2503 = vrot.lane.b32.xlu0 %v2473, 32
      %v2504 = vpop.permute.xlu0 %2503
      %2505 = vrot.lane.b32.xlu0 %v2474, 32
      %v2506 = vpop.permute.xlu0 %2505
      %v2509 = vsel %vm865, %v1595, %v1692
      %v2512 = vsel %vm865, %v1596, %v1694
      %v2515 = vsel %vm865, %v1597, %v1696
      %v2518 = vsel %vm865, %v1598, %v1698
      %v2521 = vsel %vm865, %v1599, %v1700
      %v2524 = vsel %vm865, %v1600, %v1702
      %v2527 = vsel %vm865, %v1601, %v1704
      %v2530 = vsel %vm865, %v1602, %v1706
      %v2533 = vsel %vm865, %v1603, %v1708
      %v2536 = vsel %vm865, %v1604, %v1710
      %v2539 = vsel %vm865, %v1605, %v1712
      %v2542 = vsel %vm865, %v1606, %v1714
      %v2545 = vsel %vm865, %v1607, %v1716
      %v2548 = vsel %vm865, %v1608, %v1718
      %v2551 = vsel %vm865, %v1609, %v1720
      %v2554 = vsel %vm865, %v1610, %v1722
      %v2556 = vsel %vm591, %v2509, %v1804
      %v2558 = vsel %vm591, %v2512, %v1806
      %v2560 = vsel %vm591, %v2515, %v1808
      %v2562 = vsel %vm591, %v2518, %v1810
      %v2564 = vsel %vm591, %v2521, %v1812
      %v2566 = vsel %vm591, %v2524, %v1814
      %v2568 = vsel %vm591, %v2527, %v1816
      %v2570 = vsel %vm591, %v2530, %v1818
      %v2572 = vsel %vm591, %v2533, %v1820
      %v2574 = vsel %vm591, %v2536, %v1822
      %v2576 = vsel %vm591, %v2539, %v1824
      %v2578 = vsel %vm591, %v2542, %v1826
      %v2580 = vsel %vm591, %v2545, %v1828
      %v2582 = vsel %vm591, %v2548, %v1830
      %v2584 = vsel %vm591, %v2551, %v1832
      %v2586 = vsel %vm591, %v2554, %v1834
      %vm2587 = vcmask 97280
      %v2589 = vsel %vm2587, %v2556, %v1916
      %v2591 = vsel %vm2587, %v2558, %v1918
      %v2593 = vsel %vm2587, %v2560, %v1920
      %v2595 = vsel %vm2587, %v2562, %v1922
      %v2597 = vsel %vm2587, %v2564, %v1924
      %v2599 = vsel %vm2587, %v2566, %v1926
      %v2601 = vsel %vm2587, %v2568, %v1928
      %v2603 = vsel %vm2587, %v2570, %v1930
      %v2605 = vsel %vm2587, %v2572, %v1932
      %v2607 = vsel %vm2587, %v2574, %v1934
      %v2609 = vsel %vm2587, %v2576, %v1936
      %v2611 = vsel %vm2587, %v2578, %v1938
      %v2613 = vsel %vm2587, %v2580, %v1940
      %v2615 = vsel %vm2587, %v2582, %v1942
      %v2617 = vsel %vm2587, %v2584, %v1944
      %v2619 = vsel %vm2587, %v2586, %v1946
      %vm2620 = vcmask 130048
      %v2622 = vsel %vm2620, %v2589, %v2028
      %v2624 = vsel %vm2620, %v2591, %v2030
      %v2626 = vsel %vm2620, %v2593, %v2032
      %v2628 = vsel %vm2620, %v2595, %v2034
      %v2630 = vsel %vm2620, %v2597, %v2036
      %v2632 = vsel %vm2620, %v2599, %v2038
      %v2634 = vsel %vm2620, %v2601, %v2040
      %v2636 = vsel %vm2620, %v2603, %v2042
      %v2638 = vsel %vm2620, %v2605, %v2044
      %v2640 = vsel %vm2620, %v2607, %v2046
      %v2642 = vsel %vm2620, %v2609, %v2048
      %v2644 = vsel %vm2620, %v2611, %v2050
      %v2646 = vsel %vm2620, %v2613, %v2052
      %v2648 = vsel %vm2620, %v2615, %v2054
      %v2650 = vsel %vm2620, %v2617, %v2056
      %v2652 = vsel %vm2620, %v2619, %v2058
      %vm2653 = vcmask 162816
      %v2655 = vsel %vm2653, %v2622, %v2140
      %v2657 = vsel %vm2653, %v2624, %v2142
      %v2659 = vsel %vm2653, %v2626, %v2144
      %v2661 = vsel %vm2653, %v2628, %v2146
      %v2663 = vsel %vm2653, %v2630, %v2148
      %v2665 = vsel %vm2653, %v2632, %v2150
      %v2667 = vsel %vm2653, %v2634, %v2152
      %v2669 = vsel %vm2653, %v2636, %v2154
      %v2671 = vsel %vm2653, %v2638, %v2156
      %v2673 = vsel %vm2653, %v2640, %v2158
      %v2675 = vsel %vm2653, %v2642, %v2160
      %v2677 = vsel %vm2653, %v2644, %v2162
      %v2679 = vsel %vm2653, %v2646, %v2164
      %v2681 = vsel %vm2653, %v2648, %v2166
      %v2683 = vsel %vm2653, %v2650, %v2168
      %v2685 = vsel %vm2653, %v2652, %v2170
      %vm2686 = vcmask 195584
      %v2688 = vsel %vm2686, %v2655, %v2252
      %v2690 = vsel %vm2686, %v2657, %v2254
      %v2692 = vsel %vm2686, %v2659, %v2256
      %v2694 = vsel %vm2686, %v2661, %v2258
      %v2696 = vsel %vm2686, %v2663, %v2260
      %v2698 = vsel %vm2686, %v2665, %v2262
      %v2700 = vsel %vm2686, %v2667, %v2264
      %v2702 = vsel %vm2686, %v2669, %v2266
      %v2704 = vsel %vm2686, %v2671, %v2268
      %v2706 = vsel %vm2686, %v2673, %v2270
      %v2708 = vsel %vm2686, %v2675, %v2272
      %v2710 = vsel %vm2686, %v2677, %v2274
      %v2712 = vsel %vm2686, %v2679, %v2276
      %v2714 = vsel %vm2686, %v2681, %v2278
      %v2716 = vsel %vm2686, %v2683, %v2280
      %v2718 = vsel %vm2686, %v2685, %v2282
      %vm2719 = vcmask 228352
      %v2721 = vsel %vm2719, %v2688, %v2364
      %v2723 = vsel %vm2719, %v2690, %v2366
      %v2725 = vsel %vm2719, %v2692, %v2368
      %v2727 = vsel %vm2719, %v2694, %v2370
      %v2729 = vsel %vm2719, %v2696, %v2372
      %v2731 = vsel %vm2719, %v2698, %v2374
      %v2733 = vsel %vm2719, %v2700, %v2376
      %v2735 = vsel %vm2719, %v2702, %v2378
      %v2737 = vsel %vm2719, %v2704, %v2380
      %v2739 = vsel %vm2719, %v2706, %v2382
      %v2741 = vsel %vm2719, %v2708, %v2384
      %v2743 = vsel %vm2719, %v2710, %v2386
      %v2745 = vsel %vm2719, %v2712, %v2388
      %v2747 = vsel %vm2719, %v2714, %v2390
      %v2749 = vsel %vm2719, %v2716, %v2392
      %v2751 = vsel %vm2719, %v2718, %v2394
      %vm2752 = vcmask 261120
      %v2754 = vsel %vm2752, %v2721, %v2476
      %v2756 = vsel %vm2752, %v2723, %v2478
      %v2758 = vsel %vm2752, %v2725, %v2480
      %v2760 = vsel %vm2752, %v2727, %v2482
      %v2762 = vsel %vm2752, %v2729, %v2484
      %v2764 = vsel %vm2752, %v2731, %v2486
      %v2766 = vsel %vm2752, %v2733, %v2488
      %v2768 = vsel %vm2752, %v2735, %v2490
      %v2770 = vsel %vm2752, %v2737, %v2492
      %v2772 = vsel %vm2752, %v2739, %v2494
      %v2774 = vsel %vm2752, %v2741, %v2496
      %v2776 = vsel %vm2752, %v2743, %v2498
      %v2778 = vsel %vm2752, %v2745, %v2500
      %v2780 = vsel %vm2752, %v2747, %v2502
      %v2782 = vsel %vm2752, %v2749, %v2504
      %v2784 = vsel %vm2752, %v2751, %v2506
      %v2785 = vld [vmem:[%s7] sm:$0xf]
      %v2786 = vld [vmem:[%s7 + $0x4] sm:$0xf]
      %v2787 = vld [vmem:[%s7 + $0x8] sm:$0xf]
      %v2788 = vld [vmem:[%s7 + $0xc] sm:$0xf]
      %v2789 = vld [vmem:[%s7 + $0x10] sm:$0x3]
      %v2790 = vld [vmem:[%s8] sm:$0x1]
      %v2792 = vperm.slane %v2790, 0
      %v2799 = vunpack.c.l.b16 %v2785
      %v2800 = vunpack.c.l.b16 %v2786
      %v2801 = vunpack.c.l.b16 %v2787
      %v2802 = vunpack.c.l.b16 %v2788
      %v2803 = vunpack.c.l.b16 %v2789
      %v2804 = vpack.c.b16 %v2800, %v2799
      %v2805 = vpack.c.b16 %v2802, %v2801
      %v2806 = vpack.c.b16 %v2803, %v2803
      %vm2809 = vcmask 293888
      %v2810 = vsel %vm2809, %v2754, 0
      %v2812 = vsel %vm2809, %v2756, 0
      %v2814 = vsel %vm2809, %v2758, 0
      %v2816 = vsel %vm2809, %v2760, 0
      %v2818 = vsel %vm2809, %v2762, 0
      %v2820 = vsel %vm2809, %v2764, 0
      %v2822 = vsel %vm2809, %v2766, 0
      %v2824 = vsel %vm2809, %v2768, 0
      %v2826 = vsel %vm2809, %v2770, 0
      %v2828 = vsel %vm2809, %v2772, 0
      %v2830 = vsel %vm2809, %v2774, 0
      %v2832 = vsel %vm2809, %v2776, 0
      %v2834 = vsel %vm2809, %v2778, 0
      %v2836 = vsel %vm2809, %v2780, 0
      %v2838 = vsel %vm2809, %v2782, 0
      %v2840 = vsel %vm2809, %v2784, 0
      %vm2842 = vcmask 1041408
      %v2844 = vsel %vm2842, %v2806, 0
      %2846 = vmatpush.bf16.msra.mxu0 0
      %2847 = vmatpush.bf16.msra.mxu0 0
      %2848 = vmatpush.bf16.msra.mxu0 0
      %2849 = vmatpush.bf16.msra.mxu0 0
      %2850 = vmatpush.bf16.msra.mxu0 0
      %2851 = vmatpush.bf16.msra.mxu0 %v2844
      %2852 = vmatpush.bf16.msra.mxu0 %v2805
      %2853 = vmatpush.bf16.msra.mxu0 %v2804
      %2854 = vmatmul.bf16.gmra.mxu0 %v2810
      %v2855 = vpop.f32.mrf.mxu0
      %v2856 = vadd.f32 %v2792, %v2855
      %v2857 = vpop.f32.mrf.mxu0
      %v2858 = vadd.f32 %v2792, %v2857
      %2859 = vmatmul.bf16.gmra.mxu0 %v2812
      %v2860 = vpop.f32.mrf.mxu0
      %v2861 = vadd.f32 %v2792, %v2860
      %v2862 = vpop.f32.mrf.mxu0
      %v2863 = vadd.f32 %v2792, %v2862
      %2864 = vmatmul.bf16.gmra.mxu0 %v2814
      %v2865 = vpop.f32.mrf.mxu0
      %v2866 = vadd.f32 %v2792, %v2865
      %v2867 = vpop.f32.mrf.mxu0
      %v2868 = vadd.f32 %v2792, %v2867
      %2869 = vmatmul.bf16.gmra.mxu0 %v2816
      %v2870 = vpop.f32.mrf.mxu0
      %v2871 = vadd.f32 %v2792, %v2870
      %v2872 = vpop.f32.mrf.mxu0
      %v2873 = vadd.f32 %v2792, %v2872
      %2874 = vmatmul.bf16.gmra.mxu0 %v2818
      %v2875 = vpop.f32.mrf.mxu0
      %v2876 = vadd.f32 %v2792, %v2875
      %v2877 = vpop.f32.mrf.mxu0
      %v2878 = vadd.f32 %v2792, %v2877
      %2879 = vmatmul.bf16.gmra.mxu0 %v2820
      %v2880 = vpop.f32.mrf.mxu0
      %v2881 = vadd.f32 %v2792, %v2880
      %v2882 = vpop.f32.mrf.mxu0
      %v2883 = vadd.f32 %v2792, %v2882
      %2884 = vmatmul.bf16.gmra.mxu0 %v2822
      %v2885 = vpop.f32.mrf.mxu0
      %v2886 = vadd.f32 %v2792, %v2885
      %v2887 = vpop.f32.mrf.mxu0
      %v2888 = vadd.f32 %v2792, %v2887
      %2889 = vmatmul.bf16.gmra.mxu0 %v2824
      %v2890 = vpop.f32.mrf.mxu0
      %v2891 = vadd.f32 %v2792, %v2890
      %v2892 = vpop.f32.mrf.mxu0
      %v2893 = vadd.f32 %v2792, %v2892
      %2894 = vmatmul.bf16.gmra.mxu0 %v2826
      %v2895 = vpop.f32.mrf.mxu0
      %v2896 = vadd.f32 %v2792, %v2895
      %v2897 = vpop.f32.mrf.mxu0
      %v2898 = vadd.f32 %v2792, %v2897
      %2899 = vmatmul.bf16.gmra.mxu0 %v2828
      %v2900 = vpop.f32.mrf.mxu0
      %v2901 = vadd.f32 %v2792, %v2900
      %v2902 = vpop.f32.mrf.mxu0
      %v2903 = vadd.f32 %v2792, %v2902
      %2904 = vmatmul.bf16.gmra.mxu0 %v2830
      %v2905 = vpop.f32.mrf.mxu0
      %v2906 = vadd.f32 %v2792, %v2905
      %v2907 = vpop.f32.mrf.mxu0
      %v2908 = vadd.f32 %v2792, %v2907
      %2909 = vmatmul.bf16.gmra.mxu0 %v2832
      %v2910 = vpop.f32.mrf.mxu0
      %v2911 = vadd.f32 %v2792, %v2910
      %v2912 = vpop.f32.mrf.mxu0
      %v2913 = vadd.f32 %v2792, %v2912
      %2914 = vmatmul.bf16.gmra.mxu0 %v2834
      %v2915 = vpop.f32.mrf.mxu0
      %v2916 = vadd.f32 %v2792, %v2915
      %v2917 = vpop.f32.mrf.mxu0
      %v2918 = vadd.f32 %v2792, %v2917
      %2919 = vmatmul.bf16.gmra.mxu0 %v2836
      %v2920 = vpop.f32.mrf.mxu0
      %v2921 = vadd.f32 %v2792, %v2920
      %v2922 = vpop.f32.mrf.mxu0
      %v2923 = vadd.f32 %v2792, %v2922
      %2924 = vmatmul.bf16.gmra.mxu0 %v2838
      %v2925 = vpop.f32.mrf.mxu0
      %v2926 = vadd.f32 %v2792, %v2925
      %v2927 = vpop.f32.mrf.mxu0
      %v2928 = vadd.f32 %v2792, %v2927
      %2929 = vmatmul.bf16.gmra.mxu0 %v2840
      %v2930 = vpop.f32.mrf.mxu0
      %v2931 = vadd.f32 %v2792, %v2930
      %v2932 = vpop.f32.mrf.mxu0
      %v2933 = vadd.f32 %v2792, %v2932
      %2934 = vdwg.mxu0
      %2935 = vst.msk [vmem:[%s332] sm:$0xff] %vm865, %v2856
      %2936 = vst.msk [vmem:[%s332 + $0x8] sm:$0xff] %vm865, %v2858
      %2937 = vst.msk [vmem:[%s332 + $0x10] sm:$0xff] %vm865, %v2861
      %2938 = vst.msk [vmem:[%s332 + $0x18] sm:$0xff] %vm865, %v2863
      %2939 = vst.msk [vmem:[%s332 + $0x20] sm:$0xff] %vm865, %v2866
      %2940 = vst.msk [vmem:[%s332 + $0x28] sm:$0xff] %vm865, %v2868
      %2941 = vst.msk [vmem:[%s332 + $0x30] sm:$0xff] %vm865, %v2871
      %2942 = vst.msk [vmem:[%s332 + $0x38] sm:$0xff] %vm865, %v2873
      %2943 = vst.msk [vmem:[%s332 + $0x40] sm:$0xff] %vm865, %v2876
      %2944 = vst.msk [vmem:[%s332 + $0x48] sm:$0xff] %vm865, %v2878
      %2945 = vst.msk [vmem:[%s332 + $0x50] sm:$0xff] %vm865, %v2881
      %2946 = vst.msk [vmem:[%s332 + $0x58] sm:$0xff] %vm865, %v2883
      %2947 = vst.msk [vmem:[%s332 + $0x60] sm:$0xff] %vm865, %v2886
      %2948 = vst.msk [vmem:[%s332 + $0x68] sm:$0xff] %vm865, %v2888
      %2949 = vst.msk [vmem:[%s332 + $0x70] sm:$0xff] %vm865, %v2891
      %2950 = vst.msk [vmem:[%s332 + $0x78] sm:$0xff] %vm865, %v2893
      %2951 = vst.msk [vmem:[%s332 + $0x80] sm:$0xff] %vm865, %v2896
      %2952 = vst.msk [vmem:[%s332 + $0x88] sm:$0xff] %vm865, %v2898
      %2953 = vst.msk [vmem:[%s332 + $0x90] sm:$0xff] %vm865, %v2901
      %2954 = vst.msk [vmem:[%s332 + $0x98] sm:$0xff] %vm865, %v2903
      %2955 = vst.msk [vmem:[%s332 + $0xa0] sm:$0xff] %vm865, %v2906
      %2956 = vst.msk [vmem:[%s332 + $0xa8] sm:$0xff] %vm865, %v2908
      %2957 = vst.msk [vmem:[%s332 + $0xb0] sm:$0xff] %vm865, %v2911
      %2958 = vst.msk [vmem:[%s332 + $0xb8] sm:$0xff] %vm865, %v2913
      %2959 = vst.msk [vmem:[%s332 + $0xc0] sm:$0xff] %vm865, %v2916
      %2960 = vst.msk [vmem:[%s332 + $0xc8] sm:$0xff] %vm865, %v2918
      %2961 = vst.msk [vmem:[%s332 + $0xd0] sm:$0xff] %vm865, %v2921
      %2962 = vst.msk [vmem:[%s332 + $0xd8] sm:$0xff] %vm865, %v2923
      %2963 = vst.msk [vmem:[%s332 + $0xe0] sm:$0xff] %vm865, %v2926
      %2964 = vst.msk [vmem:[%s332 + $0xe8] sm:$0xff] %vm865, %v2928
      %2965 = vst.msk [vmem:[%s332 + $0xf0] sm:$0xff] %vm865, %v2931
      %2966 = vst.msk [vmem:[%s332 + $0xf8] sm:$0xff] %vm865, %v2933
      %p2967 = scmp.lt.s32.totalorder %s20, 1
      %s2968 = scalar_select %p2967, %s20, 1
      %s2969 = smul.addr %s2968, 32
      %s2970 = smul.addr %s2969, 8
      %s2971 = scalar_lea.vmem %s9, %s2970
      // Predicated region
      $region57: #{upblocks_forward.4} parent=55 // pred_check
        %p2972 = pneg %p232
      $region58: #{upblocks_forward.4} parent=55 // pred_check_branch
        %2974 = sbr.rel (%p2972) target = $region60
      $region59: #{upblocks_forward.4} parent=55 // pred_region
        _
      $region60: #{upblocks_forward.4} parent=55 // pred_fallthru
        _
    $region56: #{upblocks_forward.4} parent=5 // pred_fallthru
      _
    %p2975 = scmp.le.s32.totalorder 2, %s15
    // Predicated region
    $region61: #{upblocks_forward.4} parent=5 // pred_check
      %p2976 = pneg %p2975
    $region62: #{upblocks_forward.4} parent=5 // pred_check_branch
      %2978 = sbr.rel (%p2976) target = $region64
    $region63: #{upblocks_forward.4} parent=5 // pred_region
      %s2979 = ssub.s32 %s15, 2
      // Predicated region
      $region65: #{upblocks_forward.4} parent=63 // pred_check
        %p2980 = pneg %p238
      $region66: #{upblocks_forward.4} parent=63 // pred_check_branch
        %2982 = sbr.rel (%p2980) target = $region68
      $region67: #{upblocks_forward.4} parent=63 // pred_region
        %p2983 = scmp.lt.s32.totalorder %s21, 1
        %s2984 = scalar_select %p2983, %s21, 1
        %s2985 = smul.addr %s2984, 32
        %s2986 = smul.addr %s2985, 8
        %s2987 = scalar_lea.vmem %s9, %s2986
      $region68: #{upblocks_forward.4} parent=63 // pred_fallthru
        _
    $region64: #{upblocks_forward.4} parent=5 // pred_fallthru
      _
  $region6: #{upblocks_forward.4} parent=0 // loop_footer
    %s19 = sadd.s32 1, %s15
  $region7: #{upblocks_forward.4} parent=0 // loop_footer_branch
    %14 = sbr.rel target = $region3
  $region8: #{upblocks_forward.4} parent=0 // loop_exit
    _

// kernel: upblocks_forward.5
$region0: #{upblocks_forward.5}
  #allocation0 [shape = 'u32[]', space=smem, size = 0x4, offset = 0x4, fixed_abs, tag = 'smem constant byte address 0x4 - core index']
  #allocation1 [shape = 'u32[72,128]{1,0:T(1,128)}', space=vmem, size = 0x9000, scoped, tag = 'internal scratch']
  #allocation2 [shape = 'f32[1,1]{1,0:T(1,128)S(1)}', space=vmem, size = 0x200, scoped, tag = 'scoped memory for upblocks_forward.5']
  %s0 = inlined_call_operand.vmem [shape: f32[2,9,9,48], index: 0, kind: input, shape index: {}]
  %s1 = inlined_call_operand.vmem [shape: bf16[192,8], index: 1, kind: input, shape index: {}]
  %s2 = inlined_call_operand.vmem [shape: f32[1,8], index: 2, kind: input, shape index: {}]
  %s3 = inlined_call_operand.vmem [shape: f32[8,2], index: 3, kind: input, shape index: {}]
  %s4 = inlined_call_operand.vmem [shape: f32[1,2], index: 4, kind: input, shape index: {}]
  %s5 = inlined_call_operand.<no memory space> [shape: f32[1,1], index: 5, kind: input, shape index: {}]
  %s6 = inlined_call_operand.vmem [shape: f32[2,8], index: 6, kind: input, shape index: {}]
  %s7 = inlined_call_operand.vmem [shape: f32[1,8], index: 7, kind: input, shape index: {}]
  %s8 = inlined_call_operand.vmem [shape: f32[2,8,8,8], index: 8, kind: output, shape index: {}]
  %s9 = sld [smem:[#allocation0]]
  $region65: #{upblocks_forward.5} parent=0
    _
  %s11 = ssub.s32 1, %s9
  %s12 = scalar_select 0, %s11, %s9
  %v13 = vstv %s5
  %14 = vst [vmem:[#allocation2] sm:$0x1] %v13
  loop: start=0, step=1, limit=4
  $region2: #{upblocks_forward.5} parent=0 // loop_pre_header
    _
  $region3: #{upblocks_forward.5} parent=0 // loop_header
    %s16 = sphi 0, %s20
    %p17 = scmp.ge.s32.totalorder %s16, 4
    %s26 = sphi 0, %s28
    %s29 = sphi 0, %s26
    %s30 = sphi 0, %s29
    %s46 = sphi 0, %s30
    %s50 = sphi 0, %s50
    %s52 = sphi 0, %s50
    %s53 = sphi 0, %s52
    %s67 = sphi 0, %s53
    %s71 = sphi 0, %s71
    %s73 = sphi 0, %s71
    %s74 = sphi 0, %s73
    %s88 = sphi 0, %s74
    %s92 = sphi 0, %s92
    %s94 = sphi 0, %s92
    %s95 = sphi 0, %s94
    %s109 = sphi 0, %s95
    %s113 = sphi 0, %s113
    %s115 = sphi 0, %s113
    %s116 = sphi 0, %s115
    %s130 = sphi 0, %s116
    %s134 = sphi 0, %s134
    %s136 = sphi 0, %s134
    %s137 = sphi 0, %s136
    %s151 = sphi 0, %s137
    %s155 = sphi 0, %s155
    %s157 = sphi 0, %s155
    %s158 = sphi 0, %s157
    %s172 = sphi 0, %s158
    %s176 = sphi 0, %s176
    %s178 = sphi 0, %s176
    %s179 = sphi 0, %s178
    %s193 = sphi 0, %s179
    %s199 = sphi 0, %s201
    %s202 = sphi 0, %s199
    %s203 = sphi 0, %s202
    %s219 = sphi 0, %s203
  $region4: #{upblocks_forward.5} parent=0 // loop_header_branch
    %19 = sbr.rel (%p17) target = $region8
  $region5: #{upblocks_forward.5} parent=0 // loop_body
    %s21 = ssub.s32 %s16, 1
    %s22 = ssub.s32 %s16, 2
    %s23 = sadd.s32 %s16, 1
    %s24 = ssub.s32 %s16, %s23
    %p25 = scmp.eq.s32.totalorder %s24, 0
    %s27 = sadd.s32 %s26, 1
    %s28 = scalar_select %p25, %s26, %s27
    %p31 = pneg %p25
    %p32 = scmp.eq.s32.totalorder %s16, 1
    %p33 = por %p31, %p32
    %p34 = scmp.ne.s32.totalorder %s26, %s29
    %p35 = scmp.eq.s32.totalorder %s16, 0
    %p36 = por %p34, %p35
    %p37 = scmp.ne.s32.totalorder %s26, %s29
    %p38 = scmp.eq.s32.totalorder %s21, 1
    %p39 = por %p37, %p38
    %p40 = scmp.ne.s32.totalorder %s29, %s30
    %p41 = scmp.eq.s32.totalorder %s21, 0
    %p42 = por %p40, %p41
    %p43 = scmp.ne.s32.totalorder %s29, %s30
    %p44 = scmp.eq.s32.totalorder %s22, 1
    %p45 = por %p43, %p44
    %p47 = scmp.ne.s32.totalorder %s30, %s46
    %p48 = scmp.eq.s32.totalorder %s22, 0
    %p49 = por %p47, %p48
    %s51 = sadd.s32 %s50, 1
    %p54 = scmp.eq.s32.totalorder %s16, 1
    %p55 = scmp.ne.s32.totalorder %s50, %s52
    %p56 = scmp.eq.s32.totalorder %s16, 0
    %p57 = por %p55, %p56
    %p58 = scmp.ne.s32.totalorder %s50, %s52
    %p59 = scmp.eq.s32.totalorder %s21, 1
    %p60 = por %p58, %p59
    %p61 = scmp.ne.s32.totalorder %s52, %s53
    %p62 = scmp.eq.s32.totalorder %s21, 0
    %p63 = por %p61, %p62
    %p64 = scmp.ne.s32.totalorder %s52, %s53
    %p65 = scmp.eq.s32.totalorder %s22, 1
    %p66 = por %p64, %p65
    %p68 = scmp.ne.s32.totalorder %s53, %s67
    %p69 = scmp.eq.s32.totalorder %s22, 0
    %p70 = por %p68, %p69
    %s72 = sadd.s32 %s71, 1
    %p75 = scmp.eq.s32.totalorder %s16, 1
    %p76 = scmp.ne.s32.totalorder %s71, %s73
    %p77 = scmp.eq.s32.totalorder %s16, 0
    %p78 = por %p76, %p77
    %p79 = scmp.ne.s32.totalorder %s71, %s73
    %p80 = scmp.eq.s32.totalorder %s21, 1
    %p81 = por %p79, %p80
    %p82 = scmp.ne.s32.totalorder %s73, %s74
    %p83 = scmp.eq.s32.totalorder %s21, 0
    %p84 = por %p82, %p83
    %p85 = scmp.ne.s32.totalorder %s73, %s74
    %p86 = scmp.eq.s32.totalorder %s22, 1
    %p87 = por %p85, %p86
    %p89 = scmp.ne.s32.totalorder %s74, %s88
    %p90 = scmp.eq.s32.totalorder %s22, 0
    %p91 = por %p89, %p90
    %s93 = sadd.s32 %s92, 1
    %p96 = scmp.eq.s32.totalorder %s16, 1
    %p97 = scmp.ne.s32.totalorder %s92, %s94
    %p98 = scmp.eq.s32.totalorder %s16, 0
    %p99 = por %p97, %p98
    %p100 = scmp.ne.s32.totalorder %s92, %s94
    %p101 = scmp.eq.s32.totalorder %s21, 1
    %p102 = por %p100, %p101
    %p103 = scmp.ne.s32.totalorder %s94, %s95
    %p104 = scmp.eq.s32.totalorder %s21, 0
    %p105 = por %p103, %p104
    %p106 = scmp.ne.s32.totalorder %s94, %s95
    %p107 = scmp.eq.s32.totalorder %s22, 1
    %p108 = por %p106, %p107
    %p110 = scmp.ne.s32.totalorder %s95, %s109
    %p111 = scmp.eq.s32.totalorder %s22, 0
    %p112 = por %p110, %p111
    %s114 = sadd.s32 %s113, 1
    %p117 = scmp.eq.s32.totalorder %s16, 1
    %p118 = scmp.ne.s32.totalorder %s113, %s115
    %p119 = scmp.eq.s32.totalorder %s16, 0
    %p120 = por %p118, %p119
    %p121 = scmp.ne.s32.totalorder %s113, %s115
    %p122 = scmp.eq.s32.totalorder %s21, 1
    %p123 = por %p121, %p122
    %p124 = scmp.ne.s32.totalorder %s115, %s116
    %p125 = scmp.eq.s32.totalorder %s21, 0
    %p126 = por %p124, %p125
    %p127 = scmp.ne.s32.totalorder %s115, %s116
    %p128 = scmp.eq.s32.totalorder %s22, 1
    %p129 = por %p127, %p128
    %p131 = scmp.ne.s32.totalorder %s116, %s130
    %p132 = scmp.eq.s32.totalorder %s22, 0
    %p133 = por %p131, %p132
    %s135 = sadd.s32 %s134, 1
    %p138 = scmp.eq.s32.totalorder %s16, 1
    %p139 = scmp.ne.s32.totalorder %s134, %s136
    %p140 = scmp.eq.s32.totalorder %s16, 0
    %p141 = por %p139, %p140
    %p142 = scmp.ne.s32.totalorder %s134, %s136
    %p143 = scmp.eq.s32.totalorder %s21, 1
    %p144 = por %p142, %p143
    %p145 = scmp.ne.s32.totalorder %s136, %s137
    %p146 = scmp.eq.s32.totalorder %s21, 0
    %p147 = por %p145, %p146
    %p148 = scmp.ne.s32.totalorder %s136, %s137
    %p149 = scmp.eq.s32.totalorder %s22, 1
    %p150 = por %p148, %p149
    %p152 = scmp.ne.s32.totalorder %s137, %s151
    %p153 = scmp.eq.s32.totalorder %s22, 0
    %p154 = por %p152, %p153
    %s156 = sadd.s32 %s155, 1
    %p159 = scmp.eq.s32.totalorder %s16, 1
    %p160 = scmp.ne.s32.totalorder %s155, %s157
    %p161 = scmp.eq.s32.totalorder %s16, 0
    %p162 = por %p160, %p161
    %p163 = scmp.ne.s32.totalorder %s155, %s157
    %p164 = scmp.eq.s32.totalorder %s21, 1
    %p165 = por %p163, %p164
    %p166 = scmp.ne.s32.totalorder %s157, %s158
    %p167 = scmp.eq.s32.totalorder %s21, 0
    %p168 = por %p166, %p167
    %p169 = scmp.ne.s32.totalorder %s157, %s158
    %p170 = scmp.eq.s32.totalorder %s22, 1
    %p171 = por %p169, %p170
    %p173 = scmp.ne.s32.totalorder %s158, %s172
    %p174 = scmp.eq.s32.totalorder %s22, 0
    %p175 = por %p173, %p174
    %s177 = sadd.s32 %s176, 1
    %p180 = scmp.eq.s32.totalorder %s16, 1
    %p181 = scmp.ne.s32.totalorder %s176, %s178
    %p182 = scmp.eq.s32.totalorder %s16, 0
    %p183 = por %p181, %p182
    %p184 = scmp.ne.s32.totalorder %s176, %s178
    %p185 = scmp.eq.s32.totalorder %s21, 1
    %p186 = por %p184, %p185
    %p187 = scmp.ne.s32.totalorder %s178, %s179
    %p188 = scmp.eq.s32.totalorder %s21, 0
    %p189 = por %p187, %p188
    %p190 = scmp.ne.s32.totalorder %s178, %s179
    %p191 = scmp.eq.s32.totalorder %s22, 1
    %p192 = por %p190, %p191
    %p194 = scmp.ne.s32.totalorder %s179, %s193
    %p195 = scmp.eq.s32.totalorder %s22, 0
    %p196 = por %p194, %p195
    %s197 = ssub.s32 %s16, %s23
    %p198 = scmp.eq.s32.totalorder %s197, 0
    %s200 = sadd.s32 %s199, 1
    %s201 = scalar_select %p198, %s199, %s200
    %p204 = pneg %p198
    %p205 = scmp.eq.s32.totalorder %s16, 1
    %p206 = por %p204, %p205
    %p207 = scmp.ne.s32.totalorder %s199, %s202
    %p208 = scmp.eq.s32.totalorder %s16, 0
    %p209 = por %p207, %p208
    %p210 = scmp.ne.s32.totalorder %s199, %s202
    %p211 = scmp.eq.s32.totalorder %s21, 1
    %p212 = por %p210, %p211
    %p213 = scmp.ne.s32.totalorder %s202, %s203
    %p214 = scmp.eq.s32.totalorder %s21, 0
    %p215 = por %p213, %p214
    %p216 = scmp.ne.s32.totalorder %s202, %s203
    %p217 = scmp.eq.s32.totalorder %s22, 1
    %p218 = por %p216, %p217
    %p220 = scmp.ne.s32.totalorder %s203, %s219
    %p221 = scmp.eq.s32.totalorder %s22, 0
    %p222 = por %p220, %p221
    %p223 = scmp.le.s32.totalorder 1, %s16
    %p224 = scmp.lt.s32.totalorder %s16, 3
    %p225 = pnand %p223, %p224
    %p226 = pneg %p225
    // Predicated region
    $region9: #{upblocks_forward.5} parent=5 // pred_check
      _
    $region10: #{upblocks_forward.5} parent=5 // pred_check_branch
      %228 = sbr.rel (%p225) target = $region12
    $region11: #{upblocks_forward.5} parent=5 // pred_region
      %s229 = ssub.s32 %s16, 1
      // Predicated region
      $region13: #{upblocks_forward.5} parent=11 // pred_check
        %p230 = pneg %p63
      $region14: #{upblocks_forward.5} parent=11 // pred_check_branch
        %232 = sbr.rel (%p230) target = $region16
      $region15: #{upblocks_forward.5} parent=11 // pred_region
        _
      $region16: #{upblocks_forward.5} parent=11 // pred_fallthru
        _
      // Predicated region
      $region17: #{upblocks_forward.5} parent=11 // pred_check
        %p233 = pneg %p84
      $region18: #{upblocks_forward.5} parent=11 // pred_check_branch
        %235 = sbr.rel (%p233) target = $region20
      $region19: #{upblocks_forward.5} parent=11 // pred_region
        _
      $region20: #{upblocks_forward.5} parent=11 // pred_fallthru
        _
      // Predicated region
      $region21: #{upblocks_forward.5} parent=11 // pred_check
        %p236 = pneg %p105
      $region22: #{upblocks_forward.5} parent=11 // pred_check_branch
        %238 = sbr.rel (%p236) target = $region24
      $region23: #{upblocks_forward.5} parent=11 // pred_region
        _
      $region24: #{upblocks_forward.5} parent=11 // pred_fallthru
        _
      // Predicated region
      $region25: #{upblocks_forward.5} parent=11 // pred_check
        %p239 = pneg %p126
      $region26: #{upblocks_forward.5} parent=11 // pred_check_branch
        %241 = sbr.rel (%p239) target = $region28
      $region27: #{upblocks_forward.5} parent=11 // pred_region
        _
      $region28: #{upblocks_forward.5} parent=11 // pred_fallthru
        _
      // Predicated region
      $region29: #{upblocks_forward.5} parent=11 // pred_check
        %p242 = pneg %p147
      $region30: #{upblocks_forward.5} parent=11 // pred_check_branch
        %244 = sbr.rel (%p242) target = $region32
      $region31: #{upblocks_forward.5} parent=11 // pred_region
        _
      $region32: #{upblocks_forward.5} parent=11 // pred_fallthru
        _
      // Predicated region
      $region33: #{upblocks_forward.5} parent=11 // pred_check
        %p245 = pneg %p168
      $region34: #{upblocks_forward.5} parent=11 // pred_check_branch
        %247 = sbr.rel (%p245) target = $region36
      $region35: #{upblocks_forward.5} parent=11 // pred_region
        _
      $region36: #{upblocks_forward.5} parent=11 // pred_fallthru
        _
      // Predicated region
      $region37: #{upblocks_forward.5} parent=11 // pred_check
        %p248 = pneg %p189
      $region38: #{upblocks_forward.5} parent=11 // pred_check_branch
        %250 = sbr.rel (%p248) target = $region40
      $region39: #{upblocks_forward.5} parent=11 // pred_region
        _
      $region40: #{upblocks_forward.5} parent=11 // pred_fallthru
        _
    $region12: #{upblocks_forward.5} parent=5 // pred_fallthru
      _
    %p251 = scmp.lt.s32.totalorder %s16, 2
    // Predicated region
    $region41: #{upblocks_forward.5} parent=5 // pred_check
      %p252 = pneg %p251
    $region42: #{upblocks_forward.5} parent=5 // pred_check_branch
      %254 = sbr.rel (%p252) target = $region44
    $region43: #{upblocks_forward.5} parent=5 // pred_region
      // Predicated region
      $region45: #{upblocks_forward.5} parent=43 // pred_check
        %p255 = pneg %p36
      $region46: #{upblocks_forward.5} parent=43 // pred_check_branch
        %257 = sbr.rel (%p255) target = $region48
      $region47: #{upblocks_forward.5} parent=43 // pred_region
        %p258 = scmp.lt.s32.totalorder %s16, 1
        %s259 = scalar_select %p258, %s16, 1
        %s260 = smul.addr %s259, 18
        %s261 = smul.addr %s260, 8
        %s262 = scalar_lea.vmem %s0, %s261
      $region48: #{upblocks_forward.5} parent=43 // pred_fallthru
        _
    $region44: #{upblocks_forward.5} parent=5 // pred_fallthru
      _
    %p263 = scmp.le.s32.totalorder 1, %s16
    %p264 = scmp.lt.s32.totalorder %s16, 3
    %p265 = pnand %p263, %p264
    %p266 = pneg %p265
    // Predicated region
    $region49: #{upblocks_forward.5} parent=5 // pred_check
      _
    $region50: #{upblocks_forward.5} parent=5 // pred_check_branch
      %268 = sbr.rel (%p265) target = $region52
    $region51: #{upblocks_forward.5} parent=5 // pred_region
      %s269 = ssub.s32 %s16, 1
      %p270 = scmp.lt.s32.totalorder %s21, 1
      %s271 = scalar_select %p270, %s21, 1
      %s272 = smul.addr %s271, 18
      %s273 = smul.addr %s272, 8
      %s274 = scalar_lea.vmem %s0, %s273
      %p275 = pneg %p42
      %p276 = pneg %p39
      %p277 = pneg %p63
      %p278 = pneg %p60
      %p279 = pneg %p84
      %p280 = pneg %p81
      %p281 = pneg %p105
      %p282 = pneg %p102
      %p283 = pneg %p126
      %p284 = pneg %p123
      %p285 = pneg %p147
      %p286 = pneg %p144
      %p287 = pneg %p168
      %p288 = pneg %p165
      %p289 = pneg %p189
      %p290 = pneg %p186
      %p291 = pneg %p215
      %p292 = pneg %p212
      %p293 = scmp.lt.s32.totalorder %s21, 1
      %s294 = scalar_select %p293, %s21, 1
      %s295 = smul.addr %s294, 8
      %s296 = smul.addr %s295, 8
      %s297 = scalar_lea.vmem %s8, %s296
      %p298 = scmp.lt.s32.totalorder %s21, 1
      %s299 = scalar_select %p298, %s21, 1
      %s300 = smul.addr %s299, 18
      %s301 = smul.addr %s300, 8
      %s302 = scalar_lea.vmem %s0, %s301
      %p303 = scmp.lt.s32.totalorder %s21, 1
      %s304 = scalar_select %p303, %s21, 1
      %s305 = smul.addr %s304, 8
      %s306 = smul.addr %s305, 8
      %s307 = scalar_lea.vmem %s8, %s306
      %v309 = vld [vmem:[%s302] sm:$0xff]
      %v310 = vld [vmem:[%s302 + $0x10] sm:$0xff]
      %v311 = vld [vmem:[%s302 + $0x20] sm:$0xff]
      %v312 = vld [vmem:[%s302 + $0x30] sm:$0xff]
      %v313 = vld [vmem:[%s302 + $0x40] sm:$0xff]
      %v314 = vld [vmem:[%s302 + $0x50] sm:$0xff]
      %v315 = vld [vmem:[%s302 + $0x60] sm:$0xff]
      %v316 = vld [vmem:[%s302 + $0x70] sm:$0xff]
      %v317 = vpack.c.bf16 %v309, %v309
      %v318 = vpack.c.bf16 %v310, %v310
      %v319 = vpack.c.bf16 %v311, %v311
      %v320 = vpack.c.bf16 %v312, %v312
      %v321 = vpack.c.bf16 %v313, %v313
      %v322 = vpack.c.bf16 %v314, %v314
      %v323 = vpack.c.bf16 %v315, %v315
      %v324 = vpack.c.bf16 %v316, %v316
      %v325 = vld [vmem:[%s302 + $0x1] sm:$0xff]
      %v326 = vld [vmem:[%s302 + $0x11] sm:$0xff]
      %v327 = vld [vmem:[%s302 + $0x21] sm:$0xff]
      %v328 = vld [vmem:[%s302 + $0x31] sm:$0xff]
      %v329 = vld [vmem:[%s302 + $0x41] sm:$0xff]
      %v330 = vld [vmem:[%s302 + $0x51] sm:$0xff]
      %v331 = vld [vmem:[%s302 + $0x61] sm:$0xff]
      %v332 = vld [vmem:[%s302 + $0x71] sm:$0xff]
      %v333 = vpack.c.bf16 %v325, %v325
      %v334 = vpack.c.bf16 %v326, %v326
      %v335 = vpack.c.bf16 %v327, %v327
      %v336 = vpack.c.bf16 %v328, %v328
      %v337 = vpack.c.bf16 %v329, %v329
      %v338 = vpack.c.bf16 %v330, %v330
      %v339 = vpack.c.bf16 %v331, %v331
      %v340 = vpack.c.bf16 %v332, %v332
      %s341 = scalar_lea.vmem %s302, 16
      %v342 = vld [vmem:[%s341] sm:$0xff]
      %v343 = vld [vmem:[%s341 + $0x10] sm:$0xff]
      %v344 = vld [vmem:[%s341 + $0x20] sm:$0xff]
      %v345 = vld [vmem:[%s341 + $0x30] sm:$0xff]
      %v346 = vld [vmem:[%s341 + $0x40] sm:$0xff]
      %v347 = vld [vmem:[%s341 + $0x50] sm:$0xff]
      %v348 = vld [vmem:[%s341 + $0x60] sm:$0xff]
      %v349 = vld [vmem:[%s341 + $0x70] sm:$0xff]
      %v350 = vpack.c.bf16 %v342, %v342
      %v351 = vpack.c.bf16 %v343, %v343
      %v352 = vpack.c.bf16 %v344, %v344
      %v353 = vpack.c.bf16 %v345, %v345
      %v354 = vpack.c.bf16 %v346, %v346
      %v355 = vpack.c.bf16 %v347, %v347
      %v356 = vpack.c.bf16 %v348, %v348
      %v357 = vpack.c.bf16 %v349, %v349
      %v358 = vld [vmem:[%s341 + $0x1] sm:$0xff]
      %v359 = vld [vmem:[%s341 + $0x11] sm:$0xff]
      %v360 = vld [vmem:[%s341 + $0x21] sm:$0xff]
      %v361 = vld [vmem:[%s341 + $0x31] sm:$0xff]
      %v362 = vld [vmem:[%s341 + $0x41] sm:$0xff]
      %v363 = vld [vmem:[%s341 + $0x51] sm:$0xff]
      %v364 = vld [vmem:[%s341 + $0x61] sm:$0xff]
      %v365 = vld [vmem:[%s341 + $0x71] sm:$0xff]
      %v366 = vpack.c.bf16 %v358, %v358
      %v367 = vpack.c.bf16 %v359, %v359
      %v368 = vpack.c.bf16 %v360, %v360
      %v369 = vpack.c.bf16 %v361, %v361
      %v370 = vpack.c.bf16 %v362, %v362
      %v371 = vpack.c.bf16 %v363, %v363
      %v372 = vpack.c.bf16 %v364, %v364
      %v373 = vpack.c.bf16 %v365, %v365
      %v382 = vunpack.c.l.b16 %v317
      %v383 = vunpack.c.l.b16 %v318
      %v384 = vunpack.c.l.b16 %v319
      %v385 = vunpack.c.l.b16 %v320
      %v386 = vunpack.c.l.b16 %v321
      %v387 = vunpack.c.l.b16 %v322
      %v388 = vunpack.c.l.b16 %v323
      %v389 = vunpack.c.l.b16 %v324
      %v390 = vpack.c.b16 %v383, %v382
      %v391 = vpack.c.b16 %v385, %v384
      %v392 = vpack.c.b16 %v387, %v386
      %v393 = vpack.c.b16 %v389, %v388
      %v402 = vunpack.c.l.b16 %v333
      %v403 = vunpack.c.l.b16 %v334
      %v404 = vunpack.c.l.b16 %v335
      %v405 = vunpack.c.l.b16 %v336
      %v406 = vunpack.c.l.b16 %v337
      %v407 = vunpack.c.l.b16 %v338
      %v408 = vunpack.c.l.b16 %v339
      %v409 = vunpack.c.l.b16 %v340
      %v410 = vpack.c.b16 %v403, %v402
      %v411 = vpack.c.b16 %v405, %v404
      %v412 = vpack.c.b16 %v407, %v406
      %v413 = vpack.c.b16 %v409, %v408
      %414 = vrot.lane.b32.xlu0 %v410, 48
      %v415 = vpop.permute.xlu0 %414
      %416 = vrot.lane.b32.xlu0 %v411, 48
      %v417 = vpop.permute.xlu0 %416
      %418 = vrot.lane.b32.xlu0 %v412, 48
      %v419 = vpop.permute.xlu0 %418
      %420 = vrot.lane.b32.xlu0 %v413, 48
      %v421 = vpop.permute.xlu0 %420
      %v430 = vunpack.c.l.b16 %v350
      %v431 = vunpack.c.l.b16 %v351
      %v432 = vunpack.c.l.b16 %v352
      %v433 = vunpack.c.l.b16 %v353
      %v434 = vunpack.c.l.b16 %v354
      %v435 = vunpack.c.l.b16 %v355
      %v436 = vunpack.c.l.b16 %v356
      %v437 = vunpack.c.l.b16 %v357
      %v438 = vpack.c.b16 %v431, %v430
      %v439 = vpack.c.b16 %v433, %v432
      %v440 = vpack.c.b16 %v435, %v434
      %v441 = vpack.c.b16 %v437, %v436
      %442 = vrot.lane.b32.xlu0 %v438, 96
      %v443 = vpop.permute.xlu0 %442
      %444 = vrot.lane.b32.xlu0 %v439, 96
      %v445 = vpop.permute.xlu0 %444
      %446 = vrot.lane.b32.xlu0 %v440, 96
      %v447 = vpop.permute.xlu0 %446
      %448 = vrot.lane.b32.xlu0 %v441, 96
      %v449 = vpop.permute.xlu0 %448
      %v458 = vunpack.c.l.b16 %v366
      %v459 = vunpack.c.l.b16 %v367
      %v460 = vunpack.c.l.b16 %v368
      %v461 = vunpack.c.l.b16 %v369
      %v462 = vunpack.c.l.b16 %v370
      %v463 = vunpack.c.l.b16 %v371
      %v464 = vunpack.c.l.b16 %v372
      %v465 = vunpack.c.l.b16 %v373
      %v466 = vpack.c.b16 %v459, %v458
      %v467 = vpack.c.b16 %v461, %v460
      %v468 = vpack.c.b16 %v463, %v462
      %v469 = vpack.c.b16 %v465, %v464
      %470 = vrot.lane.b32.xlu0 %v466, 16
      %v471 = vpop.permute.xlu0 %470
      %472 = vrot.lane.b32.xlu0 %v467, 16
      %v473 = vpop.permute.xlu0 %472
      %474 = vrot.lane.b32.xlu0 %v468, 16
      %v475 = vpop.permute.xlu0 %474
      %476 = vrot.lane.b32.xlu0 %v469, 16
      %v477 = vpop.permute.xlu0 %476
      %vm478 = vcmask 392192
      %v481 = vsel %vm478, %v390, %v415
      %v484 = vsel %vm478, %v391, %v417
      %v487 = vsel %vm478, %v392, %v419
      %v490 = vsel %vm478, %v393, %v421
      %vm491 = vcmask 785408
      %v493 = vsel %vm491, %v481, %v443
      %v496 = vsel %vm491, %v484, %v445
      %v499 = vsel %vm491, %v487, %v447
      %v502 = vsel %vm491, %v490, %v449
      %vm504 = vcmask 130048
      %v506 = vsel %vm504, %v443, %v471
      %v508 = vsel %vm504, %v445, %v473
      %v510 = vsel %vm504, %v447, %v475
      %v512 = vsel %vm504, %v449, %v477
      %v513 = vld [vmem:[%s1] sm:$0xf]
      %v514 = vld [vmem:[%s1 + $0x4] sm:$0xf]
      %v515 = vld [vmem:[%s1 + $0x8] sm:$0xf]
      %v516 = vld [vmem:[%s1 + $0xc] sm:$0xf]
      %v517 = vld [vmem:[%s1 + $0x10] sm:$0xf]
      %v518 = vld [vmem:[%s1 + $0x14] sm:$0xf]
      %v519 = vld [vmem:[%s1 + $0x18] sm:$0xf]
      %v520 = vld [vmem:[%s1 + $0x1c] sm:$0xf]
      %v521 = vld [vmem:[%s1 + $0x20] sm:$0xf]
      %v522 = vld [vmem:[%s1 + $0x24] sm:$0xf]
      %v523 = vld [vmem:[%s1 + $0x28] sm:$0xf]
      %v524 = vld [vmem:[%s1 + $0x2c] sm:$0xf]
      %v525 = vld [vmem:[%s1 + $0x30] sm:$0xf]
      %v526 = vld [vmem:[%s1 + $0x34] sm:$0xf]
      %v527 = vld [vmem:[%s1 + $0x38] sm:$0xf]
      %v528 = vld [vmem:[%s1 + $0x3c] sm:$0xf]
      %v529 = vld [vmem:[%s1 + $0x40] sm:$0xf]
      %v530 = vld [vmem:[%s1 + $0x44] sm:$0xf]
      %v531 = vld [vmem:[%s1 + $0x48] sm:$0xf]
      %v532 = vld [vmem:[%s1 + $0x4c] sm:$0xf]
      %v533 = vld [vmem:[%s1 + $0x50] sm:$0xf]
      %v534 = vld [vmem:[%s1 + $0x54] sm:$0xf]
      %v535 = vld [vmem:[%s1 + $0x58] sm:$0xf]
      %v536 = vld [vmem:[%s1 + $0x5c] sm:$0xf]
      %v537 = vld [vmem:[%s2] sm:$0x1]
      %v539 = vperm.slane %v537, 0
      %v565 = vunpack.c.l.b16 %v513
      %v566 = vunpack.c.l.b16 %v514
      %v567 = vunpack.c.l.b16 %v515
      %v568 = vunpack.c.l.b16 %v516
      %v569 = vunpack.c.l.b16 %v517
      %v570 = vunpack.c.l.b16 %v518
      %v571 = vunpack.c.l.b16 %v519
      %v572 = vunpack.c.l.b16 %v520
      %v573 = vunpack.c.l.b16 %v521
      %v574 = vunpack.c.l.b16 %v522
      %v575 = vunpack.c.l.b16 %v523
      %v576 = vunpack.c.l.b16 %v524
      %v577 = vunpack.c.l.b16 %v525
      %v578 = vunpack.c.l.b16 %v526
      %v579 = vunpack.c.l.b16 %v527
      %v580 = vunpack.c.l.b16 %v528
      %v581 = vunpack.c.l.b16 %v529
      %v582 = vunpack.c.l.b16 %v530
      %v583 = vunpack.c.l.b16 %v531
      %v584 = vunpack.c.l.b16 %v532
      %v585 = vunpack.c.l.b16 %v533
      %v586 = vunpack.c.l.b16 %v534
      %v587 = vunpack.c.l.b16 %v535
      %v588 = vunpack.c.l.b16 %v536
      %v589 = vpack.c.b16 %v566, %v565
      %v590 = vpack.c.b16 %v568, %v567
      %v591 = vpack.c.b16 %v570, %v569
      %v592 = vpack.c.b16 %v572, %v571
      %v593 = vpack.c.b16 %v574, %v573
      %v594 = vpack.c.b16 %v576, %v575
      %v595 = vpack.c.b16 %v578, %v577
      %v596 = vpack.c.b16 %v580, %v579
      %v597 = vpack.c.b16 %v582, %v581
      %v598 = vpack.c.b16 %v584, %v583
      %v599 = vpack.c.b16 %v586, %v585
      %v600 = vpack.c.b16 %v588, %v587
      %vm613 = vcmask 523264
      %v614 = vsel %vm613, %v506, 0
      %v616 = vsel %vm613, %v508, 0
      %v618 = vsel %vm613, %v510, 0
      %v620 = vsel %vm613, %v512, 0
      %622 = vmatpush.bf16.msra.mxu0 %v596
      %623 = vmatpush.bf16.msra.mxu0 %v595
      %624 = vmatpush.bf16.msra.mxu0 %v594
      %625 = vmatpush.bf16.msra.mxu0 %v593
      %626 = vmatpush.bf16.msra.mxu0 %v592
      %627 = vmatpush.bf16.msra.mxu0 %v591
      %628 = vmatpush.bf16.msra.mxu0 %v590
      %629 = vmatpush.bf16.msra.mxu0 %v589
      %630 = vmatmul.bf16.gmra.mxu0 %v493
      %v631 = vpop.f32.mrf.mxu0
      %v632 = vadd.f32 %v539, %v631
      %v633 = vpop.f32.mrf.mxu0
      %v634 = vadd.f32 %v539, %v633
      %635 = vmatmul.bf16.gmra.mxu0 %v496
      %v636 = vpop.f32.mrf.mxu0
      %v637 = vadd.f32 %v539, %v636
      %v638 = vpop.f32.mrf.mxu0
      %v639 = vadd.f32 %v539, %v638
      %640 = vmatmul.bf16.gmra.mxu0 %v499
      %v641 = vpop.f32.mrf.mxu0
      %v642 = vadd.f32 %v539, %v641
      %v643 = vpop.f32.mrf.mxu0
      %v644 = vadd.f32 %v539, %v643
      %645 = vmatmul.bf16.gmra.mxu0 %v502
      %v646 = vpop.f32.mrf.mxu0
      %v647 = vadd.f32 %v539, %v646
      %v648 = vpop.f32.mrf.mxu0
      %v649 = vadd.f32 %v539, %v648
      %650 = vdwg.mxu0
      %651 = vmatpush.bf16.msra.mxu0 0
      %652 = vmatpush.bf16.msra.mxu0 0
      %653 = vmatpush.bf16.msra.mxu0 0
      %654 = vmatpush.bf16.msra.mxu0 0
      %655 = vmatpush.bf16.msra.mxu0 %v600
      %656 = vmatpush.bf16.msra.mxu0 %v599
      %657 = vmatpush.bf16.msra.mxu0 %v598
      %658 = vmatpush.bf16.msra.mxu0 %v597
      %659 = vmatmul.bf16.gmra.mxu0 %v614
      %v660 = vpop.f32.mrf.mxu0
      %v661 = vadd.f32 %v632, %v660
      %v662 = vpop.f32.mrf.mxu0
      %v663 = vadd.f32 %v634, %v662
      %664 = vmatmul.bf16.gmra.mxu0 %v616
      %v665 = vpop.f32.mrf.mxu0
      %v666 = vadd.f32 %v637, %v665
      %v667 = vpop.f32.mrf.mxu0
      %v668 = vadd.f32 %v639, %v667
      %669 = vmatmul.bf16.gmra.mxu0 %v618
      %v670 = vpop.f32.mrf.mxu0
      %v671 = vadd.f32 %v642, %v670
      %v672 = vpop.f32.mrf.mxu0
      %v673 = vadd.f32 %v644, %v672
      %674 = vmatmul.bf16.gmra.mxu0 %v620
      %v675 = vpop.f32.mrf.mxu0
      %v676 = vadd.f32 %v647, %v675
      %v677 = vpop.f32.mrf.mxu0
      %v678 = vadd.f32 %v649, %v677
      %679 = vdwg.mxu0
      %vm680 = vcmask 64512
      %v681 = vsel %vm680, %v661, 0.0
      %v682 = vsel %vm680, %v663, 0.0
      %v683 = vadd.f32 %v681, %v682
      %v684 = vsel %vm680, %v666, 0.0
      %v685 = vadd.f32 %v683, %v684
      %v686 = vsel %vm680, %v668, 0.0
      %v687 = vadd.f32 %v685, %v686
      %v688 = vsel %vm680, %v671, 0.0
      %v689 = vadd.f32 %v687, %v688
      %v690 = vsel %vm680, %v673, 0.0
      %v691 = vadd.f32 %v689, %v690
      %v692 = vsel %vm680, %v676, 0.0
      %v693 = vadd.f32 %v691, %v692
      %v694 = vsel %vm680, %v678, 0.0
      %v695 = vadd.f32 %v693, %v694
      %v696 = vrot.slane %v695, 4
      %v697 = vadd.f32 %v695, %v696
      %v698 = vrot.slane %v697, 2
      %v699 = vadd.f32 %v697, %v698
      %v700 = vrot.slane %v699, 1
      %v701 = vadd.f32 %v699, %v700
      %v702 = vrcp.pop 64.0
      %v703 = vmul.f32 64.0, %v702
      %v704 = vsub.f32 1.0, %v703
      %v705 = vmul.f32 %v702, %v704
      %v706 = vadd.f32 %v702, %v705
      %vm707 = vweird.f32 %v702
      %v708 = vsel %vm707, %v702, %v706
      %v709 = vmul.f32 %v701, %v708
      %v710 = vld [vmem:[%s3] sm:$0xff]
      %v711 = vld [vmem:[%s4] sm:$0x1]
      %v713 = vsel %vm680, %v709, 0
      %715 = vmatpush.msra.mxu0 0.0
      %716 = vmatpush.msra.mxu0 0.0
      %717 = vmatpush.msra.mxu0 0.0
      %718 = vmatpush.msra.mxu0 0.0
      %719 = vmatpush.msra.mxu0 0.0
      %720 = vmatpush.msra.mxu0 0.0
      %721 = vmatpush.msra.mxu0 0.0
      %722 = vmatpush.msra.mxu0 0.0
      %723 = vmatpush.msra.mxu0 0.0
      %724 = vmatpush.msra.mxu0 0.0
      %725 = vmatpush.msra.mxu0 0.0
      %726 = vmatpush.msra.mxu0 0.0
      %727 = vmatpush.msra.mxu0 0.0
      %728 = vmatpush.msra.mxu0 0.0
      %729 = vmatpush.msra.mxu0 0.0
      %730 = vmatpush.msra.mxu0 %v710
      %731 = vmatmul.f32.gmra.mxu0 %v713
      %v732 = vpop.f32.mrf.mxu0
      %v733 = vadd.f32 %v711, %v732
      %734 = vdwg.mxu0
      %v735 = vmax.f32 %v733, 0.0
      %v736 = vld [vmem:[#allocation2] sm:$0x1]
      %v737 = vmin.f32 %v733, 0.0
      %739 = vset.pattern.permute.xlu0 0
      %740 = vperm.xlu0 %739, %v736
      %v741 = vpop.permute.xlu0 %740
      %v743 = vperm.slane %v741, 0
      %v744 = vmul.f32 %v743, %v737
      %v745 = vadd.f32 %v735, %v744
      %v746 = vld [vmem:[%s6] sm:$0x3]
      %v747 = vld [vmem:[%s7] sm:$0x1]
      %vm748 = vcmask 15360
      %v750 = vsel %vm748, %v745, 0
      %vm752 = vcmask 1041408
      %v754 = vsel %vm752, %v746, 0
      %756 = vmatpush.msra.mxu0 0.0
      %757 = vmatpush.msra.mxu0 0.0
      %758 = vmatpush.msra.mxu0 0.0
      %759 = vmatpush.msra.mxu0 0.0
      %760 = vmatpush.msra.mxu0 0.0
      %761 = vmatpush.msra.mxu0 0.0
      %762 = vmatpush.msra.mxu0 0.0
      %763 = vmatpush.msra.mxu0 0.0
      %764 = vmatpush.msra.mxu0 0.0
      %765 = vmatpush.msra.mxu0 0.0
      %766 = vmatpush.msra.mxu0 0.0
      %767 = vmatpush.msra.mxu0 0.0
      %768 = vmatpush.msra.mxu0 0.0
      %769 = vmatpush.msra.mxu0 0.0
      %770 = vmatpush.msra.mxu0 0.0
      %771 = vmatpush.msra.mxu0 %v754
      %772 = vmatmul.f32.gmra.mxu0 %v750
      %v773 = vpop.f32.mrf.mxu0
      %v774 = vadd.f32 %v747, %v773
      %775 = vdwg.mxu0
      %v776 = vxor.u32 %v774, 2147483648
      %v777 = vmul.f32 %v776, 1.442695
      %v778 = vpow.pop %v777
      %v779 = vadd.f32 %v778, 1.0
      %v780 = vrcp.pop %v779
      %v781 = vmul.f32 %v779, %v780
      %v782 = vsub.f32 1.0, %v781
      %v783 = vmul.f32 %v780, %v782
      %v784 = vadd.f32 %v780, %v783
      %vm785 = vweird.f32 %v779
      %vm786 = vweird.f32 %v780
      %vm787 = vmor %vm785, %vm786
      %v788 = vsel %vm787, %v780, %v784
      %v789 = vand.u32 2147483647, %v779
      %vm790 = vcmp.eq.f32.partialorder %v789, 8.507059e+37
      %v791 = vand.u32 %v779, 2147483648
      %v792 = vor.u32 1.1754944e-38, %v791
      %v793 = vsel %vm790, %v792, %v788
      %v794 = vmul.f32 1.0, %v793
      %v795 = vadd.f32 %v794, 1.0
      %v796 = vperm.slane %v795, 0
      %v797 = vmul.f32 %v661, %v796
      %v798 = vmul.f32 %v663, %v796
      %v799 = vmul.f32 %v666, %v796
      %v800 = vmul.f32 %v668, %v796
      %v801 = vmul.f32 %v671, %v796
      %v802 = vmul.f32 %v673, %v796
      %v803 = vmul.f32 %v676, %v796
      %v804 = vmul.f32 %v678, %v796
      %805 = vst.msk [vmem:[%s307] sm:$0xff] %vm680, %v797
      %806 = vst.msk [vmem:[%s307 + $0x8] sm:$0xff] %vm680, %v798
      %807 = vst.msk [vmem:[%s307 + $0x10] sm:$0xff] %vm680, %v799
      %808 = vst.msk [vmem:[%s307 + $0x18] sm:$0xff] %vm680, %v800
      %809 = vst.msk [vmem:[%s307 + $0x20] sm:$0xff] %vm680, %v801
      %810 = vst.msk [vmem:[%s307 + $0x28] sm:$0xff] %vm680, %v802
      %811 = vst.msk [vmem:[%s307 + $0x30] sm:$0xff] %vm680, %v803
      %812 = vst.msk [vmem:[%s307 + $0x38] sm:$0xff] %vm680, %v804
      %p813 = scmp.lt.s32.totalorder %s21, 1
      %s814 = scalar_select %p813, %s21, 1
      %s815 = smul.addr %s814, 8
      %s816 = smul.addr %s815, 8
      %s817 = scalar_lea.vmem %s8, %s816
      // Predicated region
      $region53: #{upblocks_forward.5} parent=51 // pred_check
        %p818 = pneg %p212
      $region54: #{upblocks_forward.5} parent=51 // pred_check_branch
        %820 = sbr.rel (%p818) target = $region56
      $region55: #{upblocks_forward.5} parent=51 // pred_region
        _
      $region56: #{upblocks_forward.5} parent=51 // pred_fallthru
        _
    $region52: #{upblocks_forward.5} parent=5 // pred_fallthru
      _
    %p821 = scmp.le.s32.totalorder 2, %s16
    // Predicated region
    $region57: #{upblocks_forward.5} parent=5 // pred_check
      %p822 = pneg %p821
    $region58: #{upblocks_forward.5} parent=5 // pred_check_branch
      %824 = sbr.rel (%p822) target = $region60
    $region59: #{upblocks_forward.5} parent=5 // pred_region
      %s825 = ssub.s32 %s16, 2
      // Predicated region
      $region61: #{upblocks_forward.5} parent=59 // pred_check
        %p826 = pneg %p218
      $region62: #{upblocks_forward.5} parent=59 // pred_check_branch
        %828 = sbr.rel (%p826) target = $region64
      $region63: #{upblocks_forward.5} parent=59 // pred_region
        %p829 = scmp.lt.s32.totalorder %s22, 1
        %s830 = scalar_select %p829, %s22, 1
        %s831 = smul.addr %s830, 8
        %s832 = smul.addr %s831, 8
        %s833 = scalar_lea.vmem %s8, %s832
      $region64: #{upblocks_forward.5} parent=59 // pred_fallthru
        _
    $region60: #{upblocks_forward.5} parent=5 // pred_fallthru
      _
  $region6: #{upblocks_forward.5} parent=0 // loop_footer
    %s20 = sadd.s32 1, %s16
  $region7: #{upblocks_forward.5} parent=0 // loop_footer_branch
    %15 = sbr.rel target = $region3
  $region8: #{upblocks_forward.5} parent=0 // loop_exit
    _

</llo_original>
